<compile_context>
chip_gen: v5e
topology: v5e:2x2
jax: 0.10.0
libtpu: 0.0.40
codegen_flags: <defaults>
</compile_context>

<pallas_src>
import jax
import jax.numpy as jnp
from jax.experimental import pallas as pl
from jax.experimental.pallas import tpu as pltpu

LATENT_DIM = 100
LATENT_PAD = 128          # lane-aligned K for the first matmul
HIDDEN = (256, 512, 1024, 2048)
EPS = 1e-5
NEG_SLOPE = 0.2


def _bn_block(h, w_bf16, bgb):
    """Linear + LeakyReLU(0.2) + BatchNorm1d(training stats), single pass.

    h:      (B, K) f32 activations
    w_bf16: (K, N) bf16 weights (upcast here; f32 accumulation on the MXU)
    bgb:    (3, N) f32 -> rows are (bias, gamma, beta)
    """
    b, g, be = bgb[0:1], bgb[1:2], bgb[2:3]
    h = jnp.dot(h, w_bf16.astype(jnp.float32),
                preferred_element_type=jnp.float32) + b
    h = jnp.where(h > 0, h, NEG_SLOPE * h)                      # LeakyReLU(0.2)

    inv_b = jnp.float32(1.0 / h.shape[0])
    s1 = jnp.sum(h, axis=0, keepdims=True)                      # XLU reduce
    s2 = jnp.sum(h * h, axis=0, keepdims=True)
    mean = s1 * inv_b
    var = jnp.maximum(s2 * inv_b - mean * mean, 0.0)            # biased variance
    scale = g * jax.lax.rsqrt(var + EPS)                        # EUP rsqrt
    shift = be - mean * scale
    return h * scale + shift


def backward_discriminator_kernel(
    x_ref,
    w1_ref, bgb1_ref,
    w2_ref, bgb2_ref,
    w3_hbm, bgb3_ref,
    w4_hbm, bgb4_ref,
    w5_ref, b5_ref,
    out_ref,
    w3_vmem, w4_vmem, dma_sem,
):
    # Kick off the two dominant weight transfers (w3: 1 MiB, w4: 4 MiB bf16)
    # so blocks 1-2 / 1-3 compute hides under the DMA.
    cp3 = pltpu.make_async_copy(w3_hbm, w3_vmem, dma_sem.at[0])
    cp4 = pltpu.make_async_copy(w4_hbm, w4_vmem, dma_sem.at[1])
    cp3.start()
    cp4.start()

    h = x_ref[...]                                   # (B, 128) f32, zero-padded
    h = _bn_block(h, w1_ref[...], bgb1_ref[...])     # 128 -> 256
    h = _bn_block(h, w2_ref[...], bgb2_ref[...])     # 256 -> 512

    cp3.wait()
    h = _bn_block(h, w3_vmem[...], bgb3_ref[...])    # 512 -> 1024

    cp4.wait()
    h = _bn_block(h, w4_vmem[...], bgb4_ref[...])    # 1024 -> 2048

    logits = jnp.dot(h, w5_ref[...].astype(jnp.float32),
                     preferred_element_type=jnp.float32) + b5_ref[...]
    out_ref[...] = jax.nn.sigmoid(logits).astype(out_ref.dtype)


def init_params(key, latent_dim=LATENT_DIM, hidden=HIDDEN):
    """PyTorch-style init: U(-1/sqrt(fan_in), 1/sqrt(fan_in)); BN gamma=1, beta=0."""
    dims = (latent_dim,) + hidden + (1,)
    linear = []
    for i in range(len(dims) - 1):
        fan_in, fan_out = dims[i], dims[i + 1]
        key, kw, kb = jax.random.split(key, 3)
        bound = 1.0 / (fan_in ** 0.5)
        w = jax.random.uniform(kw, (fan_in, fan_out), jnp.float32, -bound, bound)
        b = jax.random.uniform(kb, (1, fan_out), jnp.float32, -bound, bound)
        linear.append((w, b))
    bn = [(jnp.ones((1, d), jnp.float32), jnp.zeros((1, d), jnp.float32))
          for d in hidden]
    return linear, bn


def prepare_params(linear, bn):
    """Kernel-ready params: bf16 weights (w1 zero-padded 100->128 rows) and
    per-layer (bias, gamma, beta) packed into one (3, N) f32 array."""
    kp = {}
    for idx in range(4):
        w, b = linear[idx]
        g, be = bn[idx]
        if idx == 0 and w.shape[0] < LATENT_PAD:
            w = jnp.pad(w, ((0, LATENT_PAD - w.shape[0]), (0, 0)))
        kp[f"w{idx + 1}"] = w.astype(jnp.bfloat16)
        kp[f"bgb{idx + 1}"] = jnp.concatenate([b, g, be], axis=0)
    w5, b5 = linear[4]
    kp["w5"] = w5.astype(jnp.bfloat16)
    kp["b5"] = b5
    return kp


@jax.jit
def backward_discriminator(x, kp):
    # Glue: flatten like `x.view(x.shape[0], -1)` and lane-pad latent dim.
    x2d = x.reshape(x.shape[0], -1).astype(jnp.float32)
    B, K = x2d.shape
    if K < LATENT_PAD:
        x2d = jnp.pad(x2d, ((0, 0), (0, LATENT_PAD - K)))

    vmem = pl.BlockSpec(memory_space=pltpu.MemorySpace.VMEM)
    hbm = pl.BlockSpec(memory_space=pl.ANY)      # manual DMA inside the kernel

    args = (x2d,
            kp["w1"], kp["bgb1"],
            kp["w2"], kp["bgb2"],
            kp["w3"], kp["bgb3"],
            kp["w4"], kp["bgb4"],
            kp["w5"], kp["b5"])
    in_specs = [vmem,
                vmem, vmem,
                vmem, vmem,
                hbm, vmem,
                hbm, vmem,
                vmem, vmem]

    return pl.pallas_call(
        backward_discriminator_kernel,
        out_shape=jax.ShapeDtypeStruct((B, 1), jnp.float32),
        in_specs=in_specs,
        out_specs=vmem,
        scratch_shapes=[
            pltpu.VMEM((HIDDEN[1], HIDDEN[2]), jnp.bfloat16),   # w3 staging (1 MiB)
            pltpu.VMEM((HIDDEN[2], HIDDEN[3]), jnp.bfloat16),   # w4 staging (4 MiB)
            pltpu.SemaphoreType.DMA((2,)),
        ],
        compiler_params=pltpu.CompilerParams(
            # ~6 MiB of persistent buffers + transient f32 weight upcasts;
            # 32 MiB is valid on v5e/v6e/v7x (v7x physical VMEM is 64 MiB).
            vmem_limit_bytes=32 * 1024 * 1024,
        ),
    )(*args)


def _reference(x, kp):
    """Pure-JAX reference (two-pass BN, f32) using the same bf16-rounded weights."""
    h = x.reshape(x.shape[0], -1).astype(jnp.float32)
    if h.shape[1] < LATENT_PAD:
        h = jnp.pad(h, ((0, 0), (0, LATENT_PAD - h.shape[1])))
    for i in range(1, 5):
        w = kp[f"w{i}"].astype(jnp.float32)
        bgb = kp[f"bgb{i}"]
        b, g, be = bgb[0:1], bgb[1:2], bgb[2:3]
        h = h @ w + b
        h = jnp.where(h > 0, h, NEG_SLOPE * h)
        mean = jnp.mean(h, axis=0, keepdims=True)
        var = jnp.mean((h - mean) ** 2, axis=0, keepdims=True)
        h = (h - mean) / jnp.sqrt(var + EPS) * g + be
    logits = h @ kp["w5"].astype(jnp.float32) + kp["b5"]
    return jax.nn.sigmoid(logits)


if __name__ == "__main__":
    key = jax.random.PRNGKey(0)
    k_param, k_x = jax.random.split(key)

    linear, bn = init_params(k_param)
    kparams = prepare_params(linear, bn)

    # Small batch (multiple of 8 sublanes so BN stats see no padded rows).
    B = 8
    x = jax.random.normal(k_x, (B, LATENT_DIM), jnp.float32)

    out = backward_discriminator(x, kparams)
    out = jax.block_until_ready(out)

    ref = _reference(x, kparams)
    assert out.shape == (B, 1)
    assert jnp.allclose(out, ref, atol=5e-4, rtol=5e-4), (out, ref)

    print("KERNEL_OK")
</pallas_src>

<mosaic_0001>
module attributes {stable_mosaic.version = 11 : i64} {
  func.func @backward_discriminator_kernel(%arg0: memref<8x128xf32, #tpu.memory_space<vmem>>, %arg1: memref<128x256xbf16, #tpu.memory_space<vmem>>, %arg2: memref<3x256xf32, #tpu.memory_space<vmem>>, %arg3: memref<256x512xbf16, #tpu.memory_space<vmem>>, %arg4: memref<3x512xf32, #tpu.memory_space<vmem>>, %arg5: memref<512x1024xbf16, #tpu.memory_space<any>>, %arg6: memref<3x1024xf32, #tpu.memory_space<vmem>>, %arg7: memref<1024x2048xbf16, #tpu.memory_space<any>>, %arg8: memref<3x2048xf32, #tpu.memory_space<vmem>>, %arg9: memref<2048x1xbf16, #tpu.memory_space<vmem>>, %arg10: memref<1x1xf32, #tpu.memory_space<vmem>>, %arg11: memref<8x1xf32, #tpu.memory_space<vmem>>, %arg12: memref<512x1024xbf16, #tpu.memory_space<vmem>>, %arg13: memref<1024x2048xbf16, #tpu.memory_space<vmem>>, %arg14: memref<2x!tpu.dma_semaphore, #tpu.memory_space<semaphore_mem>>) attributes {dimension_semantics = [], scalar_prefetch = 0 : i64, scratch_operands = 3 : i64, tpu.core_type = #tpu.core_type<tc>} {
    %c0_i32 = arith.constant 0 : i32
    %0 = tpu.memref_slice %arg14[%c0_i32] : memref<2x!tpu.dma_semaphore, #tpu.memory_space<semaphore_mem>> -> memref<1x!tpu.dma_semaphore, #tpu.memory_space<semaphore_mem>>
    %1 = tpu.memref_squeeze %0 : memref<1x!tpu.dma_semaphore, #tpu.memory_space<semaphore_mem>> -> memref<!tpu.dma_semaphore, #tpu.memory_space<semaphore_mem>>
    tpu.enqueue_dma source(%arg5 : memref<512x1024xbf16, #tpu.memory_space<any>>) target(%arg12 : memref<512x1024xbf16, #tpu.memory_space<vmem>>) target_semaphore(%1 : memref<!tpu.dma_semaphore, #tpu.memory_space<semaphore_mem>>)
    %c1_i32 = arith.constant 1 : i32
    %2 = tpu.memref_slice %arg14[%c1_i32] : memref<2x!tpu.dma_semaphore, #tpu.memory_space<semaphore_mem>> -> memref<1x!tpu.dma_semaphore, #tpu.memory_space<semaphore_mem>>
    %3 = tpu.memref_squeeze %2 : memref<1x!tpu.dma_semaphore, #tpu.memory_space<semaphore_mem>> -> memref<!tpu.dma_semaphore, #tpu.memory_space<semaphore_mem>>
    tpu.enqueue_dma source(%arg7 : memref<1024x2048xbf16, #tpu.memory_space<any>>) target(%arg13 : memref<1024x2048xbf16, #tpu.memory_space<vmem>>) target_semaphore(%3 : memref<!tpu.dma_semaphore, #tpu.memory_space<semaphore_mem>>)
    %c0 = arith.constant 0 : index
    %c0_0 = arith.constant 0 : index
    %4 = vector.load %arg0[%c0, %c0_0] : memref<8x128xf32, #tpu.memory_space<vmem>>, vector<8x128xf32>
    %c0_1 = arith.constant 0 : index
    %c0_2 = arith.constant 0 : index
    %5 = vector.load %arg1[%c0_1, %c0_2] : memref<128x256xbf16, #tpu.memory_space<vmem>>, vector<128x256xbf16>
    %c0_3 = arith.constant 0 : index
    %c0_4 = arith.constant 0 : index
    %6 = vector.load %arg2[%c0_3, %c0_4] : memref<3x256xf32, #tpu.memory_space<vmem>>, vector<3x256xf32>
    %7 = vector.extract_strided_slice %6 {offsets = [0, 0], sizes = [1, 256], strides = [1, 1]} : vector<3x256xf32> to vector<1x256xf32>
    %8 = vector.extract_strided_slice %6 {offsets = [1, 0], sizes = [1, 256], strides = [1, 1]} : vector<3x256xf32> to vector<1x256xf32>
    %9 = vector.extract_strided_slice %6 {offsets = [2, 0], sizes = [1, 256], strides = [1, 1]} : vector<3x256xf32> to vector<1x256xf32>
    %10 = arith.extf %5 : vector<128x256xbf16> to vector<128x256xf32>
    %cst = arith.constant dense<0.000000e+00> : vector<8x256xf32>
    %11 = tpu.matmul %4, %10, %cst {dimension_numbers = #tpu.dot_dimension_numbers<[1], [0], [0], [1], [0, 0, 1, 1], [], []>} : vector<8x128xf32>, vector<128x256xf32>, vector<8x256xf32> -> vector<8x256xf32>
    %12 = vector.broadcast %7 : vector<1x256xf32> to vector<8x256xf32>
    %13 = arith.addf %11, %12 : vector<8x256xf32>
    %cst_5 = arith.constant 0.000000e+00 : f32
    %14 = vector.broadcast %cst_5 : f32 to vector<8x256xf32>
    %15 = arith.cmpf ogt, %13, %14 : vector<8x256xf32>
    %cst_6 = arith.constant 2.000000e-01 : f32
    %16 = vector.broadcast %cst_6 : f32 to vector<8x256xf32>
    %17 = arith.mulf %16, %13 : vector<8x256xf32>
    %18 = arith.select %15, %13, %17 : vector<8x256xi1>, vector<8x256xf32>
    %cst_7 = arith.constant dense<0.000000e+00> : vector<256xf32>
    %19 = vector.multi_reduction <add>, %18, %cst_7 [0] : vector<8x256xf32> to vector<256xf32>
    %20 = vector.shape_cast %19 : vector<256xf32> to vector<1x256xf32>
    %21 = arith.mulf %18, %18 : vector<8x256xf32>
    %cst_8 = arith.constant dense<0.000000e+00> : vector<256xf32>
    %22 = vector.multi_reduction <add>, %21, %cst_8 [0] : vector<8x256xf32> to vector<256xf32>
    %23 = vector.shape_cast %22 : vector<256xf32> to vector<1x256xf32>
    %cst_9 = arith.constant 1.250000e-01 : f32
    %24 = vector.broadcast %cst_9 : f32 to vector<1x256xf32>
    %25 = arith.mulf %20, %24 : vector<1x256xf32>
    %cst_10 = arith.constant 1.250000e-01 : f32
    %26 = vector.broadcast %cst_10 : f32 to vector<1x256xf32>
    %27 = arith.mulf %23, %26 : vector<1x256xf32>
    %28 = arith.mulf %25, %25 : vector<1x256xf32>
    %29 = arith.subf %27, %28 : vector<1x256xf32>
    %cst_11 = arith.constant 0.000000e+00 : f32
    %30 = vector.broadcast %cst_11 : f32 to vector<1x256xf32>
    %31 = arith.maximumf %29, %30 : vector<1x256xf32>
    %cst_12 = arith.constant 9.99999974E-6 : f32
    %32 = vector.broadcast %cst_12 : f32 to vector<1x256xf32>
    %33 = arith.addf %31, %32 : vector<1x256xf32>
    %34 = math.rsqrt %33 : vector<1x256xf32>
    %35 = arith.mulf %8, %34 : vector<1x256xf32>
    %36 = arith.mulf %25, %35 : vector<1x256xf32>
    %37 = arith.subf %9, %36 : vector<1x256xf32>
    %38 = vector.broadcast %35 : vector<1x256xf32> to vector<8x256xf32>
    %39 = arith.mulf %18, %38 : vector<8x256xf32>
    %40 = vector.broadcast %37 : vector<1x256xf32> to vector<8x256xf32>
    %41 = arith.addf %39, %40 : vector<8x256xf32>
    %c0_13 = arith.constant 0 : index
    %c0_14 = arith.constant 0 : index
    %42 = vector.load %arg3[%c0_13, %c0_14] : memref<256x512xbf16, #tpu.memory_space<vmem>>, vector<256x512xbf16>
    %c0_15 = arith.constant 0 : index
    %c0_16 = arith.constant 0 : index
    %43 = vector.load %arg4[%c0_15, %c0_16] : memref<3x512xf32, #tpu.memory_space<vmem>>, vector<3x512xf32>
    %44 = vector.extract_strided_slice %43 {offsets = [0, 0], sizes = [1, 512], strides = [1, 1]} : vector<3x512xf32> to vector<1x512xf32>
    %45 = vector.extract_strided_slice %43 {offsets = [1, 0], sizes = [1, 512], strides = [1, 1]} : vector<3x512xf32> to vector<1x512xf32>
    %46 = vector.extract_strided_slice %43 {offsets = [2, 0], sizes = [1, 512], strides = [1, 1]} : vector<3x512xf32> to vector<1x512xf32>
    %47 = arith.extf %42 : vector<256x512xbf16> to vector<256x512xf32>
    %cst_17 = arith.constant dense<0.000000e+00> : vector<8x512xf32>
    %48 = tpu.matmul %41, %47, %cst_17 {dimension_numbers = #tpu.dot_dimension_numbers<[1], [0], [0], [1], [0, 0, 1, 1], [], []>} : vector<8x256xf32>, vector<256x512xf32>, vector<8x512xf32> -> vector<8x512xf32>
    %49 = vector.broadcast %44 : vector<1x512xf32> to vector<8x512xf32>
    %50 = arith.addf %48, %49 : vector<8x512xf32>
    %cst_18 = arith.constant 0.000000e+00 : f32
    %51 = vector.broadcast %cst_18 : f32 to vector<8x512xf32>
    %52 = arith.cmpf ogt, %50, %51 : vector<8x512xf32>
    %cst_19 = arith.constant 2.000000e-01 : f32
    %53 = vector.broadcast %cst_19 : f32 to vector<8x512xf32>
    %54 = arith.mulf %53, %50 : vector<8x512xf32>
    %55 = arith.select %52, %50, %54 : vector<8x512xi1>, vector<8x512xf32>
    %cst_20 = arith.constant dense<0.000000e+00> : vector<512xf32>
    %56 = vector.multi_reduction <add>, %55, %cst_20 [0] : vector<8x512xf32> to vector<512xf32>
    %57 = vector.shape_cast %56 : vector<512xf32> to vector<1x512xf32>
    %58 = arith.mulf %55, %55 : vector<8x512xf32>
    %cst_21 = arith.constant dense<0.000000e+00> : vector<512xf32>
    %59 = vector.multi_reduction <add>, %58, %cst_21 [0] : vector<8x512xf32> to vector<512xf32>
    %60 = vector.shape_cast %59 : vector<512xf32> to vector<1x512xf32>
    %cst_22 = arith.constant 1.250000e-01 : f32
    %61 = vector.broadcast %cst_22 : f32 to vector<1x512xf32>
    %62 = arith.mulf %57, %61 : vector<1x512xf32>
    %cst_23 = arith.constant 1.250000e-01 : f32
    %63 = vector.broadcast %cst_23 : f32 to vector<1x512xf32>
    %64 = arith.mulf %60, %63 : vector<1x512xf32>
    %65 = arith.mulf %62, %62 : vector<1x512xf32>
    %66 = arith.subf %64, %65 : vector<1x512xf32>
    %cst_24 = arith.constant 0.000000e+00 : f32
    %67 = vector.broadcast %cst_24 : f32 to vector<1x512xf32>
    %68 = arith.maximumf %66, %67 : vector<1x512xf32>
    %cst_25 = arith.constant 9.99999974E-6 : f32
    %69 = vector.broadcast %cst_25 : f32 to vector<1x512xf32>
    %70 = arith.addf %68, %69 : vector<1x512xf32>
    %71 = math.rsqrt %70 : vector<1x512xf32>
    %72 = arith.mulf %45, %71 : vector<1x512xf32>
    %73 = arith.mulf %62, %72 : vector<1x512xf32>
    %74 = arith.subf %46, %73 : vector<1x512xf32>
    %75 = vector.broadcast %72 : vector<1x512xf32> to vector<8x512xf32>
    %76 = arith.mulf %55, %75 : vector<8x512xf32>
    %77 = vector.broadcast %74 : vector<1x512xf32> to vector<8x512xf32>
    %78 = arith.addf %76, %77 : vector<8x512xf32>
    %c0_i32_26 = arith.constant 0 : i32
    %79 = tpu.memref_slice %arg14[%c0_i32_26] : memref<2x!tpu.dma_semaphore, #tpu.memory_space<semaphore_mem>> -> memref<1x!tpu.dma_semaphore, #tpu.memory_space<semaphore_mem>>
    %80 = tpu.memref_squeeze %79 : memref<1x!tpu.dma_semaphore, #tpu.memory_space<semaphore_mem>> -> memref<!tpu.dma_semaphore, #tpu.memory_space<semaphore_mem>>
    tpu.wait_dma2 semaphore(%80 : memref<!tpu.dma_semaphore, #tpu.memory_space<semaphore_mem>>) src(%arg5 : memref<512x1024xbf16, #tpu.memory_space<any>>) dst(%arg12 : memref<512x1024xbf16, #tpu.memory_space<vmem>>)
    %c0_27 = arith.constant 0 : index
    %c0_28 = arith.constant 0 : index
    %81 = vector.load %arg12[%c0_27, %c0_28] : memref<512x1024xbf16, #tpu.memory_space<vmem>>, vector<512x1024xbf16>
    %c0_29 = arith.constant 0 : index
    %c0_30 = arith.constant 0 : index
    %82 = vector.load %arg6[%c0_29, %c0_30] : memref<3x1024xf32, #tpu.memory_space<vmem>>, vector<3x1024xf32>
    %83 = vector.extract_strided_slice %82 {offsets = [0, 0], sizes = [1, 1024], strides = [1, 1]} : vector<3x1024xf32> to vector<1x1024xf32>
    %84 = vector.extract_strided_slice %82 {offsets = [1, 0], sizes = [1, 1024], strides = [1, 1]} : vector<3x1024xf32> to vector<1x1024xf32>
    %85 = vector.extract_strided_slice %82 {offsets = [2, 0], sizes = [1, 1024], strides = [1, 1]} : vector<3x1024xf32> to vector<1x1024xf32>
    %86 = arith.extf %81 : vector<512x1024xbf16> to vector<512x1024xf32>
    %cst_31 = arith.constant dense<0.000000e+00> : vector<8x1024xf32>
    %87 = tpu.matmul %78, %86, %cst_31 {dimension_numbers = #tpu.dot_dimension_numbers<[1], [0], [0], [1], [0, 0, 1, 1], [], []>} : vector<8x512xf32>, vector<512x1024xf32>, vector<8x1024xf32> -> vector<8x1024xf32>
    %88 = vector.broadcast %83 : vector<1x1024xf32> to vector<8x1024xf32>
    %89 = arith.addf %87, %88 : vector<8x1024xf32>
    %cst_32 = arith.constant 0.000000e+00 : f32
    %90 = vector.broadcast %cst_32 : f32 to vector<8x1024xf32>
    %91 = arith.cmpf ogt, %89, %90 : vector<8x1024xf32>
    %cst_33 = arith.constant 2.000000e-01 : f32
    %92 = vector.broadcast %cst_33 : f32 to vector<8x1024xf32>
    %93 = arith.mulf %92, %89 : vector<8x1024xf32>
    %94 = arith.select %91, %89, %93 : vector<8x1024xi1>, vector<8x1024xf32>
    %cst_34 = arith.constant dense<0.000000e+00> : vector<1024xf32>
    %95 = vector.multi_reduction <add>, %94, %cst_34 [0] : vector<8x1024xf32> to vector<1024xf32>
    %96 = vector.shape_cast %95 : vector<1024xf32> to vector<1x1024xf32>
    %97 = arith.mulf %94, %94 : vector<8x1024xf32>
    %cst_35 = arith.constant dense<0.000000e+00> : vector<1024xf32>
    %98 = vector.multi_reduction <add>, %97, %cst_35 [0] : vector<8x1024xf32> to vector<1024xf32>
    %99 = vector.shape_cast %98 : vector<1024xf32> to vector<1x1024xf32>
    %cst_36 = arith.constant 1.250000e-01 : f32
    %100 = vector.broadcast %cst_36 : f32 to vector<1x1024xf32>
    %101 = arith.mulf %96, %100 : vector<1x1024xf32>
    %cst_37 = arith.constant 1.250000e-01 : f32
    %102 = vector.broadcast %cst_37 : f32 to vector<1x1024xf32>
    %103 = arith.mulf %99, %102 : vector<1x1024xf32>
    %104 = arith.mulf %101, %101 : vector<1x1024xf32>
    %105 = arith.subf %103, %104 : vector<1x1024xf32>
    %cst_38 = arith.constant 0.000000e+00 : f32
    %106 = vector.broadcast %cst_38 : f32 to vector<1x1024xf32>
    %107 = arith.maximumf %105, %106 : vector<1x1024xf32>
    %cst_39 = arith.constant 9.99999974E-6 : f32
    %108 = vector.broadcast %cst_39 : f32 to vector<1x1024xf32>
    %109 = arith.addf %107, %108 : vector<1x1024xf32>
    %110 = math.rsqrt %109 : vector<1x1024xf32>
    %111 = arith.mulf %84, %110 : vector<1x1024xf32>
    %112 = arith.mulf %101, %111 : vector<1x1024xf32>
    %113 = arith.subf %85, %112 : vector<1x1024xf32>
    %114 = vector.broadcast %111 : vector<1x1024xf32> to vector<8x1024xf32>
    %115 = arith.mulf %94, %114 : vector<8x1024xf32>
    %116 = vector.broadcast %113 : vector<1x1024xf32> to vector<8x1024xf32>
    %117 = arith.addf %115, %116 : vector<8x1024xf32>
    %c1_i32_40 = arith.constant 1 : i32
    %118 = tpu.memref_slice %arg14[%c1_i32_40] : memref<2x!tpu.dma_semaphore, #tpu.memory_space<semaphore_mem>> -> memref<1x!tpu.dma_semaphore, #tpu.memory_space<semaphore_mem>>
    %119 = tpu.memref_squeeze %118 : memref<1x!tpu.dma_semaphore, #tpu.memory_space<semaphore_mem>> -> memref<!tpu.dma_semaphore, #tpu.memory_space<semaphore_mem>>
    tpu.wait_dma2 semaphore(%119 : memref<!tpu.dma_semaphore, #tpu.memory_space<semaphore_mem>>) src(%arg7 : memref<1024x2048xbf16, #tpu.memory_space<any>>) dst(%arg13 : memref<1024x2048xbf16, #tpu.memory_space<vmem>>)
    %c0_41 = arith.constant 0 : index
    %c0_42 = arith.constant 0 : index
    %120 = vector.load %arg13[%c0_41, %c0_42] : memref<1024x2048xbf16, #tpu.memory_space<vmem>>, vector<1024x2048xbf16>
    %c0_43 = arith.constant 0 : index
    %c0_44 = arith.constant 0 : index
    %121 = vector.load %arg8[%c0_43, %c0_44] : memref<3x2048xf32, #tpu.memory_space<vmem>>, vector<3x2048xf32>
    %122 = vector.extract_strided_slice %121 {offsets = [0, 0], sizes = [1, 2048], strides = [1, 1]} : vector<3x2048xf32> to vector<1x2048xf32>
    %123 = vector.extract_strided_slice %121 {offsets = [1, 0], sizes = [1, 2048], strides = [1, 1]} : vector<3x2048xf32> to vector<1x2048xf32>
    %124 = vector.extract_strided_slice %121 {offsets = [2, 0], sizes = [1, 2048], strides = [1, 1]} : vector<3x2048xf32> to vector<1x2048xf32>
    %125 = arith.extf %120 : vector<1024x2048xbf16> to vector<1024x2048xf32>
    %cst_45 = arith.constant dense<0.000000e+00> : vector<8x2048xf32>
    %126 = tpu.matmul %117, %125, %cst_45 {dimension_numbers = #tpu.dot_dimension_numbers<[1], [0], [0], [1], [0, 0, 1, 1], [], []>} : vector<8x1024xf32>, vector<1024x2048xf32>, vector<8x2048xf32> -> vector<8x2048xf32>
    %127 = vector.broadcast %122 : vector<1x2048xf32> to vector<8x2048xf32>
    %128 = arith.addf %126, %127 : vector<8x2048xf32>
    %cst_46 = arith.constant 0.000000e+00 : f32
    %129 = vector.broadcast %cst_46 : f32 to vector<8x2048xf32>
    %130 = arith.cmpf ogt, %128, %129 : vector<8x2048xf32>
    %cst_47 = arith.constant 2.000000e-01 : f32
    %131 = vector.broadcast %cst_47 : f32 to vector<8x2048xf32>
    %132 = arith.mulf %131, %128 : vector<8x2048xf32>
    %133 = arith.select %130, %128, %132 : vector<8x2048xi1>, vector<8x2048xf32>
    %cst_48 = arith.constant dense<0.000000e+00> : vector<2048xf32>
    %134 = vector.multi_reduction <add>, %133, %cst_48 [0] : vector<8x2048xf32> to vector<2048xf32>
    %135 = vector.shape_cast %134 : vector<2048xf32> to vector<1x2048xf32>
    %136 = arith.mulf %133, %133 : vector<8x2048xf32>
    %cst_49 = arith.constant dense<0.000000e+00> : vector<2048xf32>
    %137 = vector.multi_reduction <add>, %136, %cst_49 [0] : vector<8x2048xf32> to vector<2048xf32>
    %138 = vector.shape_cast %137 : vector<2048xf32> to vector<1x2048xf32>
    %cst_50 = arith.constant 1.250000e-01 : f32
    %139 = vector.broadcast %cst_50 : f32 to vector<1x2048xf32>
    %140 = arith.mulf %135, %139 : vector<1x2048xf32>
    %cst_51 = arith.constant 1.250000e-01 : f32
    %141 = vector.broadcast %cst_51 : f32 to vector<1x2048xf32>
    %142 = arith.mulf %138, %141 : vector<1x2048xf32>
    %143 = arith.mulf %140, %140 : vector<1x2048xf32>
    %144 = arith.subf %142, %143 : vector<1x2048xf32>
    %cst_52 = arith.constant 0.000000e+00 : f32
    %145 = vector.broadcast %cst_52 : f32 to vector<1x2048xf32>
    %146 = arith.maximumf %144, %145 : vector<1x2048xf32>
    %cst_53 = arith.constant 9.99999974E-6 : f32
    %147 = vector.broadcast %cst_53 : f32 to vector<1x2048xf32>
    %148 = arith.addf %146, %147 : vector<1x2048xf32>
    %149 = math.rsqrt %148 : vector<1x2048xf32>
    %150 = arith.mulf %123, %149 : vector<1x2048xf32>
    %151 = arith.mulf %140, %150 : vector<1x2048xf32>
    %152 = arith.subf %124, %151 : vector<1x2048xf32>
    %153 = vector.broadcast %150 : vector<1x2048xf32> to vector<8x2048xf32>
    %154 = arith.mulf %133, %153 : vector<8x2048xf32>
    %155 = vector.broadcast %152 : vector<1x2048xf32> to vector<8x2048xf32>
    %156 = arith.addf %154, %155 : vector<8x2048xf32>
    %c0_54 = arith.constant 0 : index
    %c0_55 = arith.constant 0 : index
    %157 = vector.load %arg9[%c0_54, %c0_55] : memref<2048x1xbf16, #tpu.memory_space<vmem>>, vector<2048x1xbf16>
    %158 = arith.extf %157 : vector<2048x1xbf16> to vector<2048x1xf32>
    %cst_56 = arith.constant dense<0.000000e+00> : vector<8x1xf32>
    %159 = tpu.matmul %156, %158, %cst_56 {dimension_numbers = #tpu.dot_dimension_numbers<[1], [0], [0], [1], [0, 0, 1, 1], [], []>} : vector<8x2048xf32>, vector<2048x1xf32>, vector<8x1xf32> -> vector<8x1xf32>
    %c0_57 = arith.constant 0 : index
    %c0_58 = arith.constant 0 : index
    %160 = vector.load %arg10[%c0_57, %c0_58] : memref<1x1xf32, #tpu.memory_space<vmem>>, vector<1x1xf32>
    %161 = vector.broadcast %160 : vector<1x1xf32> to vector<8x1xf32>
    %162 = arith.addf %159, %161 : vector<8x1xf32>
    %163 = arith.negf %162 : vector<8x1xf32>
    %164 = math.exp %163 : vector<8x1xf32>
    %cst_59 = arith.constant 1.000000e+00 : f32
    %165 = vector.broadcast %cst_59 : f32 to vector<8x1xf32>
    %166 = arith.addf %165, %164 : vector<8x1xf32>
    %167 = arith.divf %165, %166 : vector<8x1xf32>
    %c0_60 = arith.constant 0 : index
    %c0_61 = arith.constant 0 : index
    %168 = vector.load %arg11[%c0_60, %c0_61] : memref<8x1xf32, #tpu.memory_space<vmem>>, vector<8x1xf32>
    tpu.vector_store %arg11[%c0_60, %c0_61], %167 {strides = array<i32>} : memref<8x1xf32, #tpu.memory_space<vmem>>, vector<8x1xf32>,
    return
  }
}

</mosaic_0001>

<llo_original>
// kernel: backward_discriminator.1
$region0: #{backward_discriminator.1}
  #allocation0 [shape = 'u32[]', space=smem, size = 0x4, offset = 0x4, fixed_abs, tag = 'smem constant byte address 0x4 - core index']
  #allocation1 [shape = 'u32[72,128]{1,0:T(1,128)}', space=vmem, size = 0x9000, scoped, tag = 'internal scratch']
  #allocation2 [shape = 'bf16[512,1024]{1,0:T(8,128)(2,1)}', space=vmem, size = 0x100000, scoped, tag = 'scratch operand']
  #allocation3 [shape = 'bf16[1024,2048]{1,0:T(8,128)(2,1)}', space=vmem, size = 0x400000, scoped, tag = 'scratch operand']
  #allocation4 [shape = 's32[2]{0}', space=sflag, size = 0x8, scoped, tag = 'scratch operand']
  #allocation5 [shape = 'f32[1,1]{1,0:T(1,128)S(1)}', space=vmem, size = 0x200, scoped, tag = 'scoped memory for backward_discriminator.1']
  #allocation16 [shape = 's32[]', space=sflag, size = 0x4, offset = 0, fixed_abs, tag = 'sflag constant byte address 0x0 - dummy sync flag']
  #allocation17 [shape = 's32[]', space=sflag, size = 0x4, offset = 0, fixed_abs, tag = 'sflag constant byte address 0x0 - dummy sync flag']
  #allocation18 [shape = 'u32[]', space=smem, size = 0x4, offset = 0x44, fixed_abs, tag = 'smem constant byte address 0x44 - assertion arg 0']
  #allocation19 [shape = 'u32[]', space=smem, size = 0x4, offset = 0x48, fixed_abs, tag = 'smem constant byte address 0x48 - assertion arg 1']
  #allocation20 [shape = 's32[]', space=sflag, size = 0x4, offset = 0, fixed_abs, tag = 'sflag constant byte address 0x0 - dummy sync flag']
  #allocation21 [shape = 's32[]', space=sflag, size = 0x4, offset = 0, fixed_abs, tag = 'sflag constant byte address 0x0 - dummy sync flag']
  %s0 = inlined_call_operand.vmem [shape: f32[8,128], index: 0, kind: input, shape index: {}]
  %s1 = inlined_call_operand.hbm [shape: bf16[128,256], index: 1, kind: input, shape index: {}]
  %s2 = inlined_call_operand.hbm [shape: f32[3,256], index: 2, kind: input, shape index: {}]
  %s3 = inlined_call_operand.hbm [shape: bf16[256,512], index: 3, kind: input, shape index: {}]
  %s4 = inlined_call_operand.hbm [shape: f32[3,512], index: 4, kind: input, shape index: {}]
  %s5 = inlined_call_operand.hbm [shape: bf16[512,1024], index: 5, kind: input, shape index: {}]
  %s6 = inlined_call_operand.hbm [shape: f32[3,1024], index: 6, kind: input, shape index: {}]
  %s7 = inlined_call_operand.hbm [shape: bf16[1024,2048], index: 7, kind: input, shape index: {}]
  %s8 = inlined_call_operand.hbm [shape: f32[3,2048], index: 8, kind: input, shape index: {}]
  %s9 = inlined_call_operand.vmem [shape: bf16[2048,1], index: 9, kind: input, shape index: {}]
  %s10 = inlined_call_operand.<no memory space> [shape: f32[1,1], index: 10, kind: input, shape index: {}]
  %s11 = inlined_call_operand.vmem [shape: f32[8,1], index: 11, kind: output, shape index: {}]
  %s12 = sld [smem:[#allocation0]]
  $region78: #{backward_discriminator.1} parent=0
    _
  %s14 = ssub.s32 1, %s12
  %s15 = scalar_select 0, %s14, %s12
  %v16 = vstv %s10
  %17 = vst [vmem:[#allocation5] sm:$0x1] %v16
  $region1: #{backward_discriminator.1} parent=0
    #allocation6 [shape = 'u8[65536]{0}', space=vmem, size = 0x10000, scoped, tag = 'input window, operand 1, single buffered']
    #allocation7 [shape = 's32[1]{0}', space=sflag, size = 0x4, scoped, tag = 'scoped memory for backward_discriminator.1']
    #allocation8 [shape = 'u8[4096]{0}', space=vmem, size = 0x1000, scoped, tag = 'input window, operand 2, single buffered']
    #allocation9 [shape = 's32[1]{0}', space=sflag, size = 0x4, scoped, tag = 'scoped memory for backward_discriminator.1']
    #allocation10 [shape = 'u8[262144]{0}', space=vmem, size = 0x40000, scoped, tag = 'input window, operand 3, single buffered']
    #allocation11 [shape = 'u8[8192]{0}', space=vmem, size = 0x2000, scoped, tag = 'input window, operand 4, single buffered']
    #allocation12 [shape = 's32[1]{0}', space=sflag, size = 0x4, scoped, tag = 'scoped memory for backward_discriminator.1']
    #allocation13 [shape = 'u8[16384]{0}', space=vmem, size = 0x4000, scoped, tag = 'input window, operand 6, single buffered']
    #allocation14 [shape = 'u8[32768]{0}', space=vmem, size = 0x8000, scoped, tag = 'input window, operand 8, single buffered']
    #allocation15 [shape = 's32[1]{0}', space=sflag, size = 0x4, scoped, tag = 'scoped memory for backward_discriminator.1']
    %18 = vsyncpa [#allocation7], 0
    %19 = vsyncpa [#allocation9], 0
    %20 = vsyncpa [#allocation12], 0
    %21 = vsyncpa [#allocation15], 0
    // Predicated region
    $region2: #{backward_discriminator.1} parent=1 // pred_check
      _
    $region3: #{backward_discriminator.1} parent=1 // pred_check_branch
      %23 = sbr.rel (0) target = $region5
    $region4: #{backward_discriminator.1} parent=1 // pred_region
      _
    $region5: #{backward_discriminator.1} parent=1 // pred_fallthru
      _
    // Predicated region
    $region6: #{backward_discriminator.1} parent=1 // pred_check
      _
    $region7: #{backward_discriminator.1} parent=1 // pred_check_branch
      %25 = sbr.rel (0) target = $region9
    $region8: #{backward_discriminator.1} parent=1 // pred_region
      %27 = vsyncadd [#allocation7], 0
      %s28 = sshll.u32 %s1, 4
      %s29 = int_to_ptr.hbm [resolvable:$true] %s28
      %s30 = sshll.u32 [#allocation6], 4
      %s31 = int_to_ptr.vmem [resolvable:$true] %s30
      %36 = dma.hbm_to_vmem [thread:$0]  %s29, 2048, %s31, [#allocation7], 128, 128, 8
    $region9: #{backward_discriminator.1} parent=1 // pred_fallthru
      _
    // Predicated region
    $region10: #{backward_discriminator.1} parent=1 // pred_check
      _
    $region11: #{backward_discriminator.1} parent=1 // pred_check_branch
      %38 = sbr.rel (0) target = $region13
    $region12: #{backward_discriminator.1} parent=1 // pred_region
      %40 = vsyncadd [#allocation9], 0
      %s42 = sshll.u32 %s2, 4
      %s43 = int_to_ptr.hbm [resolvable:$true] %s42
      %s44 = sshll.u32 [#allocation8], 4
      %s45 = int_to_ptr.vmem [resolvable:$true] %s44
      %47 = dma.hbm_to_vmem [thread:$0]  %s43, 128, %s45, [#allocation9]
    $region13: #{backward_discriminator.1} parent=1 // pred_fallthru
      _
    // Predicated region
    $region14: #{backward_discriminator.1} parent=1 // pred_check
      _
    $region15: #{backward_discriminator.1} parent=1 // pred_check_branch
      %49 = sbr.rel (0) target = $region17
    $region16: #{backward_discriminator.1} parent=1 // pred_region
      %51 = vsyncadd [#allocation9], 0
      %s52 = sshll.u32 %s3, 4
      %s53 = int_to_ptr.hbm [resolvable:$true] %s52
      %s54 = sshll.u32 [#allocation10], 4
      %s55 = int_to_ptr.vmem [resolvable:$true] %s54
      %60 = dma.hbm_to_vmem [thread:$0]  %s53, 8192, %s55, [#allocation9], 256, 256, 16
    $region17: #{backward_discriminator.1} parent=1 // pred_fallthru
      _
    // Predicated region
    $region18: #{backward_discriminator.1} parent=1 // pred_check
      _
    $region19: #{backward_discriminator.1} parent=1 // pred_check_branch
      %62 = sbr.rel (0) target = $region21
    $region20: #{backward_discriminator.1} parent=1 // pred_region
      %64 = vsyncadd [#allocation12], 0
      %s66 = sshll.u32 %s4, 4
      %s67 = int_to_ptr.hbm [resolvable:$true] %s66
      %s68 = sshll.u32 [#allocation11], 4
      %s69 = int_to_ptr.vmem [resolvable:$true] %s68
      %71 = dma.hbm_to_vmem [thread:$0]  %s67, 256, %s69, [#allocation12]
    $region21: #{backward_discriminator.1} parent=1 // pred_fallthru
      _
    // Predicated region
    $region22: #{backward_discriminator.1} parent=1 // pred_check
      _
    $region23: #{backward_discriminator.1} parent=1 // pred_check_branch
      %73 = sbr.rel (0) target = $region25
    $region24: #{backward_discriminator.1} parent=1 // pred_region
      %75 = vsyncadd [#allocation12], 0
      %s77 = sshll.u32 %s6, 4
      %s78 = int_to_ptr.hbm [resolvable:$true] %s77
      %s79 = sshll.u32 [#allocation13], 4
      %s80 = int_to_ptr.vmem [resolvable:$true] %s79
      %82 = dma.hbm_to_vmem [thread:$0]  %s78, 512, %s80, [#allocation12]
    $region25: #{backward_discriminator.1} parent=1 // pred_fallthru
      _
    // Predicated region
    $region26: #{backward_discriminator.1} parent=1 // pred_check
      _
    $region27: #{backward_discriminator.1} parent=1 // pred_check_branch
      %84 = sbr.rel (0) target = $region29
    $region28: #{backward_discriminator.1} parent=1 // pred_region
      %86 = vsyncadd [#allocation15], 0
      %s88 = sshll.u32 %s8, 4
      %s89 = int_to_ptr.hbm [resolvable:$true] %s88
      %s90 = sshll.u32 [#allocation14], 4
      %s91 = int_to_ptr.vmem [resolvable:$true] %s90
      %93 = dma.hbm_to_vmem [thread:$0]  %s89, 1024, %s91, [#allocation15]
    $region29: #{backward_discriminator.1} parent=1 // pred_fallthru
      _
    // Predicated region
    $region30: #{backward_discriminator.1} parent=1 // pred_check
      _
    $region31: #{backward_discriminator.1} parent=1 // pred_check_branch
      %95 = sbr.rel (0) target = $region33
    $region32: #{backward_discriminator.1} parent=1 // pred_region
      _
    $region33: #{backward_discriminator.1} parent=1 // pred_fallthru
      _
    // Predicated region
    $region34: #{backward_discriminator.1} parent=1 // pred_check
      _
    $region35: #{backward_discriminator.1} parent=1 // pred_check_branch
      %97 = sbr.rel (0) target = $region37
    $region36: #{backward_discriminator.1} parent=1 // pred_region
      _
    $region37: #{backward_discriminator.1} parent=1 // pred_fallthru
      _
    // Predicated region
    $region38: #{backward_discriminator.1} parent=1 // pred_check
      _
    $region39: #{backward_discriminator.1} parent=1 // pred_check_branch
      %99 = sbr.rel (0) target = $region41
    $region40: #{backward_discriminator.1} parent=1 // pred_region
      %101 = dma.done [#allocation7], 2048
    $region41: #{backward_discriminator.1} parent=1 // pred_fallthru
      _
    // Predicated region
    $region42: #{backward_discriminator.1} parent=1 // pred_check
      _
    $region43: #{backward_discriminator.1} parent=1 // pred_check_branch
      %103 = sbr.rel (0) target = $region45
    $region44: #{backward_discriminator.1} parent=1 // pred_region
      %105 = dma.done [#allocation9], 128
    $region45: #{backward_discriminator.1} parent=1 // pred_fallthru
      _
    // Predicated region
    $region46: #{backward_discriminator.1} parent=1 // pred_check
      _
    $region47: #{backward_discriminator.1} parent=1 // pred_check_branch
      %107 = sbr.rel (0) target = $region49
    $region48: #{backward_discriminator.1} parent=1 // pred_region
      %109 = dma.done [#allocation9], 8192
    $region49: #{backward_discriminator.1} parent=1 // pred_fallthru
      _
    // Predicated region
    $region50: #{backward_discriminator.1} parent=1 // pred_check
      _
    $region51: #{backward_discriminator.1} parent=1 // pred_check_branch
      %111 = sbr.rel (0) target = $region53
    $region52: #{backward_discriminator.1} parent=1 // pred_region
      %113 = dma.done [#allocation12], 256
    $region53: #{backward_discriminator.1} parent=1 // pred_fallthru
      _
    // Predicated region
    $region54: #{backward_discriminator.1} parent=1 // pred_check
      _
    $region55: #{backward_discriminator.1} parent=1 // pred_check_branch
      %115 = sbr.rel (0) target = $region57
    $region56: #{backward_discriminator.1} parent=1 // pred_region
      %117 = dma.done [#allocation12], 512
    $region57: #{backward_discriminator.1} parent=1 // pred_fallthru
      _
    // Predicated region
    $region58: #{backward_discriminator.1} parent=1 // pred_check
      _
    $region59: #{backward_discriminator.1} parent=1 // pred_check_branch
      %119 = sbr.rel (0) target = $region61
    $region60: #{backward_discriminator.1} parent=1 // pred_region
      %121 = dma.done [#allocation15], 1024
    $region61: #{backward_discriminator.1} parent=1 // pred_fallthru
      _
    // Predicated region
    $region62: #{backward_discriminator.1} parent=1 // pred_check
      _
    $region63: #{backward_discriminator.1} parent=1 // pred_check_branch
      %123 = sbr.rel target = $region65
    $region64: #{backward_discriminator.1} parent=1 // pred_region
      %124 = sst [smem:[#allocation18]] [#allocation17]
      %125 = sst [smem:[#allocation19]] [#allocation16]
    $region65: #{backward_discriminator.1} parent=1 // pred_fallthru
      _
    %127 = shalt.err (0)
    %s129 = sshll.u32 %s5, 4
    %s130 = int_to_ptr.hbm [resolvable:$true] %s129
    %s131 = sshll.u32 [#allocation2], 4
    %s132 = int_to_ptr.vmem [resolvable:$true] %s131
    %134 = dma.hbm_to_vmem [thread:$0]  %s130, 32768, %s132, [#allocation4]
    %s135 = scalar_lea.sflag [#allocation4], 1
    // Predicated region
    $region66: #{backward_discriminator.1} parent=1 // pred_check
      _
    $region67: #{backward_discriminator.1} parent=1 // pred_check_branch
      %137 = sbr.rel target = $region69
    $region68: #{backward_discriminator.1} parent=1 // pred_region
      %138 = sst [smem:[#allocation18]] [#allocation21]
      %139 = sst [smem:[#allocation19]] [#allocation20]
    $region69: #{backward_discriminator.1} parent=1 // pred_fallthru
      _
    %141 = shalt.err (0)
    %s143 = sshll.u32 %s7, 4
    %s144 = int_to_ptr.hbm [resolvable:$true] %s143
    %s145 = sshll.u32 [#allocation3], 4
    %s146 = int_to_ptr.vmem [resolvable:$true] %s145
    %148 = dma.hbm_to_vmem [thread:$0]  %s144, 131072, %s146, %s135
    %v149 = vld [vmem:[%s0] sm:$0xff]
    %v150 = vld [vmem:[#allocation6] sm:$0xff]
    %v151 = vld [vmem:[#allocation6 + $0x8] sm:$0xff]
    %v152 = vld [vmem:[#allocation6 + $0x10] sm:$0xff]
    %v153 = vld [vmem:[#allocation6 + $0x18] sm:$0xff]
    %v154 = vld [vmem:[#allocation6 + $0x20] sm:$0xff]
    %v155 = vld [vmem:[#allocation6 + $0x28] sm:$0xff]
    %v156 = vld [vmem:[#allocation6 + $0x30] sm:$0xff]
    %v157 = vld [vmem:[#allocation6 + $0x38] sm:$0xff]
    %v158 = vld [vmem:[#allocation6 + $0x40] sm:$0xff]
    %v159 = vld [vmem:[#allocation6 + $0x48] sm:$0xff]
    %v160 = vld [vmem:[#allocation6 + $0x50] sm:$0xff]
    %v161 = vld [vmem:[#allocation6 + $0x58] sm:$0xff]
    %v162 = vld [vmem:[#allocation6 + $0x60] sm:$0xff]
    %v163 = vld [vmem:[#allocation6 + $0x68] sm:$0xff]
    %v164 = vld [vmem:[#allocation6 + $0x70] sm:$0xff]
    %v165 = vld [vmem:[#allocation6 + $0x78] sm:$0xff]
    %v166 = vld [vmem:[#allocation8] sm:$0x77]
    %v167 = vunpack.c.l.bf16 %v150
    %v168 = vunpack.c.h.bf16 %v150
    %v169 = vunpack.c.l.bf16 %v151
    %v170 = vunpack.c.h.bf16 %v151
    %v171 = vunpack.c.l.bf16 %v152
    %v172 = vunpack.c.h.bf16 %v152
    %v173 = vunpack.c.l.bf16 %v153
    %v174 = vunpack.c.h.bf16 %v153
    %v175 = vunpack.c.l.bf16 %v154
    %v176 = vunpack.c.h.bf16 %v154
    %v177 = vunpack.c.l.bf16 %v155
    %v178 = vunpack.c.h.bf16 %v155
    %v179 = vunpack.c.l.bf16 %v156
    %v180 = vunpack.c.h.bf16 %v156
    %v181 = vunpack.c.l.bf16 %v157
    %v182 = vunpack.c.h.bf16 %v157
    %v183 = vunpack.c.l.bf16 %v158
    %v184 = vunpack.c.h.bf16 %v158
    %v185 = vunpack.c.l.bf16 %v159
    %v186 = vunpack.c.h.bf16 %v159
    %v187 = vunpack.c.l.bf16 %v160
    %v188 = vunpack.c.h.bf16 %v160
    %v189 = vunpack.c.l.bf16 %v161
    %v190 = vunpack.c.h.bf16 %v161
    %v191 = vunpack.c.l.bf16 %v162
    %v192 = vunpack.c.h.bf16 %v162
    %v193 = vunpack.c.l.bf16 %v163
    %v194 = vunpack.c.h.bf16 %v163
    %v195 = vunpack.c.l.bf16 %v164
    %v196 = vunpack.c.h.bf16 %v164
    %v197 = vunpack.c.l.bf16 %v165
    %v198 = vunpack.c.h.bf16 %v165
    %v200 = vperm.slane %v166, 0
    %v201 = vperm.slane %v166, 4
    %v204 = vperm.slane %v200, 0
    %v205 = vperm.slane %v201, 0
    %206 = vmatpush.msra.mxu0 %v197
    %207 = vmatpush.msra.mxu0 %v195
    %208 = vmatpush.msra.mxu0 %v193
    %209 = vmatpush.msra.mxu0 %v191
    %210 = vmatpush.msra.mxu0 %v189
    %211 = vmatpush.msra.mxu0 %v187
    %212 = vmatpush.msra.mxu0 %v185
    %213 = vmatpush.msra.mxu0 %v183
    %214 = vmatpush.msra.mxu0 %v181
    %215 = vmatpush.msra.mxu0 %v179
    %216 = vmatpush.msra.mxu0 %v177
    %217 = vmatpush.msra.mxu0 %v175
    %218 = vmatpush.msra.mxu0 %v173
    %219 = vmatpush.msra.mxu0 %v171
    %220 = vmatpush.msra.mxu0 %v169
    %221 = vmatpush.msra.mxu0 %v167
    %222 = vmatmul.f32.gmra.mxu0 %v149
    %v223 = vpop.f32.mrf.mxu0
    %v224 = vadd.f32 %v204, %v223
    %225 = vdwg.mxu0
    %226 = vmatpush.msra.mxu0 %v198
    %227 = vmatpush.msra.mxu0 %v196
    %228 = vmatpush.msra.mxu0 %v194
    %229 = vmatpush.msra.mxu0 %v192
    %230 = vmatpush.msra.mxu0 %v190
    %231 = vmatpush.msra.mxu0 %v188
    %232 = vmatpush.msra.mxu0 %v186
    %233 = vmatpush.msra.mxu0 %v184
    %234 = vmatpush.msra.mxu0 %v182
    %235 = vmatpush.msra.mxu0 %v180
    %236 = vmatpush.msra.mxu0 %v178
    %237 = vmatpush.msra.mxu0 %v176
    %238 = vmatpush.msra.mxu0 %v174
    %239 = vmatpush.msra.mxu0 %v172
    %240 = vmatpush.msra.mxu0 %v170
    %241 = vmatpush.msra.mxu0 %v168
    %242 = vmatmul.f32.gmra.mxu0 %v149
    %v243 = vpop.f32.mrf.mxu0
    %v244 = vadd.f32 %v205, %v243
    %245 = vdwg.mxu0
    %vm246 = vcmp.gt.f32.partialorder %v224, 0.0
    %vm247 = vcmp.gt.f32.partialorder %v244, 0.0
    %v248 = vmul.f32 %v224, 0.2
    %v249 = vmul.f32 %v244, 0.2
    %v250 = vsel %vm246, %v224, %v248
    %v251 = vsel %vm247, %v244, %v249
    %v252 = vrot.slane %v250, 4
    %v253 = vadd.f32 %v250, %v252
    %v254 = vrot.slane %v253, 2
    %v255 = vadd.f32 %v253, %v254
    %v256 = vrot.slane %v255, 1
    %v257 = vadd.f32 %v255, %v256
    %v258 = vrot.slane %v251, 4
    %v259 = vadd.f32 %v251, %v258
    %v260 = vrot.slane %v259, 2
    %v261 = vadd.f32 %v259, %v260
    %v262 = vrot.slane %v261, 1
    %v263 = vadd.f32 %v261, %v262
    %v264 = vmul.f32 %v250, %v250
    %v265 = vmul.f32 %v251, %v251
    %v266 = vrot.slane %v264, 4
    %v267 = vadd.f32 %v264, %v266
    %v268 = vrot.slane %v267, 2
    %v269 = vadd.f32 %v267, %v268
    %v270 = vrot.slane %v269, 1
    %v271 = vadd.f32 %v269, %v270
    %v272 = vrot.slane %v265, 4
    %v273 = vadd.f32 %v265, %v272
    %v274 = vrot.slane %v273, 2
    %v275 = vadd.f32 %v273, %v274
    %v276 = vrot.slane %v275, 1
    %v277 = vadd.f32 %v275, %v276
    %v278 = vmul.f32 %v257, 0.125
    %v279 = vmul.f32 %v263, 0.125
    %v280 = vmul.f32 %v271, 0.125
    %v281 = vmul.f32 %v277, 0.125
    %v282 = vmul.f32 %v278, %v278
    %v283 = vmul.f32 %v279, %v279
    %v284 = vsub.f32 %v280, %v282
    %v285 = vsub.f32 %v281, %v283
    %v286 = vmax.f32 %v284, 0.0
    %v287 = vmax.f32 %v285, 0.0
    %v288 = vadd.f32 %v286, 1e-05
    %v289 = vadd.f32 %v287, 1e-05
    %v290 = vrsqrt.pop %v288
    %v291 = vmul.f32 %v290, %v288
    %v292 = vmul.f32 %v291, %v290
    %v293 = vmul.f32 0.5, %v292
    %v294 = vsub.f32 1.5, %v293
    %v295 = vmul.f32 %v290, %v294
    %vm296 = vweird.f32 %v288
    %vm297 = vweird.f32 %v290
    %vm298 = vmor %vm296, %vm297
    %v299 = vsel %vm298, %v290, %v295
    %v300 = vrsqrt.pop %v289
    %v301 = vmul.f32 %v300, %v289
    %v302 = vmul.f32 %v301, %v300
    %v303 = vmul.f32 0.5, %v302
    %v304 = vsub.f32 1.5, %v303
    %v305 = vmul.f32 %v300, %v304
    %vm306 = vweird.f32 %v289
    %vm307 = vweird.f32 %v300
    %vm308 = vmor %vm306, %vm307
    %v309 = vsel %vm308, %v300, %v305
    %v312 = vrot.slane %v309, 4
    %vm313 = vcmask 1043456
    %v314 = vsel %vm313, %v299, %v312
    %v315 = vrot.slane %v314, 7
    %v317 = vmul.f32 %v166, %v315
    %v319 = vperm.slane %v317, 1
    %v320 = vperm.slane %v317, 5
    %v323 = vmul.f32 %v278, %v319
    %v324 = vmul.f32 %v279, %v320
    %v327 = vrot.slane %v324, 4
    %v328 = vsel %vm313, %v323, %v327
    %v329 = vrot.slane %v328, 6
    %v331 = vsub.f32 %v166, %v329
    %v332 = vperm.slane %v319, 1
    %v333 = vperm.slane %v320, 1
    %v334 = vmul.f32 %v250, %v332
    %v335 = vmul.f32 %v251, %v333
    %v337 = vperm.slane %v331, 2
    %v338 = vperm.slane %v331, 6
    %v341 = vperm.slane %v337, 2
    %v342 = vperm.slane %v338, 2
    %v343 = vadd.f32 %v334, %v341
    %v344 = vadd.f32 %v335, %v342
    %v345 = vld [vmem:[#allocation10] sm:$0xff]
    %v346 = vld [vmem:[#allocation10 + $0x8] sm:$0xff]
    %v347 = vld [vmem:[#allocation10 + $0x10] sm:$0xff]
    %v348 = vld [vmem:[#allocation10 + $0x18] sm:$0xff]
    %v349 = vld [vmem:[#allocation10 + $0x20] sm:$0xff]
    %v350 = vld [vmem:[#allocation10 + $0x28] sm:$0xff]
    %v351 = vld [vmem:[#allocation10 + $0x30] sm:$0xff]
    %v352 = vld [vmem:[#allocation10 + $0x38] sm:$0xff]
    %v353 = vld [vmem:[#allocation10 + $0x40] sm:$0xff]
    %v354 = vld [vmem:[#allocation10 + $0x48] sm:$0xff]
    %v355 = vld [vmem:[#allocation10 + $0x50] sm:$0xff]
    %v356 = vld [vmem:[#allocation10 + $0x58] sm:$0xff]
    %v357 = vld [vmem:[#allocation10 + $0x60] sm:$0xff]
    %v358 = vld [vmem:[#allocation10 + $0x68] sm:$0xff]
    %v359 = vld [vmem:[#allocation10 + $0x70] sm:$0xff]
    %v360 = vld [vmem:[#allocation10 + $0x78] sm:$0xff]
    %v361 = vld [vmem:[#allocation10 + $0x80] sm:$0xff]
    %v362 = vld [vmem:[#allocation10 + $0x88] sm:$0xff]
    %v363 = vld [vmem:[#allocation10 + $0x90] sm:$0xff]
    %v364 = vld [vmem:[#allocation10 + $0x98] sm:$0xff]
    %v365 = vld [vmem:[#allocation10 + $0xa0] sm:$0xff]
    %v366 = vld [vmem:[#allocation10 + $0xa8] sm:$0xff]
    %v367 = vld [vmem:[#allocation10 + $0xb0] sm:$0xff]
    %v368 = vld [vmem:[#allocation10 + $0xb8] sm:$0xff]
    %v369 = vld [vmem:[#allocation10 + $0xc0] sm:$0xff]
    %v370 = vld [vmem:[#allocation10 + $0xc8] sm:$0xff]
    %v371 = vld [vmem:[#allocation10 + $0xd0] sm:$0xff]
    %v372 = vld [vmem:[#allocation10 + $0xd8] sm:$0xff]
    %v373 = vld [vmem:[#allocation10 + $0xe0] sm:$0xff]
    %v374 = vld [vmem:[#allocation10 + $0xe8] sm:$0xff]
    %v375 = vld [vmem:[#allocation10 + $0xf0] sm:$0xff]
    %v376 = vld [vmem:[#allocation10 + $0xf8] sm:$0xff]
    %v377 = vld [vmem:[#allocation10 + $0x100] sm:$0xff]
    %v378 = vld [vmem:[#allocation10 + $0x108] sm:$0xff]
    %v379 = vld [vmem:[#allocation10 + $0x110] sm:$0xff]
    %v380 = vld [vmem:[#allocation10 + $0x118] sm:$0xff]
    %v381 = vld [vmem:[#allocation10 + $0x120] sm:$0xff]
    %v382 = vld [vmem:[#allocation10 + $0x128] sm:$0xff]
    %v383 = vld [vmem:[#allocation10 + $0x130] sm:$0xff]
    %v384 = vld [vmem:[#allocation10 + $0x138] sm:$0xff]
    %v385 = vld [vmem:[#allocation10 + $0x140] sm:$0xff]
    %v386 = vld [vmem:[#allocation10 + $0x148] sm:$0xff]
    %v387 = vld [vmem:[#allocation10 + $0x150] sm:$0xff]
    %v388 = vld [vmem:[#allocation10 + $0x158] sm:$0xff]
    %v389 = vld [vmem:[#allocation10 + $0x160] sm:$0xff]
    %v390 = vld [vmem:[#allocation10 + $0x168] sm:$0xff]
    %v391 = vld [vmem:[#allocation10 + $0x170] sm:$0xff]
    %v392 = vld [vmem:[#allocation10 + $0x178] sm:$0xff]
    %v393 = vld [vmem:[#allocation10 + $0x180] sm:$0xff]
    %v394 = vld [vmem:[#allocation10 + $0x188] sm:$0xff]
    %v395 = vld [vmem:[#allocation10 + $0x190] sm:$0xff]
    %v396 = vld [vmem:[#allocation10 + $0x198] sm:$0xff]
    %v397 = vld [vmem:[#allocation10 + $0x1a0] sm:$0xff]
    %v398 = vld [vmem:[#allocation10 + $0x1a8] sm:$0xff]
    %v399 = vld [vmem:[#allocation10 + $0x1b0] sm:$0xff]
    %v400 = vld [vmem:[#allocation10 + $0x1b8] sm:$0xff]
    %v401 = vld [vmem:[#allocation10 + $0x1c0] sm:$0xff]
    %v402 = vld [vmem:[#allocation10 + $0x1c8] sm:$0xff]
    %v403 = vld [vmem:[#allocation10 + $0x1d0] sm:$0xff]
    %v404 = vld [vmem:[#allocation10 + $0x1d8] sm:$0xff]
    %v405 = vld [vmem:[#allocation10 + $0x1e0] sm:$0xff]
    %v406 = vld [vmem:[#allocation10 + $0x1e8] sm:$0xff]
    %v407 = vld [vmem:[#allocation10 + $0x1f0] sm:$0xff]
    %v408 = vld [vmem:[#allocation10 + $0x1f8] sm:$0xff]
    %v409 = vld [vmem:[#allocation11] sm:$0x77]
    %v410 = vld [vmem:[#allocation11 + $0x8] sm:$0x77]
    %v411 = vunpack.c.l.bf16 %v345
    %v412 = vunpack.c.h.bf16 %v345
    %v413 = vunpack.c.l.bf16 %v346
    %v414 = vunpack.c.h.bf16 %v346
    %v415 = vunpack.c.l.bf16 %v347
    %v416 = vunpack.c.h.bf16 %v347
    %v417 = vunpack.c.l.bf16 %v348
    %v418 = vunpack.c.h.bf16 %v348
    %v419 = vunpack.c.l.bf16 %v349
    %v420 = vunpack.c.h.bf16 %v349
    %v421 = vunpack.c.l.bf16 %v350
    %v422 = vunpack.c.h.bf16 %v350
    %v423 = vunpack.c.l.bf16 %v351
    %v424 = vunpack.c.h.bf16 %v351
    %v425 = vunpack.c.l.bf16 %v352
    %v426 = vunpack.c.h.bf16 %v352
    %v427 = vunpack.c.l.bf16 %v353
    %v428 = vunpack.c.h.bf16 %v353
    %v429 = vunpack.c.l.bf16 %v354
    %v430 = vunpack.c.h.bf16 %v354
    %v431 = vunpack.c.l.bf16 %v355
    %v432 = vunpack.c.h.bf16 %v355
    %v433 = vunpack.c.l.bf16 %v356
    %v434 = vunpack.c.h.bf16 %v356
    %v435 = vunpack.c.l.bf16 %v357
    %v436 = vunpack.c.h.bf16 %v357
    %v437 = vunpack.c.l.bf16 %v358
    %v438 = vunpack.c.h.bf16 %v358
    %v439 = vunpack.c.l.bf16 %v359
    %v440 = vunpack.c.h.bf16 %v359
    %v441 = vunpack.c.l.bf16 %v360
    %v442 = vunpack.c.h.bf16 %v360
    %v443 = vunpack.c.l.bf16 %v361
    %v444 = vunpack.c.h.bf16 %v361
    %v445 = vunpack.c.l.bf16 %v362
    %v446 = vunpack.c.h.bf16 %v362
    %v447 = vunpack.c.l.bf16 %v363
    %v448 = vunpack.c.h.bf16 %v363
    %v449 = vunpack.c.l.bf16 %v364
    %v450 = vunpack.c.h.bf16 %v364
    %v451 = vunpack.c.l.bf16 %v365
    %v452 = vunpack.c.h.bf16 %v365
    %v453 = vunpack.c.l.bf16 %v366
    %v454 = vunpack.c.h.bf16 %v366
    %v455 = vunpack.c.l.bf16 %v367
    %v456 = vunpack.c.h.bf16 %v367
    %v457 = vunpack.c.l.bf16 %v368
    %v458 = vunpack.c.h.bf16 %v368
    %v459 = vunpack.c.l.bf16 %v369
    %v460 = vunpack.c.h.bf16 %v369
    %v461 = vunpack.c.l.bf16 %v370
    %v462 = vunpack.c.h.bf16 %v370
    %v463 = vunpack.c.l.bf16 %v371
    %v464 = vunpack.c.h.bf16 %v371
    %v465 = vunpack.c.l.bf16 %v372
    %v466 = vunpack.c.h.bf16 %v372
    %v467 = vunpack.c.l.bf16 %v373
    %v468 = vunpack.c.h.bf16 %v373
    %v469 = vunpack.c.l.bf16 %v374
    %v470 = vunpack.c.h.bf16 %v374
    %v471 = vunpack.c.l.bf16 %v375
    %v472 = vunpack.c.h.bf16 %v375
    %v473 = vunpack.c.l.bf16 %v376
    %v474 = vunpack.c.h.bf16 %v376
    %v475 = vunpack.c.l.bf16 %v377
    %v476 = vunpack.c.h.bf16 %v377
    %v477 = vunpack.c.l.bf16 %v378
    %v478 = vunpack.c.h.bf16 %v378
    %v479 = vunpack.c.l.bf16 %v379
    %v480 = vunpack.c.h.bf16 %v379
    %v481 = vunpack.c.l.bf16 %v380
    %v482 = vunpack.c.h.bf16 %v380
    %v483 = vunpack.c.l.bf16 %v381
    %v484 = vunpack.c.h.bf16 %v381
    %v485 = vunpack.c.l.bf16 %v382
    %v486 = vunpack.c.h.bf16 %v382
    %v487 = vunpack.c.l.bf16 %v383
    %v488 = vunpack.c.h.bf16 %v383
    %v489 = vunpack.c.l.bf16 %v384
    %v490 = vunpack.c.h.bf16 %v384
    %v491 = vunpack.c.l.bf16 %v385
    %v492 = vunpack.c.h.bf16 %v385
    %v493 = vunpack.c.l.bf16 %v386
    %v494 = vunpack.c.h.bf16 %v386
    %v495 = vunpack.c.l.bf16 %v387
    %v496 = vunpack.c.h.bf16 %v387
    %v497 = vunpack.c.l.bf16 %v388
    %v498 = vunpack.c.h.bf16 %v388
    %v499 = vunpack.c.l.bf16 %v389
    %v500 = vunpack.c.h.bf16 %v389
    %v501 = vunpack.c.l.bf16 %v390
    %v502 = vunpack.c.h.bf16 %v390
    %v503 = vunpack.c.l.bf16 %v391
    %v504 = vunpack.c.h.bf16 %v391
    %v505 = vunpack.c.l.bf16 %v392
    %v506 = vunpack.c.h.bf16 %v392
    %v507 = vunpack.c.l.bf16 %v393
    %v508 = vunpack.c.h.bf16 %v393
    %v509 = vunpack.c.l.bf16 %v394
    %v510 = vunpack.c.h.bf16 %v394
    %v511 = vunpack.c.l.bf16 %v395
    %v512 = vunpack.c.h.bf16 %v395
    %v513 = vunpack.c.l.bf16 %v396
    %v514 = vunpack.c.h.bf16 %v396
    %v515 = vunpack.c.l.bf16 %v397
    %v516 = vunpack.c.h.bf16 %v397
    %v517 = vunpack.c.l.bf16 %v398
    %v518 = vunpack.c.h.bf16 %v398
    %v519 = vunpack.c.l.bf16 %v399
    %v520 = vunpack.c.h.bf16 %v399
    %v521 = vunpack.c.l.bf16 %v400
    %v522 = vunpack.c.h.bf16 %v400
    %v523 = vunpack.c.l.bf16 %v401
    %v524 = vunpack.c.h.bf16 %v401
    %v525 = vunpack.c.l.bf16 %v402
    %v526 = vunpack.c.h.bf16 %v402
    %v527 = vunpack.c.l.bf16 %v403
    %v528 = vunpack.c.h.bf16 %v403
    %v529 = vunpack.c.l.bf16 %v404
    %v530 = vunpack.c.h.bf16 %v404
    %v531 = vunpack.c.l.bf16 %v405
    %v532 = vunpack.c.h.bf16 %v405
    %v533 = vunpack.c.l.bf16 %v406
    %v534 = vunpack.c.h.bf16 %v406
    %v535 = vunpack.c.l.bf16 %v407
    %v536 = vunpack.c.h.bf16 %v407
    %v537 = vunpack.c.l.bf16 %v408
    %v538 = vunpack.c.h.bf16 %v408
    %v541 = vperm.slane %v409, 0
    %v542 = vperm.slane %v409, 4
    %v543 = vperm.slane %v410, 0
    %v544 = vperm.slane %v410, 4
    %v549 = vperm.slane %v541, 0
    %v550 = vperm.slane %v542, 0
    %v551 = vperm.slane %v543, 0
    %v552 = vperm.slane %v544, 0
    %553 = vmatpush.msra.mxu0 %v471
    %554 = vmatpush.msra.mxu0 %v467
    %555 = vmatpush.msra.mxu0 %v463
    %556 = vmatpush.msra.mxu0 %v459
    %557 = vmatpush.msra.mxu0 %v455
    %558 = vmatpush.msra.mxu0 %v451
    %559 = vmatpush.msra.mxu0 %v447
    %560 = vmatpush.msra.mxu0 %v443
    %561 = vmatpush.msra.mxu0 %v439
    %562 = vmatpush.msra.mxu0 %v435
    %563 = vmatpush.msra.mxu0 %v431
    %564 = vmatpush.msra.mxu0 %v427
    %565 = vmatpush.msra.mxu0 %v423
    %566 = vmatpush.msra.mxu0 %v419
    %567 = vmatpush.msra.mxu0 %v415
    %568 = vmatpush.msra.mxu0 %v411
    %569 = vmatmul.f32.gmra.mxu0 %v343
    %v570 = vpop.f32.mrf.mxu0
    %v571 = vadd.f32 %v549, %v570
    %572 = vdwg.mxu0
    %573 = vmatpush.msra.mxu0 %v535
    %574 = vmatpush.msra.mxu0 %v531
    %575 = vmatpush.msra.mxu0 %v527
    %576 = vmatpush.msra.mxu0 %v523
    %577 = vmatpush.msra.mxu0 %v519
    %578 = vmatpush.msra.mxu0 %v515
    %579 = vmatpush.msra.mxu0 %v511
    %580 = vmatpush.msra.mxu0 %v507
    %581 = vmatpush.msra.mxu0 %v503
    %582 = vmatpush.msra.mxu0 %v499
    %583 = vmatpush.msra.mxu0 %v495
    %584 = vmatpush.msra.mxu0 %v491
    %585 = vmatpush.msra.mxu0 %v487
    %586 = vmatpush.msra.mxu0 %v483
    %587 = vmatpush.msra.mxu0 %v479
    %588 = vmatpush.msra.mxu0 %v475
    %589 = vmatmul.f32.gmra.mxu0 %v344
    %v590 = vpop.f32.mrf.mxu0
    %v591 = vadd.f32 %v571, %v590
    %592 = vdwg.mxu0
    %593 = vmatpush.msra.mxu0 %v472
    %594 = vmatpush.msra.mxu0 %v468
    %595 = vmatpush.msra.mxu0 %v464
    %596 = vmatpush.msra.mxu0 %v460
    %597 = vmatpush.msra.mxu0 %v456
    %598 = vmatpush.msra.mxu0 %v452
    %599 = vmatpush.msra.mxu0 %v448
    %600 = vmatpush.msra.mxu0 %v444
    %601 = vmatpush.msra.mxu0 %v440
    %602 = vmatpush.msra.mxu0 %v436
    %603 = vmatpush.msra.mxu0 %v432
    %604 = vmatpush.msra.mxu0 %v428
    %605 = vmatpush.msra.mxu0 %v424
    %606 = vmatpush.msra.mxu0 %v420
    %607 = vmatpush.msra.mxu0 %v416
    %608 = vmatpush.msra.mxu0 %v412
    %609 = vmatmul.f32.gmra.mxu0 %v343
    %v610 = vpop.f32.mrf.mxu0
    %v611 = vadd.f32 %v550, %v610
    %612 = vdwg.mxu0
    %613 = vmatpush.msra.mxu0 %v536
    %614 = vmatpush.msra.mxu0 %v532
    %615 = vmatpush.msra.mxu0 %v528
    %616 = vmatpush.msra.mxu0 %v524
    %617 = vmatpush.msra.mxu0 %v520
    %618 = vmatpush.msra.mxu0 %v516
    %619 = vmatpush.msra.mxu0 %v512
    %620 = vmatpush.msra.mxu0 %v508
    %621 = vmatpush.msra.mxu0 %v504
    %622 = vmatpush.msra.mxu0 %v500
    %623 = vmatpush.msra.mxu0 %v496
    %624 = vmatpush.msra.mxu0 %v492
    %625 = vmatpush.msra.mxu0 %v488
    %626 = vmatpush.msra.mxu0 %v484
    %627 = vmatpush.msra.mxu0 %v480
    %628 = vmatpush.msra.mxu0 %v476
    %629 = vmatmul.f32.gmra.mxu0 %v344
    %v630 = vpop.f32.mrf.mxu0
    %v631 = vadd.f32 %v611, %v630
    %632 = vdwg.mxu0
    %633 = vmatpush.msra.mxu0 %v473
    %634 = vmatpush.msra.mxu0 %v469
    %635 = vmatpush.msra.mxu0 %v465
    %636 = vmatpush.msra.mxu0 %v461
    %637 = vmatpush.msra.mxu0 %v457
    %638 = vmatpush.msra.mxu0 %v453
    %639 = vmatpush.msra.mxu0 %v449
    %640 = vmatpush.msra.mxu0 %v445
    %641 = vmatpush.msra.mxu0 %v441
    %642 = vmatpush.msra.mxu0 %v437
    %643 = vmatpush.msra.mxu0 %v433
    %644 = vmatpush.msra.mxu0 %v429
    %645 = vmatpush.msra.mxu0 %v425
    %646 = vmatpush.msra.mxu0 %v421
    %647 = vmatpush.msra.mxu0 %v417
    %648 = vmatpush.msra.mxu0 %v413
    %649 = vmatmul.f32.gmra.mxu0 %v343
    %v650 = vpop.f32.mrf.mxu0
    %v651 = vadd.f32 %v551, %v650
    %652 = vdwg.mxu0
    %653 = vmatpush.msra.mxu0 %v537
    %654 = vmatpush.msra.mxu0 %v533
    %655 = vmatpush.msra.mxu0 %v529
    %656 = vmatpush.msra.mxu0 %v525
    %657 = vmatpush.msra.mxu0 %v521
    %658 = vmatpush.msra.mxu0 %v517
    %659 = vmatpush.msra.mxu0 %v513
    %660 = vmatpush.msra.mxu0 %v509
    %661 = vmatpush.msra.mxu0 %v505
    %662 = vmatpush.msra.mxu0 %v501
    %663 = vmatpush.msra.mxu0 %v497
    %664 = vmatpush.msra.mxu0 %v493
    %665 = vmatpush.msra.mxu0 %v489
    %666 = vmatpush.msra.mxu0 %v485
    %667 = vmatpush.msra.mxu0 %v481
    %668 = vmatpush.msra.mxu0 %v477
    %669 = vmatmul.f32.gmra.mxu0 %v344
    %v670 = vpop.f32.mrf.mxu0
    %v671 = vadd.f32 %v651, %v670
    %672 = vdwg.mxu0
    %673 = vmatpush.msra.mxu0 %v474
    %674 = vmatpush.msra.mxu0 %v470
    %675 = vmatpush.msra.mxu0 %v466
    %676 = vmatpush.msra.mxu0 %v462
    %677 = vmatpush.msra.mxu0 %v458
    %678 = vmatpush.msra.mxu0 %v454
    %679 = vmatpush.msra.mxu0 %v450
    %680 = vmatpush.msra.mxu0 %v446
    %681 = vmatpush.msra.mxu0 %v442
    %682 = vmatpush.msra.mxu0 %v438
    %683 = vmatpush.msra.mxu0 %v434
    %684 = vmatpush.msra.mxu0 %v430
    %685 = vmatpush.msra.mxu0 %v426
    %686 = vmatpush.msra.mxu0 %v422
    %687 = vmatpush.msra.mxu0 %v418
    %688 = vmatpush.msra.mxu0 %v414
    %689 = vmatmul.f32.gmra.mxu0 %v343
    %v690 = vpop.f32.mrf.mxu0
    %v691 = vadd.f32 %v552, %v690
    %692 = vdwg.mxu0
    %693 = vmatpush.msra.mxu0 %v538
    %694 = vmatpush.msra.mxu0 %v534
    %695 = vmatpush.msra.mxu0 %v530
    %696 = vmatpush.msra.mxu0 %v526
    %697 = vmatpush.msra.mxu0 %v522
    %698 = vmatpush.msra.mxu0 %v518
    %699 = vmatpush.msra.mxu0 %v514
    %700 = vmatpush.msra.mxu0 %v510
    %701 = vmatpush.msra.mxu0 %v506
    %702 = vmatpush.msra.mxu0 %v502
    %703 = vmatpush.msra.mxu0 %v498
    %704 = vmatpush.msra.mxu0 %v494
    %705 = vmatpush.msra.mxu0 %v490
    %706 = vmatpush.msra.mxu0 %v486
    %707 = vmatpush.msra.mxu0 %v482
    %708 = vmatpush.msra.mxu0 %v478
    %709 = vmatmul.f32.gmra.mxu0 %v344
    %v710 = vpop.f32.mrf.mxu0
    %v711 = vadd.f32 %v691, %v710
    %712 = vdwg.mxu0
    %vm713 = vcmp.gt.f32.partialorder %v591, 0.0
    %vm714 = vcmp.gt.f32.partialorder %v631, 0.0
    %vm715 = vcmp.gt.f32.partialorder %v671, 0.0
    %vm716 = vcmp.gt.f32.partialorder %v711, 0.0
    %v717 = vmul.f32 %v591, 0.2
    %v718 = vmul.f32 %v631, 0.2
    %v719 = vmul.f32 %v671, 0.2
    %v720 = vmul.f32 %v711, 0.2
    %v721 = vsel %vm713, %v591, %v717
    %v722 = vsel %vm714, %v631, %v718
    %v723 = vsel %vm715, %v671, %v719
    %v724 = vsel %vm716, %v711, %v720
    %v725 = vrot.slane %v721, 4
    %v726 = vadd.f32 %v721, %v725
    %v727 = vrot.slane %v726, 2
    %v728 = vadd.f32 %v726, %v727
    %v729 = vrot.slane %v728, 1
    %v730 = vadd.f32 %v728, %v729
    %v731 = vrot.slane %v722, 4
    %v732 = vadd.f32 %v722, %v731
    %v733 = vrot.slane %v732, 2
    %v734 = vadd.f32 %v732, %v733
    %v735 = vrot.slane %v734, 1
    %v736 = vadd.f32 %v734, %v735
    %v737 = vrot.slane %v723, 4
    %v738 = vadd.f32 %v723, %v737
    %v739 = vrot.slane %v738, 2
    %v740 = vadd.f32 %v738, %v739
    %v741 = vrot.slane %v740, 1
    %v742 = vadd.f32 %v740, %v741
    %v743 = vrot.slane %v724, 4
    %v744 = vadd.f32 %v724, %v743
    %v745 = vrot.slane %v744, 2
    %v746 = vadd.f32 %v744, %v745
    %v747 = vrot.slane %v746, 1
    %v748 = vadd.f32 %v746, %v747
    %v749 = vmul.f32 %v721, %v721
    %v750 = vmul.f32 %v722, %v722
    %v751 = vmul.f32 %v723, %v723
    %v752 = vmul.f32 %v724, %v724
    %v753 = vrot.slane %v749, 4
    %v754 = vadd.f32 %v749, %v753
    %v755 = vrot.slane %v754, 2
    %v756 = vadd.f32 %v754, %v755
    %v757 = vrot.slane %v756, 1
    %v758 = vadd.f32 %v756, %v757
    %v759 = vrot.slane %v750, 4
    %v760 = vadd.f32 %v750, %v759
    %v761 = vrot.slane %v760, 2
    %v762 = vadd.f32 %v760, %v761
    %v763 = vrot.slane %v762, 1
    %v764 = vadd.f32 %v762, %v763
    %v765 = vrot.slane %v751, 4
    %v766 = vadd.f32 %v751, %v765
    %v767 = vrot.slane %v766, 2
    %v768 = vadd.f32 %v766, %v767
    %v769 = vrot.slane %v768, 1
    %v770 = vadd.f32 %v768, %v769
    %v771 = vrot.slane %v752, 4
    %v772 = vadd.f32 %v752, %v771
    %v773 = vrot.slane %v772, 2
    %v774 = vadd.f32 %v772, %v773
    %v775 = vrot.slane %v774, 1
    %v776 = vadd.f32 %v774, %v775
    %v777 = vmul.f32 %v730, 0.125
    %v778 = vmul.f32 %v736, 0.125
    %v779 = vmul.f32 %v742, 0.125
    %v780 = vmul.f32 %v748, 0.125
    %v781 = vmul.f32 %v758, 0.125
    %v782 = vmul.f32 %v764, 0.125
    %v783 = vmul.f32 %v770, 0.125
    %v784 = vmul.f32 %v776, 0.125
    %v785 = vmul.f32 %v777, %v777
    %v786 = vmul.f32 %v778, %v778
    %v787 = vmul.f32 %v779, %v779
    %v788 = vmul.f32 %v780, %v780
    %v789 = vsub.f32 %v781, %v785
    %v790 = vsub.f32 %v782, %v786
    %v791 = vsub.f32 %v783, %v787
    %v792 = vsub.f32 %v784, %v788
    %v793 = vmax.f32 %v789, 0.0
    %v794 = vmax.f32 %v790, 0.0
    %v795 = vmax.f32 %v791, 0.0
    %v796 = vmax.f32 %v792, 0.0
    %v797 = vadd.f32 %v793, 1e-05
    %v798 = vadd.f32 %v794, 1e-05
    %v799 = vadd.f32 %v795, 1e-05
    %v800 = vadd.f32 %v796, 1e-05
    %v801 = vrsqrt.pop %v797
    %v802 = vmul.f32 %v801, %v797
    %v803 = vmul.f32 %v802, %v801
    %v804 = vmul.f32 0.5, %v803
    %v805 = vsub.f32 1.5, %v804
    %v806 = vmul.f32 %v801, %v805
    %vm807 = vweird.f32 %v797
    %vm808 = vweird.f32 %v801
    %vm809 = vmor %vm807, %vm808
    %v810 = vsel %vm809, %v801, %v806
    %v811 = vrsqrt.pop %v798
    %v812 = vmul.f32 %v811, %v798
    %v813 = vmul.f32 %v812, %v811
    %v814 = vmul.f32 0.5, %v813
    %v815 = vsub.f32 1.5, %v814
    %v816 = vmul.f32 %v811, %v815
    %vm817 = vweird.f32 %v798
    %vm818 = vweird.f32 %v811
    %vm819 = vmor %vm817, %vm818
    %v820 = vsel %vm819, %v811, %v816
    %v821 = vrsqrt.pop %v799
    %v822 = vmul.f32 %v821, %v799
    %v823 = vmul.f32 %v822, %v821
    %v824 = vmul.f32 0.5, %v823
    %v825 = vsub.f32 1.5, %v824
    %v826 = vmul.f32 %v821, %v825
    %vm827 = vweird.f32 %v799
    %vm828 = vweird.f32 %v821
    %vm829 = vmor %vm827, %vm828
    %v830 = vsel %vm829, %v821, %v826
    %v831 = vrsqrt.pop %v800
    %v832 = vmul.f32 %v831, %v800
    %v833 = vmul.f32 %v832, %v831
    %v834 = vmul.f32 0.5, %v833
    %v835 = vsub.f32 1.5, %v834
    %v836 = vmul.f32 %v831, %v835
    %vm837 = vweird.f32 %v800
    %vm838 = vweird.f32 %v831
    %vm839 = vmor %vm837, %vm838
    %v840 = vsel %vm839, %v831, %v836
    %v845 = vrot.slane %v820, 4
    %v846 = vrot.slane %v840, 4
    %v847 = vsel %vm313, %v810, %v845
    %v848 = vsel %vm313, %v830, %v846
    %v849 = vrot.slane %v847, 7
    %v850 = vrot.slane %v848, 7
    %v853 = vmul.f32 %v409, %v849
    %v854 = vmul.f32 %v410, %v850
    %v857 = vperm.slane %v853, 1
    %v858 = vperm.slane %v853, 5
    %v859 = vperm.slane %v854, 1
    %v860 = vperm.slane %v854, 5
    %v865 = vmul.f32 %v777, %v857
    %v866 = vmul.f32 %v778, %v858
    %v867 = vmul.f32 %v779, %v859
    %v868 = vmul.f32 %v780, %v860
    %v873 = vrot.slane %v866, 4
    %v874 = vrot.slane %v868, 4
    %v875 = vsel %vm313, %v865, %v873
    %v876 = vsel %vm313, %v867, %v874
    %v877 = vrot.slane %v875, 6
    %v878 = vrot.slane %v876, 6
    %v881 = vsub.f32 %v409, %v877
    %v882 = vsub.f32 %v410, %v878
    %v883 = vperm.slane %v857, 1
    %v884 = vperm.slane %v858, 1
    %v885 = vperm.slane %v859, 1
    %v886 = vperm.slane %v860, 1
    %v887 = vmul.f32 %v721, %v883
    %v888 = vmul.f32 %v722, %v884
    %v889 = vmul.f32 %v723, %v885
    %v890 = vmul.f32 %v724, %v886
    %v893 = vperm.slane %v881, 2
    %v894 = vperm.slane %v881, 6
    %v895 = vperm.slane %v882, 2
    %v896 = vperm.slane %v882, 6
    %v901 = vperm.slane %v893, 2
    %v902 = vperm.slane %v894, 2
    %v903 = vperm.slane %v895, 2
    %v904 = vperm.slane %v896, 2
    %v905 = vadd.f32 %v887, %v901
    %v906 = vadd.f32 %v888, %v902
    %v907 = vadd.f32 %v889, %v903
    %v908 = vadd.f32 %v890, %v904
    %s909 = smul.u32 4, 64
    %s910 = smul.u32 %s909, 8
    %s911 = sshll.u32 %s910, 4
    %912 = dma.done [#allocation4], %s911
    %v913 = vld [vmem:[#allocation2] sm:$0xff]
    %v914 = vld [vmem:[#allocation2 + $0x8] sm:$0xff]
    %v915 = vld [vmem:[#allocation2 + $0x10] sm:$0xff]
    %v916 = vld [vmem:[#allocation2 + $0x18] sm:$0xff]
    %v917 = vld [vmem:[#allocation2 + $0x20] sm:$0xff]
    %v918 = vld [vmem:[#allocation2 + $0x28] sm:$0xff]
    %v919 = vld [vmem:[#allocation2 + $0x30] sm:$0xff]
    %v920 = vld [vmem:[#allocation2 + $0x38] sm:$0xff]
    %v921 = vld [vmem:[#allocation2 + $0x40] sm:$0xff]
    %v922 = vld [vmem:[#allocation2 + $0x48] sm:$0xff]
    %v923 = vld [vmem:[#allocation2 + $0x50] sm:$0xff]
    %v924 = vld [vmem:[#allocation2 + $0x58] sm:$0xff]
    %v925 = vld [vmem:[#allocation2 + $0x60] sm:$0xff]
    %v926 = vld [vmem:[#allocation2 + $0x68] sm:$0xff]
    %v927 = vld [vmem:[#allocation2 + $0x70] sm:$0xff]
    %v928 = vld [vmem:[#allocation2 + $0x78] sm:$0xff]
    %v929 = vld [vmem:[#allocation2 + $0x80] sm:$0xff]
    %v930 = vld [vmem:[#allocation2 + $0x88] sm:$0xff]
    %v931 = vld [vmem:[#allocation2 + $0x90] sm:$0xff]
    %v932 = vld [vmem:[#allocation2 + $0x98] sm:$0xff]
    %v933 = vld [vmem:[#allocation2 + $0xa0] sm:$0xff]
    %v934 = vld [vmem:[#allocation2 + $0xa8] sm:$0xff]
    %v935 = vld [vmem:[#allocation2 + $0xb0] sm:$0xff]
    %v936 = vld [vmem:[#allocation2 + $0xb8] sm:$0xff]
    %v937 = vld [vmem:[#allocation2 + $0xc0] sm:$0xff]
    %v938 = vld [vmem:[#allocation2 + $0xc8] sm:$0xff]
    %v939 = vld [vmem:[#allocation2 + $0xd0] sm:$0xff]
    %v940 = vld [vmem:[#allocation2 + $0xd8] sm:$0xff]
    %v941 = vld [vmem:[#allocation2 + $0xe0] sm:$0xff]
    %v942 = vld [vmem:[#allocation2 + $0xe8] sm:$0xff]
    %v943 = vld [vmem:[#allocation2 + $0xf0] sm:$0xff]
    %v944 = vld [vmem:[#allocation2 + $0xf8] sm:$0xff]
    %v945 = vld [vmem:[#allocation2 + $0x100] sm:$0xff]
    %v946 = vld [vmem:[#allocation2 + $0x108] sm:$0xff]
    %v947 = vld [vmem:[#allocation2 + $0x110] sm:$0xff]
    %v948 = vld [vmem:[#allocation2 + $0x118] sm:$0xff]
    %v949 = vld [vmem:[#allocation2 + $0x120] sm:$0xff]
    %v950 = vld [vmem:[#allocation2 + $0x128] sm:$0xff]
    %v951 = vld [vmem:[#allocation2 + $0x130] sm:$0xff]
    %v952 = vld [vmem:[#allocation2 + $0x138] sm:$0xff]
    %v953 = vld [vmem:[#allocation2 + $0x140] sm:$0xff]
    %v954 = vld [vmem:[#allocation2 + $0x148] sm:$0xff]
    %v955 = vld [vmem:[#allocation2 + $0x150] sm:$0xff]
    %v956 = vld [vmem:[#allocation2 + $0x158] sm:$0xff]
    %v957 = vld [vmem:[#allocation2 + $0x160] sm:$0xff]
    %v958 = vld [vmem:[#allocation2 + $0x168] sm:$0xff]
    %v959 = vld [vmem:[#allocation2 + $0x170] sm:$0xff]
    %v960 = vld [vmem:[#allocation2 + $0x178] sm:$0xff]
    %v961 = vld [vmem:[#allocation2 + $0x180] sm:$0xff]
    %v962 = vld [vmem:[#allocation2 + $0x188] sm:$0xff]
    %v963 = vld [vmem:[#allocation2 + $0x190] sm:$0xff]
    %v964 = vld [vmem:[#allocation2 + $0x198] sm:$0xff]
    %v965 = vld [vmem:[#allocation2 + $0x1a0] sm:$0xff]
    %v966 = vld [vmem:[#allocation2 + $0x1a8] sm:$0xff]
    %v967 = vld [vmem:[#allocation2 + $0x1b0] sm:$0xff]
    %v968 = vld [vmem:[#allocation2 + $0x1b8] sm:$0xff]
    %v969 = vld [vmem:[#allocation2 + $0x1c0] sm:$0xff]
    %v970 = vld [vmem:[#allocation2 + $0x1c8] sm:$0xff]
    %v971 = vld [vmem:[#allocation2 + $0x1d0] sm:$0xff]
    %v972 = vld [vmem:[#allocation2 + $0x1d8] sm:$0xff]
    %v973 = vld [vmem:[#allocation2 + $0x1e0] sm:$0xff]
    %v974 = vld [vmem:[#allocation2 + $0x1e8] sm:$0xff]
    %v975 = vld [vmem:[#allocation2 + $0x1f0] sm:$0xff]
    %v976 = vld [vmem:[#allocation2 + $0x1f8] sm:$0xff]
    %v977 = vld [vmem:[#allocation2 + $0x200] sm:$0xff]
    %v978 = vld [vmem:[#allocation2 + $0x208] sm:$0xff]
    %v979 = vld [vmem:[#allocation2 + $0x210] sm:$0xff]
    %v980 = vld [vmem:[#allocation2 + $0x218] sm:$0xff]
    %v981 = vld [vmem:[#allocation2 + $0x220] sm:$0xff]
    %v982 = vld [vmem:[#allocation2 + $0x228] sm:$0xff]
    %v983 = vld [vmem:[#allocation2 + $0x230] sm:$0xff]
    %v984 = vld [vmem:[#allocation2 + $0x238] sm:$0xff]
    %v985 = vld [vmem:[#allocation2 + $0x240] sm:$0xff]
    %v986 = vld [vmem:[#allocation2 + $0x248] sm:$0xff]
    %v987 = vld [vmem:[#allocation2 + $0x250] sm:$0xff]
    %v988 = vld [vmem:[#allocation2 + $0x258] sm:$0xff]
    %v989 = vld [vmem:[#allocation2 + $0x260] sm:$0xff]
    %v990 = vld [vmem:[#allocation2 + $0x268] sm:$0xff]
    %v991 = vld [vmem:[#allocation2 + $0x270] sm:$0xff]
    %v992 = vld [vmem:[#allocation2 + $0x278] sm:$0xff]
    %v993 = vld [vmem:[#allocation2 + $0x280] sm:$0xff]
    %v994 = vld [vmem:[#allocation2 + $0x288] sm:$0xff]
    %v995 = vld [vmem:[#allocation2 + $0x290] sm:$0xff]
    %v996 = vld [vmem:[#allocation2 + $0x298] sm:$0xff]
    %v997 = vld [vmem:[#allocation2 + $0x2a0] sm:$0xff]
    %v998 = vld [vmem:[#allocation2 + $0x2a8] sm:$0xff]
    %v999 = vld [vmem:[#allocation2 + $0x2b0] sm:$0xff]
    %v1000 = vld [vmem:[#allocation2 + $0x2b8] sm:$0xff]
    %v1001 = vld [vmem:[#allocation2 + $0x2c0] sm:$0xff]
    %v1002 = vld [vmem:[#allocation2 + $0x2c8] sm:$0xff]
    %v1003 = vld [vmem:[#allocation2 + $0x2d0] sm:$0xff]
    %v1004 = vld [vmem:[#allocation2 + $0x2d8] sm:$0xff]
    %v1005 = vld [vmem:[#allocation2 + $0x2e0] sm:$0xff]
    %v1006 = vld [vmem:[#allocation2 + $0x2e8] sm:$0xff]
    %v1007 = vld [vmem:[#allocation2 + $0x2f0] sm:$0xff]
    %v1008 = vld [vmem:[#allocation2 + $0x2f8] sm:$0xff]
    %v1009 = vld [vmem:[#allocation2 + $0x300] sm:$0xff]
    %v1010 = vld [vmem:[#allocation2 + $0x308] sm:$0xff]
    %v1011 = vld [vmem:[#allocation2 + $0x310] sm:$0xff]
    %v1012 = vld [vmem:[#allocation2 + $0x318] sm:$0xff]
    %v1013 = vld [vmem:[#allocation2 + $0x320] sm:$0xff]
    %v1014 = vld [vmem:[#allocation2 + $0x328] sm:$0xff]
    %v1015 = vld [vmem:[#allocation2 + $0x330] sm:$0xff]
    %v1016 = vld [vmem:[#allocation2 + $0x338] sm:$0xff]
    %v1017 = vld [vmem:[#allocation2 + $0x340] sm:$0xff]
    %v1018 = vld [vmem:[#allocation2 + $0x348] sm:$0xff]
    %v1019 = vld [vmem:[#allocation2 + $0x350] sm:$0xff]
    %v1020 = vld [vmem:[#allocation2 + $0x358] sm:$0xff]
    %v1021 = vld [vmem:[#allocation2 + $0x360] sm:$0xff]
    %v1022 = vld [vmem:[#allocation2 + $0x368] sm:$0xff]
    %v1023 = vld [vmem:[#allocation2 + $0x370] sm:$0xff]
    %v1024 = vld [vmem:[#allocation2 + $0x378] sm:$0xff]
    %v1025 = vld [vmem:[#allocation2 + $0x380] sm:$0xff]
    %v1026 = vld [vmem:[#allocation2 + $0x388] sm:$0xff]
    %v1027 = vld [vmem:[#allocation2 + $0x390] sm:$0xff]
    %v1028 = vld [vmem:[#allocation2 + $0x398] sm:$0xff]
    %v1029 = vld [vmem:[#allocation2 + $0x3a0] sm:$0xff]
    %v1030 = vld [vmem:[#allocation2 + $0x3a8] sm:$0xff]
    %v1031 = vld [vmem:[#allocation2 + $0x3b0] sm:$0xff]
    %v1032 = vld [vmem:[#allocation2 + $0x3b8] sm:$0xff]
    %v1033 = vld [vmem:[#allocation2 + $0x3c0] sm:$0xff]
    %v1034 = vld [vmem:[#allocation2 + $0x3c8] sm:$0xff]
    %v1035 = vld [vmem:[#allocation2 + $0x3d0] sm:$0xff]
    %v1036 = vld [vmem:[#allocation2 + $0x3d8] sm:$0xff]
    %v1037 = vld [vmem:[#allocation2 + $0x3e0] sm:$0xff]
    %v1038 = vld [vmem:[#allocation2 + $0x3e8] sm:$0xff]
    %v1039 = vld [vmem:[#allocation2 + $0x3f0] sm:$0xff]
    %v1040 = vld [vmem:[#allocation2 + $0x3f8] sm:$0xff]
    %v1041 = vld [vmem:[#allocation2 + $0x400] sm:$0xff]
    %v1042 = vld [vmem:[#allocation2 + $0x408] sm:$0xff]
    %v1043 = vld [vmem:[#allocation2 + $0x410] sm:$0xff]
    %v1044 = vld [vmem:[#allocation2 + $0x418] sm:$0xff]
    %v1045 = vld [vmem:[#allocation2 + $0x420] sm:$0xff]
    %v1046 = vld [vmem:[#allocation2 + $0x428] sm:$0xff]
    %v1047 = vld [vmem:[#allocation2 + $0x430] sm:$0xff]
    %v1048 = vld [vmem:[#allocation2 + $0x438] sm:$0xff]
    %v1049 = vld [vmem:[#allocation2 + $0x440] sm:$0xff]
    %v1050 = vld [vmem:[#allocation2 + $0x448] sm:$0xff]
    %v1051 = vld [vmem:[#allocation2 + $0x450] sm:$0xff]
    %v1052 = vld [vmem:[#allocation2 + $0x458] sm:$0xff]
    %v1053 = vld [vmem:[#allocation2 + $0x460] sm:$0xff]
    %v1054 = vld [vmem:[#allocation2 + $0x468] sm:$0xff]
    %v1055 = vld [vmem:[#allocation2 + $0x470] sm:$0xff]
    %v1056 = vld [vmem:[#allocation2 + $0x478] sm:$0xff]
    %v1057 = vld [vmem:[#allocation2 + $0x480] sm:$0xff]
    %v1058 = vld [vmem:[#allocation2 + $0x488] sm:$0xff]
    %v1059 = vld [vmem:[#allocation2 + $0x490] sm:$0xff]
    %v1060 = vld [vmem:[#allocation2 + $0x498] sm:$0xff]
    %v1061 = vld [vmem:[#allocation2 + $0x4a0] sm:$0xff]
    %v1062 = vld [vmem:[#allocation2 + $0x4a8] sm:$0xff]
    %v1063 = vld [vmem:[#allocation2 + $0x4b0] sm:$0xff]
    %v1064 = vld [vmem:[#allocation2 + $0x4b8] sm:$0xff]
    %v1065 = vld [vmem:[#allocation2 + $0x4c0] sm:$0xff]
    %v1066 = vld [vmem:[#allocation2 + $0x4c8] sm:$0xff]
    %v1067 = vld [vmem:[#allocation2 + $0x4d0] sm:$0xff]
    %v1068 = vld [vmem:[#allocation2 + $0x4d8] sm:$0xff]
    %v1069 = vld [vmem:[#allocation2 + $0x4e0] sm:$0xff]
    %v1070 = vld [vmem:[#allocation2 + $0x4e8] sm:$0xff]
    %v1071 = vld [vmem:[#allocation2 + $0x4f0] sm:$0xff]
    %v1072 = vld [vmem:[#allocation2 + $0x4f8] sm:$0xff]
    %v1073 = vld [vmem:[#allocation2 + $0x500] sm:$0xff]
    %v1074 = vld [vmem:[#allocation2 + $0x508] sm:$0xff]
    %v1075 = vld [vmem:[#allocation2 + $0x510] sm:$0xff]
    %v1076 = vld [vmem:[#allocation2 + $0x518] sm:$0xff]
    %v1077 = vld [vmem:[#allocation2 + $0x520] sm:$0xff]
    %v1078 = vld [vmem:[#allocation2 + $0x528] sm:$0xff]
    %v1079 = vld [vmem:[#allocation2 + $0x530] sm:$0xff]
    %v1080 = vld [vmem:[#allocation2 + $0x538] sm:$0xff]
    %v1081 = vld [vmem:[#allocation2 + $0x540] sm:$0xff]
    %v1082 = vld [vmem:[#allocation2 + $0x548] sm:$0xff]
    %v1083 = vld [vmem:[#allocation2 + $0x550] sm:$0xff]
    %v1084 = vld [vmem:[#allocation2 + $0x558] sm:$0xff]
    %v1085 = vld [vmem:[#allocation2 + $0x560] sm:$0xff]
    %v1086 = vld [vmem:[#allocation2 + $0x568] sm:$0xff]
    %v1087 = vld [vmem:[#allocation2 + $0x570] sm:$0xff]
    %v1088 = vld [vmem:[#allocation2 + $0x578] sm:$0xff]
    %v1089 = vld [vmem:[#allocation2 + $0x580] sm:$0xff]
    %v1090 = vld [vmem:[#allocation2 + $0x588] sm:$0xff]
    %v1091 = vld [vmem:[#allocation2 + $0x590] sm:$0xff]
    %v1092 = vld [vmem:[#allocation2 + $0x598] sm:$0xff]
    %v1093 = vld [vmem:[#allocation2 + $0x5a0] sm:$0xff]
    %v1094 = vld [vmem:[#allocation2 + $0x5a8] sm:$0xff]
    %v1095 = vld [vmem:[#allocation2 + $0x5b0] sm:$0xff]
    %v1096 = vld [vmem:[#allocation2 + $0x5b8] sm:$0xff]
    %v1097 = vld [vmem:[#allocation2 + $0x5c0] sm:$0xff]
    %v1098 = vld [vmem:[#allocation2 + $0x5c8] sm:$0xff]
    %v1099 = vld [vmem:[#allocation2 + $0x5d0] sm:$0xff]
    %v1100 = vld [vmem:[#allocation2 + $0x5d8] sm:$0xff]
    %v1101 = vld [vmem:[#allocation2 + $0x5e0] sm:$0xff]
    %v1102 = vld [vmem:[#allocation2 + $0x5e8] sm:$0xff]
    %v1103 = vld [vmem:[#allocation2 + $0x5f0] sm:$0xff]
    %v1104 = vld [vmem:[#allocation2 + $0x5f8] sm:$0xff]
    %v1105 = vld [vmem:[#allocation2 + $0x600] sm:$0xff]
    %v1106 = vld [vmem:[#allocation2 + $0x608] sm:$0xff]
    %v1107 = vld [vmem:[#allocation2 + $0x610] sm:$0xff]
    %v1108 = vld [vmem:[#allocation2 + $0x618] sm:$0xff]
    %v1109 = vld [vmem:[#allocation2 + $0x620] sm:$0xff]
    %v1110 = vld [vmem:[#allocation2 + $0x628] sm:$0xff]
    %v1111 = vld [vmem:[#allocation2 + $0x630] sm:$0xff]
    %v1112 = vld [vmem:[#allocation2 + $0x638] sm:$0xff]
    %v1113 = vld [vmem:[#allocation2 + $0x640] sm:$0xff]
    %v1114 = vld [vmem:[#allocation2 + $0x648] sm:$0xff]
    %v1115 = vld [vmem:[#allocation2 + $0x650] sm:$0xff]
    %v1116 = vld [vmem:[#allocation2 + $0x658] sm:$0xff]
    %v1117 = vld [vmem:[#allocation2 + $0x660] sm:$0xff]
    %v1118 = vld [vmem:[#allocation2 + $0x668] sm:$0xff]
    %v1119 = vld [vmem:[#allocation2 + $0x670] sm:$0xff]
    %v1120 = vld [vmem:[#allocation2 + $0x678] sm:$0xff]
    %v1121 = vld [vmem:[#allocation2 + $0x680] sm:$0xff]
    %v1122 = vld [vmem:[#allocation2 + $0x688] sm:$0xff]
    %v1123 = vld [vmem:[#allocation2 + $0x690] sm:$0xff]
    %v1124 = vld [vmem:[#allocation2 + $0x698] sm:$0xff]
    %v1125 = vld [vmem:[#allocation2 + $0x6a0] sm:$0xff]
    %v1126 = vld [vmem:[#allocation2 + $0x6a8] sm:$0xff]
    %v1127 = vld [vmem:[#allocation2 + $0x6b0] sm:$0xff]
    %v1128 = vld [vmem:[#allocation2 + $0x6b8] sm:$0xff]
    %v1129 = vld [vmem:[#allocation2 + $0x6c0] sm:$0xff]
    %v1130 = vld [vmem:[#allocation2 + $0x6c8] sm:$0xff]
    %v1131 = vld [vmem:[#allocation2 + $0x6d0] sm:$0xff]
    %v1132 = vld [vmem:[#allocation2 + $0x6d8] sm:$0xff]
    %v1133 = vld [vmem:[#allocation2 + $0x6e0] sm:$0xff]
    %v1134 = vld [vmem:[#allocation2 + $0x6e8] sm:$0xff]
    %v1135 = vld [vmem:[#allocation2 + $0x6f0] sm:$0xff]
    %v1136 = vld [vmem:[#allocation2 + $0x6f8] sm:$0xff]
    %v1137 = vld [vmem:[#allocation2 + $0x700] sm:$0xff]
    %v1138 = vld [vmem:[#allocation2 + $0x708] sm:$0xff]
    %v1139 = vld [vmem:[#allocation2 + $0x710] sm:$0xff]
    %v1140 = vld [vmem:[#allocation2 + $0x718] sm:$0xff]
    %v1141 = vld [vmem:[#allocation2 + $0x720] sm:$0xff]
    %v1142 = vld [vmem:[#allocation2 + $0x728] sm:$0xff]
    %v1143 = vld [vmem:[#allocation2 + $0x730] sm:$0xff]
    %v1144 = vld [vmem:[#allocation2 + $0x738] sm:$0xff]
    %v1145 = vld [vmem:[#allocation2 + $0x740] sm:$0xff]
    %v1146 = vld [vmem:[#allocation2 + $0x748] sm:$0xff]
    %v1147 = vld [vmem:[#allocation2 + $0x750] sm:$0xff]
    %v1148 = vld [vmem:[#allocation2 + $0x758] sm:$0xff]
    %v1149 = vld [vmem:[#allocation2 + $0x760] sm:$0xff]
    %v1150 = vld [vmem:[#allocation2 + $0x768] sm:$0xff]
    %v1151 = vld [vmem:[#allocation2 + $0x770] sm:$0xff]
    %v1152 = vld [vmem:[#allocation2 + $0x778] sm:$0xff]
    %v1153 = vld [vmem:[#allocation2 + $0x780] sm:$0xff]
    %v1154 = vld [vmem:[#allocation2 + $0x788] sm:$0xff]
    %v1155 = vld [vmem:[#allocation2 + $0x790] sm:$0xff]
    %v1156 = vld [vmem:[#allocation2 + $0x798] sm:$0xff]
    %v1157 = vld [vmem:[#allocation2 + $0x7a0] sm:$0xff]
    %v1158 = vld [vmem:[#allocation2 + $0x7a8] sm:$0xff]
    %v1159 = vld [vmem:[#allocation2 + $0x7b0] sm:$0xff]
    %v1160 = vld [vmem:[#allocation2 + $0x7b8] sm:$0xff]
    %v1161 = vld [vmem:[#allocation2 + $0x7c0] sm:$0xff]
    %v1162 = vld [vmem:[#allocation2 + $0x7c8] sm:$0xff]
    %v1163 = vld [vmem:[#allocation2 + $0x7d0] sm:$0xff]
    %v1164 = vld [vmem:[#allocation2 + $0x7d8] sm:$0xff]
    %v1165 = vld [vmem:[#allocation2 + $0x7e0] sm:$0xff]
    %v1166 = vld [vmem:[#allocation2 + $0x7e8] sm:$0xff]
    %v1167 = vld [vmem:[#allocation2 + $0x7f0] sm:$0xff]
    %v1168 = vld [vmem:[#allocation2 + $0x7f8] sm:$0xff]
    %v1169 = vld [vmem:[#allocation13] sm:$0x77]
    %v1170 = vld [vmem:[#allocation13 + $0x8] sm:$0x77]
    %v1171 = vld [vmem:[#allocation13 + $0x10] sm:$0x77]
    %v1172 = vld [vmem:[#allocation13 + $0x18] sm:$0x77]
    %v1173 = vunpack.c.l.bf16 %v913
    %v1174 = vunpack.c.h.bf16 %v913
    %v1175 = vunpack.c.l.bf16 %v914
    %v1176 = vunpack.c.h.bf16 %v914
    %v1177 = vunpack.c.l.bf16 %v915
    %v1178 = vunpack.c.h.bf16 %v915
    %v1179 = vunpack.c.l.bf16 %v916
    %v1180 = vunpack.c.h.bf16 %v916
    %v1181 = vunpack.c.l.bf16 %v917
    %v1182 = vunpack.c.h.bf16 %v917
    %v1183 = vunpack.c.l.bf16 %v918
    %v1184 = vunpack.c.h.bf16 %v918
    %v1185 = vunpack.c.l.bf16 %v919
    %v1186 = vunpack.c.h.bf16 %v919
    %v1187 = vunpack.c.l.bf16 %v920
    %v1188 = vunpack.c.h.bf16 %v920
    %v1189 = vunpack.c.l.bf16 %v921
    %v1190 = vunpack.c.h.bf16 %v921
    %v1191 = vunpack.c.l.bf16 %v922
    %v1192 = vunpack.c.h.bf16 %v922
    %v1193 = vunpack.c.l.bf16 %v923
    %v1194 = vunpack.c.h.bf16 %v923
    %v1195 = vunpack.c.l.bf16 %v924
    %v1196 = vunpack.c.h.bf16 %v924
    %v1197 = vunpack.c.l.bf16 %v925
    %v1198 = vunpack.c.h.bf16 %v925
    %v1199 = vunpack.c.l.bf16 %v926
    %v1200 = vunpack.c.h.bf16 %v926
    %v1201 = vunpack.c.l.bf16 %v927
    %v1202 = vunpack.c.h.bf16 %v927
    %v1203 = vunpack.c.l.bf16 %v928
    %v1204 = vunpack.c.h.bf16 %v928
    %v1205 = vunpack.c.l.bf16 %v929
    %v1206 = vunpack.c.h.bf16 %v929
    %v1207 = vunpack.c.l.bf16 %v930
    %v1208 = vunpack.c.h.bf16 %v930
    %v1209 = vunpack.c.l.bf16 %v931
    %v1210 = vunpack.c.h.bf16 %v931
    %v1211 = vunpack.c.l.bf16 %v932
    %v1212 = vunpack.c.h.bf16 %v932
    %v1213 = vunpack.c.l.bf16 %v933
    %v1214 = vunpack.c.h.bf16 %v933
    %v1215 = vunpack.c.l.bf16 %v934
    %v1216 = vunpack.c.h.bf16 %v934
    %v1217 = vunpack.c.l.bf16 %v935
    %v1218 = vunpack.c.h.bf16 %v935
    %v1219 = vunpack.c.l.bf16 %v936
    %v1220 = vunpack.c.h.bf16 %v936
    %v1221 = vunpack.c.l.bf16 %v937
    %v1222 = vunpack.c.h.bf16 %v937
    %v1223 = vunpack.c.l.bf16 %v938
    %v1224 = vunpack.c.h.bf16 %v938
    %v1225 = vunpack.c.l.bf16 %v939
    %v1226 = vunpack.c.h.bf16 %v939
    %v1227 = vunpack.c.l.bf16 %v940
    %v1228 = vunpack.c.h.bf16 %v940
    %v1229 = vunpack.c.l.bf16 %v941
    %v1230 = vunpack.c.h.bf16 %v941
    %v1231 = vunpack.c.l.bf16 %v942
    %v1232 = vunpack.c.h.bf16 %v942
    %v1233 = vunpack.c.l.bf16 %v943
    %v1234 = vunpack.c.h.bf16 %v943
    %v1235 = vunpack.c.l.bf16 %v944
    %v1236 = vunpack.c.h.bf16 %v944
    %v1237 = vunpack.c.l.bf16 %v945
    %v1238 = vunpack.c.h.bf16 %v945
    %v1239 = vunpack.c.l.bf16 %v946
    %v1240 = vunpack.c.h.bf16 %v946
    %v1241 = vunpack.c.l.bf16 %v947
    %v1242 = vunpack.c.h.bf16 %v947
    %v1243 = vunpack.c.l.bf16 %v948
    %v1244 = vunpack.c.h.bf16 %v948
    %v1245 = vunpack.c.l.bf16 %v949
    %v1246 = vunpack.c.h.bf16 %v949
    %v1247 = vunpack.c.l.bf16 %v950
    %v1248 = vunpack.c.h.bf16 %v950
    %v1249 = vunpack.c.l.bf16 %v951
    %v1250 = vunpack.c.h.bf16 %v951
    %v1251 = vunpack.c.l.bf16 %v952
    %v1252 = vunpack.c.h.bf16 %v952
    %v1253 = vunpack.c.l.bf16 %v953
    %v1254 = vunpack.c.h.bf16 %v953
    %v1255 = vunpack.c.l.bf16 %v954
    %v1256 = vunpack.c.h.bf16 %v954
    %v1257 = vunpack.c.l.bf16 %v955
    %v1258 = vunpack.c.h.bf16 %v955
    %v1259 = vunpack.c.l.bf16 %v956
    %v1260 = vunpack.c.h.bf16 %v956
    %v1261 = vunpack.c.l.bf16 %v957
    %v1262 = vunpack.c.h.bf16 %v957
    %v1263 = vunpack.c.l.bf16 %v958
    %v1264 = vunpack.c.h.bf16 %v958
    %v1265 = vunpack.c.l.bf16 %v959
    %v1266 = vunpack.c.h.bf16 %v959
    %v1267 = vunpack.c.l.bf16 %v960
    %v1268 = vunpack.c.h.bf16 %v960
    %v1269 = vunpack.c.l.bf16 %v961
    %v1270 = vunpack.c.h.bf16 %v961
    %v1271 = vunpack.c.l.bf16 %v962
    %v1272 = vunpack.c.h.bf16 %v962
    %v1273 = vunpack.c.l.bf16 %v963
    %v1274 = vunpack.c.h.bf16 %v963
    %v1275 = vunpack.c.l.bf16 %v964
    %v1276 = vunpack.c.h.bf16 %v964
    %v1277 = vunpack.c.l.bf16 %v965
    %v1278 = vunpack.c.h.bf16 %v965
    %v1279 = vunpack.c.l.bf16 %v966
    %v1280 = vunpack.c.h.bf16 %v966
    %v1281 = vunpack.c.l.bf16 %v967
    %v1282 = vunpack.c.h.bf16 %v967
    %v1283 = vunpack.c.l.bf16 %v968
    %v1284 = vunpack.c.h.bf16 %v968
    %v1285 = vunpack.c.l.bf16 %v969
    %v1286 = vunpack.c.h.bf16 %v969
    %v1287 = vunpack.c.l.bf16 %v970
    %v1288 = vunpack.c.h.bf16 %v970
    %v1289 = vunpack.c.l.bf16 %v971
    %v1290 = vunpack.c.h.bf16 %v971
    %v1291 = vunpack.c.l.bf16 %v972
    %v1292 = vunpack.c.h.bf16 %v972
    %v1293 = vunpack.c.l.bf16 %v973
    %v1294 = vunpack.c.h.bf16 %v973
    %v1295 = vunpack.c.l.bf16 %v974
    %v1296 = vunpack.c.h.bf16 %v974
    %v1297 = vunpack.c.l.bf16 %v975
    %v1298 = vunpack.c.h.bf16 %v975
    %v1299 = vunpack.c.l.bf16 %v976
    %v1300 = vunpack.c.h.bf16 %v976
    %v1301 = vunpack.c.l.bf16 %v977
    %v1302 = vunpack.c.h.bf16 %v977
    %v1303 = vunpack.c.l.bf16 %v978
    %v1304 = vunpack.c.h.bf16 %v978
    %v1305 = vunpack.c.l.bf16 %v979
    %v1306 = vunpack.c.h.bf16 %v979
    %v1307 = vunpack.c.l.bf16 %v980
    %v1308 = vunpack.c.h.bf16 %v980
    %v1309 = vunpack.c.l.bf16 %v981
    %v1310 = vunpack.c.h.bf16 %v981
    %v1311 = vunpack.c.l.bf16 %v982
    %v1312 = vunpack.c.h.bf16 %v982
    %v1313 = vunpack.c.l.bf16 %v983
    %v1314 = vunpack.c.h.bf16 %v983
    %v1315 = vunpack.c.l.bf16 %v984
    %v1316 = vunpack.c.h.bf16 %v984
    %v1317 = vunpack.c.l.bf16 %v985
    %v1318 = vunpack.c.h.bf16 %v985
    %v1319 = vunpack.c.l.bf16 %v986
    %v1320 = vunpack.c.h.bf16 %v986
    %v1321 = vunpack.c.l.bf16 %v987
    %v1322 = vunpack.c.h.bf16 %v987
    %v1323 = vunpack.c.l.bf16 %v988
    %v1324 = vunpack.c.h.bf16 %v988
    %v1325 = vunpack.c.l.bf16 %v989
    %v1326 = vunpack.c.h.bf16 %v989
    %v1327 = vunpack.c.l.bf16 %v990
    %v1328 = vunpack.c.h.bf16 %v990
    %v1329 = vunpack.c.l.bf16 %v991
    %v1330 = vunpack.c.h.bf16 %v991
    %v1331 = vunpack.c.l.bf16 %v992
    %v1332 = vunpack.c.h.bf16 %v992
    %v1333 = vunpack.c.l.bf16 %v993
    %v1334 = vunpack.c.h.bf16 %v993
    %v1335 = vunpack.c.l.bf16 %v994
    %v1336 = vunpack.c.h.bf16 %v994
    %v1337 = vunpack.c.l.bf16 %v995
    %v1338 = vunpack.c.h.bf16 %v995
    %v1339 = vunpack.c.l.bf16 %v996
    %v1340 = vunpack.c.h.bf16 %v996
    %v1341 = vunpack.c.l.bf16 %v997
    %v1342 = vunpack.c.h.bf16 %v997
    %v1343 = vunpack.c.l.bf16 %v998
    %v1344 = vunpack.c.h.bf16 %v998
    %v1345 = vunpack.c.l.bf16 %v999
    %v1346 = vunpack.c.h.bf16 %v999
    %v1347 = vunpack.c.l.bf16 %v1000
    %v1348 = vunpack.c.h.bf16 %v1000
    %v1349 = vunpack.c.l.bf16 %v1001
    %v1350 = vunpack.c.h.bf16 %v1001
    %v1351 = vunpack.c.l.bf16 %v1002
    %v1352 = vunpack.c.h.bf16 %v1002
    %v1353 = vunpack.c.l.bf16 %v1003
    %v1354 = vunpack.c.h.bf16 %v1003
    %v1355 = vunpack.c.l.bf16 %v1004
    %v1356 = vunpack.c.h.bf16 %v1004
    %v1357 = vunpack.c.l.bf16 %v1005
    %v1358 = vunpack.c.h.bf16 %v1005
    %v1359 = vunpack.c.l.bf16 %v1006
    %v1360 = vunpack.c.h.bf16 %v1006
    %v1361 = vunpack.c.l.bf16 %v1007
    %v1362 = vunpack.c.h.bf16 %v1007
    %v1363 = vunpack.c.l.bf16 %v1008
    %v1364 = vunpack.c.h.bf16 %v1008
    %v1365 = vunpack.c.l.bf16 %v1009
    %v1366 = vunpack.c.h.bf16 %v1009
    %v1367 = vunpack.c.l.bf16 %v1010
    %v1368 = vunpack.c.h.bf16 %v1010
    %v1369 = vunpack.c.l.bf16 %v1011
    %v1370 = vunpack.c.h.bf16 %v1011
    %v1371 = vunpack.c.l.bf16 %v1012
    %v1372 = vunpack.c.h.bf16 %v1012
    %v1373 = vunpack.c.l.bf16 %v1013
    %v1374 = vunpack.c.h.bf16 %v1013
    %v1375 = vunpack.c.l.bf16 %v1014
    %v1376 = vunpack.c.h.bf16 %v1014
    %v1377 = vunpack.c.l.bf16 %v1015
    %v1378 = vunpack.c.h.bf16 %v1015
    %v1379 = vunpack.c.l.bf16 %v1016
    %v1380 = vunpack.c.h.bf16 %v1016
    %v1381 = vunpack.c.l.bf16 %v1017
    %v1382 = vunpack.c.h.bf16 %v1017
    %v1383 = vunpack.c.l.bf16 %v1018
    %v1384 = vunpack.c.h.bf16 %v1018
    %v1385 = vunpack.c.l.bf16 %v1019
    %v1386 = vunpack.c.h.bf16 %v1019
    %v1387 = vunpack.c.l.bf16 %v1020
    %v1388 = vunpack.c.h.bf16 %v1020
    %v1389 = vunpack.c.l.bf16 %v1021
    %v1390 = vunpack.c.h.bf16 %v1021
    %v1391 = vunpack.c.l.bf16 %v1022
    %v1392 = vunpack.c.h.bf16 %v1022
    %v1393 = vunpack.c.l.bf16 %v1023
    %v1394 = vunpack.c.h.bf16 %v1023
    %v1395 = vunpack.c.l.bf16 %v1024
    %v1396 = vunpack.c.h.bf16 %v1024
    %v1397 = vunpack.c.l.bf16 %v1025
    %v1398 = vunpack.c.h.bf16 %v1025
    %v1399 = vunpack.c.l.bf16 %v1026
    %v1400 = vunpack.c.h.bf16 %v1026
    %v1401 = vunpack.c.l.bf16 %v1027
    %v1402 = vunpack.c.h.bf16 %v1027
    %v1403 = vunpack.c.l.bf16 %v1028
    %v1404 = vunpack.c.h.bf16 %v1028
    %v1405 = vunpack.c.l.bf16 %v1029
    %v1406 = vunpack.c.h.bf16 %v1029
    %v1407 = vunpack.c.l.bf16 %v1030
    %v1408 = vunpack.c.h.bf16 %v1030
    %v1409 = vunpack.c.l.bf16 %v1031
    %v1410 = vunpack.c.h.bf16 %v1031
    %v1411 = vunpack.c.l.bf16 %v1032
    %v1412 = vunpack.c.h.bf16 %v1032
    %v1413 = vunpack.c.l.bf16 %v1033
    %v1414 = vunpack.c.h.bf16 %v1033
    %v1415 = vunpack.c.l.bf16 %v1034
    %v1416 = vunpack.c.h.bf16 %v1034
    %v1417 = vunpack.c.l.bf16 %v1035
    %v1418 = vunpack.c.h.bf16 %v1035
    %v1419 = vunpack.c.l.bf16 %v1036
    %v1420 = vunpack.c.h.bf16 %v1036
    %v1421 = vunpack.c.l.bf16 %v1037
    %v1422 = vunpack.c.h.bf16 %v1037
    %v1423 = vunpack.c.l.bf16 %v1038
    %v1424 = vunpack.c.h.bf16 %v1038
    %v1425 = vunpack.c.l.bf16 %v1039
    %v1426 = vunpack.c.h.bf16 %v1039
    %v1427 = vunpack.c.l.bf16 %v1040
    %v1428 = vunpack.c.h.bf16 %v1040
    %v1429 = vunpack.c.l.bf16 %v1041
    %v1430 = vunpack.c.h.bf16 %v1041
    %v1431 = vunpack.c.l.bf16 %v1042
    %v1432 = vunpack.c.h.bf16 %v1042
    %v1433 = vunpack.c.l.bf16 %v1043
    %v1434 = vunpack.c.h.bf16 %v1043
    %v1435 = vunpack.c.l.bf16 %v1044
    %v1436 = vunpack.c.h.bf16 %v1044
    %v1437 = vunpack.c.l.bf16 %v1045
    %v1438 = vunpack.c.h.bf16 %v1045
    %v1439 = vunpack.c.l.bf16 %v1046
    %v1440 = vunpack.c.h.bf16 %v1046
    %v1441 = vunpack.c.l.bf16 %v1047
    %v1442 = vunpack.c.h.bf16 %v1047
    %v1443 = vunpack.c.l.bf16 %v1048
    %v1444 = vunpack.c.h.bf16 %v1048
    %v1445 = vunpack.c.l.bf16 %v1049
    %v1446 = vunpack.c.h.bf16 %v1049
    %v1447 = vunpack.c.l.bf16 %v1050
    %v1448 = vunpack.c.h.bf16 %v1050
    %v1449 = vunpack.c.l.bf16 %v1051
    %v1450 = vunpack.c.h.bf16 %v1051
    %v1451 = vunpack.c.l.bf16 %v1052
    %v1452 = vunpack.c.h.bf16 %v1052
    %v1453 = vunpack.c.l.bf16 %v1053
    %v1454 = vunpack.c.h.bf16 %v1053
    %v1455 = vunpack.c.l.bf16 %v1054
    %v1456 = vunpack.c.h.bf16 %v1054
    %v1457 = vunpack.c.l.bf16 %v1055
    %v1458 = vunpack.c.h.bf16 %v1055
    %v1459 = vunpack.c.l.bf16 %v1056
    %v1460 = vunpack.c.h.bf16 %v1056
    %v1461 = vunpack.c.l.bf16 %v1057
    %v1462 = vunpack.c.h.bf16 %v1057
    %v1463 = vunpack.c.l.bf16 %v1058
    %v1464 = vunpack.c.h.bf16 %v1058
    %v1465 = vunpack.c.l.bf16 %v1059
    %v1466 = vunpack.c.h.bf16 %v1059
    %v1467 = vunpack.c.l.bf16 %v1060
    %v1468 = vunpack.c.h.bf16 %v1060
    %v1469 = vunpack.c.l.bf16 %v1061
    %v1470 = vunpack.c.h.bf16 %v1061
    %v1471 = vunpack.c.l.bf16 %v1062
    %v1472 = vunpack.c.h.bf16 %v1062
    %v1473 = vunpack.c.l.bf16 %v1063
    %v1474 = vunpack.c.h.bf16 %v1063
    %v1475 = vunpack.c.l.bf16 %v1064
    %v1476 = vunpack.c.h.bf16 %v1064
    %v1477 = vunpack.c.l.bf16 %v1065
    %v1478 = vunpack.c.h.bf16 %v1065
    %v1479 = vunpack.c.l.bf16 %v1066
    %v1480 = vunpack.c.h.bf16 %v1066
    %v1481 = vunpack.c.l.bf16 %v1067
    %v1482 = vunpack.c.h.bf16 %v1067
    %v1483 = vunpack.c.l.bf16 %v1068
    %v1484 = vunpack.c.h.bf16 %v1068
    %v1485 = vunpack.c.l.bf16 %v1069
    %v1486 = vunpack.c.h.bf16 %v1069
    %v1487 = vunpack.c.l.bf16 %v1070
    %v1488 = vunpack.c.h.bf16 %v1070
    %v1489 = vunpack.c.l.bf16 %v1071
    %v1490 = vunpack.c.h.bf16 %v1071
    %v1491 = vunpack.c.l.bf16 %v1072
    %v1492 = vunpack.c.h.bf16 %v1072
    %v1493 = vunpack.c.l.bf16 %v1073
    %v1494 = vunpack.c.h.bf16 %v1073
    %v1495 = vunpack.c.l.bf16 %v1074
    %v1496 = vunpack.c.h.bf16 %v1074
    %v1497 = vunpack.c.l.bf16 %v1075
    %v1498 = vunpack.c.h.bf16 %v1075
    %v1499 = vunpack.c.l.bf16 %v1076
    %v1500 = vunpack.c.h.bf16 %v1076
    %v1501 = vunpack.c.l.bf16 %v1077
    %v1502 = vunpack.c.h.bf16 %v1077
    %v1503 = vunpack.c.l.bf16 %v1078
    %v1504 = vunpack.c.h.bf16 %v1078
    %v1505 = vunpack.c.l.bf16 %v1079
    %v1506 = vunpack.c.h.bf16 %v1079
    %v1507 = vunpack.c.l.bf16 %v1080
    %v1508 = vunpack.c.h.bf16 %v1080
    %v1509 = vunpack.c.l.bf16 %v1081
    %v1510 = vunpack.c.h.bf16 %v1081
    %v1511 = vunpack.c.l.bf16 %v1082
    %v1512 = vunpack.c.h.bf16 %v1082
    %v1513 = vunpack.c.l.bf16 %v1083
    %v1514 = vunpack.c.h.bf16 %v1083
    %v1515 = vunpack.c.l.bf16 %v1084
    %v1516 = vunpack.c.h.bf16 %v1084
    %v1517 = vunpack.c.l.bf16 %v1085
    %v1518 = vunpack.c.h.bf16 %v1085
    %v1519 = vunpack.c.l.bf16 %v1086
    %v1520 = vunpack.c.h.bf16 %v1086
    %v1521 = vunpack.c.l.bf16 %v1087
    %v1522 = vunpack.c.h.bf16 %v1087
    %v1523 = vunpack.c.l.bf16 %v1088
    %v1524 = vunpack.c.h.bf16 %v1088
    %v1525 = vunpack.c.l.bf16 %v1089
    %v1526 = vunpack.c.h.bf16 %v1089
    %v1527 = vunpack.c.l.bf16 %v1090
    %v1528 = vunpack.c.h.bf16 %v1090
    %v1529 = vunpack.c.l.bf16 %v1091
    %v1530 = vunpack.c.h.bf16 %v1091
    %v1531 = vunpack.c.l.bf16 %v1092
    %v1532 = vunpack.c.h.bf16 %v1092
    %v1533 = vunpack.c.l.bf16 %v1093
    %v1534 = vunpack.c.h.bf16 %v1093
    %v1535 = vunpack.c.l.bf16 %v1094
    %v1536 = vunpack.c.h.bf16 %v1094
    %v1537 = vunpack.c.l.bf16 %v1095
    %v1538 = vunpack.c.h.bf16 %v1095
    %v1539 = vunpack.c.l.bf16 %v1096
    %v1540 = vunpack.c.h.bf16 %v1096
    %v1541 = vunpack.c.l.bf16 %v1097
    %v1542 = vunpack.c.h.bf16 %v1097
    %v1543 = vunpack.c.l.bf16 %v1098
    %v1544 = vunpack.c.h.bf16 %v1098
    %v1545 = vunpack.c.l.bf16 %v1099
    %v1546 = vunpack.c.h.bf16 %v1099
    %v1547 = vunpack.c.l.bf16 %v1100
    %v1548 = vunpack.c.h.bf16 %v1100
    %v1549 = vunpack.c.l.bf16 %v1101
    %v1550 = vunpack.c.h.bf16 %v1101
    %v1551 = vunpack.c.l.bf16 %v1102
    %v1552 = vunpack.c.h.bf16 %v1102
    %v1553 = vunpack.c.l.bf16 %v1103
    %v1554 = vunpack.c.h.bf16 %v1103
    %v1555 = vunpack.c.l.bf16 %v1104
    %v1556 = vunpack.c.h.bf16 %v1104
    %v1557 = vunpack.c.l.bf16 %v1105
    %v1558 = vunpack.c.h.bf16 %v1105
    %v1559 = vunpack.c.l.bf16 %v1106
    %v1560 = vunpack.c.h.bf16 %v1106
    %v1561 = vunpack.c.l.bf16 %v1107
    %v1562 = vunpack.c.h.bf16 %v1107
    %v1563 = vunpack.c.l.bf16 %v1108
    %v1564 = vunpack.c.h.bf16 %v1108
    %v1565 = vunpack.c.l.bf16 %v1109
    %v1566 = vunpack.c.h.bf16 %v1109
    %v1567 = vunpack.c.l.bf16 %v1110
    %v1568 = vunpack.c.h.bf16 %v1110
    %v1569 = vunpack.c.l.bf16 %v1111
    %v1570 = vunpack.c.h.bf16 %v1111
    %v1571 = vunpack.c.l.bf16 %v1112
    %v1572 = vunpack.c.h.bf16 %v1112
    %v1573 = vunpack.c.l.bf16 %v1113
    %v1574 = vunpack.c.h.bf16 %v1113
    %v1575 = vunpack.c.l.bf16 %v1114
    %v1576 = vunpack.c.h.bf16 %v1114
    %v1577 = vunpack.c.l.bf16 %v1115
    %v1578 = vunpack.c.h.bf16 %v1115
    %v1579 = vunpack.c.l.bf16 %v1116
    %v1580 = vunpack.c.h.bf16 %v1116
    %v1581 = vunpack.c.l.bf16 %v1117
    %v1582 = vunpack.c.h.bf16 %v1117
    %v1583 = vunpack.c.l.bf16 %v1118
    %v1584 = vunpack.c.h.bf16 %v1118
    %v1585 = vunpack.c.l.bf16 %v1119
    %v1586 = vunpack.c.h.bf16 %v1119
    %v1587 = vunpack.c.l.bf16 %v1120
    %v1588 = vunpack.c.h.bf16 %v1120
    %v1589 = vunpack.c.l.bf16 %v1121
    %v1590 = vunpack.c.h.bf16 %v1121
    %v1591 = vunpack.c.l.bf16 %v1122
    %v1592 = vunpack.c.h.bf16 %v1122
    %v1593 = vunpack.c.l.bf16 %v1123
    %v1594 = vunpack.c.h.bf16 %v1123
    %v1595 = vunpack.c.l.bf16 %v1124
    %v1596 = vunpack.c.h.bf16 %v1124
    %v1597 = vunpack.c.l.bf16 %v1125
    %v1598 = vunpack.c.h.bf16 %v1125
    %v1599 = vunpack.c.l.bf16 %v1126
    %v1600 = vunpack.c.h.bf16 %v1126
    %v1601 = vunpack.c.l.bf16 %v1127
    %v1602 = vunpack.c.h.bf16 %v1127
    %v1603 = vunpack.c.l.bf16 %v1128
    %v1604 = vunpack.c.h.bf16 %v1128
    %v1605 = vunpack.c.l.bf16 %v1129
    %v1606 = vunpack.c.h.bf16 %v1129
    %v1607 = vunpack.c.l.bf16 %v1130
    %v1608 = vunpack.c.h.bf16 %v1130
    %v1609 = vunpack.c.l.bf16 %v1131
    %v1610 = vunpack.c.h.bf16 %v1131
    %v1611 = vunpack.c.l.bf16 %v1132
    %v1612 = vunpack.c.h.bf16 %v1132
    %v1613 = vunpack.c.l.bf16 %v1133
    %v1614 = vunpack.c.h.bf16 %v1133
    %v1615 = vunpack.c.l.bf16 %v1134
    %v1616 = vunpack.c.h.bf16 %v1134
    %v1617 = vunpack.c.l.bf16 %v1135
    %v1618 = vunpack.c.h.bf16 %v1135
    %v1619 = vunpack.c.l.bf16 %v1136
    %v1620 = vunpack.c.h.bf16 %v1136
    %v1621 = vunpack.c.l.bf16 %v1137
    %v1622 = vunpack.c.h.bf16 %v1137
    %v1623 = vunpack.c.l.bf16 %v1138
    %v1624 = vunpack.c.h.bf16 %v1138
    %v1625 = vunpack.c.l.bf16 %v1139
    %v1626 = vunpack.c.h.bf16 %v1139
    %v1627 = vunpack.c.l.bf16 %v1140
    %v1628 = vunpack.c.h.bf16 %v1140
    %v1629 = vunpack.c.l.bf16 %v1141
    %v1630 = vunpack.c.h.bf16 %v1141
    %v1631 = vunpack.c.l.bf16 %v1142
    %v1632 = vunpack.c.h.bf16 %v1142
    %v1633 = vunpack.c.l.bf16 %v1143
    %v1634 = vunpack.c.h.bf16 %v1143
    %v1635 = vunpack.c.l.bf16 %v1144
    %v1636 = vunpack.c.h.bf16 %v1144
    %v1637 = vunpack.c.l.bf16 %v1145
    %v1638 = vunpack.c.h.bf16 %v1145
    %v1639 = vunpack.c.l.bf16 %v1146
    %v1640 = vunpack.c.h.bf16 %v1146
    %v1641 = vunpack.c.l.bf16 %v1147
    %v1642 = vunpack.c.h.bf16 %v1147
    %v1643 = vunpack.c.l.bf16 %v1148
    %v1644 = vunpack.c.h.bf16 %v1148
    %v1645 = vunpack.c.l.bf16 %v1149
    %v1646 = vunpack.c.h.bf16 %v1149
    %v1647 = vunpack.c.l.bf16 %v1150
    %v1648 = vunpack.c.h.bf16 %v1150
    %v1649 = vunpack.c.l.bf16 %v1151
    %v1650 = vunpack.c.h.bf16 %v1151
    %v1651 = vunpack.c.l.bf16 %v1152
    %v1652 = vunpack.c.h.bf16 %v1152
    %v1653 = vunpack.c.l.bf16 %v1153
    %v1654 = vunpack.c.h.bf16 %v1153
    %v1655 = vunpack.c.l.bf16 %v1154
    %v1656 = vunpack.c.h.bf16 %v1154
    %v1657 = vunpack.c.l.bf16 %v1155
    %v1658 = vunpack.c.h.bf16 %v1155
    %v1659 = vunpack.c.l.bf16 %v1156
    %v1660 = vunpack.c.h.bf16 %v1156
    %v1661 = vunpack.c.l.bf16 %v1157
    %v1662 = vunpack.c.h.bf16 %v1157
    %v1663 = vunpack.c.l.bf16 %v1158
    %v1664 = vunpack.c.h.bf16 %v1158
    %v1665 = vunpack.c.l.bf16 %v1159
    %v1666 = vunpack.c.h.bf16 %v1159
    %v1667 = vunpack.c.l.bf16 %v1160
    %v1668 = vunpack.c.h.bf16 %v1160
    %v1669 = vunpack.c.l.bf16 %v1161
    %v1670 = vunpack.c.h.bf16 %v1161
    %v1671 = vunpack.c.l.bf16 %v1162
    %v1672 = vunpack.c.h.bf16 %v1162
    %v1673 = vunpack.c.l.bf16 %v1163
    %v1674 = vunpack.c.h.bf16 %v1163
    %v1675 = vunpack.c.l.bf16 %v1164
    %v1676 = vunpack.c.h.bf16 %v1164
    %v1677 = vunpack.c.l.bf16 %v1165
    %v1678 = vunpack.c.h.bf16 %v1165
    %v1679 = vunpack.c.l.bf16 %v1166
    %v1680 = vunpack.c.h.bf16 %v1166
    %v1681 = vunpack.c.l.bf16 %v1167
    %v1682 = vunpack.c.h.bf16 %v1167
    %v1683 = vunpack.c.l.bf16 %v1168
    %v1684 = vunpack.c.h.bf16 %v1168
    %v1689 = vperm.slane %v1169, 0
    %v1690 = vperm.slane %v1169, 4
    %v1691 = vperm.slane %v1170, 0
    %v1692 = vperm.slane %v1170, 4
    %v1693 = vperm.slane %v1171, 0
    %v1694 = vperm.slane %v1171, 4
    %v1695 = vperm.slane %v1172, 0
    %v1696 = vperm.slane %v1172, 4
    %v1705 = vperm.slane %v1689, 0
    %v1706 = vperm.slane %v1690, 0
    %v1707 = vperm.slane %v1691, 0
    %v1708 = vperm.slane %v1692, 0
    %v1709 = vperm.slane %v1693, 0
    %v1710 = vperm.slane %v1694, 0
    %v1711 = vperm.slane %v1695, 0
    %v1712 = vperm.slane %v1696, 0
    %1713 = vmatpush.msra.mxu0 %v1293
    %1714 = vmatpush.msra.mxu0 %v1285
    %1715 = vmatpush.msra.mxu0 %v1277
    %1716 = vmatpush.msra.mxu0 %v1269
    %1717 = vmatpush.msra.mxu0 %v1261
    %1718 = vmatpush.msra.mxu0 %v1253
    %1719 = vmatpush.msra.mxu0 %v1245
    %1720 = vmatpush.msra.mxu0 %v1237
    %1721 = vmatpush.msra.mxu0 %v1229
    %1722 = vmatpush.msra.mxu0 %v1221
    %1723 = vmatpush.msra.mxu0 %v1213
    %1724 = vmatpush.msra.mxu0 %v1205
    %1725 = vmatpush.msra.mxu0 %v1197
    %1726 = vmatpush.msra.mxu0 %v1189
    %1727 = vmatpush.msra.mxu0 %v1181
    %1728 = vmatpush.msra.mxu0 %v1173
    %1729 = vmatmul.f32.gmra.mxu0 %v905
    %v1730 = vpop.f32.mrf.mxu0
    %v1731 = vadd.f32 %v1705, %v1730
    %1732 = vdwg.mxu0
    %1733 = vmatpush.msra.mxu0 %v1421
    %1734 = vmatpush.msra.mxu0 %v1413
    %1735 = vmatpush.msra.mxu0 %v1405
    %1736 = vmatpush.msra.mxu0 %v1397
    %1737 = vmatpush.msra.mxu0 %v1389
    %1738 = vmatpush.msra.mxu0 %v1381
    %1739 = vmatpush.msra.mxu0 %v1373
    %1740 = vmatpush.msra.mxu0 %v1365
    %1741 = vmatpush.msra.mxu0 %v1357
    %1742 = vmatpush.msra.mxu0 %v1349
    %1743 = vmatpush.msra.mxu0 %v1341
    %1744 = vmatpush.msra.mxu0 %v1333
    %1745 = vmatpush.msra.mxu0 %v1325
    %1746 = vmatpush.msra.mxu0 %v1317
    %1747 = vmatpush.msra.mxu0 %v1309
    %1748 = vmatpush.msra.mxu0 %v1301
    %1749 = vmatmul.f32.gmra.mxu0 %v906
    %v1750 = vpop.f32.mrf.mxu0
    %v1751 = vadd.f32 %v1731, %v1750
    %1752 = vdwg.mxu0
    %1753 = vmatpush.msra.mxu0 %v1549
    %1754 = vmatpush.msra.mxu0 %v1541
    %1755 = vmatpush.msra.mxu0 %v1533
    %1756 = vmatpush.msra.mxu0 %v1525
    %1757 = vmatpush.msra.mxu0 %v1517
    %1758 = vmatpush.msra.mxu0 %v1509
    %1759 = vmatpush.msra.mxu0 %v1501
    %1760 = vmatpush.msra.mxu0 %v1493
    %1761 = vmatpush.msra.mxu0 %v1485
    %1762 = vmatpush.msra.mxu0 %v1477
    %1763 = vmatpush.msra.mxu0 %v1469
    %1764 = vmatpush.msra.mxu0 %v1461
    %1765 = vmatpush.msra.mxu0 %v1453
    %1766 = vmatpush.msra.mxu0 %v1445
    %1767 = vmatpush.msra.mxu0 %v1437
    %1768 = vmatpush.msra.mxu0 %v1429
    %1769 = vmatmul.f32.gmra.mxu0 %v907
    %v1770 = vpop.f32.mrf.mxu0
    %v1771 = vadd.f32 %v1751, %v1770
    %1772 = vdwg.mxu0
    %1773 = vmatpush.msra.mxu0 %v1677
    %1774 = vmatpush.msra.mxu0 %v1669
    %1775 = vmatpush.msra.mxu0 %v1661
    %1776 = vmatpush.msra.mxu0 %v1653
    %1777 = vmatpush.msra.mxu0 %v1645
    %1778 = vmatpush.msra.mxu0 %v1637
    %1779 = vmatpush.msra.mxu0 %v1629
    %1780 = vmatpush.msra.mxu0 %v1621
    %1781 = vmatpush.msra.mxu0 %v1613
    %1782 = vmatpush.msra.mxu0 %v1605
    %1783 = vmatpush.msra.mxu0 %v1597
    %1784 = vmatpush.msra.mxu0 %v1589
    %1785 = vmatpush.msra.mxu0 %v1581
    %1786 = vmatpush.msra.mxu0 %v1573
    %1787 = vmatpush.msra.mxu0 %v1565
    %1788 = vmatpush.msra.mxu0 %v1557
    %1789 = vmatmul.f32.gmra.mxu0 %v908
    %v1790 = vpop.f32.mrf.mxu0
    %v1791 = vadd.f32 %v1771, %v1790
    %1792 = vdwg.mxu0
    %1793 = vmatpush.msra.mxu0 %v1294
    %1794 = vmatpush.msra.mxu0 %v1286
    %1795 = vmatpush.msra.mxu0 %v1278
    %1796 = vmatpush.msra.mxu0 %v1270
    %1797 = vmatpush.msra.mxu0 %v1262
    %1798 = vmatpush.msra.mxu0 %v1254
    %1799 = vmatpush.msra.mxu0 %v1246
    %1800 = vmatpush.msra.mxu0 %v1238
    %1801 = vmatpush.msra.mxu0 %v1230
    %1802 = vmatpush.msra.mxu0 %v1222
    %1803 = vmatpush.msra.mxu0 %v1214
    %1804 = vmatpush.msra.mxu0 %v1206
    %1805 = vmatpush.msra.mxu0 %v1198
    %1806 = vmatpush.msra.mxu0 %v1190
    %1807 = vmatpush.msra.mxu0 %v1182
    %1808 = vmatpush.msra.mxu0 %v1174
    %1809 = vmatmul.f32.gmra.mxu0 %v905
    %v1810 = vpop.f32.mrf.mxu0
    %v1811 = vadd.f32 %v1706, %v1810
    %1812 = vdwg.mxu0
    %1813 = vmatpush.msra.mxu0 %v1422
    %1814 = vmatpush.msra.mxu0 %v1414
    %1815 = vmatpush.msra.mxu0 %v1406
    %1816 = vmatpush.msra.mxu0 %v1398
    %1817 = vmatpush.msra.mxu0 %v1390
    %1818 = vmatpush.msra.mxu0 %v1382
    %1819 = vmatpush.msra.mxu0 %v1374
    %1820 = vmatpush.msra.mxu0 %v1366
    %1821 = vmatpush.msra.mxu0 %v1358
    %1822 = vmatpush.msra.mxu0 %v1350
    %1823 = vmatpush.msra.mxu0 %v1342
    %1824 = vmatpush.msra.mxu0 %v1334
    %1825 = vmatpush.msra.mxu0 %v1326
    %1826 = vmatpush.msra.mxu0 %v1318
    %1827 = vmatpush.msra.mxu0 %v1310
    %1828 = vmatpush.msra.mxu0 %v1302
    %1829 = vmatmul.f32.gmra.mxu0 %v906
    %v1830 = vpop.f32.mrf.mxu0
    %v1831 = vadd.f32 %v1811, %v1830
    %1832 = vdwg.mxu0
    %1833 = vmatpush.msra.mxu0 %v1550
    %1834 = vmatpush.msra.mxu0 %v1542
    %1835 = vmatpush.msra.mxu0 %v1534
    %1836 = vmatpush.msra.mxu0 %v1526
    %1837 = vmatpush.msra.mxu0 %v1518
    %1838 = vmatpush.msra.mxu0 %v1510
    %1839 = vmatpush.msra.mxu0 %v1502
    %1840 = vmatpush.msra.mxu0 %v1494
    %1841 = vmatpush.msra.mxu0 %v1486
    %1842 = vmatpush.msra.mxu0 %v1478
    %1843 = vmatpush.msra.mxu0 %v1470
    %1844 = vmatpush.msra.mxu0 %v1462
    %1845 = vmatpush.msra.mxu0 %v1454
    %1846 = vmatpush.msra.mxu0 %v1446
    %1847 = vmatpush.msra.mxu0 %v1438
    %1848 = vmatpush.msra.mxu0 %v1430
    %1849 = vmatmul.f32.gmra.mxu0 %v907
    %v1850 = vpop.f32.mrf.mxu0
    %v1851 = vadd.f32 %v1831, %v1850
    %1852 = vdwg.mxu0
    %1853 = vmatpush.msra.mxu0 %v1678
    %1854 = vmatpush.msra.mxu0 %v1670
    %1855 = vmatpush.msra.mxu0 %v1662
    %1856 = vmatpush.msra.mxu0 %v1654
    %1857 = vmatpush.msra.mxu0 %v1646
    %1858 = vmatpush.msra.mxu0 %v1638
    %1859 = vmatpush.msra.mxu0 %v1630
    %1860 = vmatpush.msra.mxu0 %v1622
    %1861 = vmatpush.msra.mxu0 %v1614
    %1862 = vmatpush.msra.mxu0 %v1606
    %1863 = vmatpush.msra.mxu0 %v1598
    %1864 = vmatpush.msra.mxu0 %v1590
    %1865 = vmatpush.msra.mxu0 %v1582
    %1866 = vmatpush.msra.mxu0 %v1574
    %1867 = vmatpush.msra.mxu0 %v1566
    %1868 = vmatpush.msra.mxu0 %v1558
    %1869 = vmatmul.f32.gmra.mxu0 %v908
    %v1870 = vpop.f32.mrf.mxu0
    %v1871 = vadd.f32 %v1851, %v1870
    %1872 = vdwg.mxu0
    %1873 = vmatpush.msra.mxu0 %v1295
    %1874 = vmatpush.msra.mxu0 %v1287
    %1875 = vmatpush.msra.mxu0 %v1279
    %1876 = vmatpush.msra.mxu0 %v1271
    %1877 = vmatpush.msra.mxu0 %v1263
    %1878 = vmatpush.msra.mxu0 %v1255
    %1879 = vmatpush.msra.mxu0 %v1247
    %1880 = vmatpush.msra.mxu0 %v1239
    %1881 = vmatpush.msra.mxu0 %v1231
    %1882 = vmatpush.msra.mxu0 %v1223
    %1883 = vmatpush.msra.mxu0 %v1215
    %1884 = vmatpush.msra.mxu0 %v1207
    %1885 = vmatpush.msra.mxu0 %v1199
    %1886 = vmatpush.msra.mxu0 %v1191
    %1887 = vmatpush.msra.mxu0 %v1183
    %1888 = vmatpush.msra.mxu0 %v1175
    %1889 = vmatmul.f32.gmra.mxu0 %v905
    %v1890 = vpop.f32.mrf.mxu0
    %v1891 = vadd.f32 %v1707, %v1890
    %1892 = vdwg.mxu0
    %1893 = vmatpush.msra.mxu0 %v1423
    %1894 = vmatpush.msra.mxu0 %v1415
    %1895 = vmatpush.msra.mxu0 %v1407
    %1896 = vmatpush.msra.mxu0 %v1399
    %1897 = vmatpush.msra.mxu0 %v1391
    %1898 = vmatpush.msra.mxu0 %v1383
    %1899 = vmatpush.msra.mxu0 %v1375
    %1900 = vmatpush.msra.mxu0 %v1367
    %1901 = vmatpush.msra.mxu0 %v1359
    %1902 = vmatpush.msra.mxu0 %v1351
    %1903 = vmatpush.msra.mxu0 %v1343
    %1904 = vmatpush.msra.mxu0 %v1335
    %1905 = vmatpush.msra.mxu0 %v1327
    %1906 = vmatpush.msra.mxu0 %v1319
    %1907 = vmatpush.msra.mxu0 %v1311
    %1908 = vmatpush.msra.mxu0 %v1303
    %1909 = vmatmul.f32.gmra.mxu0 %v906
    %v1910 = vpop.f32.mrf.mxu0
    %v1911 = vadd.f32 %v1891, %v1910
    %1912 = vdwg.mxu0
    %1913 = vmatpush.msra.mxu0 %v1551
    %1914 = vmatpush.msra.mxu0 %v1543
    %1915 = vmatpush.msra.mxu0 %v1535
    %1916 = vmatpush.msra.mxu0 %v1527
    %1917 = vmatpush.msra.mxu0 %v1519
    %1918 = vmatpush.msra.mxu0 %v1511
    %1919 = vmatpush.msra.mxu0 %v1503
    %1920 = vmatpush.msra.mxu0 %v1495
    %1921 = vmatpush.msra.mxu0 %v1487
    %1922 = vmatpush.msra.mxu0 %v1479
    %1923 = vmatpush.msra.mxu0 %v1471
    %1924 = vmatpush.msra.mxu0 %v1463
    %1925 = vmatpush.msra.mxu0 %v1455
    %1926 = vmatpush.msra.mxu0 %v1447
    %1927 = vmatpush.msra.mxu0 %v1439
    %1928 = vmatpush.msra.mxu0 %v1431
    %1929 = vmatmul.f32.gmra.mxu0 %v907
    %v1930 = vpop.f32.mrf.mxu0
    %v1931 = vadd.f32 %v1911, %v1930
    %1932 = vdwg.mxu0
    %1933 = vmatpush.msra.mxu0 %v1679
    %1934 = vmatpush.msra.mxu0 %v1671
    %1935 = vmatpush.msra.mxu0 %v1663
    %1936 = vmatpush.msra.mxu0 %v1655
    %1937 = vmatpush.msra.mxu0 %v1647
    %1938 = vmatpush.msra.mxu0 %v1639
    %1939 = vmatpush.msra.mxu0 %v1631
    %1940 = vmatpush.msra.mxu0 %v1623
    %1941 = vmatpush.msra.mxu0 %v1615
    %1942 = vmatpush.msra.mxu0 %v1607
    %1943 = vmatpush.msra.mxu0 %v1599
    %1944 = vmatpush.msra.mxu0 %v1591
    %1945 = vmatpush.msra.mxu0 %v1583
    %1946 = vmatpush.msra.mxu0 %v1575
    %1947 = vmatpush.msra.mxu0 %v1567
    %1948 = vmatpush.msra.mxu0 %v1559
    %1949 = vmatmul.f32.gmra.mxu0 %v908
    %v1950 = vpop.f32.mrf.mxu0
    %v1951 = vadd.f32 %v1931, %v1950
    %1952 = vdwg.mxu0
    %1953 = vmatpush.msra.mxu0 %v1296
    %1954 = vmatpush.msra.mxu0 %v1288
    %1955 = vmatpush.msra.mxu0 %v1280
    %1956 = vmatpush.msra.mxu0 %v1272
    %1957 = vmatpush.msra.mxu0 %v1264
    %1958 = vmatpush.msra.mxu0 %v1256
    %1959 = vmatpush.msra.mxu0 %v1248
    %1960 = vmatpush.msra.mxu0 %v1240
    %1961 = vmatpush.msra.mxu0 %v1232
    %1962 = vmatpush.msra.mxu0 %v1224
    %1963 = vmatpush.msra.mxu0 %v1216
    %1964 = vmatpush.msra.mxu0 %v1208
    %1965 = vmatpush.msra.mxu0 %v1200
    %1966 = vmatpush.msra.mxu0 %v1192
    %1967 = vmatpush.msra.mxu0 %v1184
    %1968 = vmatpush.msra.mxu0 %v1176
    %1969 = vmatmul.f32.gmra.mxu0 %v905
    %v1970 = vpop.f32.mrf.mxu0
    %v1971 = vadd.f32 %v1708, %v1970
    %1972 = vdwg.mxu0
    %1973 = vmatpush.msra.mxu0 %v1424
    %1974 = vmatpush.msra.mxu0 %v1416
    %1975 = vmatpush.msra.mxu0 %v1408
    %1976 = vmatpush.msra.mxu0 %v1400
    %1977 = vmatpush.msra.mxu0 %v1392
    %1978 = vmatpush.msra.mxu0 %v1384
    %1979 = vmatpush.msra.mxu0 %v1376
    %1980 = vmatpush.msra.mxu0 %v1368
    %1981 = vmatpush.msra.mxu0 %v1360
    %1982 = vmatpush.msra.mxu0 %v1352
    %1983 = vmatpush.msra.mxu0 %v1344
    %1984 = vmatpush.msra.mxu0 %v1336
    %1985 = vmatpush.msra.mxu0 %v1328
    %1986 = vmatpush.msra.mxu0 %v1320
    %1987 = vmatpush.msra.mxu0 %v1312
    %1988 = vmatpush.msra.mxu0 %v1304
    %1989 = vmatmul.f32.gmra.mxu0 %v906
    %v1990 = vpop.f32.mrf.mxu0
    %v1991 = vadd.f32 %v1971, %v1990
    %1992 = vdwg.mxu0
    %1993 = vmatpush.msra.mxu0 %v1552
    %1994 = vmatpush.msra.mxu0 %v1544
    %1995 = vmatpush.msra.mxu0 %v1536
    %1996 = vmatpush.msra.mxu0 %v1528
    %1997 = vmatpush.msra.mxu0 %v1520
    %1998 = vmatpush.msra.mxu0 %v1512
    %1999 = vmatpush.msra.mxu0 %v1504
    %2000 = vmatpush.msra.mxu0 %v1496
    %2001 = vmatpush.msra.mxu0 %v1488
    %2002 = vmatpush.msra.mxu0 %v1480
    %2003 = vmatpush.msra.mxu0 %v1472
    %2004 = vmatpush.msra.mxu0 %v1464
    %2005 = vmatpush.msra.mxu0 %v1456
    %2006 = vmatpush.msra.mxu0 %v1448
    %2007 = vmatpush.msra.mxu0 %v1440
    %2008 = vmatpush.msra.mxu0 %v1432
    %2009 = vmatmul.f32.gmra.mxu0 %v907
    %v2010 = vpop.f32.mrf.mxu0
    %v2011 = vadd.f32 %v1991, %v2010
    %2012 = vdwg.mxu0
    %2013 = vmatpush.msra.mxu0 %v1680
    %2014 = vmatpush.msra.mxu0 %v1672
    %2015 = vmatpush.msra.mxu0 %v1664
    %2016 = vmatpush.msra.mxu0 %v1656
    %2017 = vmatpush.msra.mxu0 %v1648
    %2018 = vmatpush.msra.mxu0 %v1640
    %2019 = vmatpush.msra.mxu0 %v1632
    %2020 = vmatpush.msra.mxu0 %v1624
    %2021 = vmatpush.msra.mxu0 %v1616
    %2022 = vmatpush.msra.mxu0 %v1608
    %2023 = vmatpush.msra.mxu0 %v1600
    %2024 = vmatpush.msra.mxu0 %v1592
    %2025 = vmatpush.msra.mxu0 %v1584
    %2026 = vmatpush.msra.mxu0 %v1576
    %2027 = vmatpush.msra.mxu0 %v1568
    %2028 = vmatpush.msra.mxu0 %v1560
    %2029 = vmatmul.f32.gmra.mxu0 %v908
    %v2030 = vpop.f32.mrf.mxu0
    %v2031 = vadd.f32 %v2011, %v2030
    %2032 = vdwg.mxu0
    %2033 = vmatpush.msra.mxu0 %v1297
    %2034 = vmatpush.msra.mxu0 %v1289
    %2035 = vmatpush.msra.mxu0 %v1281
    %2036 = vmatpush.msra.mxu0 %v1273
    %2037 = vmatpush.msra.mxu0 %v1265
    %2038 = vmatpush.msra.mxu0 %v1257
    %2039 = vmatpush.msra.mxu0 %v1249
    %2040 = vmatpush.msra.mxu0 %v1241
    %2041 = vmatpush.msra.mxu0 %v1233
    %2042 = vmatpush.msra.mxu0 %v1225
    %2043 = vmatpush.msra.mxu0 %v1217
    %2044 = vmatpush.msra.mxu0 %v1209
    %2045 = vmatpush.msra.mxu0 %v1201
    %2046 = vmatpush.msra.mxu0 %v1193
    %2047 = vmatpush.msra.mxu0 %v1185
    %2048 = vmatpush.msra.mxu0 %v1177
    %2049 = vmatmul.f32.gmra.mxu0 %v905
    %v2050 = vpop.f32.mrf.mxu0
    %v2051 = vadd.f32 %v1709, %v2050
    %2052 = vdwg.mxu0
    %2053 = vmatpush.msra.mxu0 %v1425
    %2054 = vmatpush.msra.mxu0 %v1417
    %2055 = vmatpush.msra.mxu0 %v1409
    %2056 = vmatpush.msra.mxu0 %v1401
    %2057 = vmatpush.msra.mxu0 %v1393
    %2058 = vmatpush.msra.mxu0 %v1385
    %2059 = vmatpush.msra.mxu0 %v1377
    %2060 = vmatpush.msra.mxu0 %v1369
    %2061 = vmatpush.msra.mxu0 %v1361
    %2062 = vmatpush.msra.mxu0 %v1353
    %2063 = vmatpush.msra.mxu0 %v1345
    %2064 = vmatpush.msra.mxu0 %v1337
    %2065 = vmatpush.msra.mxu0 %v1329
    %2066 = vmatpush.msra.mxu0 %v1321
    %2067 = vmatpush.msra.mxu0 %v1313
    %2068 = vmatpush.msra.mxu0 %v1305
    %2069 = vmatmul.f32.gmra.mxu0 %v906
    %v2070 = vpop.f32.mrf.mxu0
    %v2071 = vadd.f32 %v2051, %v2070
    %2072 = vdwg.mxu0
    %2073 = vmatpush.msra.mxu0 %v1553
    %2074 = vmatpush.msra.mxu0 %v1545
    %2075 = vmatpush.msra.mxu0 %v1537
    %2076 = vmatpush.msra.mxu0 %v1529
    %2077 = vmatpush.msra.mxu0 %v1521
    %2078 = vmatpush.msra.mxu0 %v1513
    %2079 = vmatpush.msra.mxu0 %v1505
    %2080 = vmatpush.msra.mxu0 %v1497
    %2081 = vmatpush.msra.mxu0 %v1489
    %2082 = vmatpush.msra.mxu0 %v1481
    %2083 = vmatpush.msra.mxu0 %v1473
    %2084 = vmatpush.msra.mxu0 %v1465
    %2085 = vmatpush.msra.mxu0 %v1457
    %2086 = vmatpush.msra.mxu0 %v1449
    %2087 = vmatpush.msra.mxu0 %v1441
    %2088 = vmatpush.msra.mxu0 %v1433
    %2089 = vmatmul.f32.gmra.mxu0 %v907
    %v2090 = vpop.f32.mrf.mxu0
    %v2091 = vadd.f32 %v2071, %v2090
    %2092 = vdwg.mxu0
    %2093 = vmatpush.msra.mxu0 %v1681
    %2094 = vmatpush.msra.mxu0 %v1673
    %2095 = vmatpush.msra.mxu0 %v1665
    %2096 = vmatpush.msra.mxu0 %v1657
    %2097 = vmatpush.msra.mxu0 %v1649
    %2098 = vmatpush.msra.mxu0 %v1641
    %2099 = vmatpush.msra.mxu0 %v1633
    %2100 = vmatpush.msra.mxu0 %v1625
    %2101 = vmatpush.msra.mxu0 %v1617
    %2102 = vmatpush.msra.mxu0 %v1609
    %2103 = vmatpush.msra.mxu0 %v1601
    %2104 = vmatpush.msra.mxu0 %v1593
    %2105 = vmatpush.msra.mxu0 %v1585
    %2106 = vmatpush.msra.mxu0 %v1577
    %2107 = vmatpush.msra.mxu0 %v1569
    %2108 = vmatpush.msra.mxu0 %v1561
    %2109 = vmatmul.f32.gmra.mxu0 %v908
    %v2110 = vpop.f32.mrf.mxu0
    %v2111 = vadd.f32 %v2091, %v2110
    %2112 = vdwg.mxu0
    %2113 = vmatpush.msra.mxu0 %v1298
    %2114 = vmatpush.msra.mxu0 %v1290
    %2115 = vmatpush.msra.mxu0 %v1282
    %2116 = vmatpush.msra.mxu0 %v1274
    %2117 = vmatpush.msra.mxu0 %v1266
    %2118 = vmatpush.msra.mxu0 %v1258
    %2119 = vmatpush.msra.mxu0 %v1250
    %2120 = vmatpush.msra.mxu0 %v1242
    %2121 = vmatpush.msra.mxu0 %v1234
    %2122 = vmatpush.msra.mxu0 %v1226
    %2123 = vmatpush.msra.mxu0 %v1218
    %2124 = vmatpush.msra.mxu0 %v1210
    %2125 = vmatpush.msra.mxu0 %v1202
    %2126 = vmatpush.msra.mxu0 %v1194
    %2127 = vmatpush.msra.mxu0 %v1186
    %2128 = vmatpush.msra.mxu0 %v1178
    %2129 = vmatmul.f32.gmra.mxu0 %v905
    %v2130 = vpop.f32.mrf.mxu0
    %v2131 = vadd.f32 %v1710, %v2130
    %2132 = vdwg.mxu0
    %2133 = vmatpush.msra.mxu0 %v1426
    %2134 = vmatpush.msra.mxu0 %v1418
    %2135 = vmatpush.msra.mxu0 %v1410
    %2136 = vmatpush.msra.mxu0 %v1402
    %2137 = vmatpush.msra.mxu0 %v1394
    %2138 = vmatpush.msra.mxu0 %v1386
    %2139 = vmatpush.msra.mxu0 %v1378
    %2140 = vmatpush.msra.mxu0 %v1370
    %2141 = vmatpush.msra.mxu0 %v1362
    %2142 = vmatpush.msra.mxu0 %v1354
    %2143 = vmatpush.msra.mxu0 %v1346
    %2144 = vmatpush.msra.mxu0 %v1338
    %2145 = vmatpush.msra.mxu0 %v1330
    %2146 = vmatpush.msra.mxu0 %v1322
    %2147 = vmatpush.msra.mxu0 %v1314
    %2148 = vmatpush.msra.mxu0 %v1306
    %2149 = vmatmul.f32.gmra.mxu0 %v906
    %v2150 = vpop.f32.mrf.mxu0
    %v2151 = vadd.f32 %v2131, %v2150
    %2152 = vdwg.mxu0
    %2153 = vmatpush.msra.mxu0 %v1554
    %2154 = vmatpush.msra.mxu0 %v1546
    %2155 = vmatpush.msra.mxu0 %v1538
    %2156 = vmatpush.msra.mxu0 %v1530
    %2157 = vmatpush.msra.mxu0 %v1522
    %2158 = vmatpush.msra.mxu0 %v1514
    %2159 = vmatpush.msra.mxu0 %v1506
    %2160 = vmatpush.msra.mxu0 %v1498
    %2161 = vmatpush.msra.mxu0 %v1490
    %2162 = vmatpush.msra.mxu0 %v1482
    %2163 = vmatpush.msra.mxu0 %v1474
    %2164 = vmatpush.msra.mxu0 %v1466
    %2165 = vmatpush.msra.mxu0 %v1458
    %2166 = vmatpush.msra.mxu0 %v1450
    %2167 = vmatpush.msra.mxu0 %v1442
    %2168 = vmatpush.msra.mxu0 %v1434
    %2169 = vmatmul.f32.gmra.mxu0 %v907
    %v2170 = vpop.f32.mrf.mxu0
    %v2171 = vadd.f32 %v2151, %v2170
    %2172 = vdwg.mxu0
    %2173 = vmatpush.msra.mxu0 %v1682
    %2174 = vmatpush.msra.mxu0 %v1674
    %2175 = vmatpush.msra.mxu0 %v1666
    %2176 = vmatpush.msra.mxu0 %v1658
    %2177 = vmatpush.msra.mxu0 %v1650
    %2178 = vmatpush.msra.mxu0 %v1642
    %2179 = vmatpush.msra.mxu0 %v1634
    %2180 = vmatpush.msra.mxu0 %v1626
    %2181 = vmatpush.msra.mxu0 %v1618
    %2182 = vmatpush.msra.mxu0 %v1610
    %2183 = vmatpush.msra.mxu0 %v1602
    %2184 = vmatpush.msra.mxu0 %v1594
    %2185 = vmatpush.msra.mxu0 %v1586
    %2186 = vmatpush.msra.mxu0 %v1578
    %2187 = vmatpush.msra.mxu0 %v1570
    %2188 = vmatpush.msra.mxu0 %v1562
    %2189 = vmatmul.f32.gmra.mxu0 %v908
    %v2190 = vpop.f32.mrf.mxu0
    %v2191 = vadd.f32 %v2171, %v2190
    %2192 = vdwg.mxu0
    %2193 = vmatpush.msra.mxu0 %v1299
    %2194 = vmatpush.msra.mxu0 %v1291
    %2195 = vmatpush.msra.mxu0 %v1283
    %2196 = vmatpush.msra.mxu0 %v1275
    %2197 = vmatpush.msra.mxu0 %v1267
    %2198 = vmatpush.msra.mxu0 %v1259
    %2199 = vmatpush.msra.mxu0 %v1251
    %2200 = vmatpush.msra.mxu0 %v1243
    %2201 = vmatpush.msra.mxu0 %v1235
    %2202 = vmatpush.msra.mxu0 %v1227
    %2203 = vmatpush.msra.mxu0 %v1219
    %2204 = vmatpush.msra.mxu0 %v1211
    %2205 = vmatpush.msra.mxu0 %v1203
    %2206 = vmatpush.msra.mxu0 %v1195
    %2207 = vmatpush.msra.mxu0 %v1187
    %2208 = vmatpush.msra.mxu0 %v1179
    %2209 = vmatmul.f32.gmra.mxu0 %v905
    %v2210 = vpop.f32.mrf.mxu0
    %v2211 = vadd.f32 %v1711, %v2210
    %2212 = vdwg.mxu0
    %2213 = vmatpush.msra.mxu0 %v1427
    %2214 = vmatpush.msra.mxu0 %v1419
    %2215 = vmatpush.msra.mxu0 %v1411
    %2216 = vmatpush.msra.mxu0 %v1403
    %2217 = vmatpush.msra.mxu0 %v1395
    %2218 = vmatpush.msra.mxu0 %v1387
    %2219 = vmatpush.msra.mxu0 %v1379
    %2220 = vmatpush.msra.mxu0 %v1371
    %2221 = vmatpush.msra.mxu0 %v1363
    %2222 = vmatpush.msra.mxu0 %v1355
    %2223 = vmatpush.msra.mxu0 %v1347
    %2224 = vmatpush.msra.mxu0 %v1339
    %2225 = vmatpush.msra.mxu0 %v1331
    %2226 = vmatpush.msra.mxu0 %v1323
    %2227 = vmatpush.msra.mxu0 %v1315
    %2228 = vmatpush.msra.mxu0 %v1307
    %2229 = vmatmul.f32.gmra.mxu0 %v906
    %v2230 = vpop.f32.mrf.mxu0
    %v2231 = vadd.f32 %v2211, %v2230
    %2232 = vdwg.mxu0
    %2233 = vmatpush.msra.mxu0 %v1555
    %2234 = vmatpush.msra.mxu0 %v1547
    %2235 = vmatpush.msra.mxu0 %v1539
    %2236 = vmatpush.msra.mxu0 %v1531
    %2237 = vmatpush.msra.mxu0 %v1523
    %2238 = vmatpush.msra.mxu0 %v1515
    %2239 = vmatpush.msra.mxu0 %v1507
    %2240 = vmatpush.msra.mxu0 %v1499
    %2241 = vmatpush.msra.mxu0 %v1491
    %2242 = vmatpush.msra.mxu0 %v1483
    %2243 = vmatpush.msra.mxu0 %v1475
    %2244 = vmatpush.msra.mxu0 %v1467
    %2245 = vmatpush.msra.mxu0 %v1459
    %2246 = vmatpush.msra.mxu0 %v1451
    %2247 = vmatpush.msra.mxu0 %v1443
    %2248 = vmatpush.msra.mxu0 %v1435
    %2249 = vmatmul.f32.gmra.mxu0 %v907
    %v2250 = vpop.f32.mrf.mxu0
    %v2251 = vadd.f32 %v2231, %v2250
    %2252 = vdwg.mxu0
    %2253 = vmatpush.msra.mxu0 %v1683
    %2254 = vmatpush.msra.mxu0 %v1675
    %2255 = vmatpush.msra.mxu0 %v1667
    %2256 = vmatpush.msra.mxu0 %v1659
    %2257 = vmatpush.msra.mxu0 %v1651
    %2258 = vmatpush.msra.mxu0 %v1643
    %2259 = vmatpush.msra.mxu0 %v1635
    %2260 = vmatpush.msra.mxu0 %v1627
    %2261 = vmatpush.msra.mxu0 %v1619
    %2262 = vmatpush.msra.mxu0 %v1611
    %2263 = vmatpush.msra.mxu0 %v1603
    %2264 = vmatpush.msra.mxu0 %v1595
    %2265 = vmatpush.msra.mxu0 %v1587
    %2266 = vmatpush.msra.mxu0 %v1579
    %2267 = vmatpush.msra.mxu0 %v1571
    %2268 = vmatpush.msra.mxu0 %v1563
    %2269 = vmatmul.f32.gmra.mxu0 %v908
    %v2270 = vpop.f32.mrf.mxu0
    %v2271 = vadd.f32 %v2251, %v2270
    %2272 = vdwg.mxu0
    %2273 = vmatpush.msra.mxu0 %v1300
    %2274 = vmatpush.msra.mxu0 %v1292
    %2275 = vmatpush.msra.mxu0 %v1284
    %2276 = vmatpush.msra.mxu0 %v1276
    %2277 = vmatpush.msra.mxu0 %v1268
    %2278 = vmatpush.msra.mxu0 %v1260
    %2279 = vmatpush.msra.mxu0 %v1252
    %2280 = vmatpush.msra.mxu0 %v1244
    %2281 = vmatpush.msra.mxu0 %v1236
    %2282 = vmatpush.msra.mxu0 %v1228
    %2283 = vmatpush.msra.mxu0 %v1220
    %2284 = vmatpush.msra.mxu0 %v1212
    %2285 = vmatpush.msra.mxu0 %v1204
    %2286 = vmatpush.msra.mxu0 %v1196
    %2287 = vmatpush.msra.mxu0 %v1188
    %2288 = vmatpush.msra.mxu0 %v1180
    %2289 = vmatmul.f32.gmra.mxu0 %v905
    %v2290 = vpop.f32.mrf.mxu0
    %v2291 = vadd.f32 %v1712, %v2290
    %2292 = vdwg.mxu0
    %2293 = vmatpush.msra.mxu0 %v1428
    %2294 = vmatpush.msra.mxu0 %v1420
    %2295 = vmatpush.msra.mxu0 %v1412
    %2296 = vmatpush.msra.mxu0 %v1404
    %2297 = vmatpush.msra.mxu0 %v1396
    %2298 = vmatpush.msra.mxu0 %v1388
    %2299 = vmatpush.msra.mxu0 %v1380
    %2300 = vmatpush.msra.mxu0 %v1372
    %2301 = vmatpush.msra.mxu0 %v1364
    %2302 = vmatpush.msra.mxu0 %v1356
    %2303 = vmatpush.msra.mxu0 %v1348
    %2304 = vmatpush.msra.mxu0 %v1340
    %2305 = vmatpush.msra.mxu0 %v1332
    %2306 = vmatpush.msra.mxu0 %v1324
    %2307 = vmatpush.msra.mxu0 %v1316
    %2308 = vmatpush.msra.mxu0 %v1308
    %2309 = vmatmul.f32.gmra.mxu0 %v906
    %v2310 = vpop.f32.mrf.mxu0
    %v2311 = vadd.f32 %v2291, %v2310
    %2312 = vdwg.mxu0
    %2313 = vmatpush.msra.mxu0 %v1556
    %2314 = vmatpush.msra.mxu0 %v1548
    %2315 = vmatpush.msra.mxu0 %v1540
    %2316 = vmatpush.msra.mxu0 %v1532
    %2317 = vmatpush.msra.mxu0 %v1524
    %2318 = vmatpush.msra.mxu0 %v1516
    %2319 = vmatpush.msra.mxu0 %v1508
    %2320 = vmatpush.msra.mxu0 %v1500
    %2321 = vmatpush.msra.mxu0 %v1492
    %2322 = vmatpush.msra.mxu0 %v1484
    %2323 = vmatpush.msra.mxu0 %v1476
    %2324 = vmatpush.msra.mxu0 %v1468
    %2325 = vmatpush.msra.mxu0 %v1460
    %2326 = vmatpush.msra.mxu0 %v1452
    %2327 = vmatpush.msra.mxu0 %v1444
    %2328 = vmatpush.msra.mxu0 %v1436
    %2329 = vmatmul.f32.gmra.mxu0 %v907
    %v2330 = vpop.f32.mrf.mxu0
    %v2331 = vadd.f32 %v2311, %v2330
    %2332 = vdwg.mxu0
    %2333 = vmatpush.msra.mxu0 %v1684
    %2334 = vmatpush.msra.mxu0 %v1676
    %2335 = vmatpush.msra.mxu0 %v1668
    %2336 = vmatpush.msra.mxu0 %v1660
    %2337 = vmatpush.msra.mxu0 %v1652
    %2338 = vmatpush.msra.mxu0 %v1644
    %2339 = vmatpush.msra.mxu0 %v1636
    %2340 = vmatpush.msra.mxu0 %v1628
    %2341 = vmatpush.msra.mxu0 %v1620
    %2342 = vmatpush.msra.mxu0 %v1612
    %2343 = vmatpush.msra.mxu0 %v1604
    %2344 = vmatpush.msra.mxu0 %v1596
    %2345 = vmatpush.msra.mxu0 %v1588
    %2346 = vmatpush.msra.mxu0 %v1580
    %2347 = vmatpush.msra.mxu0 %v1572
    %2348 = vmatpush.msra.mxu0 %v1564
    %2349 = vmatmul.f32.gmra.mxu0 %v908
    %v2350 = vpop.f32.mrf.mxu0
    %v2351 = vadd.f32 %v2331, %v2350
    %2352 = vdwg.mxu0
    %vm2353 = vcmp.gt.f32.partialorder %v1791, 0.0
    %vm2354 = vcmp.gt.f32.partialorder %v1871, 0.0
    %vm2355 = vcmp.gt.f32.partialorder %v1951, 0.0
    %vm2356 = vcmp.gt.f32.partialorder %v2031, 0.0
    %vm2357 = vcmp.gt.f32.partialorder %v2111, 0.0
    %vm2358 = vcmp.gt.f32.partialorder %v2191, 0.0
    %vm2359 = vcmp.gt.f32.partialorder %v2271, 0.0
    %vm2360 = vcmp.gt.f32.partialorder %v2351, 0.0
    %v2361 = vmul.f32 %v1791, 0.2
    %v2362 = vmul.f32 %v1871, 0.2
    %v2363 = vmul.f32 %v1951, 0.2
    %v2364 = vmul.f32 %v2031, 0.2
    %v2365 = vmul.f32 %v2111, 0.2
    %v2366 = vmul.f32 %v2191, 0.2
    %v2367 = vmul.f32 %v2271, 0.2
    %v2368 = vmul.f32 %v2351, 0.2
    %v2369 = vsel %vm2353, %v1791, %v2361
    %v2370 = vsel %vm2354, %v1871, %v2362
    %v2371 = vsel %vm2355, %v1951, %v2363
    %v2372 = vsel %vm2356, %v2031, %v2364
    %v2373 = vsel %vm2357, %v2111, %v2365
    %v2374 = vsel %vm2358, %v2191, %v2366
    %v2375 = vsel %vm2359, %v2271, %v2367
    %v2376 = vsel %vm2360, %v2351, %v2368
    %v2377 = vrot.slane %v2369, 4
    %v2378 = vadd.f32 %v2369, %v2377
    %v2379 = vrot.slane %v2378, 2
    %v2380 = vadd.f32 %v2378, %v2379
    %v2381 = vrot.slane %v2380, 1
    %v2382 = vadd.f32 %v2380, %v2381
    %v2383 = vrot.slane %v2370, 4
    %v2384 = vadd.f32 %v2370, %v2383
    %v2385 = vrot.slane %v2384, 2
    %v2386 = vadd.f32 %v2384, %v2385
    %v2387 = vrot.slane %v2386, 1
    %v2388 = vadd.f32 %v2386, %v2387
    %v2389 = vrot.slane %v2371, 4
    %v2390 = vadd.f32 %v2371, %v2389
    %v2391 = vrot.slane %v2390, 2
    %v2392 = vadd.f32 %v2390, %v2391
    %v2393 = vrot.slane %v2392, 1
    %v2394 = vadd.f32 %v2392, %v2393
    %v2395 = vrot.slane %v2372, 4
    %v2396 = vadd.f32 %v2372, %v2395
    %v2397 = vrot.slane %v2396, 2
    %v2398 = vadd.f32 %v2396, %v2397
    %v2399 = vrot.slane %v2398, 1
    %v2400 = vadd.f32 %v2398, %v2399
    %v2401 = vrot.slane %v2373, 4
    %v2402 = vadd.f32 %v2373, %v2401
    %v2403 = vrot.slane %v2402, 2
    %v2404 = vadd.f32 %v2402, %v2403
    %v2405 = vrot.slane %v2404, 1
    %v2406 = vadd.f32 %v2404, %v2405
    %v2407 = vrot.slane %v2374, 4
    %v2408 = vadd.f32 %v2374, %v2407
    %v2409 = vrot.slane %v2408, 2
    %v2410 = vadd.f32 %v2408, %v2409
    %v2411 = vrot.slane %v2410, 1
    %v2412 = vadd.f32 %v2410, %v2411
    %v2413 = vrot.slane %v2375, 4
    %v2414 = vadd.f32 %v2375, %v2413
    %v2415 = vrot.slane %v2414, 2
    %v2416 = vadd.f32 %v2414, %v2415
    %v2417 = vrot.slane %v2416, 1
    %v2418 = vadd.f32 %v2416, %v2417
    %v2419 = vrot.slane %v2376, 4
    %v2420 = vadd.f32 %v2376, %v2419
    %v2421 = vrot.slane %v2420, 2
    %v2422 = vadd.f32 %v2420, %v2421
    %v2423 = vrot.slane %v2422, 1
    %v2424 = vadd.f32 %v2422, %v2423
    %v2425 = vmul.f32 %v2369, %v2369
    %v2426 = vmul.f32 %v2370, %v2370
    %v2427 = vmul.f32 %v2371, %v2371
    %v2428 = vmul.f32 %v2372, %v2372
    %v2429 = vmul.f32 %v2373, %v2373
    %v2430 = vmul.f32 %v2374, %v2374
    %v2431 = vmul.f32 %v2375, %v2375
    %v2432 = vmul.f32 %v2376, %v2376
    %v2433 = vrot.slane %v2425, 4
    %v2434 = vadd.f32 %v2425, %v2433
    %v2435 = vrot.slane %v2434, 2
    %v2436 = vadd.f32 %v2434, %v2435
    %v2437 = vrot.slane %v2436, 1
    %v2438 = vadd.f32 %v2436, %v2437
    %v2439 = vrot.slane %v2426, 4
    %v2440 = vadd.f32 %v2426, %v2439
    %v2441 = vrot.slane %v2440, 2
    %v2442 = vadd.f32 %v2440, %v2441
    %v2443 = vrot.slane %v2442, 1
    %v2444 = vadd.f32 %v2442, %v2443
    %v2445 = vrot.slane %v2427, 4
    %v2446 = vadd.f32 %v2427, %v2445
    %v2447 = vrot.slane %v2446, 2
    %v2448 = vadd.f32 %v2446, %v2447
    %v2449 = vrot.slane %v2448, 1
    %v2450 = vadd.f32 %v2448, %v2449
    %v2451 = vrot.slane %v2428, 4
    %v2452 = vadd.f32 %v2428, %v2451
    %v2453 = vrot.slane %v2452, 2
    %v2454 = vadd.f32 %v2452, %v2453
    %v2455 = vrot.slane %v2454, 1
    %v2456 = vadd.f32 %v2454, %v2455
    %v2457 = vrot.slane %v2429, 4
    %v2458 = vadd.f32 %v2429, %v2457
    %v2459 = vrot.slane %v2458, 2
    %v2460 = vadd.f32 %v2458, %v2459
    %v2461 = vrot.slane %v2460, 1
    %v2462 = vadd.f32 %v2460, %v2461
    %v2463 = vrot.slane %v2430, 4
    %v2464 = vadd.f32 %v2430, %v2463
    %v2465 = vrot.slane %v2464, 2
    %v2466 = vadd.f32 %v2464, %v2465
    %v2467 = vrot.slane %v2466, 1
    %v2468 = vadd.f32 %v2466, %v2467
    %v2469 = vrot.slane %v2431, 4
    %v2470 = vadd.f32 %v2431, %v2469
    %v2471 = vrot.slane %v2470, 2
    %v2472 = vadd.f32 %v2470, %v2471
    %v2473 = vrot.slane %v2472, 1
    %v2474 = vadd.f32 %v2472, %v2473
    %v2475 = vrot.slane %v2432, 4
    %v2476 = vadd.f32 %v2432, %v2475
    %v2477 = vrot.slane %v2476, 2
    %v2478 = vadd.f32 %v2476, %v2477
    %v2479 = vrot.slane %v2478, 1
    %v2480 = vadd.f32 %v2478, %v2479
    %v2481 = vmul.f32 %v2382, 0.125
    %v2482 = vmul.f32 %v2388, 0.125
    %v2483 = vmul.f32 %v2394, 0.125
    %v2484 = vmul.f32 %v2400, 0.125
    %v2485 = vmul.f32 %v2406, 0.125
    %v2486 = vmul.f32 %v2412, 0.125
    %v2487 = vmul.f32 %v2418, 0.125
    %v2488 = vmul.f32 %v2424, 0.125
    %v2489 = vmul.f32 %v2438, 0.125
    %v2490 = vmul.f32 %v2444, 0.125
    %v2491 = vmul.f32 %v2450, 0.125
    %v2492 = vmul.f32 %v2456, 0.125
    %v2493 = vmul.f32 %v2462, 0.125
    %v2494 = vmul.f32 %v2468, 0.125
    %v2495 = vmul.f32 %v2474, 0.125
    %v2496 = vmul.f32 %v2480, 0.125
    %v2497 = vmul.f32 %v2481, %v2481
    %v2498 = vmul.f32 %v2482, %v2482
    %v2499 = vmul.f32 %v2483, %v2483
    %v2500 = vmul.f32 %v2484, %v2484
    %v2501 = vmul.f32 %v2485, %v2485
    %v2502 = vmul.f32 %v2486, %v2486
    %v2503 = vmul.f32 %v2487, %v2487
    %v2504 = vmul.f32 %v2488, %v2488
    %v2505 = vsub.f32 %v2489, %v2497
    %v2506 = vsub.f32 %v2490, %v2498
    %v2507 = vsub.f32 %v2491, %v2499
    %v2508 = vsub.f32 %v2492, %v2500
    %v2509 = vsub.f32 %v2493, %v2501
    %v2510 = vsub.f32 %v2494, %v2502
    %v2511 = vsub.f32 %v2495, %v2503
    %v2512 = vsub.f32 %v2496, %v2504
    %v2513 = vmax.f32 %v2505, 0.0
    %v2514 = vmax.f32 %v2506, 0.0
    %v2515 = vmax.f32 %v2507, 0.0
    %v2516 = vmax.f32 %v2508, 0.0
    %v2517 = vmax.f32 %v2509, 0.0
    %v2518 = vmax.f32 %v2510, 0.0
    %v2519 = vmax.f32 %v2511, 0.0
    %v2520 = vmax.f32 %v2512, 0.0
    %v2521 = vadd.f32 %v2513, 1e-05
    %v2522 = vadd.f32 %v2514, 1e-05
    %v2523 = vadd.f32 %v2515, 1e-05
    %v2524 = vadd.f32 %v2516, 1e-05
    %v2525 = vadd.f32 %v2517, 1e-05
    %v2526 = vadd.f32 %v2518, 1e-05
    %v2527 = vadd.f32 %v2519, 1e-05
    %v2528 = vadd.f32 %v2520, 1e-05
    %v2529 = vrsqrt.pop %v2521
    %v2530 = vmul.f32 %v2529, %v2521
    %v2531 = vmul.f32 %v2530, %v2529
    %v2532 = vmul.f32 0.5, %v2531
    %v2533 = vsub.f32 1.5, %v2532
    %v2534 = vmul.f32 %v2529, %v2533
    %vm2535 = vweird.f32 %v2521
    %vm2536 = vweird.f32 %v2529
    %vm2537 = vmor %vm2535, %vm2536
    %v2538 = vsel %vm2537, %v2529, %v2534
    %v2539 = vrsqrt.pop %v2522
    %v2540 = vmul.f32 %v2539, %v2522
    %v2541 = vmul.f32 %v2540, %v2539
    %v2542 = vmul.f32 0.5, %v2541
    %v2543 = vsub.f32 1.5, %v2542
    %v2544 = vmul.f32 %v2539, %v2543
    %vm2545 = vweird.f32 %v2522
    %vm2546 = vweird.f32 %v2539
    %vm2547 = vmor %vm2545, %vm2546
    %v2548 = vsel %vm2547, %v2539, %v2544
    %v2549 = vrsqrt.pop %v2523
    %v2550 = vmul.f32 %v2549, %v2523
    %v2551 = vmul.f32 %v2550, %v2549
    %v2552 = vmul.f32 0.5, %v2551
    %v2553 = vsub.f32 1.5, %v2552
    %v2554 = vmul.f32 %v2549, %v2553
    %vm2555 = vweird.f32 %v2523
    %vm2556 = vweird.f32 %v2549
    %vm2557 = vmor %vm2555, %vm2556
    %v2558 = vsel %vm2557, %v2549, %v2554
    %v2559 = vrsqrt.pop %v2524
    %v2560 = vmul.f32 %v2559, %v2524
    %v2561 = vmul.f32 %v2560, %v2559
    %v2562 = vmul.f32 0.5, %v2561
    %v2563 = vsub.f32 1.5, %v2562
    %v2564 = vmul.f32 %v2559, %v2563
    %vm2565 = vweird.f32 %v2524
    %vm2566 = vweird.f32 %v2559
    %vm2567 = vmor %vm2565, %vm2566
    %v2568 = vsel %vm2567, %v2559, %v2564
    %v2569 = vrsqrt.pop %v2525
    %v2570 = vmul.f32 %v2569, %v2525
    %v2571 = vmul.f32 %v2570, %v2569
    %v2572 = vmul.f32 0.5, %v2571
    %v2573 = vsub.f32 1.5, %v2572
    %v2574 = vmul.f32 %v2569, %v2573
    %vm2575 = vweird.f32 %v2525
    %vm2576 = vweird.f32 %v2569
    %vm2577 = vmor %vm2575, %vm2576
    %v2578 = vsel %vm2577, %v2569, %v2574
    %v2579 = vrsqrt.pop %v2526
    %v2580 = vmul.f32 %v2579, %v2526
    %v2581 = vmul.f32 %v2580, %v2579
    %v2582 = vmul.f32 0.5, %v2581
    %v2583 = vsub.f32 1.5, %v2582
    %v2584 = vmul.f32 %v2579, %v2583
    %vm2585 = vweird.f32 %v2526
    %vm2586 = vweird.f32 %v2579
    %vm2587 = vmor %vm2585, %vm2586
    %v2588 = vsel %vm2587, %v2579, %v2584
    %v2589 = vrsqrt.pop %v2527
    %v2590 = vmul.f32 %v2589, %v2527
    %v2591 = vmul.f32 %v2590, %v2589
    %v2592 = vmul.f32 0.5, %v2591
    %v2593 = vsub.f32 1.5, %v2592
    %v2594 = vmul.f32 %v2589, %v2593
    %vm2595 = vweird.f32 %v2527
    %vm2596 = vweird.f32 %v2589
    %vm2597 = vmor %vm2595, %vm2596
    %v2598 = vsel %vm2597, %v2589, %v2594
    %v2599 = vrsqrt.pop %v2528
    %v2600 = vmul.f32 %v2599, %v2528
    %v2601 = vmul.f32 %v2600, %v2599
    %v2602 = vmul.f32 0.5, %v2601
    %v2603 = vsub.f32 1.5, %v2602
    %v2604 = vmul.f32 %v2599, %v2603
    %vm2605 = vweird.f32 %v2528
    %vm2606 = vweird.f32 %v2599
    %vm2607 = vmor %vm2605, %vm2606
    %v2608 = vsel %vm2607, %v2599, %v2604
    %v2617 = vrot.slane %v2548, 4
    %v2618 = vrot.slane %v2568, 4
    %v2619 = vrot.slane %v2588, 4
    %v2620 = vrot.slane %v2608, 4
    %v2621 = vsel %vm313, %v2538, %v2617
    %v2622 = vsel %vm313, %v2558, %v2618
    %v2623 = vsel %vm313, %v2578, %v2619
    %v2624 = vsel %vm313, %v2598, %v2620
    %v2625 = vrot.slane %v2621, 7
    %v2626 = vrot.slane %v2622, 7
    %v2627 = vrot.slane %v2623, 7
    %v2628 = vrot.slane %v2624, 7
    %v2633 = vmul.f32 %v1169, %v2625
    %v2634 = vmul.f32 %v1170, %v2626
    %v2635 = vmul.f32 %v1171, %v2627
    %v2636 = vmul.f32 %v1172, %v2628
    %v2641 = vperm.slane %v2633, 1
    %v2642 = vperm.slane %v2633, 5
    %v2643 = vperm.slane %v2634, 1
    %v2644 = vperm.slane %v2634, 5
    %v2645 = vperm.slane %v2635, 1
    %v2646 = vperm.slane %v2635, 5
    %v2647 = vperm.slane %v2636, 1
    %v2648 = vperm.slane %v2636, 5
    %v2657 = vmul.f32 %v2481, %v2641
    %v2658 = vmul.f32 %v2482, %v2642
    %v2659 = vmul.f32 %v2483, %v2643
    %v2660 = vmul.f32 %v2484, %v2644
    %v2661 = vmul.f32 %v2485, %v2645
    %v2662 = vmul.f32 %v2486, %v2646
    %v2663 = vmul.f32 %v2487, %v2647
    %v2664 = vmul.f32 %v2488, %v2648
    %v2673 = vrot.slane %v2658, 4
    %v2674 = vrot.slane %v2660, 4
    %v2675 = vrot.slane %v2662, 4
    %v2676 = vrot.slane %v2664, 4
    %v2677 = vsel %vm313, %v2657, %v2673
    %v2678 = vsel %vm313, %v2659, %v2674
    %v2679 = vsel %vm313, %v2661, %v2675
    %v2680 = vsel %vm313, %v2663, %v2676
    %v2681 = vrot.slane %v2677, 6
    %v2682 = vrot.slane %v2678, 6
    %v2683 = vrot.slane %v2679, 6
    %v2684 = vrot.slane %v2680, 6
    %v2689 = vsub.f32 %v1169, %v2681
    %v2690 = vsub.f32 %v1170, %v2682
    %v2691 = vsub.f32 %v1171, %v2683
    %v2692 = vsub.f32 %v1172, %v2684
    %v2693 = vperm.slane %v2641, 1
    %v2694 = vperm.slane %v2642, 1
    %v2695 = vperm.slane %v2643, 1
    %v2696 = vperm.slane %v2644, 1
    %v2697 = vperm.slane %v2645, 1
    %v2698 = vperm.slane %v2646, 1
    %v2699 = vperm.slane %v2647, 1
    %v2700 = vperm.slane %v2648, 1
    %v2701 = vmul.f32 %v2369, %v2693
    %v2702 = vmul.f32 %v2370, %v2694
    %v2703 = vmul.f32 %v2371, %v2695
    %v2704 = vmul.f32 %v2372, %v2696
    %v2705 = vmul.f32 %v2373, %v2697
    %v2706 = vmul.f32 %v2374, %v2698
    %v2707 = vmul.f32 %v2375, %v2699
    %v2708 = vmul.f32 %v2376, %v2700
    %v2713 = vperm.slane %v2689, 2
    %v2714 = vperm.slane %v2689, 6
    %v2715 = vperm.slane %v2690, 2
    %v2716 = vperm.slane %v2690, 6
    %v2717 = vperm.slane %v2691, 2
    %v2718 = vperm.slane %v2691, 6
    %v2719 = vperm.slane %v2692, 2
    %v2720 = vperm.slane %v2692, 6
    %v2729 = vperm.slane %v2713, 2
    %v2730 = vperm.slane %v2714, 2
    %v2731 = vperm.slane %v2715, 2
    %v2732 = vperm.slane %v2716, 2
    %v2733 = vperm.slane %v2717, 2
    %v2734 = vperm.slane %v2718, 2
    %v2735 = vperm.slane %v2719, 2
    %v2736 = vperm.slane %v2720, 2
    %v2737 = vadd.f32 %v2701, %v2729
    %v2738 = vadd.f32 %v2702, %v2730
    %v2739 = vadd.f32 %v2703, %v2731
    %v2740 = vadd.f32 %v2704, %v2732
    %v2741 = vadd.f32 %v2705, %v2733
    %v2742 = vadd.f32 %v2706, %v2734
    %v2743 = vadd.f32 %v2707, %v2735
    %v2744 = vadd.f32 %v2708, %v2736
    %s2745 = smul.u32 4, 128
    %s2746 = smul.u32 %s2745, 16
    %s2747 = sshll.u32 %s2746, 4
    %2748 = dma.done %s135, %s2747
    %v2749 = vld [vmem:[#allocation3] sm:$0xff]
    %v2750 = vld [vmem:[#allocation3 + $0x8] sm:$0xff]
    %v2751 = vld [vmem:[#allocation3 + $0x10] sm:$0xff]
    %v2752 = vld [vmem:[#allocation3 + $0x18] sm:$0xff]
    %v2753 = vld [vmem:[#allocation3 + $0x20] sm:$0xff]
    %v2754 = vld [vmem:[#allocation3 + $0x28] sm:$0xff]
    %v2755 = vld [vmem:[#allocation3 + $0x30] sm:$0xff]
    %v2756 = vld [vmem:[#allocation3 + $0x38] sm:$0xff]
    %v2757 = vld [vmem:[#allocation3 + $0x40] sm:$0xff]
    %v2758 = vld [vmem:[#allocation3 + $0x48] sm:$0xff]
    %v2759 = vld [vmem:[#allocation3 + $0x50] sm:$0xff]
    %v2760 = vld [vmem:[#allocation3 + $0x58] sm:$0xff]
    %v2761 = vld [vmem:[#allocation3 + $0x60] sm:$0xff]
    %v2762 = vld [vmem:[#allocation3 + $0x68] sm:$0xff]
    %v2763 = vld [vmem:[#allocation3 + $0x70] sm:$0xff]
    %v2764 = vld [vmem:[#allocation3 + $0x78] sm:$0xff]
    %v2765 = vld [vmem:[#allocation3 + $0x80] sm:$0xff]
    %v2766 = vld [vmem:[#allocation3 + $0x88] sm:$0xff]
    %v2767 = vld [vmem:[#allocation3 + $0x90] sm:$0xff]
    %v2768 = vld [vmem:[#allocation3 + $0x98] sm:$0xff]
    %v2769 = vld [vmem:[#allocation3 + $0xa0] sm:$0xff]
    %v2770 = vld [vmem:[#allocation3 + $0xa8] sm:$0xff]
    %v2771 = vld [vmem:[#allocation3 + $0xb0] sm:$0xff]
    %v2772 = vld [vmem:[#allocation3 + $0xb8] sm:$0xff]
    %v2773 = vld [vmem:[#allocation3 + $0xc0] sm:$0xff]
    %v2774 = vld [vmem:[#allocation3 + $0xc8] sm:$0xff]
    %v2775 = vld [vmem:[#allocation3 + $0xd0] sm:$0xff]
    %v2776 = vld [vmem:[#allocation3 + $0xd8] sm:$0xff]
    %v2777 = vld [vmem:[#allocation3 + $0xe0] sm:$0xff]
    %v2778 = vld [vmem:[#allocation3 + $0xe8] sm:$0xff]
    %v2779 = vld [vmem:[#allocation3 + $0xf0] sm:$0xff]
    %v2780 = vld [vmem:[#allocation3 + $0xf8] sm:$0xff]
    %v2781 = vld [vmem:[#allocation3 + $0x100] sm:$0xff]
    %v2782 = vld [vmem:[#allocation3 + $0x108] sm:$0xff]
    %v2783 = vld [vmem:[#allocation3 + $0x110] sm:$0xff]
    %v2784 = vld [vmem:[#allocation3 + $0x118] sm:$0xff]
    %v2785 = vld [vmem:[#allocation3 + $0x120] sm:$0xff]
    %v2786 = vld [vmem:[#allocation3 + $0x128] sm:$0xff]
    %v2787 = vld [vmem:[#allocation3 + $0x130] sm:$0xff]
    %v2788 = vld [vmem:[#allocation3 + $0x138] sm:$0xff]
    %v2789 = vld [vmem:[#allocation3 + $0x140] sm:$0xff]
    %v2790 = vld [vmem:[#allocation3 + $0x148] sm:$0xff]
    %v2791 = vld [vmem:[#allocation3 + $0x150] sm:$0xff]
    %v2792 = vld [vmem:[#allocation3 + $0x158] sm:$0xff]
    %v2793 = vld [vmem:[#allocation3 + $0x160] sm:$0xff]
    %v2794 = vld [vmem:[#allocation3 + $0x168] sm:$0xff]
    %v2795 = vld [vmem:[#allocation3 + $0x170] sm:$0xff]
    %v2796 = vld [vmem:[#allocation3 + $0x178] sm:$0xff]
    %v2797 = vld [vmem:[#allocation3 + $0x180] sm:$0xff]
    %v2798 = vld [vmem:[#allocation3 + $0x188] sm:$0xff]
    %v2799 = vld [vmem:[#allocation3 + $0x190] sm:$0xff]
    %v2800 = vld [vmem:[#allocation3 + $0x198] sm:$0xff]
    %v2801 = vld [vmem:[#allocation3 + $0x1a0] sm:$0xff]
    %v2802 = vld [vmem:[#allocation3 + $0x1a8] sm:$0xff]
    %v2803 = vld [vmem:[#allocation3 + $0x1b0] sm:$0xff]
    %v2804 = vld [vmem:[#allocation3 + $0x1b8] sm:$0xff]
    %v2805 = vld [vmem:[#allocation3 + $0x1c0] sm:$0xff]
    %v2806 = vld [vmem:[#allocation3 + $0x1c8] sm:$0xff]
    %v2807 = vld [vmem:[#allocation3 + $0x1d0] sm:$0xff]
    %v2808 = vld [vmem:[#allocation3 + $0x1d8] sm:$0xff]
    %v2809 = vld [vmem:[#allocation3 + $0x1e0] sm:$0xff]
    %v2810 = vld [vmem:[#allocation3 + $0x1e8] sm:$0xff]
    %v2811 = vld [vmem:[#allocation3 + $0x1f0] sm:$0xff]
    %v2812 = vld [vmem:[#allocation3 + $0x1f8] sm:$0xff]
    %v2813 = vld [vmem:[#allocation3 + $0x200] sm:$0xff]
    %v2814 = vld [vmem:[#allocation3 + $0x208] sm:$0xff]
    %v2815 = vld [vmem:[#allocation3 + $0x210] sm:$0xff]
    %v2816 = vld [vmem:[#allocation3 + $0x218] sm:$0xff]
    %v2817 = vld [vmem:[#allocation3 + $0x220] sm:$0xff]
    %v2818 = vld [vmem:[#allocation3 + $0x228] sm:$0xff]
    %v2819 = vld [vmem:[#allocation3 + $0x230] sm:$0xff]
    %v2820 = vld [vmem:[#allocation3 + $0x238] sm:$0xff]
    %v2821 = vld [vmem:[#allocation3 + $0x240] sm:$0xff]
    %v2822 = vld [vmem:[#allocation3 + $0x248] sm:$0xff]
    %v2823 = vld [vmem:[#allocation3 + $0x250] sm:$0xff]
    %v2824 = vld [vmem:[#allocation3 + $0x258] sm:$0xff]
    %v2825 = vld [vmem:[#allocation3 + $0x260] sm:$0xff]
    %v2826 = vld [vmem:[#allocation3 + $0x268] sm:$0xff]
    %v2827 = vld [vmem:[#allocation3 + $0x270] sm:$0xff]
    %v2828 = vld [vmem:[#allocation3 + $0x278] sm:$0xff]
    %v2829 = vld [vmem:[#allocation3 + $0x280] sm:$0xff]
    %v2830 = vld [vmem:[#allocation3 + $0x288] sm:$0xff]
    %v2831 = vld [vmem:[#allocation3 + $0x290] sm:$0xff]
    %v2832 = vld [vmem:[#allocation3 + $0x298] sm:$0xff]
    %v2833 = vld [vmem:[#allocation3 + $0x2a0] sm:$0xff]
    %v2834 = vld [vmem:[#allocation3 + $0x2a8] sm:$0xff]
    %v2835 = vld [vmem:[#allocation3 + $0x2b0] sm:$0xff]
    %v2836 = vld [vmem:[#allocation3 + $0x2b8] sm:$0xff]
    %v2837 = vld [vmem:[#allocation3 + $0x2c0] sm:$0xff]
    %v2838 = vld [vmem:[#allocation3 + $0x2c8] sm:$0xff]
    %v2839 = vld [vmem:[#allocation3 + $0x2d0] sm:$0xff]
    %v2840 = vld [vmem:[#allocation3 + $0x2d8] sm:$0xff]
    %v2841 = vld [vmem:[#allocation3 + $0x2e0] sm:$0xff]
    %v2842 = vld [vmem:[#allocation3 + $0x2e8] sm:$0xff]
    %v2843 = vld [vmem:[#allocation3 + $0x2f0] sm:$0xff]
    %v2844 = vld [vmem:[#allocation3 + $0x2f8] sm:$0xff]
    %v2845 = vld [vmem:[#allocation3 + $0x300] sm:$0xff]
    %v2846 = vld [vmem:[#allocation3 + $0x308] sm:$0xff]
    %v2847 = vld [vmem:[#allocation3 + $0x310] sm:$0xff]
    %v2848 = vld [vmem:[#allocation3 + $0x318] sm:$0xff]
    %v2849 = vld [vmem:[#allocation3 + $0x320] sm:$0xff]
    %v2850 = vld [vmem:[#allocation3 + $0x328] sm:$0xff]
    %v2851 = vld [vmem:[#allocation3 + $0x330] sm:$0xff]
    %v2852 = vld [vmem:[#allocation3 + $0x338] sm:$0xff]
    %v2853 = vld [vmem:[#allocation3 + $0x340] sm:$0xff]
    %v2854 = vld [vmem:[#allocation3 + $0x348] sm:$0xff]
    %v2855 = vld [vmem:[#allocation3 + $0x350] sm:$0xff]
    %v2856 = vld [vmem:[#allocation3 + $0x358] sm:$0xff]
    %v2857 = vld [vmem:[#allocation3 + $0x360] sm:$0xff]
    %v2858 = vld [vmem:[#allocation3 + $0x368] sm:$0xff]
    %v2859 = vld [vmem:[#allocation3 + $0x370] sm:$0xff]
    %v2860 = vld [vmem:[#allocation3 + $0x378] sm:$0xff]
    %v2861 = vld [vmem:[#allocation3 + $0x380] sm:$0xff]
    %v2862 = vld [vmem:[#allocation3 + $0x388] sm:$0xff]
    %v2863 = vld [vmem:[#allocation3 + $0x390] sm:$0xff]
    %v2864 = vld [vmem:[#allocation3 + $0x398] sm:$0xff]
    %v2865 = vld [vmem:[#allocation3 + $0x3a0] sm:$0xff]
    %v2866 = vld [vmem:[#allocation3 + $0x3a8] sm:$0xff]
    %v2867 = vld [vmem:[#allocation3 + $0x3b0] sm:$0xff]
    %v2868 = vld [vmem:[#allocation3 + $0x3b8] sm:$0xff]
    %v2869 = vld [vmem:[#allocation3 + $0x3c0] sm:$0xff]
    %v2870 = vld [vmem:[#allocation3 + $0x3c8] sm:$0xff]
    %v2871 = vld [vmem:[#allocation3 + $0x3d0] sm:$0xff]
    %v2872 = vld [vmem:[#allocation3 + $0x3d8] sm:$0xff]
    %v2873 = vld [vmem:[#allocation3 + $0x3e0] sm:$0xff]
    %v2874 = vld [vmem:[#allocation3 + $0x3e8] sm:$0xff]
    %v2875 = vld [vmem:[#allocation3 + $0x3f0] sm:$0xff]
    %v2876 = vld [vmem:[#allocation3 + $0x3f8] sm:$0xff]
    %v2877 = vld [vmem:[#allocation3 + $0x400] sm:$0xff]
    %v2878 = vld [vmem:[#allocation3 + $0x408] sm:$0xff]
    %v2879 = vld [vmem:[#allocation3 + $0x410] sm:$0xff]
    %v2880 = vld [vmem:[#allocation3 + $0x418] sm:$0xff]
    %v2881 = vld [vmem:[#allocation3 + $0x420] sm:$0xff]
    %v2882 = vld [vmem:[#allocation3 + $0x428] sm:$0xff]
    %v2883 = vld [vmem:[#allocation3 + $0x430] sm:$0xff]
    %v2884 = vld [vmem:[#allocation3 + $0x438] sm:$0xff]
    %v2885 = vld [vmem:[#allocation3 + $0x440] sm:$0xff]
    %v2886 = vld [vmem:[#allocation3 + $0x448] sm:$0xff]
    %v2887 = vld [vmem:[#allocation3 + $0x450] sm:$0xff]
    %v2888 = vld [vmem:[#allocation3 + $0x458] sm:$0xff]
    %v2889 = vld [vmem:[#allocation3 + $0x460] sm:$0xff]
    %v2890 = vld [vmem:[#allocation3 + $0x468] sm:$0xff]
    %v2891 = vld [vmem:[#allocation3 + $0x470] sm:$0xff]
    %v2892 = vld [vmem:[#allocation3 + $0x478] sm:$0xff]
    %v2893 = vld [vmem:[#allocation3 + $0x480] sm:$0xff]
    %v2894 = vld [vmem:[#allocation3 + $0x488] sm:$0xff]
    %v2895 = vld [vmem:[#allocation3 + $0x490] sm:$0xff]
    %v2896 = vld [vmem:[#allocation3 + $0x498] sm:$0xff]
    %v2897 = vld [vmem:[#allocation3 + $0x4a0] sm:$0xff]
    %v2898 = vld [vmem:[#allocation3 + $0x4a8] sm:$0xff]
    %v2899 = vld [vmem:[#allocation3 + $0x4b0] sm:$0xff]
    %v2900 = vld [vmem:[#allocation3 + $0x4b8] sm:$0xff]
    %v2901 = vld [vmem:[#allocation3 + $0x4c0] sm:$0xff]
    %v2902 = vld [vmem:[#allocation3 + $0x4c8] sm:$0xff]
    %v2903 = vld [vmem:[#allocation3 + $0x4d0] sm:$0xff]
    %v2904 = vld [vmem:[#allocation3 + $0x4d8] sm:$0xff]
    %v2905 = vld [vmem:[#allocation3 + $0x4e0] sm:$0xff]
    %v2906 = vld [vmem:[#allocation3 + $0x4e8] sm:$0xff]
    %v2907 = vld [vmem:[#allocation3 + $0x4f0] sm:$0xff]
    %v2908 = vld [vmem:[#allocation3 + $0x4f8] sm:$0xff]
    %v2909 = vld [vmem:[#allocation3 + $0x500] sm:$0xff]
    %v2910 = vld [vmem:[#allocation3 + $0x508] sm:$0xff]
    %v2911 = vld [vmem:[#allocation3 + $0x510] sm:$0xff]
    %v2912 = vld [vmem:[#allocation3 + $0x518] sm:$0xff]
    %v2913 = vld [vmem:[#allocation3 + $0x520] sm:$0xff]
    %v2914 = vld [vmem:[#allocation3 + $0x528] sm:$0xff]
    %v2915 = vld [vmem:[#allocation3 + $0x530] sm:$0xff]
    %v2916 = vld [vmem:[#allocation3 + $0x538] sm:$0xff]
    %v2917 = vld [vmem:[#allocation3 + $0x540] sm:$0xff]
    %v2918 = vld [vmem:[#allocation3 + $0x548] sm:$0xff]
    %v2919 = vld [vmem:[#allocation3 + $0x550] sm:$0xff]
    %v2920 = vld [vmem:[#allocation3 + $0x558] sm:$0xff]
    %v2921 = vld [vmem:[#allocation3 + $0x560] sm:$0xff]
    %v2922 = vld [vmem:[#allocation3 + $0x568] sm:$0xff]
    %v2923 = vld [vmem:[#allocation3 + $0x570] sm:$0xff]
    %v2924 = vld [vmem:[#allocation3 + $0x578] sm:$0xff]
    %v2925 = vld [vmem:[#allocation3 + $0x580] sm:$0xff]
    %v2926 = vld [vmem:[#allocation3 + $0x588] sm:$0xff]
    %v2927 = vld [vmem:[#allocation3 + $0x590] sm:$0xff]
    %v2928 = vld [vmem:[#allocation3 + $0x598] sm:$0xff]
    %v2929 = vld [vmem:[#allocation3 + $0x5a0] sm:$0xff]
    %v2930 = vld [vmem:[#allocation3 + $0x5a8] sm:$0xff]
    %v2931 = vld [vmem:[#allocation3 + $0x5b0] sm:$0xff]
    %v2932 = vld [vmem:[#allocation3 + $0x5b8] sm:$0xff]
    %v2933 = vld [vmem:[#allocation3 + $0x5c0] sm:$0xff]
    %v2934 = vld [vmem:[#allocation3 + $0x5c8] sm:$0xff]
    %v2935 = vld [vmem:[#allocation3 + $0x5d0] sm:$0xff]
    %v2936 = vld [vmem:[#allocation3 + $0x5d8] sm:$0xff]
    %v2937 = vld [vmem:[#allocation3 + $0x5e0] sm:$0xff]
    %v2938 = vld [vmem:[#allocation3 + $0x5e8] sm:$0xff]
    %v2939 = vld [vmem:[#allocation3 + $0x5f0] sm:$0xff]
    %v2940 = vld [vmem:[#allocation3 + $0x5f8] sm:$0xff]
    %v2941 = vld [vmem:[#allocation3 + $0x600] sm:$0xff]
    %v2942 = vld [vmem:[#allocation3 + $0x608] sm:$0xff]
    %v2943 = vld [vmem:[#allocation3 + $0x610] sm:$0xff]
    %v2944 = vld [vmem:[#allocation3 + $0x618] sm:$0xff]
    %v2945 = vld [vmem:[#allocation3 + $0x620] sm:$0xff]
    %v2946 = vld [vmem:[#allocation3 + $0x628] sm:$0xff]
    %v2947 = vld [vmem:[#allocation3 + $0x630] sm:$0xff]
    %v2948 = vld [vmem:[#allocation3 + $0x638] sm:$0xff]
    %v2949 = vld [vmem:[#allocation3 + $0x640] sm:$0xff]
    %v2950 = vld [vmem:[#allocation3 + $0x648] sm:$0xff]
    %v2951 = vld [vmem:[#allocation3 + $0x650] sm:$0xff]
    %v2952 = vld [vmem:[#allocation3 + $0x658] sm:$0xff]
    %v2953 = vld [vmem:[#allocation3 + $0x660] sm:$0xff]
    %v2954 = vld [vmem:[#allocation3 + $0x668] sm:$0xff]
    %v2955 = vld [vmem:[#allocation3 + $0x670] sm:$0xff]
    %v2956 = vld [vmem:[#allocation3 + $0x678] sm:$0xff]
    %v2957 = vld [vmem:[#allocation3 + $0x680] sm:$0xff]
    %v2958 = vld [vmem:[#allocation3 + $0x688] sm:$0xff]
    %v2959 = vld [vmem:[#allocation3 + $0x690] sm:$0xff]
    %v2960 = vld [vmem:[#allocation3 + $0x698] sm:$0xff]
    %v2961 = vld [vmem:[#allocation3 + $0x6a0] sm:$0xff]
    %v2962 = vld [vmem:[#allocation3 + $0x6a8] sm:$0xff]
    %v2963 = vld [vmem:[#allocation3 + $0x6b0] sm:$0xff]
    %v2964 = vld [vmem:[#allocation3 + $0x6b8] sm:$0xff]
    %v2965 = vld [vmem:[#allocation3 + $0x6c0] sm:$0xff]
    %v2966 = vld [vmem:[#allocation3 + $0x6c8] sm:$0xff]
    %v2967 = vld [vmem:[#allocation3 + $0x6d0] sm:$0xff]
    %v2968 = vld [vmem:[#allocation3 + $0x6d8] sm:$0xff]
    %v2969 = vld [vmem:[#allocation3 + $0x6e0] sm:$0xff]
    %v2970 = vld [vmem:[#allocation3 + $0x6e8] sm:$0xff]
    %v2971 = vld [vmem:[#allocation3 + $0x6f0] sm:$0xff]
    %v2972 = vld [vmem:[#allocation3 + $0x6f8] sm:$0xff]
    %v2973 = vld [vmem:[#allocation3 + $0x700] sm:$0xff]
    %v2974 = vld [vmem:[#allocation3 + $0x708] sm:$0xff]
    %v2975 = vld [vmem:[#allocation3 + $0x710] sm:$0xff]
    %v2976 = vld [vmem:[#allocation3 + $0x718] sm:$0xff]
    %v2977 = vld [vmem:[#allocation3 + $0x720] sm:$0xff]
    %v2978 = vld [vmem:[#allocation3 + $0x728] sm:$0xff]
    %v2979 = vld [vmem:[#allocation3 + $0x730] sm:$0xff]
    %v2980 = vld [vmem:[#allocation3 + $0x738] sm:$0xff]
    %v2981 = vld [vmem:[#allocation3 + $0x740] sm:$0xff]
    %v2982 = vld [vmem:[#allocation3 + $0x748] sm:$0xff]
    %v2983 = vld [vmem:[#allocation3 + $0x750] sm:$0xff]
    %v2984 = vld [vmem:[#allocation3 + $0x758] sm:$0xff]
    %v2985 = vld [vmem:[#allocation3 + $0x760] sm:$0xff]
    %v2986 = vld [vmem:[#allocation3 + $0x768] sm:$0xff]
    %v2987 = vld [vmem:[#allocation3 + $0x770] sm:$0xff]
    %v2988 = vld [vmem:[#allocation3 + $0x778] sm:$0xff]
    %v2989 = vld [vmem:[#allocation3 + $0x780] sm:$0xff]
    %v2990 = vld [vmem:[#allocation3 + $0x788] sm:$0xff]
    %v2991 = vld [vmem:[#allocation3 + $0x790] sm:$0xff]
    %v2992 = vld [vmem:[#allocation3 + $0x798] sm:$0xff]
    %v2993 = vld [vmem:[#allocation3 + $0x7a0] sm:$0xff]
    %v2994 = vld [vmem:[#allocation3 + $0x7a8] sm:$0xff]
    %v2995 = vld [vmem:[#allocation3 + $0x7b0] sm:$0xff]
    %v2996 = vld [vmem:[#allocation3 + $0x7b8] sm:$0xff]
    %v2997 = vld [vmem:[#allocation3 + $0x7c0] sm:$0xff]
    %v2998 = vld [vmem:[#allocation3 + $0x7c8] sm:$0xff]
    %v2999 = vld [vmem:[#allocation3 + $0x7d0] sm:$0xff]
    %v3000 = vld [vmem:[#allocation3 + $0x7d8] sm:$0xff]
    %v3001 = vld [vmem:[#allocation3 + $0x7e0] sm:$0xff]
    %v3002 = vld [vmem:[#allocation3 + $0x7e8] sm:$0xff]
    %v3003 = vld [vmem:[#allocation3 + $0x7f0] sm:$0xff]
    %v3004 = vld [vmem:[#allocation3 + $0x7f8] sm:$0xff]
    %v3005 = vld [vmem:[#allocation3 + $0x800] sm:$0xff]
    %v3006 = vld [vmem:[#allocation3 + $0x808] sm:$0xff]
    %v3007 = vld [vmem:[#allocation3 + $0x810] sm:$0xff]
    %v3008 = vld [vmem:[#allocation3 + $0x818] sm:$0xff]
    %v3009 = vld [vmem:[#allocation3 + $0x820] sm:$0xff]
    %v3010 = vld [vmem:[#allocation3 + $0x828] sm:$0xff]
    %v3011 = vld [vmem:[#allocation3 + $0x830] sm:$0xff]
    %v3012 = vld [vmem:[#allocation3 + $0x838] sm:$0xff]
    %v3013 = vld [vmem:[#allocation3 + $0x840] sm:$0xff]
    %v3014 = vld [vmem:[#allocation3 + $0x848] sm:$0xff]
    %v3015 = vld [vmem:[#allocation3 + $0x850] sm:$0xff]
    %v3016 = vld [vmem:[#allocation3 + $0x858] sm:$0xff]
    %v3017 = vld [vmem:[#allocation3 + $0x860] sm:$0xff]
    %v3018 = vld [vmem:[#allocation3 + $0x868] sm:$0xff]
    %v3019 = vld [vmem:[#allocation3 + $0x870] sm:$0xff]
    %v3020 = vld [vmem:[#allocation3 + $0x878] sm:$0xff]
    %v3021 = vld [vmem:[#allocation3 + $0x880] sm:$0xff]
    %v3022 = vld [vmem:[#allocation3 + $0x888] sm:$0xff]
    %v3023 = vld [vmem:[#allocation3 + $0x890] sm:$0xff]
    %v3024 = vld [vmem:[#allocation3 + $0x898] sm:$0xff]
    %v3025 = vld [vmem:[#allocation3 + $0x8a0] sm:$0xff]
    %v3026 = vld [vmem:[#allocation3 + $0x8a8] sm:$0xff]
    %v3027 = vld [vmem:[#allocation3 + $0x8b0] sm:$0xff]
    %v3028 = vld [vmem:[#allocation3 + $0x8b8] sm:$0xff]
    %v3029 = vld [vmem:[#allocation3 + $0x8c0] sm:$0xff]
    %v3030 = vld [vmem:[#allocation3 + $0x8c8] sm:$0xff]
    %v3031 = vld [vmem:[#allocation3 + $0x8d0] sm:$0xff]
    %v3032 = vld [vmem:[#allocation3 + $0x8d8] sm:$0xff]
    %v3033 = vld [vmem:[#allocation3 + $0x8e0] sm:$0xff]
    %v3034 = vld [vmem:[#allocation3 + $0x8e8] sm:$0xff]
    %v3035 = vld [vmem:[#allocation3 + $0x8f0] sm:$0xff]
    %v3036 = vld [vmem:[#allocation3 + $0x8f8] sm:$0xff]
    %v3037 = vld [vmem:[#allocation3 + $0x900] sm:$0xff]
    %v3038 = vld [vmem:[#allocation3 + $0x908] sm:$0xff]
    %v3039 = vld [vmem:[#allocation3 + $0x910] sm:$0xff]
    %v3040 = vld [vmem:[#allocation3 + $0x918] sm:$0xff]
    %v3041 = vld [vmem:[#allocation3 + $0x920] sm:$0xff]
    %v3042 = vld [vmem:[#allocation3 + $0x928] sm:$0xff]
    %v3043 = vld [vmem:[#allocation3 + $0x930] sm:$0xff]
    %v3044 = vld [vmem:[#allocation3 + $0x938] sm:$0xff]
    %v3045 = vld [vmem:[#allocation3 + $0x940] sm:$0xff]
    %v3046 = vld [vmem:[#allocation3 + $0x948] sm:$0xff]
    %v3047 = vld [vmem:[#allocation3 + $0x950] sm:$0xff]
    %v3048 = vld [vmem:[#allocation3 + $0x958] sm:$0xff]
    %v3049 = vld [vmem:[#allocation3 + $0x960] sm:$0xff]
    %v3050 = vld [vmem:[#allocation3 + $0x968] sm:$0xff]
    %v3051 = vld [vmem:[#allocation3 + $0x970] sm:$0xff]
    %v3052 = vld [vmem:[#allocation3 + $0x978] sm:$0xff]
    %v3053 = vld [vmem:[#allocation3 + $0x980] sm:$0xff]
    %v3054 = vld [vmem:[#allocation3 + $0x988] sm:$0xff]
    %v3055 = vld [vmem:[#allocation3 + $0x990] sm:$0xff]
    %v3056 = vld [vmem:[#allocation3 + $0x998] sm:$0xff]
    %v3057 = vld [vmem:[#allocation3 + $0x9a0] sm:$0xff]
    %v3058 = vld [vmem:[#allocation3 + $0x9a8] sm:$0xff]
    %v3059 = vld [vmem:[#allocation3 + $0x9b0] sm:$0xff]
    %v3060 = vld [vmem:[#allocation3 + $0x9b8] sm:$0xff]
    %v3061 = vld [vmem:[#allocation3 + $0x9c0] sm:$0xff]
    %v3062 = vld [vmem:[#allocation3 + $0x9c8] sm:$0xff]
    %v3063 = vld [vmem:[#allocation3 + $0x9d0] sm:$0xff]
    %v3064 = vld [vmem:[#allocation3 + $0x9d8] sm:$0xff]
    %v3065 = vld [vmem:[#allocation3 + $0x9e0] sm:$0xff]
    %v3066 = vld [vmem:[#allocation3 + $0x9e8] sm:$0xff]
    %v3067 = vld [vmem:[#allocation3 + $0x9f0] sm:$0xff]
    %v3068 = vld [vmem:[#allocation3 + $0x9f8] sm:$0xff]
    %v3069 = vld [vmem:[#allocation3 + $0xa00] sm:$0xff]
    %v3070 = vld [vmem:[#allocation3 + $0xa08] sm:$0xff]
    %v3071 = vld [vmem:[#allocation3 + $0xa10] sm:$0xff]
    %v3072 = vld [vmem:[#allocation3 + $0xa18] sm:$0xff]
    %v3073 = vld [vmem:[#allocation3 + $0xa20] sm:$0xff]
    %v3074 = vld [vmem:[#allocation3 + $0xa28] sm:$0xff]
    %v3075 = vld [vmem:[#allocation3 + $0xa30] sm:$0xff]
    %v3076 = vld [vmem:[#allocation3 + $0xa38] sm:$0xff]
    %v3077 = vld [vmem:[#allocation3 + $0xa40] sm:$0xff]
    %v3078 = vld [vmem:[#allocation3 + $0xa48] sm:$0xff]
    %v3079 = vld [vmem:[#allocation3 + $0xa50] sm:$0xff]
    %v3080 = vld [vmem:[#allocation3 + $0xa58] sm:$0xff]
    %v3081 = vld [vmem:[#allocation3 + $0xa60] sm:$0xff]
    %v3082 = vld [vmem:[#allocation3 + $0xa68] sm:$0xff]
    %v3083 = vld [vmem:[#allocation3 + $0xa70] sm:$0xff]
    %v3084 = vld [vmem:[#allocation3 + $0xa78] sm:$0xff]
    %v3085 = vld [vmem:[#allocation3 + $0xa80] sm:$0xff]
    %v3086 = vld [vmem:[#allocation3 + $0xa88] sm:$0xff]
    %v3087 = vld [vmem:[#allocation3 + $0xa90] sm:$0xff]
    %v3088 = vld [vmem:[#allocation3 + $0xa98] sm:$0xff]
    %v3089 = vld [vmem:[#allocation3 + $0xaa0] sm:$0xff]
    %v3090 = vld [vmem:[#allocation3 + $0xaa8] sm:$0xff]
    %v3091 = vld [vmem:[#allocation3 + $0xab0] sm:$0xff]
    %v3092 = vld [vmem:[#allocation3 + $0xab8] sm:$0xff]
    %v3093 = vld [vmem:[#allocation3 + $0xac0] sm:$0xff]
    %v3094 = vld [vmem:[#allocation3 + $0xac8] sm:$0xff]
    %v3095 = vld [vmem:[#allocation3 + $0xad0] sm:$0xff]
    %v3096 = vld [vmem:[#allocation3 + $0xad8] sm:$0xff]
    %v3097 = vld [vmem:[#allocation3 + $0xae0] sm:$0xff]
    %v3098 = vld [vmem:[#allocation3 + $0xae8] sm:$0xff]
    %v3099 = vld [vmem:[#allocation3 + $0xaf0] sm:$0xff]
    %v3100 = vld [vmem:[#allocation3 + $0xaf8] sm:$0xff]
    %v3101 = vld [vmem:[#allocation3 + $0xb00] sm:$0xff]
    %v3102 = vld [vmem:[#allocation3 + $0xb08] sm:$0xff]
    %v3103 = vld [vmem:[#allocation3 + $0xb10] sm:$0xff]
    %v3104 = vld [vmem:[#allocation3 + $0xb18] sm:$0xff]
    %v3105 = vld [vmem:[#allocation3 + $0xb20] sm:$0xff]
    %v3106 = vld [vmem:[#allocation3 + $0xb28] sm:$0xff]
    %v3107 = vld [vmem:[#allocation3 + $0xb30] sm:$0xff]
    %v3108 = vld [vmem:[#allocation3 + $0xb38] sm:$0xff]
    %v3109 = vld [vmem:[#allocation3 + $0xb40] sm:$0xff]
    %v3110 = vld [vmem:[#allocation3 + $0xb48] sm:$0xff]
    %v3111 = vld [vmem:[#allocation3 + $0xb50] sm:$0xff]
    %v3112 = vld [vmem:[#allocation3 + $0xb58] sm:$0xff]
    %v3113 = vld [vmem:[#allocation3 + $0xb60] sm:$0xff]
    %v3114 = vld [vmem:[#allocation3 + $0xb68] sm:$0xff]
    %v3115 = vld [vmem:[#allocation3 + $0xb70] sm:$0xff]
    %v3116 = vld [vmem:[#allocation3 + $0xb78] sm:$0xff]
    %v3117 = vld [vmem:[#allocation3 + $0xb80] sm:$0xff]
    %v3118 = vld [vmem:[#allocation3 + $0xb88] sm:$0xff]
    %v3119 = vld [vmem:[#allocation3 + $0xb90] sm:$0xff]
    %v3120 = vld [vmem:[#allocation3 + $0xb98] sm:$0xff]
    %v3121 = vld [vmem:[#allocation3 + $0xba0] sm:$0xff]
    %v3122 = vld [vmem:[#allocation3 + $0xba8] sm:$0xff]
    %v3123 = vld [vmem:[#allocation3 + $0xbb0] sm:$0xff]
    %v3124 = vld [vmem:[#allocation3 + $0xbb8] sm:$0xff]
    %v3125 = vld [vmem:[#allocation3 + $0xbc0] sm:$0xff]
    %v3126 = vld [vmem:[#allocation3 + $0xbc8] sm:$0xff]
    %v3127 = vld [vmem:[#allocation3 + $0xbd0] sm:$0xff]
    %v3128 = vld [vmem:[#allocation3 + $0xbd8] sm:$0xff]
    %v3129 = vld [vmem:[#allocation3 + $0xbe0] sm:$0xff]
    %v3130 = vld [vmem:[#allocation3 + $0xbe8] sm:$0xff]
    %v3131 = vld [vmem:[#allocation3 + $0xbf0] sm:$0xff]
    %v3132 = vld [vmem:[#allocation3 + $0xbf8] sm:$0xff]
    %v3133 = vld [vmem:[#allocation3 + $0xc00] sm:$0xff]
    %v3134 = vld [vmem:[#allocation3 + $0xc08] sm:$0xff]
    %v3135 = vld [vmem:[#allocation3 + $0xc10] sm:$0xff]
    %v3136 = vld [vmem:[#allocation3 + $0xc18] sm:$0xff]
    %v3137 = vld [vmem:[#allocation3 + $0xc20] sm:$0xff]
    %v3138 = vld [vmem:[#allocation3 + $0xc28] sm:$0xff]
    %v3139 = vld [vmem:[#allocation3 + $0xc30] sm:$0xff]
    %v3140 = vld [vmem:[#allocation3 + $0xc38] sm:$0xff]
    %v3141 = vld [vmem:[#allocation3 + $0xc40] sm:$0xff]
    %v3142 = vld [vmem:[#allocation3 + $0xc48] sm:$0xff]
    %v3143 = vld [vmem:[#allocation3 + $0xc50] sm:$0xff]
    %v3144 = vld [vmem:[#allocation3 + $0xc58] sm:$0xff]
    %v3145 = vld [vmem:[#allocation3 + $0xc60] sm:$0xff]
    %v3146 = vld [vmem:[#allocation3 + $0xc68] sm:$0xff]
    %v3147 = vld [vmem:[#allocation3 + $0xc70] sm:$0xff]
    %v3148 = vld [vmem:[#allocation3 + $0xc78] sm:$0xff]
    %v3149 = vld [vmem:[#allocation3 + $0xc80] sm:$0xff]
    %v3150 = vld [vmem:[#allocation3 + $0xc88] sm:$0xff]
    %v3151 = vld [vmem:[#allocation3 + $0xc90] sm:$0xff]
    %v3152 = vld [vmem:[#allocation3 + $0xc98] sm:$0xff]
    %v3153 = vld [vmem:[#allocation3 + $0xca0] sm:$0xff]
    %v3154 = vld [vmem:[#allocation3 + $0xca8] sm:$0xff]
    %v3155 = vld [vmem:[#allocation3 + $0xcb0] sm:$0xff]
    %v3156 = vld [vmem:[#allocation3 + $0xcb8] sm:$0xff]
    %v3157 = vld [vmem:[#allocation3 + $0xcc0] sm:$0xff]
    %v3158 = vld [vmem:[#allocation3 + $0xcc8] sm:$0xff]
    %v3159 = vld [vmem:[#allocation3 + $0xcd0] sm:$0xff]
    %v3160 = vld [vmem:[#allocation3 + $0xcd8] sm:$0xff]
    %v3161 = vld [vmem:[#allocation3 + $0xce0] sm:$0xff]
    %v3162 = vld [vmem:[#allocation3 + $0xce8] sm:$0xff]
    %v3163 = vld [vmem:[#allocation3 + $0xcf0] sm:$0xff]
    %v3164 = vld [vmem:[#allocation3 + $0xcf8] sm:$0xff]
    %v3165 = vld [vmem:[#allocation3 + $0xd00] sm:$0xff]
    %v3166 = vld [vmem:[#allocation3 + $0xd08] sm:$0xff]
    %v3167 = vld [vmem:[#allocation3 + $0xd10] sm:$0xff]
    %v3168 = vld [vmem:[#allocation3 + $0xd18] sm:$0xff]
    %v3169 = vld [vmem:[#allocation3 + $0xd20] sm:$0xff]
    %v3170 = vld [vmem:[#allocation3 + $0xd28] sm:$0xff]
    %v3171 = vld [vmem:[#allocation3 + $0xd30] sm:$0xff]
    %v3172 = vld [vmem:[#allocation3 + $0xd38] sm:$0xff]
    %v3173 = vld [vmem:[#allocation3 + $0xd40] sm:$0xff]
    %v3174 = vld [vmem:[#allocation3 + $0xd48] sm:$0xff]
    %v3175 = vld [vmem:[#allocation3 + $0xd50] sm:$0xff]
    %v3176 = vld [vmem:[#allocation3 + $0xd58] sm:$0xff]
    %v3177 = vld [vmem:[#allocation3 + $0xd60] sm:$0xff]
    %v3178 = vld [vmem:[#allocation3 + $0xd68] sm:$0xff]
    %v3179 = vld [vmem:[#allocation3 + $0xd70] sm:$0xff]
    %v3180 = vld [vmem:[#allocation3 + $0xd78] sm:$0xff]
    %v3181 = vld [vmem:[#allocation3 + $0xd80] sm:$0xff]
    %v3182 = vld [vmem:[#allocation3 + $0xd88] sm:$0xff]
    %v3183 = vld [vmem:[#allocation3 + $0xd90] sm:$0xff]
    %v3184 = vld [vmem:[#allocation3 + $0xd98] sm:$0xff]
    %v3185 = vld [vmem:[#allocation3 + $0xda0] sm:$0xff]
    %v3186 = vld [vmem:[#allocation3 + $0xda8] sm:$0xff]
    %v3187 = vld [vmem:[#allocation3 + $0xdb0] sm:$0xff]
    %v3188 = vld [vmem:[#allocation3 + $0xdb8] sm:$0xff]
    %v3189 = vld [vmem:[#allocation3 + $0xdc0] sm:$0xff]
    %v3190 = vld [vmem:[#allocation3 + $0xdc8] sm:$0xff]
    %v3191 = vld [vmem:[#allocation3 + $0xdd0] sm:$0xff]
    %v3192 = vld [vmem:[#allocation3 + $0xdd8] sm:$0xff]
    %v3193 = vld [vmem:[#allocation3 + $0xde0] sm:$0xff]
    %v3194 = vld [vmem:[#allocation3 + $0xde8] sm:$0xff]
    %v3195 = vld [vmem:[#allocation3 + $0xdf0] sm:$0xff]
    %v3196 = vld [vmem:[#allocation3 + $0xdf8] sm:$0xff]
    %v3197 = vld [vmem:[#allocation3 + $0xe00] sm:$0xff]
    %v3198 = vld [vmem:[#allocation3 + $0xe08] sm:$0xff]
    %v3199 = vld [vmem:[#allocation3 + $0xe10] sm:$0xff]
    %v3200 = vld [vmem:[#allocation3 + $0xe18] sm:$0xff]
    %v3201 = vld [vmem:[#allocation3 + $0xe20] sm:$0xff]
    %v3202 = vld [vmem:[#allocation3 + $0xe28] sm:$0xff]
    %v3203 = vld [vmem:[#allocation3 + $0xe30] sm:$0xff]
    %v3204 = vld [vmem:[#allocation3 + $0xe38] sm:$0xff]
    %v3205 = vld [vmem:[#allocation3 + $0xe40] sm:$0xff]
    %v3206 = vld [vmem:[#allocation3 + $0xe48] sm:$0xff]
    %v3207 = vld [vmem:[#allocation3 + $0xe50] sm:$0xff]
    %v3208 = vld [vmem:[#allocation3 + $0xe58] sm:$0xff]
    %v3209 = vld [vmem:[#allocation3 + $0xe60] sm:$0xff]
    %v3210 = vld [vmem:[#allocation3 + $0xe68] sm:$0xff]
    %v3211 = vld [vmem:[#allocation3 + $0xe70] sm:$0xff]
    %v3212 = vld [vmem:[#allocation3 + $0xe78] sm:$0xff]
    %v3213 = vld [vmem:[#allocation3 + $0xe80] sm:$0xff]
    %v3214 = vld [vmem:[#allocation3 + $0xe88] sm:$0xff]
    %v3215 = vld [vmem:[#allocation3 + $0xe90] sm:$0xff]
    %v3216 = vld [vmem:[#allocation3 + $0xe98] sm:$0xff]
    %v3217 = vld [vmem:[#allocation3 + $0xea0] sm:$0xff]
    %v3218 = vld [vmem:[#allocation3 + $0xea8] sm:$0xff]
    %v3219 = vld [vmem:[#allocation3 + $0xeb0] sm:$0xff]
    %v3220 = vld [vmem:[#allocation3 + $0xeb8] sm:$0xff]
    %v3221 = vld [vmem:[#allocation3 + $0xec0] sm:$0xff]
    %v3222 = vld [vmem:[#allocation3 + $0xec8] sm:$0xff]
    %v3223 = vld [vmem:[#allocation3 + $0xed0] sm:$0xff]
    %v3224 = vld [vmem:[#allocation3 + $0xed8] sm:$0xff]
    %v3225 = vld [vmem:[#allocation3 + $0xee0] sm:$0xff]
    %v3226 = vld [vmem:[#allocation3 + $0xee8] sm:$0xff]
    %v3227 = vld [vmem:[#allocation3 + $0xef0] sm:$0xff]
    %v3228 = vld [vmem:[#allocation3 + $0xef8] sm:$0xff]
    %v3229 = vld [vmem:[#allocation3 + $0xf00] sm:$0xff]
    %v3230 = vld [vmem:[#allocation3 + $0xf08] sm:$0xff]
    %v3231 = vld [vmem:[#allocation3 + $0xf10] sm:$0xff]
    %v3232 = vld [vmem:[#allocation3 + $0xf18] sm:$0xff]
    %v3233 = vld [vmem:[#allocation3 + $0xf20] sm:$0xff]
    %v3234 = vld [vmem:[#allocation3 + $0xf28] sm:$0xff]
    %v3235 = vld [vmem:[#allocation3 + $0xf30] sm:$0xff]
    %v3236 = vld [vmem:[#allocation3 + $0xf38] sm:$0xff]
    %v3237 = vld [vmem:[#allocation3 + $0xf40] sm:$0xff]
    %v3238 = vld [vmem:[#allocation3 + $0xf48] sm:$0xff]
    %v3239 = vld [vmem:[#allocation3 + $0xf50] sm:$0xff]
    %v3240 = vld [vmem:[#allocation3 + $0xf58] sm:$0xff]
    %v3241 = vld [vmem:[#allocation3 + $0xf60] sm:$0xff]
    %v3242 = vld [vmem:[#allocation3 + $0xf68] sm:$0xff]
    %v3243 = vld [vmem:[#allocation3 + $0xf70] sm:$0xff]
    %v3244 = vld [vmem:[#allocation3 + $0xf78] sm:$0xff]
    %v3245 = vld [vmem:[#allocation3 + $0xf80] sm:$0xff]
    %v3246 = vld [vmem:[#allocation3 + $0xf88] sm:$0xff]
    %v3247 = vld [vmem:[#allocation3 + $0xf90] sm:$0xff]
    %v3248 = vld [vmem:[#allocation3 + $0xf98] sm:$0xff]
    %v3249 = vld [vmem:[#allocation3 + $0xfa0] sm:$0xff]
    %v3250 = vld [vmem:[#allocation3 + $0xfa8] sm:$0xff]
    %v3251 = vld [vmem:[#allocation3 + $0xfb0] sm:$0xff]
    %v3252 = vld [vmem:[#allocation3 + $0xfb8] sm:$0xff]
    %v3253 = vld [vmem:[#allocation3 + $0xfc0] sm:$0xff]
    %v3254 = vld [vmem:[#allocation3 + $0xfc8] sm:$0xff]
    %v3255 = vld [vmem:[#allocation3 + $0xfd0] sm:$0xff]
    %v3256 = vld [vmem:[#allocation3 + $0xfd8] sm:$0xff]
    %v3257 = vld [vmem:[#allocation3 + $0xfe0] sm:$0xff]
    %v3258 = vld [vmem:[#allocation3 + $0xfe8] sm:$0xff]
    %v3259 = vld [vmem:[#allocation3 + $0xff0] sm:$0xff]
    %v3260 = vld [vmem:[#allocation3 + $0xff8] sm:$0xff]
    %v3261 = vld [vmem:[#allocation3 + $0x1000] sm:$0xff]
    %v3262 = vld [vmem:[#allocation3 + $0x1008] sm:$0xff]
    %v3263 = vld [vmem:[#allocation3 + $0x1010] sm:$0xff]
    %v3264 = vld [vmem:[#allocation3 + $0x1018] sm:$0xff]
    %v3265 = vld [vmem:[#allocation3 + $0x1020] sm:$0xff]
    %v3266 = vld [vmem:[#allocation3 + $0x1028] sm:$0xff]
    %v3267 = vld [vmem:[#allocation3 + $0x1030] sm:$0xff]
    %v3268 = vld [vmem:[#allocation3 + $0x1038] sm:$0xff]
    %v3269 = vld [vmem:[#allocation3 + $0x1040] sm:$0xff]
    %v3270 = vld [vmem:[#allocation3 + $0x1048] sm:$0xff]
    %v3271 = vld [vmem:[#allocation3 + $0x1050] sm:$0xff]
    %v3272 = vld [vmem:[#allocation3 + $0x1058] sm:$0xff]
    %v3273 = vld [vmem:[#allocation3 + $0x1060] sm:$0xff]
    %v3274 = vld [vmem:[#allocation3 + $0x1068] sm:$0xff]
    %v3275 = vld [vmem:[#allocation3 + $0x1070] sm:$0xff]
    %v3276 = vld [vmem:[#allocation3 + $0x1078] sm:$0xff]
    %v3277 = vld [vmem:[#allocation3 + $0x1080] sm:$0xff]
    %v3278 = vld [vmem:[#allocation3 + $0x1088] sm:$0xff]
    %v3279 = vld [vmem:[#allocation3 + $0x1090] sm:$0xff]
    %v3280 = vld [vmem:[#allocation3 + $0x1098] sm:$0xff]
    %v3281 = vld [vmem:[#allocation3 + $0x10a0] sm:$0xff]
    %v3282 = vld [vmem:[#allocation3 + $0x10a8] sm:$0xff]
    %v3283 = vld [vmem:[#allocation3 + $0x10b0] sm:$0xff]
    %v3284 = vld [vmem:[#allocation3 + $0x10b8] sm:$0xff]
    %v3285 = vld [vmem:[#allocation3 + $0x10c0] sm:$0xff]
    %v3286 = vld [vmem:[#allocation3 + $0x10c8] sm:$0xff]
    %v3287 = vld [vmem:[#allocation3 + $0x10d0] sm:$0xff]
    %v3288 = vld [vmem:[#allocation3 + $0x10d8] sm:$0xff]
    %v3289 = vld [vmem:[#allocation3 + $0x10e0] sm:$0xff]
    %v3290 = vld [vmem:[#allocation3 + $0x10e8] sm:$0xff]
    %v3291 = vld [vmem:[#allocation3 + $0x10f0] sm:$0xff]
    %v3292 = vld [vmem:[#allocation3 + $0x10f8] sm:$0xff]
    %v3293 = vld [vmem:[#allocation3 + $0x1100] sm:$0xff]
    %v3294 = vld [vmem:[#allocation3 + $0x1108] sm:$0xff]
    %v3295 = vld [vmem:[#allocation3 + $0x1110] sm:$0xff]
    %v3296 = vld [vmem:[#allocation3 + $0x1118] sm:$0xff]
    %v3297 = vld [vmem:[#allocation3 + $0x1120] sm:$0xff]
    %v3298 = vld [vmem:[#allocation3 + $0x1128] sm:$0xff]
    %v3299 = vld [vmem:[#allocation3 + $0x1130] sm:$0xff]
    %v3300 = vld [vmem:[#allocation3 + $0x1138] sm:$0xff]
    %v3301 = vld [vmem:[#allocation3 + $0x1140] sm:$0xff]
    %v3302 = vld [vmem:[#allocation3 + $0x1148] sm:$0xff]
    %v3303 = vld [vmem:[#allocation3 + $0x1150] sm:$0xff]
    %v3304 = vld [vmem:[#allocation3 + $0x1158] sm:$0xff]
    %v3305 = vld [vmem:[#allocation3 + $0x1160] sm:$0xff]
    %v3306 = vld [vmem:[#allocation3 + $0x1168] sm:$0xff]
    %v3307 = vld [vmem:[#allocation3 + $0x1170] sm:$0xff]
    %v3308 = vld [vmem:[#allocation3 + $0x1178] sm:$0xff]
    %v3309 = vld [vmem:[#allocation3 + $0x1180] sm:$0xff]
    %v3310 = vld [vmem:[#allocation3 + $0x1188] sm:$0xff]
    %v3311 = vld [vmem:[#allocation3 + $0x1190] sm:$0xff]
    %v3312 = vld [vmem:[#allocation3 + $0x1198] sm:$0xff]
    %v3313 = vld [vmem:[#allocation3 + $0x11a0] sm:$0xff]
    %v3314 = vld [vmem:[#allocation3 + $0x11a8] sm:$0xff]
    %v3315 = vld [vmem:[#allocation3 + $0x11b0] sm:$0xff]
    %v3316 = vld [vmem:[#allocation3 + $0x11b8] sm:$0xff]
    %v3317 = vld [vmem:[#allocation3 + $0x11c0] sm:$0xff]
    %v3318 = vld [vmem:[#allocation3 + $0x11c8] sm:$0xff]
    %v3319 = vld [vmem:[#allocation3 + $0x11d0] sm:$0xff]
    %v3320 = vld [vmem:[#allocation3 + $0x11d8] sm:$0xff]
    %v3321 = vld [vmem:[#allocation3 + $0x11e0] sm:$0xff]
    %v3322 = vld [vmem:[#allocation3 + $0x11e8] sm:$0xff]
    %v3323 = vld [vmem:[#allocation3 + $0x11f0] sm:$0xff]
    %v3324 = vld [vmem:[#allocation3 + $0x11f8] sm:$0xff]
    %v3325 = vld [vmem:[#allocation3 + $0x1200] sm:$0xff]
    %v3326 = vld [vmem:[#allocation3 + $0x1208] sm:$0xff]
    %v3327 = vld [vmem:[#allocation3 + $0x1210] sm:$0xff]
    %v3328 = vld [vmem:[#allocation3 + $0x1218] sm:$0xff]
    %v3329 = vld [vmem:[#allocation3 + $0x1220] sm:$0xff]
    %v3330 = vld [vmem:[#allocation3 + $0x1228] sm:$0xff]
    %v3331 = vld [vmem:[#allocation3 + $0x1230] sm:$0xff]
    %v3332 = vld [vmem:[#allocation3 + $0x1238] sm:$0xff]
    %v3333 = vld [vmem:[#allocation3 + $0x1240] sm:$0xff]
    %v3334 = vld [vmem:[#allocation3 + $0x1248] sm:$0xff]
    %v3335 = vld [vmem:[#allocation3 + $0x1250] sm:$0xff]
    %v3336 = vld [vmem:[#allocation3 + $0x1258] sm:$0xff]
    %v3337 = vld [vmem:[#allocation3 + $0x1260] sm:$0xff]
    %v3338 = vld [vmem:[#allocation3 + $0x1268] sm:$0xff]
    %v3339 = vld [vmem:[#allocation3 + $0x1270] sm:$0xff]
    %v3340 = vld [vmem:[#allocation3 + $0x1278] sm:$0xff]
    %v3341 = vld [vmem:[#allocation3 + $0x1280] sm:$0xff]
    %v3342 = vld [vmem:[#allocation3 + $0x1288] sm:$0xff]
    %v3343 = vld [vmem:[#allocation3 + $0x1290] sm:$0xff]
    %v3344 = vld [vmem:[#allocation3 + $0x1298] sm:$0xff]
    %v3345 = vld [vmem:[#allocation3 + $0x12a0] sm:$0xff]
    %v3346 = vld [vmem:[#allocation3 + $0x12a8] sm:$0xff]
    %v3347 = vld [vmem:[#allocation3 + $0x12b0] sm:$0xff]
    %v3348 = vld [vmem:[#allocation3 + $0x12b8] sm:$0xff]
    %v3349 = vld [vmem:[#allocation3 + $0x12c0] sm:$0xff]
    %v3350 = vld [vmem:[#allocation3 + $0x12c8] sm:$0xff]
    %v3351 = vld [vmem:[#allocation3 + $0x12d0] sm:$0xff]
    %v3352 = vld [vmem:[#allocation3 + $0x12d8] sm:$0xff]
    %v3353 = vld [vmem:[#allocation3 + $0x12e0] sm:$0xff]
    %v3354 = vld [vmem:[#allocation3 + $0x12e8] sm:$0xff]
    %v3355 = vld [vmem:[#allocation3 + $0x12f0] sm:$0xff]
    %v3356 = vld [vmem:[#allocation3 + $0x12f8] sm:$0xff]
    %v3357 = vld [vmem:[#allocation3 + $0x1300] sm:$0xff]
    %v3358 = vld [vmem:[#allocation3 + $0x1308] sm:$0xff]
    %v3359 = vld [vmem:[#allocation3 + $0x1310] sm:$0xff]
    %v3360 = vld [vmem:[#allocation3 + $0x1318] sm:$0xff]
    %v3361 = vld [vmem:[#allocation3 + $0x1320] sm:$0xff]
    %v3362 = vld [vmem:[#allocation3 + $0x1328] sm:$0xff]
    %v3363 = vld [vmem:[#allocation3 + $0x1330] sm:$0xff]
    %v3364 = vld [vmem:[#allocation3 + $0x1338] sm:$0xff]
    %v3365 = vld [vmem:[#allocation3 + $0x1340] sm:$0xff]
    %v3366 = vld [vmem:[#allocation3 + $0x1348] sm:$0xff]
    %v3367 = vld [vmem:[#allocation3 + $0x1350] sm:$0xff]
    %v3368 = vld [vmem:[#allocation3 + $0x1358] sm:$0xff]
    %v3369 = vld [vmem:[#allocation3 + $0x1360] sm:$0xff]
    %v3370 = vld [vmem:[#allocation3 + $0x1368] sm:$0xff]
    %v3371 = vld [vmem:[#allocation3 + $0x1370] sm:$0xff]
    %v3372 = vld [vmem:[#allocation3 + $0x1378] sm:$0xff]
    %v3373 = vld [vmem:[#allocation3 + $0x1380] sm:$0xff]
    %v3374 = vld [vmem:[#allocation3 + $0x1388] sm:$0xff]
    %v3375 = vld [vmem:[#allocation3 + $0x1390] sm:$0xff]
    %v3376 = vld [vmem:[#allocation3 + $0x1398] sm:$0xff]
    %v3377 = vld [vmem:[#allocation3 + $0x13a0] sm:$0xff]
    %v3378 = vld [vmem:[#allocation3 + $0x13a8] sm:$0xff]
    %v3379 = vld [vmem:[#allocation3 + $0x13b0] sm:$0xff]
    %v3380 = vld [vmem:[#allocation3 + $0x13b8] sm:$0xff]
    %v3381 = vld [vmem:[#allocation3 + $0x13c0] sm:$0xff]
    %v3382 = vld [vmem:[#allocation3 + $0x13c8] sm:$0xff]
    %v3383 = vld [vmem:[#allocation3 + $0x13d0] sm:$0xff]
    %v3384 = vld [vmem:[#allocation3 + $0x13d8] sm:$0xff]
    %v3385 = vld [vmem:[#allocation3 + $0x13e0] sm:$0xff]
    %v3386 = vld [vmem:[#allocation3 + $0x13e8] sm:$0xff]
    %v3387 = vld [vmem:[#allocation3 + $0x13f0] sm:$0xff]
    %v3388 = vld [vmem:[#allocation3 + $0x13f8] sm:$0xff]
    %v3389 = vld [vmem:[#allocation3 + $0x1400] sm:$0xff]
    %v3390 = vld [vmem:[#allocation3 + $0x1408] sm:$0xff]
    %v3391 = vld [vmem:[#allocation3 + $0x1410] sm:$0xff]
    %v3392 = vld [vmem:[#allocation3 + $0x1418] sm:$0xff]
    %v3393 = vld [vmem:[#allocation3 + $0x1420] sm:$0xff]
    %v3394 = vld [vmem:[#allocation3 + $0x1428] sm:$0xff]
    %v3395 = vld [vmem:[#allocation3 + $0x1430] sm:$0xff]
    %v3396 = vld [vmem:[#allocation3 + $0x1438] sm:$0xff]
    %v3397 = vld [vmem:[#allocation3 + $0x1440] sm:$0xff]
    %v3398 = vld [vmem:[#allocation3 + $0x1448] sm:$0xff]
    %v3399 = vld [vmem:[#allocation3 + $0x1450] sm:$0xff]
    %v3400 = vld [vmem:[#allocation3 + $0x1458] sm:$0xff]
    %v3401 = vld [vmem:[#allocation3 + $0x1460] sm:$0xff]
    %v3402 = vld [vmem:[#allocation3 + $0x1468] sm:$0xff]
    %v3403 = vld [vmem:[#allocation3 + $0x1470] sm:$0xff]
    %v3404 = vld [vmem:[#allocation3 + $0x1478] sm:$0xff]
    %v3405 = vld [vmem:[#allocation3 + $0x1480] sm:$0xff]
    %v3406 = vld [vmem:[#allocation3 + $0x1488] sm:$0xff]
    %v3407 = vld [vmem:[#allocation3 + $0x1490] sm:$0xff]
    %v3408 = vld [vmem:[#allocation3 + $0x1498] sm:$0xff]
    %v3409 = vld [vmem:[#allocation3 + $0x14a0] sm:$0xff]
    %v3410 = vld [vmem:[#allocation3 + $0x14a8] sm:$0xff]
    %v3411 = vld [vmem:[#allocation3 + $0x14b0] sm:$0xff]
    %v3412 = vld [vmem:[#allocation3 + $0x14b8] sm:$0xff]
    %v3413 = vld [vmem:[#allocation3 + $0x14c0] sm:$0xff]
    %v3414 = vld [vmem:[#allocation3 + $0x14c8] sm:$0xff]
    %v3415 = vld [vmem:[#allocation3 + $0x14d0] sm:$0xff]
    %v3416 = vld [vmem:[#allocation3 + $0x14d8] sm:$0xff]
    %v3417 = vld [vmem:[#allocation3 + $0x14e0] sm:$0xff]
    %v3418 = vld [vmem:[#allocation3 + $0x14e8] sm:$0xff]
    %v3419 = vld [vmem:[#allocation3 + $0x14f0] sm:$0xff]
    %v3420 = vld [vmem:[#allocation3 + $0x14f8] sm:$0xff]
    %v3421 = vld [vmem:[#allocation3 + $0x1500] sm:$0xff]
    %v3422 = vld [vmem:[#allocation3 + $0x1508] sm:$0xff]
    %v3423 = vld [vmem:[#allocation3 + $0x1510] sm:$0xff]
    %v3424 = vld [vmem:[#allocation3 + $0x1518] sm:$0xff]
    %v3425 = vld [vmem:[#allocation3 + $0x1520] sm:$0xff]
    %v3426 = vld [vmem:[#allocation3 + $0x1528] sm:$0xff]
    %v3427 = vld [vmem:[#allocation3 + $0x1530] sm:$0xff]
    %v3428 = vld [vmem:[#allocation3 + $0x1538] sm:$0xff]
    %v3429 = vld [vmem:[#allocation3 + $0x1540] sm:$0xff]
    %v3430 = vld [vmem:[#allocation3 + $0x1548] sm:$0xff]
    %v3431 = vld [vmem:[#allocation3 + $0x1550] sm:$0xff]
    %v3432 = vld [vmem:[#allocation3 + $0x1558] sm:$0xff]
    %v3433 = vld [vmem:[#allocation3 + $0x1560] sm:$0xff]
    %v3434 = vld [vmem:[#allocation3 + $0x1568] sm:$0xff]
    %v3435 = vld [vmem:[#allocation3 + $0x1570] sm:$0xff]
    %v3436 = vld [vmem:[#allocation3 + $0x1578] sm:$0xff]
    %v3437 = vld [vmem:[#allocation3 + $0x1580] sm:$0xff]
    %v3438 = vld [vmem:[#allocation3 + $0x1588] sm:$0xff]
    %v3439 = vld [vmem:[#allocation3 + $0x1590] sm:$0xff]
    %v3440 = vld [vmem:[#allocation3 + $0x1598] sm:$0xff]
    %v3441 = vld [vmem:[#allocation3 + $0x15a0] sm:$0xff]
    %v3442 = vld [vmem:[#allocation3 + $0x15a8] sm:$0xff]
    %v3443 = vld [vmem:[#allocation3 + $0x15b0] sm:$0xff]
    %v3444 = vld [vmem:[#allocation3 + $0x15b8] sm:$0xff]
    %v3445 = vld [vmem:[#allocation3 + $0x15c0] sm:$0xff]
    %v3446 = vld [vmem:[#allocation3 + $0x15c8] sm:$0xff]
    %v3447 = vld [vmem:[#allocation3 + $0x15d0] sm:$0xff]
    %v3448 = vld [vmem:[#allocation3 + $0x15d8] sm:$0xff]
    %v3449 = vld [vmem:[#allocation3 + $0x15e0] sm:$0xff]
    %v3450 = vld [vmem:[#allocation3 + $0x15e8] sm:$0xff]
    %v3451 = vld [vmem:[#allocation3 + $0x15f0] sm:$0xff]
    %v3452 = vld [vmem:[#allocation3 + $0x15f8] sm:$0xff]
    %v3453 = vld [vmem:[#allocation3 + $0x1600] sm:$0xff]
    %v3454 = vld [vmem:[#allocation3 + $0x1608] sm:$0xff]
    %v3455 = vld [vmem:[#allocation3 + $0x1610] sm:$0xff]
    %v3456 = vld [vmem:[#allocation3 + $0x1618] sm:$0xff]
    %v3457 = vld [vmem:[#allocation3 + $0x1620] sm:$0xff]
    %v3458 = vld [vmem:[#allocation3 + $0x1628] sm:$0xff]
    %v3459 = vld [vmem:[#allocation3 + $0x1630] sm:$0xff]
    %v3460 = vld [vmem:[#allocation3 + $0x1638] sm:$0xff]
    %v3461 = vld [vmem:[#allocation3 + $0x1640] sm:$0xff]
    %v3462 = vld [vmem:[#allocation3 + $0x1648] sm:$0xff]
    %v3463 = vld [vmem:[#allocation3 + $0x1650] sm:$0xff]
    %v3464 = vld [vmem:[#allocation3 + $0x1658] sm:$0xff]
    %v3465 = vld [vmem:[#allocation3 + $0x1660] sm:$0xff]
    %v3466 = vld [vmem:[#allocation3 + $0x1668] sm:$0xff]
    %v3467 = vld [vmem:[#allocation3 + $0x1670] sm:$0xff]
    %v3468 = vld [vmem:[#allocation3 + $0x1678] sm:$0xff]
    %v3469 = vld [vmem:[#allocation3 + $0x1680] sm:$0xff]
    %v3470 = vld [vmem:[#allocation3 + $0x1688] sm:$0xff]
    %v3471 = vld [vmem:[#allocation3 + $0x1690] sm:$0xff]
    %v3472 = vld [vmem:[#allocation3 + $0x1698] sm:$0xff]
    %v3473 = vld [vmem:[#allocation3 + $0x16a0] sm:$0xff]
    %v3474 = vld [vmem:[#allocation3 + $0x16a8] sm:$0xff]
    %v3475 = vld [vmem:[#allocation3 + $0x16b0] sm:$0xff]
    %v3476 = vld [vmem:[#allocation3 + $0x16b8] sm:$0xff]
    %v3477 = vld [vmem:[#allocation3 + $0x16c0] sm:$0xff]
    %v3478 = vld [vmem:[#allocation3 + $0x16c8] sm:$0xff]
    %v3479 = vld [vmem:[#allocation3 + $0x16d0] sm:$0xff]
    %v3480 = vld [vmem:[#allocation3 + $0x16d8] sm:$0xff]
    %v3481 = vld [vmem:[#allocation3 + $0x16e0] sm:$0xff]
    %v3482 = vld [vmem:[#allocation3 + $0x16e8] sm:$0xff]
    %v3483 = vld [vmem:[#allocation3 + $0x16f0] sm:$0xff]
    %v3484 = vld [vmem:[#allocation3 + $0x16f8] sm:$0xff]
    %v3485 = vld [vmem:[#allocation3 + $0x1700] sm:$0xff]
    %v3486 = vld [vmem:[#allocation3 + $0x1708] sm:$0xff]
    %v3487 = vld [vmem:[#allocation3 + $0x1710] sm:$0xff]
    %v3488 = vld [vmem:[#allocation3 + $0x1718] sm:$0xff]
    %v3489 = vld [vmem:[#allocation3 + $0x1720] sm:$0xff]
    %v3490 = vld [vmem:[#allocation3 + $0x1728] sm:$0xff]
    %v3491 = vld [vmem:[#allocation3 + $0x1730] sm:$0xff]
    %v3492 = vld [vmem:[#allocation3 + $0x1738] sm:$0xff]
    %v3493 = vld [vmem:[#allocation3 + $0x1740] sm:$0xff]
    %v3494 = vld [vmem:[#allocation3 + $0x1748] sm:$0xff]
    %v3495 = vld [vmem:[#allocation3 + $0x1750] sm:$0xff]
    %v3496 = vld [vmem:[#allocation3 + $0x1758] sm:$0xff]
    %v3497 = vld [vmem:[#allocation3 + $0x1760] sm:$0xff]
    %v3498 = vld [vmem:[#allocation3 + $0x1768] sm:$0xff]
    %v3499 = vld [vmem:[#allocation3 + $0x1770] sm:$0xff]
    %v3500 = vld [vmem:[#allocation3 + $0x1778] sm:$0xff]
    %v3501 = vld [vmem:[#allocation3 + $0x1780] sm:$0xff]
    %v3502 = vld [vmem:[#allocation3 + $0x1788] sm:$0xff]
    %v3503 = vld [vmem:[#allocation3 + $0x1790] sm:$0xff]
    %v3504 = vld [vmem:[#allocation3 + $0x1798] sm:$0xff]
    %v3505 = vld [vmem:[#allocation3 + $0x17a0] sm:$0xff]
    %v3506 = vld [vmem:[#allocation3 + $0x17a8] sm:$0xff]
    %v3507 = vld [vmem:[#allocation3 + $0x17b0] sm:$0xff]
    %v3508 = vld [vmem:[#allocation3 + $0x17b8] sm:$0xff]
    %v3509 = vld [vmem:[#allocation3 + $0x17c0] sm:$0xff]
    %v3510 = vld [vmem:[#allocation3 + $0x17c8] sm:$0xff]
    %v3511 = vld [vmem:[#allocation3 + $0x17d0] sm:$0xff]
    %v3512 = vld [vmem:[#allocation3 + $0x17d8] sm:$0xff]
    %v3513 = vld [vmem:[#allocation3 + $0x17e0] sm:$0xff]
    %v3514 = vld [vmem:[#allocation3 + $0x17e8] sm:$0xff]
    %v3515 = vld [vmem:[#allocation3 + $0x17f0] sm:$0xff]
    %v3516 = vld [vmem:[#allocation3 + $0x17f8] sm:$0xff]
    %v3517 = vld [vmem:[#allocation3 + $0x1800] sm:$0xff]
    %v3518 = vld [vmem:[#allocation3 + $0x1808] sm:$0xff]
    %v3519 = vld [vmem:[#allocation3 + $0x1810] sm:$0xff]
    %v3520 = vld [vmem:[#allocation3 + $0x1818] sm:$0xff]
    %v3521 = vld [vmem:[#allocation3 + $0x1820] sm:$0xff]
    %v3522 = vld [vmem:[#allocation3 + $0x1828] sm:$0xff]
    %v3523 = vld [vmem:[#allocation3 + $0x1830] sm:$0xff]
    %v3524 = vld [vmem:[#allocation3 + $0x1838] sm:$0xff]
    %v3525 = vld [vmem:[#allocation3 + $0x1840] sm:$0xff]
    %v3526 = vld [vmem:[#allocation3 + $0x1848] sm:$0xff]
    %v3527 = vld [vmem:[#allocation3 + $0x1850] sm:$0xff]
    %v3528 = vld [vmem:[#allocation3 + $0x1858] sm:$0xff]
    %v3529 = vld [vmem:[#allocation3 + $0x1860] sm:$0xff]
    %v3530 = vld [vmem:[#allocation3 + $0x1868] sm:$0xff]
    %v3531 = vld [vmem:[#allocation3 + $0x1870] sm:$0xff]
    %v3532 = vld [vmem:[#allocation3 + $0x1878] sm:$0xff]
    %v3533 = vld [vmem:[#allocation3 + $0x1880] sm:$0xff]
    %v3534 = vld [vmem:[#allocation3 + $0x1888] sm:$0xff]
    %v3535 = vld [vmem:[#allocation3 + $0x1890] sm:$0xff]
    %v3536 = vld [vmem:[#allocation3 + $0x1898] sm:$0xff]
    %v3537 = vld [vmem:[#allocation3 + $0x18a0] sm:$0xff]
    %v3538 = vld [vmem:[#allocation3 + $0x18a8] sm:$0xff]
    %v3539 = vld [vmem:[#allocation3 + $0x18b0] sm:$0xff]
    %v3540 = vld [vmem:[#allocation3 + $0x18b8] sm:$0xff]
    %v3541 = vld [vmem:[#allocation3 + $0x18c0] sm:$0xff]
    %v3542 = vld [vmem:[#allocation3 + $0x18c8] sm:$0xff]
    %v3543 = vld [vmem:[#allocation3 + $0x18d0] sm:$0xff]
    %v3544 = vld [vmem:[#allocation3 + $0x18d8] sm:$0xff]
    %v3545 = vld [vmem:[#allocation3 + $0x18e0] sm:$0xff]
    %v3546 = vld [vmem:[#allocation3 + $0x18e8] sm:$0xff]
    %v3547 = vld [vmem:[#allocation3 + $0x18f0] sm:$0xff]
    %v3548 = vld [vmem:[#allocation3 + $0x18f8] sm:$0xff]
    %v3549 = vld [vmem:[#allocation3 + $0x1900] sm:$0xff]
    %v3550 = vld [vmem:[#allocation3 + $0x1908] sm:$0xff]
    %v3551 = vld [vmem:[#allocation3 + $0x1910] sm:$0xff]
    %v3552 = vld [vmem:[#allocation3 + $0x1918] sm:$0xff]
    %v3553 = vld [vmem:[#allocation3 + $0x1920] sm:$0xff]
    %v3554 = vld [vmem:[#allocation3 + $0x1928] sm:$0xff]
    %v3555 = vld [vmem:[#allocation3 + $0x1930] sm:$0xff]
    %v3556 = vld [vmem:[#allocation3 + $0x1938] sm:$0xff]
    %v3557 = vld [vmem:[#allocation3 + $0x1940] sm:$0xff]
    %v3558 = vld [vmem:[#allocation3 + $0x1948] sm:$0xff]
    %v3559 = vld [vmem:[#allocation3 + $0x1950] sm:$0xff]
    %v3560 = vld [vmem:[#allocation3 + $0x1958] sm:$0xff]
    %v3561 = vld [vmem:[#allocation3 + $0x1960] sm:$0xff]
    %v3562 = vld [vmem:[#allocation3 + $0x1968] sm:$0xff]
    %v3563 = vld [vmem:[#allocation3 + $0x1970] sm:$0xff]
    %v3564 = vld [vmem:[#allocation3 + $0x1978] sm:$0xff]
    %v3565 = vld [vmem:[#allocation3 + $0x1980] sm:$0xff]
    %v3566 = vld [vmem:[#allocation3 + $0x1988] sm:$0xff]
    %v3567 = vld [vmem:[#allocation3 + $0x1990] sm:$0xff]
    %v3568 = vld [vmem:[#allocation3 + $0x1998] sm:$0xff]
    %v3569 = vld [vmem:[#allocation3 + $0x19a0] sm:$0xff]
    %v3570 = vld [vmem:[#allocation3 + $0x19a8] sm:$0xff]
    %v3571 = vld [vmem:[#allocation3 + $0x19b0] sm:$0xff]
    %v3572 = vld [vmem:[#allocation3 + $0x19b8] sm:$0xff]
    %v3573 = vld [vmem:[#allocation3 + $0x19c0] sm:$0xff]
    %v3574 = vld [vmem:[#allocation3 + $0x19c8] sm:$0xff]
    %v3575 = vld [vmem:[#allocation3 + $0x19d0] sm:$0xff]
    %v3576 = vld [vmem:[#allocation3 + $0x19d8] sm:$0xff]
    %v3577 = vld [vmem:[#allocation3 + $0x19e0] sm:$0xff]
    %v3578 = vld [vmem:[#allocation3 + $0x19e8] sm:$0xff]
    %v3579 = vld [vmem:[#allocation3 + $0x19f0] sm:$0xff]
    %v3580 = vld [vmem:[#allocation3 + $0x19f8] sm:$0xff]
    %v3581 = vld [vmem:[#allocation3 + $0x1a00] sm:$0xff]
    %v3582 = vld [vmem:[#allocation3 + $0x1a08] sm:$0xff]
    %v3583 = vld [vmem:[#allocation3 + $0x1a10] sm:$0xff]
    %v3584 = vld [vmem:[#allocation3 + $0x1a18] sm:$0xff]
    %v3585 = vld [vmem:[#allocation3 + $0x1a20] sm:$0xff]
    %v3586 = vld [vmem:[#allocation3 + $0x1a28] sm:$0xff]
    %v3587 = vld [vmem:[#allocation3 + $0x1a30] sm:$0xff]
    %v3588 = vld [vmem:[#allocation3 + $0x1a38] sm:$0xff]
    %v3589 = vld [vmem:[#allocation3 + $0x1a40] sm:$0xff]
    %v3590 = vld [vmem:[#allocation3 + $0x1a48] sm:$0xff]
    %v3591 = vld [vmem:[#allocation3 + $0x1a50] sm:$0xff]
    %v3592 = vld [vmem:[#allocation3 + $0x1a58] sm:$0xff]
    %v3593 = vld [vmem:[#allocation3 + $0x1a60] sm:$0xff]
    %v3594 = vld [vmem:[#allocation3 + $0x1a68] sm:$0xff]
    %v3595 = vld [vmem:[#allocation3 + $0x1a70] sm:$0xff]
    %v3596 = vld [vmem:[#allocation3 + $0x1a78] sm:$0xff]
    %v3597 = vld [vmem:[#allocation3 + $0x1a80] sm:$0xff]
    %v3598 = vld [vmem:[#allocation3 + $0x1a88] sm:$0xff]
    %v3599 = vld [vmem:[#allocation3 + $0x1a90] sm:$0xff]
    %v3600 = vld [vmem:[#allocation3 + $0x1a98] sm:$0xff]
    %v3601 = vld [vmem:[#allocation3 + $0x1aa0] sm:$0xff]
    %v3602 = vld [vmem:[#allocation3 + $0x1aa8] sm:$0xff]
    %v3603 = vld [vmem:[#allocation3 + $0x1ab0] sm:$0xff]
    %v3604 = vld [vmem:[#allocation3 + $0x1ab8] sm:$0xff]
    %v3605 = vld [vmem:[#allocation3 + $0x1ac0] sm:$0xff]
    %v3606 = vld [vmem:[#allocation3 + $0x1ac8] sm:$0xff]
    %v3607 = vld [vmem:[#allocation3 + $0x1ad0] sm:$0xff]
    %v3608 = vld [vmem:[#allocation3 + $0x1ad8] sm:$0xff]
    %v3609 = vld [vmem:[#allocation3 + $0x1ae0] sm:$0xff]
    %v3610 = vld [vmem:[#allocation3 + $0x1ae8] sm:$0xff]
    %v3611 = vld [vmem:[#allocation3 + $0x1af0] sm:$0xff]
    %v3612 = vld [vmem:[#allocation3 + $0x1af8] sm:$0xff]
    %v3613 = vld [vmem:[#allocation3 + $0x1b00] sm:$0xff]
    %v3614 = vld [vmem:[#allocation3 + $0x1b08] sm:$0xff]
    %v3615 = vld [vmem:[#allocation3 + $0x1b10] sm:$0xff]
    %v3616 = vld [vmem:[#allocation3 + $0x1b18] sm:$0xff]
    %v3617 = vld [vmem:[#allocation3 + $0x1b20] sm:$0xff]
    %v3618 = vld [vmem:[#allocation3 + $0x1b28] sm:$0xff]
    %v3619 = vld [vmem:[#allocation3 + $0x1b30] sm:$0xff]
    %v3620 = vld [vmem:[#allocation3 + $0x1b38] sm:$0xff]
    %v3621 = vld [vmem:[#allocation3 + $0x1b40] sm:$0xff]
    %v3622 = vld [vmem:[#allocation3 + $0x1b48] sm:$0xff]
    %v3623 = vld [vmem:[#allocation3 + $0x1b50] sm:$0xff]
    %v3624 = vld [vmem:[#allocation3 + $0x1b58] sm:$0xff]
    %v3625 = vld [vmem:[#allocation3 + $0x1b60] sm:$0xff]
    %v3626 = vld [vmem:[#allocation3 + $0x1b68] sm:$0xff]
    %v3627 = vld [vmem:[#allocation3 + $0x1b70] sm:$0xff]
    %v3628 = vld [vmem:[#allocation3 + $0x1b78] sm:$0xff]
    %v3629 = vld [vmem:[#allocation3 + $0x1b80] sm:$0xff]
    %v3630 = vld [vmem:[#allocation3 + $0x1b88] sm:$0xff]
    %v3631 = vld [vmem:[#allocation3 + $0x1b90] sm:$0xff]
    %v3632 = vld [vmem:[#allocation3 + $0x1b98] sm:$0xff]
    %v3633 = vld [vmem:[#allocation3 + $0x1ba0] sm:$0xff]
    %v3634 = vld [vmem:[#allocation3 + $0x1ba8] sm:$0xff]
    %v3635 = vld [vmem:[#allocation3 + $0x1bb0] sm:$0xff]
    %v3636 = vld [vmem:[#allocation3 + $0x1bb8] sm:$0xff]
    %v3637 = vld [vmem:[#allocation3 + $0x1bc0] sm:$0xff]
    %v3638 = vld [vmem:[#allocation3 + $0x1bc8] sm:$0xff]
    %v3639 = vld [vmem:[#allocation3 + $0x1bd0] sm:$0xff]
    %v3640 = vld [vmem:[#allocation3 + $0x1bd8] sm:$0xff]
    %v3641 = vld [vmem:[#allocation3 + $0x1be0] sm:$0xff]
    %v3642 = vld [vmem:[#allocation3 + $0x1be8] sm:$0xff]
    %v3643 = vld [vmem:[#allocation3 + $0x1bf0] sm:$0xff]
    %v3644 = vld [vmem:[#allocation3 + $0x1bf8] sm:$0xff]
    %v3645 = vld [vmem:[#allocation3 + $0x1c00] sm:$0xff]
    %v3646 = vld [vmem:[#allocation3 + $0x1c08] sm:$0xff]
    %v3647 = vld [vmem:[#allocation3 + $0x1c10] sm:$0xff]
    %v3648 = vld [vmem:[#allocation3 + $0x1c18] sm:$0xff]
    %v3649 = vld [vmem:[#allocation3 + $0x1c20] sm:$0xff]
    %v3650 = vld [vmem:[#allocation3 + $0x1c28] sm:$0xff]
    %v3651 = vld [vmem:[#allocation3 + $0x1c30] sm:$0xff]
    %v3652 = vld [vmem:[#allocation3 + $0x1c38] sm:$0xff]
    %v3653 = vld [vmem:[#allocation3 + $0x1c40] sm:$0xff]
    %v3654 = vld [vmem:[#allocation3 + $0x1c48] sm:$0xff]
    %v3655 = vld [vmem:[#allocation3 + $0x1c50] sm:$0xff]
    %v3656 = vld [vmem:[#allocation3 + $0x1c58] sm:$0xff]
    %v3657 = vld [vmem:[#allocation3 + $0x1c60] sm:$0xff]
    %v3658 = vld [vmem:[#allocation3 + $0x1c68] sm:$0xff]
    %v3659 = vld [vmem:[#allocation3 + $0x1c70] sm:$0xff]
    %v3660 = vld [vmem:[#allocation3 + $0x1c78] sm:$0xff]
    %v3661 = vld [vmem:[#allocation3 + $0x1c80] sm:$0xff]
    %v3662 = vld [vmem:[#allocation3 + $0x1c88] sm:$0xff]
    %v3663 = vld [vmem:[#allocation3 + $0x1c90] sm:$0xff]
    %v3664 = vld [vmem:[#allocation3 + $0x1c98] sm:$0xff]
    %v3665 = vld [vmem:[#allocation3 + $0x1ca0] sm:$0xff]
    %v3666 = vld [vmem:[#allocation3 + $0x1ca8] sm:$0xff]
    %v3667 = vld [vmem:[#allocation3 + $0x1cb0] sm:$0xff]
    %v3668 = vld [vmem:[#allocation3 + $0x1cb8] sm:$0xff]
    %v3669 = vld [vmem:[#allocation3 + $0x1cc0] sm:$0xff]
    %v3670 = vld [vmem:[#allocation3 + $0x1cc8] sm:$0xff]
    %v3671 = vld [vmem:[#allocation3 + $0x1cd0] sm:$0xff]
    %v3672 = vld [vmem:[#allocation3 + $0x1cd8] sm:$0xff]
    %v3673 = vld [vmem:[#allocation3 + $0x1ce0] sm:$0xff]
    %v3674 = vld [vmem:[#allocation3 + $0x1ce8] sm:$0xff]
    %v3675 = vld [vmem:[#allocation3 + $0x1cf0] sm:$0xff]
    %v3676 = vld [vmem:[#allocation3 + $0x1cf8] sm:$0xff]
    %v3677 = vld [vmem:[#allocation3 + $0x1d00] sm:$0xff]
    %v3678 = vld [vmem:[#allocation3 + $0x1d08] sm:$0xff]
    %v3679 = vld [vmem:[#allocation3 + $0x1d10] sm:$0xff]
    %v3680 = vld [vmem:[#allocation3 + $0x1d18] sm:$0xff]
    %v3681 = vld [vmem:[#allocation3 + $0x1d20] sm:$0xff]
    %v3682 = vld [vmem:[#allocation3 + $0x1d28] sm:$0xff]
    %v3683 = vld [vmem:[#allocation3 + $0x1d30] sm:$0xff]
    %v3684 = vld [vmem:[#allocation3 + $0x1d38] sm:$0xff]
    %v3685 = vld [vmem:[#allocation3 + $0x1d40] sm:$0xff]
    %v3686 = vld [vmem:[#allocation3 + $0x1d48] sm:$0xff]
    %v3687 = vld [vmem:[#allocation3 + $0x1d50] sm:$0xff]
    %v3688 = vld [vmem:[#allocation3 + $0x1d58] sm:$0xff]
    %v3689 = vld [vmem:[#allocation3 + $0x1d60] sm:$0xff]
    %v3690 = vld [vmem:[#allocation3 + $0x1d68] sm:$0xff]
    %v3691 = vld [vmem:[#allocation3 + $0x1d70] sm:$0xff]
    %v3692 = vld [vmem:[#allocation3 + $0x1d78] sm:$0xff]
    %v3693 = vld [vmem:[#allocation3 + $0x1d80] sm:$0xff]
    %v3694 = vld [vmem:[#allocation3 + $0x1d88] sm:$0xff]
    %v3695 = vld [vmem:[#allocation3 + $0x1d90] sm:$0xff]
    %v3696 = vld [vmem:[#allocation3 + $0x1d98] sm:$0xff]
    %v3697 = vld [vmem:[#allocation3 + $0x1da0] sm:$0xff]
    %v3698 = vld [vmem:[#allocation3 + $0x1da8] sm:$0xff]
    %v3699 = vld [vmem:[#allocation3 + $0x1db0] sm:$0xff]
    %v3700 = vld [vmem:[#allocation3 + $0x1db8] sm:$0xff]
    %v3701 = vld [vmem:[#allocation3 + $0x1dc0] sm:$0xff]
    %v3702 = vld [vmem:[#allocation3 + $0x1dc8] sm:$0xff]
    %v3703 = vld [vmem:[#allocation3 + $0x1dd0] sm:$0xff]
    %v3704 = vld [vmem:[#allocation3 + $0x1dd8] sm:$0xff]
    %v3705 = vld [vmem:[#allocation3 + $0x1de0] sm:$0xff]
    %v3706 = vld [vmem:[#allocation3 + $0x1de8] sm:$0xff]
    %v3707 = vld [vmem:[#allocation3 + $0x1df0] sm:$0xff]
    %v3708 = vld [vmem:[#allocation3 + $0x1df8] sm:$0xff]
    %v3709 = vld [vmem:[#allocation3 + $0x1e00] sm:$0xff]
    %v3710 = vld [vmem:[#allocation3 + $0x1e08] sm:$0xff]
    %v3711 = vld [vmem:[#allocation3 + $0x1e10] sm:$0xff]
    %v3712 = vld [vmem:[#allocation3 + $0x1e18] sm:$0xff]
    %v3713 = vld [vmem:[#allocation3 + $0x1e20] sm:$0xff]
    %v3714 = vld [vmem:[#allocation3 + $0x1e28] sm:$0xff]
    %v3715 = vld [vmem:[#allocation3 + $0x1e30] sm:$0xff]
    %v3716 = vld [vmem:[#allocation3 + $0x1e38] sm:$0xff]
    %v3717 = vld [vmem:[#allocation3 + $0x1e40] sm:$0xff]
    %v3718 = vld [vmem:[#allocation3 + $0x1e48] sm:$0xff]
    %v3719 = vld [vmem:[#allocation3 + $0x1e50] sm:$0xff]
    %v3720 = vld [vmem:[#allocation3 + $0x1e58] sm:$0xff]
    %v3721 = vld [vmem:[#allocation3 + $0x1e60] sm:$0xff]
    %v3722 = vld [vmem:[#allocation3 + $0x1e68] sm:$0xff]
    %v3723 = vld [vmem:[#allocation3 + $0x1e70] sm:$0xff]
    %v3724 = vld [vmem:[#allocation3 + $0x1e78] sm:$0xff]
    %v3725 = vld [vmem:[#allocation3 + $0x1e80] sm:$0xff]
    %v3726 = vld [vmem:[#allocation3 + $0x1e88] sm:$0xff]
    %v3727 = vld [vmem:[#allocation3 + $0x1e90] sm:$0xff]
    %v3728 = vld [vmem:[#allocation3 + $0x1e98] sm:$0xff]
    %v3729 = vld [vmem:[#allocation3 + $0x1ea0] sm:$0xff]
    %v3730 = vld [vmem:[#allocation3 + $0x1ea8] sm:$0xff]
    %v3731 = vld [vmem:[#allocation3 + $0x1eb0] sm:$0xff]
    %v3732 = vld [vmem:[#allocation3 + $0x1eb8] sm:$0xff]
    %v3733 = vld [vmem:[#allocation3 + $0x1ec0] sm:$0xff]
    %v3734 = vld [vmem:[#allocation3 + $0x1ec8] sm:$0xff]
    %v3735 = vld [vmem:[#allocation3 + $0x1ed0] sm:$0xff]
    %v3736 = vld [vmem:[#allocation3 + $0x1ed8] sm:$0xff]
    %v3737 = vld [vmem:[#allocation3 + $0x1ee0] sm:$0xff]
    %v3738 = vld [vmem:[#allocation3 + $0x1ee8] sm:$0xff]
    %v3739 = vld [vmem:[#allocation3 + $0x1ef0] sm:$0xff]
    %v3740 = vld [vmem:[#allocation3 + $0x1ef8] sm:$0xff]
    %v3741 = vld [vmem:[#allocation3 + $0x1f00] sm:$0xff]
    %v3742 = vld [vmem:[#allocation3 + $0x1f08] sm:$0xff]
    %v3743 = vld [vmem:[#allocation3 + $0x1f10] sm:$0xff]
    %v3744 = vld [vmem:[#allocation3 + $0x1f18] sm:$0xff]
    %v3745 = vld [vmem:[#allocation3 + $0x1f20] sm:$0xff]
    %v3746 = vld [vmem:[#allocation3 + $0x1f28] sm:$0xff]
    %v3747 = vld [vmem:[#allocation3 + $0x1f30] sm:$0xff]
    %v3748 = vld [vmem:[#allocation3 + $0x1f38] sm:$0xff]
    %v3749 = vld [vmem:[#allocation3 + $0x1f40] sm:$0xff]
    %v3750 = vld [vmem:[#allocation3 + $0x1f48] sm:$0xff]
    %v3751 = vld [vmem:[#allocation3 + $0x1f50] sm:$0xff]
    %v3752 = vld [vmem:[#allocation3 + $0x1f58] sm:$0xff]
    %v3753 = vld [vmem:[#allocation3 + $0x1f60] sm:$0xff]
    %v3754 = vld [vmem:[#allocation3 + $0x1f68] sm:$0xff]
    %v3755 = vld [vmem:[#allocation3 + $0x1f70] sm:$0xff]
    %v3756 = vld [vmem:[#allocation3 + $0x1f78] sm:$0xff]
    %v3757 = vld [vmem:[#allocation3 + $0x1f80] sm:$0xff]
    %v3758 = vld [vmem:[#allocation3 + $0x1f88] sm:$0xff]
    %v3759 = vld [vmem:[#allocation3 + $0x1f90] sm:$0xff]
    %v3760 = vld [vmem:[#allocation3 + $0x1f98] sm:$0xff]
    %v3761 = vld [vmem:[#allocation3 + $0x1fa0] sm:$0xff]
    %v3762 = vld [vmem:[#allocation3 + $0x1fa8] sm:$0xff]
    %v3763 = vld [vmem:[#allocation3 + $0x1fb0] sm:$0xff]
    %v3764 = vld [vmem:[#allocation3 + $0x1fb8] sm:$0xff]
    %v3765 = vld [vmem:[#allocation3 + $0x1fc0] sm:$0xff]
    %v3766 = vld [vmem:[#allocation3 + $0x1fc8] sm:$0xff]
    %v3767 = vld [vmem:[#allocation3 + $0x1fd0] sm:$0xff]
    %v3768 = vld [vmem:[#allocation3 + $0x1fd8] sm:$0xff]
    %v3769 = vld [vmem:[#allocation3 + $0x1fe0] sm:$0xff]
    %v3770 = vld [vmem:[#allocation3 + $0x1fe8] sm:$0xff]
    %v3771 = vld [vmem:[#allocation3 + $0x1ff0] sm:$0xff]
    %v3772 = vld [vmem:[#allocation3 + $0x1ff8] sm:$0xff]
    %v3773 = vld [vmem:[#allocation14] sm:$0x77]
    %v3774 = vld [vmem:[#allocation14 + $0x8] sm:$0x77]
    %v3775 = vld [vmem:[#allocation14 + $0x10] sm:$0x77]
    %v3776 = vld [vmem:[#allocation14 + $0x18] sm:$0x77]
    %v3777 = vld [vmem:[#allocation14 + $0x20] sm:$0x77]
    %v3778 = vld [vmem:[#allocation14 + $0x28] sm:$0x77]
    %v3779 = vld [vmem:[#allocation14 + $0x30] sm:$0x77]
    %v3780 = vld [vmem:[#allocation14 + $0x38] sm:$0x77]
    %v3781 = vunpack.c.l.bf16 %v2749
    %v3782 = vunpack.c.h.bf16 %v2749
    %v3783 = vunpack.c.l.bf16 %v2750
    %v3784 = vunpack.c.h.bf16 %v2750
    %v3785 = vunpack.c.l.bf16 %v2751
    %v3786 = vunpack.c.h.bf16 %v2751
    %v3787 = vunpack.c.l.bf16 %v2752
    %v3788 = vunpack.c.h.bf16 %v2752
    %v3789 = vunpack.c.l.bf16 %v2753
    %v3790 = vunpack.c.h.bf16 %v2753
    %v3791 = vunpack.c.l.bf16 %v2754
    %v3792 = vunpack.c.h.bf16 %v2754
    %v3793 = vunpack.c.l.bf16 %v2755
    %v3794 = vunpack.c.h.bf16 %v2755
    %v3795 = vunpack.c.l.bf16 %v2756
    %v3796 = vunpack.c.h.bf16 %v2756
    %v3797 = vunpack.c.l.bf16 %v2757
    %v3798 = vunpack.c.h.bf16 %v2757
    %v3799 = vunpack.c.l.bf16 %v2758
    %v3800 = vunpack.c.h.bf16 %v2758
    %v3801 = vunpack.c.l.bf16 %v2759
    %v3802 = vunpack.c.h.bf16 %v2759
    %v3803 = vunpack.c.l.bf16 %v2760
    %v3804 = vunpack.c.h.bf16 %v2760
    %v3805 = vunpack.c.l.bf16 %v2761
    %v3806 = vunpack.c.h.bf16 %v2761
    %v3807 = vunpack.c.l.bf16 %v2762
    %v3808 = vunpack.c.h.bf16 %v2762
    %v3809 = vunpack.c.l.bf16 %v2763
    %v3810 = vunpack.c.h.bf16 %v2763
    %v3811 = vunpack.c.l.bf16 %v2764
    %v3812 = vunpack.c.h.bf16 %v2764
    %v3813 = vunpack.c.l.bf16 %v2765
    %v3814 = vunpack.c.h.bf16 %v2765
    %v3815 = vunpack.c.l.bf16 %v2766
    %v3816 = vunpack.c.h.bf16 %v2766
    %v3817 = vunpack.c.l.bf16 %v2767
    %v3818 = vunpack.c.h.bf16 %v2767
    %v3819 = vunpack.c.l.bf16 %v2768
    %v3820 = vunpack.c.h.bf16 %v2768
    %v3821 = vunpack.c.l.bf16 %v2769
    %v3822 = vunpack.c.h.bf16 %v2769
    %v3823 = vunpack.c.l.bf16 %v2770
    %v3824 = vunpack.c.h.bf16 %v2770
    %v3825 = vunpack.c.l.bf16 %v2771
    %v3826 = vunpack.c.h.bf16 %v2771
    %v3827 = vunpack.c.l.bf16 %v2772
    %v3828 = vunpack.c.h.bf16 %v2772
    %v3829 = vunpack.c.l.bf16 %v2773
    %v3830 = vunpack.c.h.bf16 %v2773
    %v3831 = vunpack.c.l.bf16 %v2774
    %v3832 = vunpack.c.h.bf16 %v2774
    %v3833 = vunpack.c.l.bf16 %v2775
    %v3834 = vunpack.c.h.bf16 %v2775
    %v3835 = vunpack.c.l.bf16 %v2776
    %v3836 = vunpack.c.h.bf16 %v2776
    %v3837 = vunpack.c.l.bf16 %v2777
    %v3838 = vunpack.c.h.bf16 %v2777
    %v3839 = vunpack.c.l.bf16 %v2778
    %v3840 = vunpack.c.h.bf16 %v2778
    %v3841 = vunpack.c.l.bf16 %v2779
    %v3842 = vunpack.c.h.bf16 %v2779
    %v3843 = vunpack.c.l.bf16 %v2780
    %v3844 = vunpack.c.h.bf16 %v2780
    %v3845 = vunpack.c.l.bf16 %v2781
    %v3846 = vunpack.c.h.bf16 %v2781
    %v3847 = vunpack.c.l.bf16 %v2782
    %v3848 = vunpack.c.h.bf16 %v2782
    %v3849 = vunpack.c.l.bf16 %v2783
    %v3850 = vunpack.c.h.bf16 %v2783
    %v3851 = vunpack.c.l.bf16 %v2784
    %v3852 = vunpack.c.h.bf16 %v2784
    %v3853 = vunpack.c.l.bf16 %v2785
    %v3854 = vunpack.c.h.bf16 %v2785
    %v3855 = vunpack.c.l.bf16 %v2786
    %v3856 = vunpack.c.h.bf16 %v2786
    %v3857 = vunpack.c.l.bf16 %v2787
    %v3858 = vunpack.c.h.bf16 %v2787
    %v3859 = vunpack.c.l.bf16 %v2788
    %v3860 = vunpack.c.h.bf16 %v2788
    %v3861 = vunpack.c.l.bf16 %v2789
    %v3862 = vunpack.c.h.bf16 %v2789
    %v3863 = vunpack.c.l.bf16 %v2790
    %v3864 = vunpack.c.h.bf16 %v2790
    %v3865 = vunpack.c.l.bf16 %v2791
    %v3866 = vunpack.c.h.bf16 %v2791
    %v3867 = vunpack.c.l.bf16 %v2792
    %v3868 = vunpack.c.h.bf16 %v2792
    %v3869 = vunpack.c.l.bf16 %v2793
    %v3870 = vunpack.c.h.bf16 %v2793
    %v3871 = vunpack.c.l.bf16 %v2794
    %v3872 = vunpack.c.h.bf16 %v2794
    %v3873 = vunpack.c.l.bf16 %v2795
    %v3874 = vunpack.c.h.bf16 %v2795
    %v3875 = vunpack.c.l.bf16 %v2796
    %v3876 = vunpack.c.h.bf16 %v2796
    %v3877 = vunpack.c.l.bf16 %v2797
    %v3878 = vunpack.c.h.bf16 %v2797
    %v3879 = vunpack.c.l.bf16 %v2798
    %v3880 = vunpack.c.h.bf16 %v2798
    %v3881 = vunpack.c.l.bf16 %v2799
    %v3882 = vunpack.c.h.bf16 %v2799
    %v3883 = vunpack.c.l.bf16 %v2800
    %v3884 = vunpack.c.h.bf16 %v2800
    %v3885 = vunpack.c.l.bf16 %v2801
    %v3886 = vunpack.c.h.bf16 %v2801
    %v3887 = vunpack.c.l.bf16 %v2802
    %v3888 = vunpack.c.h.bf16 %v2802
    %v3889 = vunpack.c.l.bf16 %v2803
    %v3890 = vunpack.c.h.bf16 %v2803
    %v3891 = vunpack.c.l.bf16 %v2804
    %v3892 = vunpack.c.h.bf16 %v2804
    %v3893 = vunpack.c.l.bf16 %v2805
    %v3894 = vunpack.c.h.bf16 %v2805
    %v3895 = vunpack.c.l.bf16 %v2806
    %v3896 = vunpack.c.h.bf16 %v2806
    %v3897 = vunpack.c.l.bf16 %v2807
    %v3898 = vunpack.c.h.bf16 %v2807
    %v3899 = vunpack.c.l.bf16 %v2808
    %v3900 = vunpack.c.h.bf16 %v2808
    %v3901 = vunpack.c.l.bf16 %v2809
    %v3902 = vunpack.c.h.bf16 %v2809
    %v3903 = vunpack.c.l.bf16 %v2810
    %v3904 = vunpack.c.h.bf16 %v2810
    %v3905 = vunpack.c.l.bf16 %v2811
    %v3906 = vunpack.c.h.bf16 %v2811
    %v3907 = vunpack.c.l.bf16 %v2812
    %v3908 = vunpack.c.h.bf16 %v2812
    %v3909 = vunpack.c.l.bf16 %v2813
    %v3910 = vunpack.c.h.bf16 %v2813
    %v3911 = vunpack.c.l.bf16 %v2814
    %v3912 = vunpack.c.h.bf16 %v2814
    %v3913 = vunpack.c.l.bf16 %v2815
    %v3914 = vunpack.c.h.bf16 %v2815
    %v3915 = vunpack.c.l.bf16 %v2816
    %v3916 = vunpack.c.h.bf16 %v2816
    %v3917 = vunpack.c.l.bf16 %v2817
    %v3918 = vunpack.c.h.bf16 %v2817
    %v3919 = vunpack.c.l.bf16 %v2818
    %v3920 = vunpack.c.h.bf16 %v2818
    %v3921 = vunpack.c.l.bf16 %v2819
    %v3922 = vunpack.c.h.bf16 %v2819
    %v3923 = vunpack.c.l.bf16 %v2820
    %v3924 = vunpack.c.h.bf16 %v2820
    %v3925 = vunpack.c.l.bf16 %v2821
    %v3926 = vunpack.c.h.bf16 %v2821
    %v3927 = vunpack.c.l.bf16 %v2822
    %v3928 = vunpack.c.h.bf16 %v2822
    %v3929 = vunpack.c.l.bf16 %v2823
    %v3930 = vunpack.c.h.bf16 %v2823
    %v3931 = vunpack.c.l.bf16 %v2824
    %v3932 = vunpack.c.h.bf16 %v2824
    %v3933 = vunpack.c.l.bf16 %v2825
    %v3934 = vunpack.c.h.bf16 %v2825
    %v3935 = vunpack.c.l.bf16 %v2826
    %v3936 = vunpack.c.h.bf16 %v2826
    %v3937 = vunpack.c.l.bf16 %v2827
    %v3938 = vunpack.c.h.bf16 %v2827
    %v3939 = vunpack.c.l.bf16 %v2828
    %v3940 = vunpack.c.h.bf16 %v2828
    %v3941 = vunpack.c.l.bf16 %v2829
    %v3942 = vunpack.c.h.bf16 %v2829
    %v3943 = vunpack.c.l.bf16 %v2830
    %v3944 = vunpack.c.h.bf16 %v2830
    %v3945 = vunpack.c.l.bf16 %v2831
    %v3946 = vunpack.c.h.bf16 %v2831
    %v3947 = vunpack.c.l.bf16 %v2832
    %v3948 = vunpack.c.h.bf16 %v2832
    %v3949 = vunpack.c.l.bf16 %v2833
    %v3950 = vunpack.c.h.bf16 %v2833
    %v3951 = vunpack.c.l.bf16 %v2834
    %v3952 = vunpack.c.h.bf16 %v2834
    %v3953 = vunpack.c.l.bf16 %v2835
    %v3954 = vunpack.c.h.bf16 %v2835
    %v3955 = vunpack.c.l.bf16 %v2836
    %v3956 = vunpack.c.h.bf16 %v2836
    %v3957 = vunpack.c.l.bf16 %v2837
    %v3958 = vunpack.c.h.bf16 %v2837
    %v3959 = vunpack.c.l.bf16 %v2838
    %v3960 = vunpack.c.h.bf16 %v2838
    %v3961 = vunpack.c.l.bf16 %v2839
    %v3962 = vunpack.c.h.bf16 %v2839
    %v3963 = vunpack.c.l.bf16 %v2840
    %v3964 = vunpack.c.h.bf16 %v2840
    %v3965 = vunpack.c.l.bf16 %v2841
    %v3966 = vunpack.c.h.bf16 %v2841
    %v3967 = vunpack.c.l.bf16 %v2842
    %v3968 = vunpack.c.h.bf16 %v2842
    %v3969 = vunpack.c.l.bf16 %v2843
    %v3970 = vunpack.c.h.bf16 %v2843
    %v3971 = vunpack.c.l.bf16 %v2844
    %v3972 = vunpack.c.h.bf16 %v2844
    %v3973 = vunpack.c.l.bf16 %v2845
    %v3974 = vunpack.c.h.bf16 %v2845
    %v3975 = vunpack.c.l.bf16 %v2846
    %v3976 = vunpack.c.h.bf16 %v2846
    %v3977 = vunpack.c.l.bf16 %v2847
    %v3978 = vunpack.c.h.bf16 %v2847
    %v3979 = vunpack.c.l.bf16 %v2848
    %v3980 = vunpack.c.h.bf16 %v2848
    %v3981 = vunpack.c.l.bf16 %v2849
    %v3982 = vunpack.c.h.bf16 %v2849
    %v3983 = vunpack.c.l.bf16 %v2850
    %v3984 = vunpack.c.h.bf16 %v2850
    %v3985 = vunpack.c.l.bf16 %v2851
    %v3986 = vunpack.c.h.bf16 %v2851
    %v3987 = vunpack.c.l.bf16 %v2852
    %v3988 = vunpack.c.h.bf16 %v2852
    %v3989 = vunpack.c.l.bf16 %v2853
    %v3990 = vunpack.c.h.bf16 %v2853
    %v3991 = vunpack.c.l.bf16 %v2854
    %v3992 = vunpack.c.h.bf16 %v2854
    %v3993 = vunpack.c.l.bf16 %v2855
    %v3994 = vunpack.c.h.bf16 %v2855
    %v3995 = vunpack.c.l.bf16 %v2856
    %v3996 = vunpack.c.h.bf16 %v2856
    %v3997 = vunpack.c.l.bf16 %v2857
    %v3998 = vunpack.c.h.bf16 %v2857
    %v3999 = vunpack.c.l.bf16 %v2858
    %v4000 = vunpack.c.h.bf16 %v2858
    %v4001 = vunpack.c.l.bf16 %v2859
    %v4002 = vunpack.c.h.bf16 %v2859
    %v4003 = vunpack.c.l.bf16 %v2860
    %v4004 = vunpack.c.h.bf16 %v2860
    %v4005 = vunpack.c.l.bf16 %v2861
    %v4006 = vunpack.c.h.bf16 %v2861
    %v4007 = vunpack.c.l.bf16 %v2862
    %v4008 = vunpack.c.h.bf16 %v2862
    %v4009 = vunpack.c.l.bf16 %v2863
    %v4010 = vunpack.c.h.bf16 %v2863
    %v4011 = vunpack.c.l.bf16 %v2864
    %v4012 = vunpack.c.h.bf16 %v2864
    %v4013 = vunpack.c.l.bf16 %v2865
    %v4014 = vunpack.c.h.bf16 %v2865
    %v4015 = vunpack.c.l.bf16 %v2866
    %v4016 = vunpack.c.h.bf16 %v2866
    %v4017 = vunpack.c.l.bf16 %v2867
    %v4018 = vunpack.c.h.bf16 %v2867
    %v4019 = vunpack.c.l.bf16 %v2868
    %v4020 = vunpack.c.h.bf16 %v2868
    %v4021 = vunpack.c.l.bf16 %v2869
    %v4022 = vunpack.c.h.bf16 %v2869
    %v4023 = vunpack.c.l.bf16 %v2870
    %v4024 = vunpack.c.h.bf16 %v2870
    %v4025 = vunpack.c.l.bf16 %v2871
    %v4026 = vunpack.c.h.bf16 %v2871
    %v4027 = vunpack.c.l.bf16 %v2872
    %v4028 = vunpack.c.h.bf16 %v2872
    %v4029 = vunpack.c.l.bf16 %v2873
    %v4030 = vunpack.c.h.bf16 %v2873
    %v4031 = vunpack.c.l.bf16 %v2874
    %v4032 = vunpack.c.h.bf16 %v2874
    %v4033 = vunpack.c.l.bf16 %v2875
    %v4034 = vunpack.c.h.bf16 %v2875
    %v4035 = vunpack.c.l.bf16 %v2876
    %v4036 = vunpack.c.h.bf16 %v2876
    %v4037 = vunpack.c.l.bf16 %v2877
    %v4038 = vunpack.c.h.bf16 %v2877
    %v4039 = vunpack.c.l.bf16 %v2878
    %v4040 = vunpack.c.h.bf16 %v2878
    %v4041 = vunpack.c.l.bf16 %v2879
    %v4042 = vunpack.c.h.bf16 %v2879
    %v4043 = vunpack.c.l.bf16 %v2880
    %v4044 = vunpack.c.h.bf16 %v2880
    %v4045 = vunpack.c.l.bf16 %v2881
    %v4046 = vunpack.c.h.bf16 %v2881
    %v4047 = vunpack.c.l.bf16 %v2882
    %v4048 = vunpack.c.h.bf16 %v2882
    %v4049 = vunpack.c.l.bf16 %v2883
    %v4050 = vunpack.c.h.bf16 %v2883
    %v4051 = vunpack.c.l.bf16 %v2884
    %v4052 = vunpack.c.h.bf16 %v2884
    %v4053 = vunpack.c.l.bf16 %v2885
    %v4054 = vunpack.c.h.bf16 %v2885
    %v4055 = vunpack.c.l.bf16 %v2886
    %v4056 = vunpack.c.h.bf16 %v2886
    %v4057 = vunpack.c.l.bf16 %v2887
    %v4058 = vunpack.c.h.bf16 %v2887
    %v4059 = vunpack.c.l.bf16 %v2888
    %v4060 = vunpack.c.h.bf16 %v2888
    %v4061 = vunpack.c.l.bf16 %v2889
    %v4062 = vunpack.c.h.bf16 %v2889
    %v4063 = vunpack.c.l.bf16 %v2890
    %v4064 = vunpack.c.h.bf16 %v2890
    %v4065 = vunpack.c.l.bf16 %v2891
    %v4066 = vunpack.c.h.bf16 %v2891
    %v4067 = vunpack.c.l.bf16 %v2892
    %v4068 = vunpack.c.h.bf16 %v2892
    %v4069 = vunpack.c.l.bf16 %v2893
    %v4070 = vunpack.c.h.bf16 %v2893
    %v4071 = vunpack.c.l.bf16 %v2894
    %v4072 = vunpack.c.h.bf16 %v2894
    %v4073 = vunpack.c.l.bf16 %v2895
    %v4074 = vunpack.c.h.bf16 %v2895
    %v4075 = vunpack.c.l.bf16 %v2896
    %v4076 = vunpack.c.h.bf16 %v2896
    %v4077 = vunpack.c.l.bf16 %v2897
    %v4078 = vunpack.c.h.bf16 %v2897
    %v4079 = vunpack.c.l.bf16 %v2898
    %v4080 = vunpack.c.h.bf16 %v2898
    %v4081 = vunpack.c.l.bf16 %v2899
    %v4082 = vunpack.c.h.bf16 %v2899
    %v4083 = vunpack.c.l.bf16 %v2900
    %v4084 = vunpack.c.h.bf16 %v2900
    %v4085 = vunpack.c.l.bf16 %v2901
    %v4086 = vunpack.c.h.bf16 %v2901
    %v4087 = vunpack.c.l.bf16 %v2902
    %v4088 = vunpack.c.h.bf16 %v2902
    %v4089 = vunpack.c.l.bf16 %v2903
    %v4090 = vunpack.c.h.bf16 %v2903
    %v4091 = vunpack.c.l.bf16 %v2904
    %v4092 = vunpack.c.h.bf16 %v2904
    %v4093 = vunpack.c.l.bf16 %v2905
    %v4094 = vunpack.c.h.bf16 %v2905
    %v4095 = vunpack.c.l.bf16 %v2906
    %v4096 = vunpack.c.h.bf16 %v2906
    %v4097 = vunpack.c.l.bf16 %v2907
    %v4098 = vunpack.c.h.bf16 %v2907
    %v4099 = vunpack.c.l.bf16 %v2908
    %v4100 = vunpack.c.h.bf16 %v2908
    %v4101 = vunpack.c.l.bf16 %v2909
    %v4102 = vunpack.c.h.bf16 %v2909
    %v4103 = vunpack.c.l.bf16 %v2910
    %v4104 = vunpack.c.h.bf16 %v2910
    %v4105 = vunpack.c.l.bf16 %v2911
    %v4106 = vunpack.c.h.bf16 %v2911
    %v4107 = vunpack.c.l.bf16 %v2912
    %v4108 = vunpack.c.h.bf16 %v2912
    %v4109 = vunpack.c.l.bf16 %v2913
    %v4110 = vunpack.c.h.bf16 %v2913
    %v4111 = vunpack.c.l.bf16 %v2914
    %v4112 = vunpack.c.h.bf16 %v2914
    %v4113 = vunpack.c.l.bf16 %v2915
    %v4114 = vunpack.c.h.bf16 %v2915
    %v4115 = vunpack.c.l.bf16 %v2916
    %v4116 = vunpack.c.h.bf16 %v2916
    %v4117 = vunpack.c.l.bf16 %v2917
    %v4118 = vunpack.c.h.bf16 %v2917
    %v4119 = vunpack.c.l.bf16 %v2918
    %v4120 = vunpack.c.h.bf16 %v2918
    %v4121 = vunpack.c.l.bf16 %v2919
    %v4122 = vunpack.c.h.bf16 %v2919
    %v4123 = vunpack.c.l.bf16 %v2920
    %v4124 = vunpack.c.h.bf16 %v2920
    %v4125 = vunpack.c.l.bf16 %v2921
    %v4126 = vunpack.c.h.bf16 %v2921
    %v4127 = vunpack.c.l.bf16 %v2922
    %v4128 = vunpack.c.h.bf16 %v2922
    %v4129 = vunpack.c.l.bf16 %v2923
    %v4130 = vunpack.c.h.bf16 %v2923
    %v4131 = vunpack.c.l.bf16 %v2924
    %v4132 = vunpack.c.h.bf16 %v2924
    %v4133 = vunpack.c.l.bf16 %v2925
    %v4134 = vunpack.c.h.bf16 %v2925
    %v4135 = vunpack.c.l.bf16 %v2926
    %v4136 = vunpack.c.h.bf16 %v2926
    %v4137 = vunpack.c.l.bf16 %v2927
    %v4138 = vunpack.c.h.bf16 %v2927
    %v4139 = vunpack.c.l.bf16 %v2928
    %v4140 = vunpack.c.h.bf16 %v2928
    %v4141 = vunpack.c.l.bf16 %v2929
    %v4142 = vunpack.c.h.bf16 %v2929
    %v4143 = vunpack.c.l.bf16 %v2930
    %v4144 = vunpack.c.h.bf16 %v2930
    %v4145 = vunpack.c.l.bf16 %v2931
    %v4146 = vunpack.c.h.bf16 %v2931
    %v4147 = vunpack.c.l.bf16 %v2932
    %v4148 = vunpack.c.h.bf16 %v2932
    %v4149 = vunpack.c.l.bf16 %v2933
    %v4150 = vunpack.c.h.bf16 %v2933
    %v4151 = vunpack.c.l.bf16 %v2934
    %v4152 = vunpack.c.h.bf16 %v2934
    %v4153 = vunpack.c.l.bf16 %v2935
    %v4154 = vunpack.c.h.bf16 %v2935
    %v4155 = vunpack.c.l.bf16 %v2936
    %v4156 = vunpack.c.h.bf16 %v2936
    %v4157 = vunpack.c.l.bf16 %v2937
    %v4158 = vunpack.c.h.bf16 %v2937
    %v4159 = vunpack.c.l.bf16 %v2938
    %v4160 = vunpack.c.h.bf16 %v2938
    %v4161 = vunpack.c.l.bf16 %v2939
    %v4162 = vunpack.c.h.bf16 %v2939
    %v4163 = vunpack.c.l.bf16 %v2940
    %v4164 = vunpack.c.h.bf16 %v2940
    %v4165 = vunpack.c.l.bf16 %v2941
    %v4166 = vunpack.c.h.bf16 %v2941
    %v4167 = vunpack.c.l.bf16 %v2942
    %v4168 = vunpack.c.h.bf16 %v2942
    %v4169 = vunpack.c.l.bf16 %v2943
    %v4170 = vunpack.c.h.bf16 %v2943
    %v4171 = vunpack.c.l.bf16 %v2944
    %v4172 = vunpack.c.h.bf16 %v2944
    %v4173 = vunpack.c.l.bf16 %v2945
    %v4174 = vunpack.c.h.bf16 %v2945
    %v4175 = vunpack.c.l.bf16 %v2946
    %v4176 = vunpack.c.h.bf16 %v2946
    %v4177 = vunpack.c.l.bf16 %v2947
    %v4178 = vunpack.c.h.bf16 %v2947
    %v4179 = vunpack.c.l.bf16 %v2948
    %v4180 = vunpack.c.h.bf16 %v2948
    %v4181 = vunpack.c.l.bf16 %v2949
    %v4182 = vunpack.c.h.bf16 %v2949
    %v4183 = vunpack.c.l.bf16 %v2950
    %v4184 = vunpack.c.h.bf16 %v2950
    %v4185 = vunpack.c.l.bf16 %v2951
    %v4186 = vunpack.c.h.bf16 %v2951
    %v4187 = vunpack.c.l.bf16 %v2952
    %v4188 = vunpack.c.h.bf16 %v2952
    %v4189 = vunpack.c.l.bf16 %v2953
    %v4190 = vunpack.c.h.bf16 %v2953
    %v4191 = vunpack.c.l.bf16 %v2954
    %v4192 = vunpack.c.h.bf16 %v2954
    %v4193 = vunpack.c.l.bf16 %v2955
    %v4194 = vunpack.c.h.bf16 %v2955
    %v4195 = vunpack.c.l.bf16 %v2956
    %v4196 = vunpack.c.h.bf16 %v2956
    %v4197 = vunpack.c.l.bf16 %v2957
    %v4198 = vunpack.c.h.bf16 %v2957
    %v4199 = vunpack.c.l.bf16 %v2958
    %v4200 = vunpack.c.h.bf16 %v2958
    %v4201 = vunpack.c.l.bf16 %v2959
    %v4202 = vunpack.c.h.bf16 %v2959
    %v4203 = vunpack.c.l.bf16 %v2960
    %v4204 = vunpack.c.h.bf16 %v2960
    %v4205 = vunpack.c.l.bf16 %v2961
    %v4206 = vunpack.c.h.bf16 %v2961
    %v4207 = vunpack.c.l.bf16 %v2962
    %v4208 = vunpack.c.h.bf16 %v2962
    %v4209 = vunpack.c.l.bf16 %v2963
    %v4210 = vunpack.c.h.bf16 %v2963
    %v4211 = vunpack.c.l.bf16 %v2964
    %v4212 = vunpack.c.h.bf16 %v2964
    %v4213 = vunpack.c.l.bf16 %v2965
    %v4214 = vunpack.c.h.bf16 %v2965
    %v4215 = vunpack.c.l.bf16 %v2966
    %v4216 = vunpack.c.h.bf16 %v2966
    %v4217 = vunpack.c.l.bf16 %v2967
    %v4218 = vunpack.c.h.bf16 %v2967
    %v4219 = vunpack.c.l.bf16 %v2968
    %v4220 = vunpack.c.h.bf16 %v2968
    %v4221 = vunpack.c.l.bf16 %v2969
    %v4222 = vunpack.c.h.bf16 %v2969
    %v4223 = vunpack.c.l.bf16 %v2970
    %v4224 = vunpack.c.h.bf16 %v2970
    %v4225 = vunpack.c.l.bf16 %v2971
    %v4226 = vunpack.c.h.bf16 %v2971
    %v4227 = vunpack.c.l.bf16 %v2972
    %v4228 = vunpack.c.h.bf16 %v2972
    %v4229 = vunpack.c.l.bf16 %v2973
    %v4230 = vunpack.c.h.bf16 %v2973
    %v4231 = vunpack.c.l.bf16 %v2974
    %v4232 = vunpack.c.h.bf16 %v2974
    %v4233 = vunpack.c.l.bf16 %v2975
    %v4234 = vunpack.c.h.bf16 %v2975
    %v4235 = vunpack.c.l.bf16 %v2976
    %v4236 = vunpack.c.h.bf16 %v2976
    %v4237 = vunpack.c.l.bf16 %v2977
    %v4238 = vunpack.c.h.bf16 %v2977
    %v4239 = vunpack.c.l.bf16 %v2978
    %v4240 = vunpack.c.h.bf16 %v2978
    %v4241 = vunpack.c.l.bf16 %v2979
    %v4242 = vunpack.c.h.bf16 %v2979
    %v4243 = vunpack.c.l.bf16 %v2980
    %v4244 = vunpack.c.h.bf16 %v2980
    %v4245 = vunpack.c.l.bf16 %v2981
    %v4246 = vunpack.c.h.bf16 %v2981
    %v4247 = vunpack.c.l.bf16 %v2982
    %v4248 = vunpack.c.h.bf16 %v2982
    %v4249 = vunpack.c.l.bf16 %v2983
    %v4250 = vunpack.c.h.bf16 %v2983
    %v4251 = vunpack.c.l.bf16 %v2984
    %v4252 = vunpack.c.h.bf16 %v2984
    %v4253 = vunpack.c.l.bf16 %v2985
    %v4254 = vunpack.c.h.bf16 %v2985
    %v4255 = vunpack.c.l.bf16 %v2986
    %v4256 = vunpack.c.h.bf16 %v2986
    %v4257 = vunpack.c.l.bf16 %v2987
    %v4258 = vunpack.c.h.bf16 %v2987
    %v4259 = vunpack.c.l.bf16 %v2988
    %v4260 = vunpack.c.h.bf16 %v2988
    %v4261 = vunpack.c.l.bf16 %v2989
    %v4262 = vunpack.c.h.bf16 %v2989
    %v4263 = vunpack.c.l.bf16 %v2990
    %v4264 = vunpack.c.h.bf16 %v2990
    %v4265 = vunpack.c.l.bf16 %v2991
    %v4266 = vunpack.c.h.bf16 %v2991
    %v4267 = vunpack.c.l.bf16 %v2992
    %v4268 = vunpack.c.h.bf16 %v2992
    %v4269 = vunpack.c.l.bf16 %v2993
    %v4270 = vunpack.c.h.bf16 %v2993
    %v4271 = vunpack.c.l.bf16 %v2994
    %v4272 = vunpack.c.h.bf16 %v2994
    %v4273 = vunpack.c.l.bf16 %v2995
    %v4274 = vunpack.c.h.bf16 %v2995
    %v4275 = vunpack.c.l.bf16 %v2996
    %v4276 = vunpack.c.h.bf16 %v2996
    %v4277 = vunpack.c.l.bf16 %v2997
    %v4278 = vunpack.c.h.bf16 %v2997
    %v4279 = vunpack.c.l.bf16 %v2998
    %v4280 = vunpack.c.h.bf16 %v2998
    %v4281 = vunpack.c.l.bf16 %v2999
    %v4282 = vunpack.c.h.bf16 %v2999
    %v4283 = vunpack.c.l.bf16 %v3000
    %v4284 = vunpack.c.h.bf16 %v3000
    %v4285 = vunpack.c.l.bf16 %v3001
    %v4286 = vunpack.c.h.bf16 %v3001
    %v4287 = vunpack.c.l.bf16 %v3002
    %v4288 = vunpack.c.h.bf16 %v3002
    %v4289 = vunpack.c.l.bf16 %v3003
    %v4290 = vunpack.c.h.bf16 %v3003
    %v4291 = vunpack.c.l.bf16 %v3004
    %v4292 = vunpack.c.h.bf16 %v3004
    %v4293 = vunpack.c.l.bf16 %v3005
    %v4294 = vunpack.c.h.bf16 %v3005
    %v4295 = vunpack.c.l.bf16 %v3006
    %v4296 = vunpack.c.h.bf16 %v3006
    %v4297 = vunpack.c.l.bf16 %v3007
    %v4298 = vunpack.c.h.bf16 %v3007
    %v4299 = vunpack.c.l.bf16 %v3008
    %v4300 = vunpack.c.h.bf16 %v3008
    %v4301 = vunpack.c.l.bf16 %v3009
    %v4302 = vunpack.c.h.bf16 %v3009
    %v4303 = vunpack.c.l.bf16 %v3010
    %v4304 = vunpack.c.h.bf16 %v3010
    %v4305 = vunpack.c.l.bf16 %v3011
    %v4306 = vunpack.c.h.bf16 %v3011
    %v4307 = vunpack.c.l.bf16 %v3012
    %v4308 = vunpack.c.h.bf16 %v3012
    %v4309 = vunpack.c.l.bf16 %v3013
    %v4310 = vunpack.c.h.bf16 %v3013
    %v4311 = vunpack.c.l.bf16 %v3014
    %v4312 = vunpack.c.h.bf16 %v3014
    %v4313 = vunpack.c.l.bf16 %v3015
    %v4314 = vunpack.c.h.bf16 %v3015
    %v4315 = vunpack.c.l.bf16 %v3016
    %v4316 = vunpack.c.h.bf16 %v3016
    %v4317 = vunpack.c.l.bf16 %v3017
    %v4318 = vunpack.c.h.bf16 %v3017
    %v4319 = vunpack.c.l.bf16 %v3018
    %v4320 = vunpack.c.h.bf16 %v3018
    %v4321 = vunpack.c.l.bf16 %v3019
    %v4322 = vunpack.c.h.bf16 %v3019
    %v4323 = vunpack.c.l.bf16 %v3020
    %v4324 = vunpack.c.h.bf16 %v3020
    %v4325 = vunpack.c.l.bf16 %v3021
    %v4326 = vunpack.c.h.bf16 %v3021
    %v4327 = vunpack.c.l.bf16 %v3022
    %v4328 = vunpack.c.h.bf16 %v3022
    %v4329 = vunpack.c.l.bf16 %v3023
    %v4330 = vunpack.c.h.bf16 %v3023
    %v4331 = vunpack.c.l.bf16 %v3024
    %v4332 = vunpack.c.h.bf16 %v3024
    %v4333 = vunpack.c.l.bf16 %v3025
    %v4334 = vunpack.c.h.bf16 %v3025
    %v4335 = vunpack.c.l.bf16 %v3026
    %v4336 = vunpack.c.h.bf16 %v3026
    %v4337 = vunpack.c.l.bf16 %v3027
    %v4338 = vunpack.c.h.bf16 %v3027
    %v4339 = vunpack.c.l.bf16 %v3028
    %v4340 = vunpack.c.h.bf16 %v3028
    %v4341 = vunpack.c.l.bf16 %v3029
    %v4342 = vunpack.c.h.bf16 %v3029
    %v4343 = vunpack.c.l.bf16 %v3030
    %v4344 = vunpack.c.h.bf16 %v3030
    %v4345 = vunpack.c.l.bf16 %v3031
    %v4346 = vunpack.c.h.bf16 %v3031
    %v4347 = vunpack.c.l.bf16 %v3032
    %v4348 = vunpack.c.h.bf16 %v3032
    %v4349 = vunpack.c.l.bf16 %v3033
    %v4350 = vunpack.c.h.bf16 %v3033
    %v4351 = vunpack.c.l.bf16 %v3034
    %v4352 = vunpack.c.h.bf16 %v3034
    %v4353 = vunpack.c.l.bf16 %v3035
    %v4354 = vunpack.c.h.bf16 %v3035
    %v4355 = vunpack.c.l.bf16 %v3036
    %v4356 = vunpack.c.h.bf16 %v3036
    %v4357 = vunpack.c.l.bf16 %v3037
    %v4358 = vunpack.c.h.bf16 %v3037
    %v4359 = vunpack.c.l.bf16 %v3038
    %v4360 = vunpack.c.h.bf16 %v3038
    %v4361 = vunpack.c.l.bf16 %v3039
    %v4362 = vunpack.c.h.bf16 %v3039
    %v4363 = vunpack.c.l.bf16 %v3040
    %v4364 = vunpack.c.h.bf16 %v3040
    %v4365 = vunpack.c.l.bf16 %v3041
    %v4366 = vunpack.c.h.bf16 %v3041
    %v4367 = vunpack.c.l.bf16 %v3042
    %v4368 = vunpack.c.h.bf16 %v3042
    %v4369 = vunpack.c.l.bf16 %v3043
    %v4370 = vunpack.c.h.bf16 %v3043
    %v4371 = vunpack.c.l.bf16 %v3044
    %v4372 = vunpack.c.h.bf16 %v3044
    %v4373 = vunpack.c.l.bf16 %v3045
    %v4374 = vunpack.c.h.bf16 %v3045
    %v4375 = vunpack.c.l.bf16 %v3046
    %v4376 = vunpack.c.h.bf16 %v3046
    %v4377 = vunpack.c.l.bf16 %v3047
    %v4378 = vunpack.c.h.bf16 %v3047
    %v4379 = vunpack.c.l.bf16 %v3048
    %v4380 = vunpack.c.h.bf16 %v3048
    %v4381 = vunpack.c.l.bf16 %v3049
    %v4382 = vunpack.c.h.bf16 %v3049
    %v4383 = vunpack.c.l.bf16 %v3050
    %v4384 = vunpack.c.h.bf16 %v3050
    %v4385 = vunpack.c.l.bf16 %v3051
    %v4386 = vunpack.c.h.bf16 %v3051
    %v4387 = vunpack.c.l.bf16 %v3052
    %v4388 = vunpack.c.h.bf16 %v3052
    %v4389 = vunpack.c.l.bf16 %v3053
    %v4390 = vunpack.c.h.bf16 %v3053
    %v4391 = vunpack.c.l.bf16 %v3054
    %v4392 = vunpack.c.h.bf16 %v3054
    %v4393 = vunpack.c.l.bf16 %v3055
    %v4394 = vunpack.c.h.bf16 %v3055
    %v4395 = vunpack.c.l.bf16 %v3056
    %v4396 = vunpack.c.h.bf16 %v3056
    %v4397 = vunpack.c.l.bf16 %v3057
    %v4398 = vunpack.c.h.bf16 %v3057
    %v4399 = vunpack.c.l.bf16 %v3058
    %v4400 = vunpack.c.h.bf16 %v3058
    %v4401 = vunpack.c.l.bf16 %v3059
    %v4402 = vunpack.c.h.bf16 %v3059
    %v4403 = vunpack.c.l.bf16 %v3060
    %v4404 = vunpack.c.h.bf16 %v3060
    %v4405 = vunpack.c.l.bf16 %v3061
    %v4406 = vunpack.c.h.bf16 %v3061
    %v4407 = vunpack.c.l.bf16 %v3062
    %v4408 = vunpack.c.h.bf16 %v3062
    %v4409 = vunpack.c.l.bf16 %v3063
    %v4410 = vunpack.c.h.bf16 %v3063
    %v4411 = vunpack.c.l.bf16 %v3064
    %v4412 = vunpack.c.h.bf16 %v3064
    %v4413 = vunpack.c.l.bf16 %v3065
    %v4414 = vunpack.c.h.bf16 %v3065
    %v4415 = vunpack.c.l.bf16 %v3066
    %v4416 = vunpack.c.h.bf16 %v3066
    %v4417 = vunpack.c.l.bf16 %v3067
    %v4418 = vunpack.c.h.bf16 %v3067
    %v4419 = vunpack.c.l.bf16 %v3068
    %v4420 = vunpack.c.h.bf16 %v3068
    %v4421 = vunpack.c.l.bf16 %v3069
    %v4422 = vunpack.c.h.bf16 %v3069
    %v4423 = vunpack.c.l.bf16 %v3070
    %v4424 = vunpack.c.h.bf16 %v3070
    %v4425 = vunpack.c.l.bf16 %v3071
    %v4426 = vunpack.c.h.bf16 %v3071
    %v4427 = vunpack.c.l.bf16 %v3072
    %v4428 = vunpack.c.h.bf16 %v3072
    %v4429 = vunpack.c.l.bf16 %v3073
    %v4430 = vunpack.c.h.bf16 %v3073
    %v4431 = vunpack.c.l.bf16 %v3074
    %v4432 = vunpack.c.h.bf16 %v3074
    %v4433 = vunpack.c.l.bf16 %v3075
    %v4434 = vunpack.c.h.bf16 %v3075
    %v4435 = vunpack.c.l.bf16 %v3076
    %v4436 = vunpack.c.h.bf16 %v3076
    %v4437 = vunpack.c.l.bf16 %v3077
    %v4438 = vunpack.c.h.bf16 %v3077
    %v4439 = vunpack.c.l.bf16 %v3078
    %v4440 = vunpack.c.h.bf16 %v3078
    %v4441 = vunpack.c.l.bf16 %v3079
    %v4442 = vunpack.c.h.bf16 %v3079
    %v4443 = vunpack.c.l.bf16 %v3080
    %v4444 = vunpack.c.h.bf16 %v3080
    %v4445 = vunpack.c.l.bf16 %v3081
    %v4446 = vunpack.c.h.bf16 %v3081
    %v4447 = vunpack.c.l.bf16 %v3082
    %v4448 = vunpack.c.h.bf16 %v3082
    %v4449 = vunpack.c.l.bf16 %v3083
    %v4450 = vunpack.c.h.bf16 %v3083
    %v4451 = vunpack.c.l.bf16 %v3084
    %v4452 = vunpack.c.h.bf16 %v3084
    %v4453 = vunpack.c.l.bf16 %v3085
    %v4454 = vunpack.c.h.bf16 %v3085
    %v4455 = vunpack.c.l.bf16 %v3086
    %v4456 = vunpack.c.h.bf16 %v3086
    %v4457 = vunpack.c.l.bf16 %v3087
    %v4458 = vunpack.c.h.bf16 %v3087
    %v4459 = vunpack.c.l.bf16 %v3088
    %v4460 = vunpack.c.h.bf16 %v3088
    %v4461 = vunpack.c.l.bf16 %v3089
    %v4462 = vunpack.c.h.bf16 %v3089
    %v4463 = vunpack.c.l.bf16 %v3090
    %v4464 = vunpack.c.h.bf16 %v3090
    %v4465 = vunpack.c.l.bf16 %v3091
    %v4466 = vunpack.c.h.bf16 %v3091
    %v4467 = vunpack.c.l.bf16 %v3092
    %v4468 = vunpack.c.h.bf16 %v3092
    %v4469 = vunpack.c.l.bf16 %v3093
    %v4470 = vunpack.c.h.bf16 %v3093
    %v4471 = vunpack.c.l.bf16 %v3094
    %v4472 = vunpack.c.h.bf16 %v3094
    %v4473 = vunpack.c.l.bf16 %v3095
    %v4474 = vunpack.c.h.bf16 %v3095
    %v4475 = vunpack.c.l.bf16 %v3096
    %v4476 = vunpack.c.h.bf16 %v3096
    %v4477 = vunpack.c.l.bf16 %v3097
    %v4478 = vunpack.c.h.bf16 %v3097
    %v4479 = vunpack.c.l.bf16 %v3098
    %v4480 = vunpack.c.h.bf16 %v3098
    %v4481 = vunpack.c.l.bf16 %v3099
    %v4482 = vunpack.c.h.bf16 %v3099
    %v4483 = vunpack.c.l.bf16 %v3100
    %v4484 = vunpack.c.h.bf16 %v3100
    %v4485 = vunpack.c.l.bf16 %v3101
    %v4486 = vunpack.c.h.bf16 %v3101
    %v4487 = vunpack.c.l.bf16 %v3102
    %v4488 = vunpack.c.h.bf16 %v3102
    %v4489 = vunpack.c.l.bf16 %v3103
    %v4490 = vunpack.c.h.bf16 %v3103
    %v4491 = vunpack.c.l.bf16 %v3104
    %v4492 = vunpack.c.h.bf16 %v3104
    %v4493 = vunpack.c.l.bf16 %v3105
    %v4494 = vunpack.c.h.bf16 %v3105
    %v4495 = vunpack.c.l.bf16 %v3106
    %v4496 = vunpack.c.h.bf16 %v3106
    %v4497 = vunpack.c.l.bf16 %v3107
    %v4498 = vunpack.c.h.bf16 %v3107
    %v4499 = vunpack.c.l.bf16 %v3108
    %v4500 = vunpack.c.h.bf16 %v3108
    %v4501 = vunpack.c.l.bf16 %v3109
    %v4502 = vunpack.c.h.bf16 %v3109
    %v4503 = vunpack.c.l.bf16 %v3110
    %v4504 = vunpack.c.h.bf16 %v3110
    %v4505 = vunpack.c.l.bf16 %v3111
    %v4506 = vunpack.c.h.bf16 %v3111
    %v4507 = vunpack.c.l.bf16 %v3112
    %v4508 = vunpack.c.h.bf16 %v3112
    %v4509 = vunpack.c.l.bf16 %v3113
    %v4510 = vunpack.c.h.bf16 %v3113
    %v4511 = vunpack.c.l.bf16 %v3114
    %v4512 = vunpack.c.h.bf16 %v3114
    %v4513 = vunpack.c.l.bf16 %v3115
    %v4514 = vunpack.c.h.bf16 %v3115
    %v4515 = vunpack.c.l.bf16 %v3116
    %v4516 = vunpack.c.h.bf16 %v3116
    %v4517 = vunpack.c.l.bf16 %v3117
    %v4518 = vunpack.c.h.bf16 %v3117
    %v4519 = vunpack.c.l.bf16 %v3118
    %v4520 = vunpack.c.h.bf16 %v3118
    %v4521 = vunpack.c.l.bf16 %v3119
    %v4522 = vunpack.c.h.bf16 %v3119
    %v4523 = vunpack.c.l.bf16 %v3120
    %v4524 = vunpack.c.h.bf16 %v3120
    %v4525 = vunpack.c.l.bf16 %v3121
    %v4526 = vunpack.c.h.bf16 %v3121
    %v4527 = vunpack.c.l.bf16 %v3122
    %v4528 = vunpack.c.h.bf16 %v3122
    %v4529 = vunpack.c.l.bf16 %v3123
    %v4530 = vunpack.c.h.bf16 %v3123
    %v4531 = vunpack.c.l.bf16 %v3124
    %v4532 = vunpack.c.h.bf16 %v3124
    %v4533 = vunpack.c.l.bf16 %v3125
    %v4534 = vunpack.c.h.bf16 %v3125
    %v4535 = vunpack.c.l.bf16 %v3126
    %v4536 = vunpack.c.h.bf16 %v3126
    %v4537 = vunpack.c.l.bf16 %v3127
    %v4538 = vunpack.c.h.bf16 %v3127
    %v4539 = vunpack.c.l.bf16 %v3128
    %v4540 = vunpack.c.h.bf16 %v3128
    %v4541 = vunpack.c.l.bf16 %v3129
    %v4542 = vunpack.c.h.bf16 %v3129
    %v4543 = vunpack.c.l.bf16 %v3130
    %v4544 = vunpack.c.h.bf16 %v3130
    %v4545 = vunpack.c.l.bf16 %v3131
    %v4546 = vunpack.c.h.bf16 %v3131
    %v4547 = vunpack.c.l.bf16 %v3132
    %v4548 = vunpack.c.h.bf16 %v3132
    %v4549 = vunpack.c.l.bf16 %v3133
    %v4550 = vunpack.c.h.bf16 %v3133
    %v4551 = vunpack.c.l.bf16 %v3134
    %v4552 = vunpack.c.h.bf16 %v3134
    %v4553 = vunpack.c.l.bf16 %v3135
    %v4554 = vunpack.c.h.bf16 %v3135
    %v4555 = vunpack.c.l.bf16 %v3136
    %v4556 = vunpack.c.h.bf16 %v3136
    %v4557 = vunpack.c.l.bf16 %v3137
    %v4558 = vunpack.c.h.bf16 %v3137
    %v4559 = vunpack.c.l.bf16 %v3138
    %v4560 = vunpack.c.h.bf16 %v3138
    %v4561 = vunpack.c.l.bf16 %v3139
    %v4562 = vunpack.c.h.bf16 %v3139
    %v4563 = vunpack.c.l.bf16 %v3140
    %v4564 = vunpack.c.h.bf16 %v3140
    %v4565 = vunpack.c.l.bf16 %v3141
    %v4566 = vunpack.c.h.bf16 %v3141
    %v4567 = vunpack.c.l.bf16 %v3142
    %v4568 = vunpack.c.h.bf16 %v3142
    %v4569 = vunpack.c.l.bf16 %v3143
    %v4570 = vunpack.c.h.bf16 %v3143
    %v4571 = vunpack.c.l.bf16 %v3144
    %v4572 = vunpack.c.h.bf16 %v3144
    %v4573 = vunpack.c.l.bf16 %v3145
    %v4574 = vunpack.c.h.bf16 %v3145
    %v4575 = vunpack.c.l.bf16 %v3146
    %v4576 = vunpack.c.h.bf16 %v3146
    %v4577 = vunpack.c.l.bf16 %v3147
    %v4578 = vunpack.c.h.bf16 %v3147
    %v4579 = vunpack.c.l.bf16 %v3148
    %v4580 = vunpack.c.h.bf16 %v3148
    %v4581 = vunpack.c.l.bf16 %v3149
    %v4582 = vunpack.c.h.bf16 %v3149
    %v4583 = vunpack.c.l.bf16 %v3150
    %v4584 = vunpack.c.h.bf16 %v3150
    %v4585 = vunpack.c.l.bf16 %v3151
    %v4586 = vunpack.c.h.bf16 %v3151
    %v4587 = vunpack.c.l.bf16 %v3152
    %v4588 = vunpack.c.h.bf16 %v3152
    %v4589 = vunpack.c.l.bf16 %v3153
    %v4590 = vunpack.c.h.bf16 %v3153
    %v4591 = vunpack.c.l.bf16 %v3154
    %v4592 = vunpack.c.h.bf16 %v3154
    %v4593 = vunpack.c.l.bf16 %v3155
    %v4594 = vunpack.c.h.bf16 %v3155
    %v4595 = vunpack.c.l.bf16 %v3156
    %v4596 = vunpack.c.h.bf16 %v3156
    %v4597 = vunpack.c.l.bf16 %v3157
    %v4598 = vunpack.c.h.bf16 %v3157
    %v4599 = vunpack.c.l.bf16 %v3158
    %v4600 = vunpack.c.h.bf16 %v3158
    %v4601 = vunpack.c.l.bf16 %v3159
    %v4602 = vunpack.c.h.bf16 %v3159
    %v4603 = vunpack.c.l.bf16 %v3160
    %v4604 = vunpack.c.h.bf16 %v3160
    %v4605 = vunpack.c.l.bf16 %v3161
    %v4606 = vunpack.c.h.bf16 %v3161
    %v4607 = vunpack.c.l.bf16 %v3162
    %v4608 = vunpack.c.h.bf16 %v3162
    %v4609 = vunpack.c.l.bf16 %v3163
    %v4610 = vunpack.c.h.bf16 %v3163
    %v4611 = vunpack.c.l.bf16 %v3164
    %v4612 = vunpack.c.h.bf16 %v3164
    %v4613 = vunpack.c.l.bf16 %v3165
    %v4614 = vunpack.c.h.bf16 %v3165
    %v4615 = vunpack.c.l.bf16 %v3166
    %v4616 = vunpack.c.h.bf16 %v3166
    %v4617 = vunpack.c.l.bf16 %v3167
    %v4618 = vunpack.c.h.bf16 %v3167
    %v4619 = vunpack.c.l.bf16 %v3168
    %v4620 = vunpack.c.h.bf16 %v3168
    %v4621 = vunpack.c.l.bf16 %v3169
    %v4622 = vunpack.c.h.bf16 %v3169
    %v4623 = vunpack.c.l.bf16 %v3170
    %v4624 = vunpack.c.h.bf16 %v3170
    %v4625 = vunpack.c.l.bf16 %v3171
    %v4626 = vunpack.c.h.bf16 %v3171
    %v4627 = vunpack.c.l.bf16 %v3172
    %v4628 = vunpack.c.h.bf16 %v3172
    %v4629 = vunpack.c.l.bf16 %v3173
    %v4630 = vunpack.c.h.bf16 %v3173
    %v4631 = vunpack.c.l.bf16 %v3174
    %v4632 = vunpack.c.h.bf16 %v3174
    %v4633 = vunpack.c.l.bf16 %v3175
    %v4634 = vunpack.c.h.bf16 %v3175
    %v4635 = vunpack.c.l.bf16 %v3176
    %v4636 = vunpack.c.h.bf16 %v3176
    %v4637 = vunpack.c.l.bf16 %v3177
    %v4638 = vunpack.c.h.bf16 %v3177
    %v4639 = vunpack.c.l.bf16 %v3178
    %v4640 = vunpack.c.h.bf16 %v3178
    %v4641 = vunpack.c.l.bf16 %v3179
    %v4642 = vunpack.c.h.bf16 %v3179
    %v4643 = vunpack.c.l.bf16 %v3180
    %v4644 = vunpack.c.h.bf16 %v3180
    %v4645 = vunpack.c.l.bf16 %v3181
    %v4646 = vunpack.c.h.bf16 %v3181
    %v4647 = vunpack.c.l.bf16 %v3182
    %v4648 = vunpack.c.h.bf16 %v3182
    %v4649 = vunpack.c.l.bf16 %v3183
    %v4650 = vunpack.c.h.bf16 %v3183
    %v4651 = vunpack.c.l.bf16 %v3184
    %v4652 = vunpack.c.h.bf16 %v3184
    %v4653 = vunpack.c.l.bf16 %v3185
    %v4654 = vunpack.c.h.bf16 %v3185
    %v4655 = vunpack.c.l.bf16 %v3186
    %v4656 = vunpack.c.h.bf16 %v3186
    %v4657 = vunpack.c.l.bf16 %v3187
    %v4658 = vunpack.c.h.bf16 %v3187
    %v4659 = vunpack.c.l.bf16 %v3188
    %v4660 = vunpack.c.h.bf16 %v3188
    %v4661 = vunpack.c.l.bf16 %v3189
    %v4662 = vunpack.c.h.bf16 %v3189
    %v4663 = vunpack.c.l.bf16 %v3190
    %v4664 = vunpack.c.h.bf16 %v3190
    %v4665 = vunpack.c.l.bf16 %v3191
    %v4666 = vunpack.c.h.bf16 %v3191
    %v4667 = vunpack.c.l.bf16 %v3192
    %v4668 = vunpack.c.h.bf16 %v3192
    %v4669 = vunpack.c.l.bf16 %v3193
    %v4670 = vunpack.c.h.bf16 %v3193
    %v4671 = vunpack.c.l.bf16 %v3194
    %v4672 = vunpack.c.h.bf16 %v3194
    %v4673 = vunpack.c.l.bf16 %v3195
    %v4674 = vunpack.c.h.bf16 %v3195
    %v4675 = vunpack.c.l.bf16 %v3196
    %v4676 = vunpack.c.h.bf16 %v3196
    %v4677 = vunpack.c.l.bf16 %v3197
    %v4678 = vunpack.c.h.bf16 %v3197
    %v4679 = vunpack.c.l.bf16 %v3198
    %v4680 = vunpack.c.h.bf16 %v3198
    %v4681 = vunpack.c.l.bf16 %v3199
    %v4682 = vunpack.c.h.bf16 %v3199
    %v4683 = vunpack.c.l.bf16 %v3200
    %v4684 = vunpack.c.h.bf16 %v3200
    %v4685 = vunpack.c.l.bf16 %v3201
    %v4686 = vunpack.c.h.bf16 %v3201
    %v4687 = vunpack.c.l.bf16 %v3202
    %v4688 = vunpack.c.h.bf16 %v3202
    %v4689 = vunpack.c.l.bf16 %v3203
    %v4690 = vunpack.c.h.bf16 %v3203
    %v4691 = vunpack.c.l.bf16 %v3204
    %v4692 = vunpack.c.h.bf16 %v3204
    %v4693 = vunpack.c.l.bf16 %v3205
    %v4694 = vunpack.c.h.bf16 %v3205
    %v4695 = vunpack.c.l.bf16 %v3206
    %v4696 = vunpack.c.h.bf16 %v3206
    %v4697 = vunpack.c.l.bf16 %v3207
    %v4698 = vunpack.c.h.bf16 %v3207
    %v4699 = vunpack.c.l.bf16 %v3208
    %v4700 = vunpack.c.h.bf16 %v3208
    %v4701 = vunpack.c.l.bf16 %v3209
    %v4702 = vunpack.c.h.bf16 %v3209
    %v4703 = vunpack.c.l.bf16 %v3210
    %v4704 = vunpack.c.h.bf16 %v3210
    %v4705 = vunpack.c.l.bf16 %v3211
    %v4706 = vunpack.c.h.bf16 %v3211
    %v4707 = vunpack.c.l.bf16 %v3212
    %v4708 = vunpack.c.h.bf16 %v3212
    %v4709 = vunpack.c.l.bf16 %v3213
    %v4710 = vunpack.c.h.bf16 %v3213
    %v4711 = vunpack.c.l.bf16 %v3214
    %v4712 = vunpack.c.h.bf16 %v3214
    %v4713 = vunpack.c.l.bf16 %v3215
    %v4714 = vunpack.c.h.bf16 %v3215
    %v4715 = vunpack.c.l.bf16 %v3216
    %v4716 = vunpack.c.h.bf16 %v3216
    %v4717 = vunpack.c.l.bf16 %v3217
    %v4718 = vunpack.c.h.bf16 %v3217
    %v4719 = vunpack.c.l.bf16 %v3218
    %v4720 = vunpack.c.h.bf16 %v3218
    %v4721 = vunpack.c.l.bf16 %v3219
    %v4722 = vunpack.c.h.bf16 %v3219
    %v4723 = vunpack.c.l.bf16 %v3220
    %v4724 = vunpack.c.h.bf16 %v3220
    %v4725 = vunpack.c.l.bf16 %v3221
    %v4726 = vunpack.c.h.bf16 %v3221
    %v4727 = vunpack.c.l.bf16 %v3222
    %v4728 = vunpack.c.h.bf16 %v3222
    %v4729 = vunpack.c.l.bf16 %v3223
    %v4730 = vunpack.c.h.bf16 %v3223
    %v4731 = vunpack.c.l.bf16 %v3224
    %v4732 = vunpack.c.h.bf16 %v3224
    %v4733 = vunpack.c.l.bf16 %v3225
    %v4734 = vunpack.c.h.bf16 %v3225
    %v4735 = vunpack.c.l.bf16 %v3226
    %v4736 = vunpack.c.h.bf16 %v3226
    %v4737 = vunpack.c.l.bf16 %v3227
    %v4738 = vunpack.c.h.bf16 %v3227
    %v4739 = vunpack.c.l.bf16 %v3228
    %v4740 = vunpack.c.h.bf16 %v3228
    %v4741 = vunpack.c.l.bf16 %v3229
    %v4742 = vunpack.c.h.bf16 %v3229
    %v4743 = vunpack.c.l.bf16 %v3230
    %v4744 = vunpack.c.h.bf16 %v3230
    %v4745 = vunpack.c.l.bf16 %v3231
    %v4746 = vunpack.c.h.bf16 %v3231
    %v4747 = vunpack.c.l.bf16 %v3232
    %v4748 = vunpack.c.h.bf16 %v3232
    %v4749 = vunpack.c.l.bf16 %v3233
    %v4750 = vunpack.c.h.bf16 %v3233
    %v4751 = vunpack.c.l.bf16 %v3234
    %v4752 = vunpack.c.h.bf16 %v3234
    %v4753 = vunpack.c.l.bf16 %v3235
    %v4754 = vunpack.c.h.bf16 %v3235
    %v4755 = vunpack.c.l.bf16 %v3236
    %v4756 = vunpack.c.h.bf16 %v3236
    %v4757 = vunpack.c.l.bf16 %v3237
    %v4758 = vunpack.c.h.bf16 %v3237
    %v4759 = vunpack.c.l.bf16 %v3238
    %v4760 = vunpack.c.h.bf16 %v3238
    %v4761 = vunpack.c.l.bf16 %v3239
    %v4762 = vunpack.c.h.bf16 %v3239
    %v4763 = vunpack.c.l.bf16 %v3240
    %v4764 = vunpack.c.h.bf16 %v3240
    %v4765 = vunpack.c.l.bf16 %v3241
    %v4766 = vunpack.c.h.bf16 %v3241
    %v4767 = vunpack.c.l.bf16 %v3242
    %v4768 = vunpack.c.h.bf16 %v3242
    %v4769 = vunpack.c.l.bf16 %v3243
    %v4770 = vunpack.c.h.bf16 %v3243
    %v4771 = vunpack.c.l.bf16 %v3244
    %v4772 = vunpack.c.h.bf16 %v3244
    %v4773 = vunpack.c.l.bf16 %v3245
    %v4774 = vunpack.c.h.bf16 %v3245
    %v4775 = vunpack.c.l.bf16 %v3246
    %v4776 = vunpack.c.h.bf16 %v3246
    %v4777 = vunpack.c.l.bf16 %v3247
    %v4778 = vunpack.c.h.bf16 %v3247
    %v4779 = vunpack.c.l.bf16 %v3248
    %v4780 = vunpack.c.h.bf16 %v3248
    %v4781 = vunpack.c.l.bf16 %v3249
    %v4782 = vunpack.c.h.bf16 %v3249
    %v4783 = vunpack.c.l.bf16 %v3250
    %v4784 = vunpack.c.h.bf16 %v3250
    %v4785 = vunpack.c.l.bf16 %v3251
    %v4786 = vunpack.c.h.bf16 %v3251
    %v4787 = vunpack.c.l.bf16 %v3252
    %v4788 = vunpack.c.h.bf16 %v3252
    %v4789 = vunpack.c.l.bf16 %v3253
    %v4790 = vunpack.c.h.bf16 %v3253
    %v4791 = vunpack.c.l.bf16 %v3254
    %v4792 = vunpack.c.h.bf16 %v3254
    %v4793 = vunpack.c.l.bf16 %v3255
    %v4794 = vunpack.c.h.bf16 %v3255
    %v4795 = vunpack.c.l.bf16 %v3256
    %v4796 = vunpack.c.h.bf16 %v3256
    %v4797 = vunpack.c.l.bf16 %v3257
    %v4798 = vunpack.c.h.bf16 %v3257
    %v4799 = vunpack.c.l.bf16 %v3258
    %v4800 = vunpack.c.h.bf16 %v3258
    %v4801 = vunpack.c.l.bf16 %v3259
    %v4802 = vunpack.c.h.bf16 %v3259
    %v4803 = vunpack.c.l.bf16 %v3260
    %v4804 = vunpack.c.h.bf16 %v3260
    %v4805 = vunpack.c.l.bf16 %v3261
    %v4806 = vunpack.c.h.bf16 %v3261
    %v4807 = vunpack.c.l.bf16 %v3262
    %v4808 = vunpack.c.h.bf16 %v3262
    %v4809 = vunpack.c.l.bf16 %v3263
    %v4810 = vunpack.c.h.bf16 %v3263
    %v4811 = vunpack.c.l.bf16 %v3264
    %v4812 = vunpack.c.h.bf16 %v3264
    %v4813 = vunpack.c.l.bf16 %v3265
    %v4814 = vunpack.c.h.bf16 %v3265
    %v4815 = vunpack.c.l.bf16 %v3266
    %v4816 = vunpack.c.h.bf16 %v3266
    %v4817 = vunpack.c.l.bf16 %v3267
    %v4818 = vunpack.c.h.bf16 %v3267
    %v4819 = vunpack.c.l.bf16 %v3268
    %v4820 = vunpack.c.h.bf16 %v3268
    %v4821 = vunpack.c.l.bf16 %v3269
    %v4822 = vunpack.c.h.bf16 %v3269
    %v4823 = vunpack.c.l.bf16 %v3270
    %v4824 = vunpack.c.h.bf16 %v3270
    %v4825 = vunpack.c.l.bf16 %v3271
    %v4826 = vunpack.c.h.bf16 %v3271
    %v4827 = vunpack.c.l.bf16 %v3272
    %v4828 = vunpack.c.h.bf16 %v3272
    %v4829 = vunpack.c.l.bf16 %v3273
    %v4830 = vunpack.c.h.bf16 %v3273
    %v4831 = vunpack.c.l.bf16 %v3274
    %v4832 = vunpack.c.h.bf16 %v3274
    %v4833 = vunpack.c.l.bf16 %v3275
    %v4834 = vunpack.c.h.bf16 %v3275
    %v4835 = vunpack.c.l.bf16 %v3276
    %v4836 = vunpack.c.h.bf16 %v3276
    %v4837 = vunpack.c.l.bf16 %v3277
    %v4838 = vunpack.c.h.bf16 %v3277
    %v4839 = vunpack.c.l.bf16 %v3278
    %v4840 = vunpack.c.h.bf16 %v3278
    %v4841 = vunpack.c.l.bf16 %v3279
    %v4842 = vunpack.c.h.bf16 %v3279
    %v4843 = vunpack.c.l.bf16 %v3280
    %v4844 = vunpack.c.h.bf16 %v3280
    %v4845 = vunpack.c.l.bf16 %v3281
    %v4846 = vunpack.c.h.bf16 %v3281
    %v4847 = vunpack.c.l.bf16 %v3282
    %v4848 = vunpack.c.h.bf16 %v3282
    %v4849 = vunpack.c.l.bf16 %v3283
    %v4850 = vunpack.c.h.bf16 %v3283
    %v4851 = vunpack.c.l.bf16 %v3284
    %v4852 = vunpack.c.h.bf16 %v3284
    %v4853 = vunpack.c.l.bf16 %v3285
    %v4854 = vunpack.c.h.bf16 %v3285
    %v4855 = vunpack.c.l.bf16 %v3286
    %v4856 = vunpack.c.h.bf16 %v3286
    %v4857 = vunpack.c.l.bf16 %v3287
    %v4858 = vunpack.c.h.bf16 %v3287
    %v4859 = vunpack.c.l.bf16 %v3288
    %v4860 = vunpack.c.h.bf16 %v3288
    %v4861 = vunpack.c.l.bf16 %v3289
    %v4862 = vunpack.c.h.bf16 %v3289
    %v4863 = vunpack.c.l.bf16 %v3290
    %v4864 = vunpack.c.h.bf16 %v3290
    %v4865 = vunpack.c.l.bf16 %v3291
    %v4866 = vunpack.c.h.bf16 %v3291
    %v4867 = vunpack.c.l.bf16 %v3292
    %v4868 = vunpack.c.h.bf16 %v3292
    %v4869 = vunpack.c.l.bf16 %v3293
    %v4870 = vunpack.c.h.bf16 %v3293
    %v4871 = vunpack.c.l.bf16 %v3294
    %v4872 = vunpack.c.h.bf16 %v3294
    %v4873 = vunpack.c.l.bf16 %v3295
    %v4874 = vunpack.c.h.bf16 %v3295
    %v4875 = vunpack.c.l.bf16 %v3296
    %v4876 = vunpack.c.h.bf16 %v3296
    %v4877 = vunpack.c.l.bf16 %v3297
    %v4878 = vunpack.c.h.bf16 %v3297
    %v4879 = vunpack.c.l.bf16 %v3298
    %v4880 = vunpack.c.h.bf16 %v3298
    %v4881 = vunpack.c.l.bf16 %v3299
    %v4882 = vunpack.c.h.bf16 %v3299
    %v4883 = vunpack.c.l.bf16 %v3300
    %v4884 = vunpack.c.h.bf16 %v3300
    %v4885 = vunpack.c.l.bf16 %v3301
    %v4886 = vunpack.c.h.bf16 %v3301
    %v4887 = vunpack.c.l.bf16 %v3302
    %v4888 = vunpack.c.h.bf16 %v3302
    %v4889 = vunpack.c.l.bf16 %v3303
    %v4890 = vunpack.c.h.bf16 %v3303
    %v4891 = vunpack.c.l.bf16 %v3304
    %v4892 = vunpack.c.h.bf16 %v3304
    %v4893 = vunpack.c.l.bf16 %v3305
    %v4894 = vunpack.c.h.bf16 %v3305
    %v4895 = vunpack.c.l.bf16 %v3306
    %v4896 = vunpack.c.h.bf16 %v3306
    %v4897 = vunpack.c.l.bf16 %v3307
    %v4898 = vunpack.c.h.bf16 %v3307
    %v4899 = vunpack.c.l.bf16 %v3308
    %v4900 = vunpack.c.h.bf16 %v3308
    %v4901 = vunpack.c.l.bf16 %v3309
    %v4902 = vunpack.c.h.bf16 %v3309
    %v4903 = vunpack.c.l.bf16 %v3310
    %v4904 = vunpack.c.h.bf16 %v3310
    %v4905 = vunpack.c.l.bf16 %v3311
    %v4906 = vunpack.c.h.bf16 %v3311
    %v4907 = vunpack.c.l.bf16 %v3312
    %v4908 = vunpack.c.h.bf16 %v3312
    %v4909 = vunpack.c.l.bf16 %v3313
    %v4910 = vunpack.c.h.bf16 %v3313
    %v4911 = vunpack.c.l.bf16 %v3314
    %v4912 = vunpack.c.h.bf16 %v3314
    %v4913 = vunpack.c.l.bf16 %v3315
    %v4914 = vunpack.c.h.bf16 %v3315
    %v4915 = vunpack.c.l.bf16 %v3316
    %v4916 = vunpack.c.h.bf16 %v3316
    %v4917 = vunpack.c.l.bf16 %v3317
    %v4918 = vunpack.c.h.bf16 %v3317
    %v4919 = vunpack.c.l.bf16 %v3318
    %v4920 = vunpack.c.h.bf16 %v3318
    %v4921 = vunpack.c.l.bf16 %v3319
    %v4922 = vunpack.c.h.bf16 %v3319
    %v4923 = vunpack.c.l.bf16 %v3320
    %v4924 = vunpack.c.h.bf16 %v3320
    %v4925 = vunpack.c.l.bf16 %v3321
    %v4926 = vunpack.c.h.bf16 %v3321
    %v4927 = vunpack.c.l.bf16 %v3322
    %v4928 = vunpack.c.h.bf16 %v3322
    %v4929 = vunpack.c.l.bf16 %v3323
    %v4930 = vunpack.c.h.bf16 %v3323
    %v4931 = vunpack.c.l.bf16 %v3324
    %v4932 = vunpack.c.h.bf16 %v3324
    %v4933 = vunpack.c.l.bf16 %v3325
    %v4934 = vunpack.c.h.bf16 %v3325
    %v4935 = vunpack.c.l.bf16 %v3326
    %v4936 = vunpack.c.h.bf16 %v3326
    %v4937 = vunpack.c.l.bf16 %v3327
    %v4938 = vunpack.c.h.bf16 %v3327
    %v4939 = vunpack.c.l.bf16 %v3328
    %v4940 = vunpack.c.h.bf16 %v3328
    %v4941 = vunpack.c.l.bf16 %v3329
    %v4942 = vunpack.c.h.bf16 %v3329
    %v4943 = vunpack.c.l.bf16 %v3330
    %v4944 = vunpack.c.h.bf16 %v3330
    %v4945 = vunpack.c.l.bf16 %v3331
    %v4946 = vunpack.c.h.bf16 %v3331
    %v4947 = vunpack.c.l.bf16 %v3332
    %v4948 = vunpack.c.h.bf16 %v3332
    %v4949 = vunpack.c.l.bf16 %v3333
    %v4950 = vunpack.c.h.bf16 %v3333
    %v4951 = vunpack.c.l.bf16 %v3334
    %v4952 = vunpack.c.h.bf16 %v3334
    %v4953 = vunpack.c.l.bf16 %v3335
    %v4954 = vunpack.c.h.bf16 %v3335
    %v4955 = vunpack.c.l.bf16 %v3336
    %v4956 = vunpack.c.h.bf16 %v3336
    %v4957 = vunpack.c.l.bf16 %v3337
    %v4958 = vunpack.c.h.bf16 %v3337
    %v4959 = vunpack.c.l.bf16 %v3338
    %v4960 = vunpack.c.h.bf16 %v3338
    %v4961 = vunpack.c.l.bf16 %v3339
    %v4962 = vunpack.c.h.bf16 %v3339
    %v4963 = vunpack.c.l.bf16 %v3340
    %v4964 = vunpack.c.h.bf16 %v3340
    %v4965 = vunpack.c.l.bf16 %v3341
    %v4966 = vunpack.c.h.bf16 %v3341
    %v4967 = vunpack.c.l.bf16 %v3342
    %v4968 = vunpack.c.h.bf16 %v3342
    %v4969 = vunpack.c.l.bf16 %v3343
    %v4970 = vunpack.c.h.bf16 %v3343
    %v4971 = vunpack.c.l.bf16 %v3344
    %v4972 = vunpack.c.h.bf16 %v3344
    %v4973 = vunpack.c.l.bf16 %v3345
    %v4974 = vunpack.c.h.bf16 %v3345
    %v4975 = vunpack.c.l.bf16 %v3346
    %v4976 = vunpack.c.h.bf16 %v3346
    %v4977 = vunpack.c.l.bf16 %v3347
    %v4978 = vunpack.c.h.bf16 %v3347
    %v4979 = vunpack.c.l.bf16 %v3348
    %v4980 = vunpack.c.h.bf16 %v3348
    %v4981 = vunpack.c.l.bf16 %v3349
    %v4982 = vunpack.c.h.bf16 %v3349
    %v4983 = vunpack.c.l.bf16 %v3350
    %v4984 = vunpack.c.h.bf16 %v3350
    %v4985 = vunpack.c.l.bf16 %v3351
    %v4986 = vunpack.c.h.bf16 %v3351
    %v4987 = vunpack.c.l.bf16 %v3352
    %v4988 = vunpack.c.h.bf16 %v3352
    %v4989 = vunpack.c.l.bf16 %v3353
    %v4990 = vunpack.c.h.bf16 %v3353
    %v4991 = vunpack.c.l.bf16 %v3354
    %v4992 = vunpack.c.h.bf16 %v3354
    %v4993 = vunpack.c.l.bf16 %v3355
    %v4994 = vunpack.c.h.bf16 %v3355
    %v4995 = vunpack.c.l.bf16 %v3356
    %v4996 = vunpack.c.h.bf16 %v3356
    %v4997 = vunpack.c.l.bf16 %v3357
    %v4998 = vunpack.c.h.bf16 %v3357
    %v4999 = vunpack.c.l.bf16 %v3358
    %v5000 = vunpack.c.h.bf16 %v3358
    %v5001 = vunpack.c.l.bf16 %v3359
    %v5002 = vunpack.c.h.bf16 %v3359
    %v5003 = vunpack.c.l.bf16 %v3360
    %v5004 = vunpack.c.h.bf16 %v3360
    %v5005 = vunpack.c.l.bf16 %v3361
    %v5006 = vunpack.c.h.bf16 %v3361
    %v5007 = vunpack.c.l.bf16 %v3362
    %v5008 = vunpack.c.h.bf16 %v3362
    %v5009 = vunpack.c.l.bf16 %v3363
    %v5010 = vunpack.c.h.bf16 %v3363
    %v5011 = vunpack.c.l.bf16 %v3364
    %v5012 = vunpack.c.h.bf16 %v3364
    %v5013 = vunpack.c.l.bf16 %v3365
    %v5014 = vunpack.c.h.bf16 %v3365
    %v5015 = vunpack.c.l.bf16 %v3366
    %v5016 = vunpack.c.h.bf16 %v3366
    %v5017 = vunpack.c.l.bf16 %v3367
    %v5018 = vunpack.c.h.bf16 %v3367
    %v5019 = vunpack.c.l.bf16 %v3368
    %v5020 = vunpack.c.h.bf16 %v3368
    %v5021 = vunpack.c.l.bf16 %v3369
    %v5022 = vunpack.c.h.bf16 %v3369
    %v5023 = vunpack.c.l.bf16 %v3370
    %v5024 = vunpack.c.h.bf16 %v3370
    %v5025 = vunpack.c.l.bf16 %v3371
    %v5026 = vunpack.c.h.bf16 %v3371
    %v5027 = vunpack.c.l.bf16 %v3372
    %v5028 = vunpack.c.h.bf16 %v3372
    %v5029 = vunpack.c.l.bf16 %v3373
    %v5030 = vunpack.c.h.bf16 %v3373
    %v5031 = vunpack.c.l.bf16 %v3374
    %v5032 = vunpack.c.h.bf16 %v3374
    %v5033 = vunpack.c.l.bf16 %v3375
    %v5034 = vunpack.c.h.bf16 %v3375
    %v5035 = vunpack.c.l.bf16 %v3376
    %v5036 = vunpack.c.h.bf16 %v3376
    %v5037 = vunpack.c.l.bf16 %v3377
    %v5038 = vunpack.c.h.bf16 %v3377
    %v5039 = vunpack.c.l.bf16 %v3378
    %v5040 = vunpack.c.h.bf16 %v3378
    %v5041 = vunpack.c.l.bf16 %v3379
    %v5042 = vunpack.c.h.bf16 %v3379
    %v5043 = vunpack.c.l.bf16 %v3380
    %v5044 = vunpack.c.h.bf16 %v3380
    %v5045 = vunpack.c.l.bf16 %v3381
    %v5046 = vunpack.c.h.bf16 %v3381
    %v5047 = vunpack.c.l.bf16 %v3382
    %v5048 = vunpack.c.h.bf16 %v3382
    %v5049 = vunpack.c.l.bf16 %v3383
    %v5050 = vunpack.c.h.bf16 %v3383
    %v5051 = vunpack.c.l.bf16 %v3384
    %v5052 = vunpack.c.h.bf16 %v3384
    %v5053 = vunpack.c.l.bf16 %v3385
    %v5054 = vunpack.c.h.bf16 %v3385
    %v5055 = vunpack.c.l.bf16 %v3386
    %v5056 = vunpack.c.h.bf16 %v3386
    %v5057 = vunpack.c.l.bf16 %v3387
    %v5058 = vunpack.c.h.bf16 %v3387
    %v5059 = vunpack.c.l.bf16 %v3388
    %v5060 = vunpack.c.h.bf16 %v3388
    %v5061 = vunpack.c.l.bf16 %v3389
    %v5062 = vunpack.c.h.bf16 %v3389
    %v5063 = vunpack.c.l.bf16 %v3390
    %v5064 = vunpack.c.h.bf16 %v3390
    %v5065 = vunpack.c.l.bf16 %v3391
    %v5066 = vunpack.c.h.bf16 %v3391
    %v5067 = vunpack.c.l.bf16 %v3392
    %v5068 = vunpack.c.h.bf16 %v3392
    %v5069 = vunpack.c.l.bf16 %v3393
    %v5070 = vunpack.c.h.bf16 %v3393
    %v5071 = vunpack.c.l.bf16 %v3394
    %v5072 = vunpack.c.h.bf16 %v3394
    %v5073 = vunpack.c.l.bf16 %v3395
    %v5074 = vunpack.c.h.bf16 %v3395
    %v5075 = vunpack.c.l.bf16 %v3396
    %v5076 = vunpack.c.h.bf16 %v3396
    %v5077 = vunpack.c.l.bf16 %v3397
    %v5078 = vunpack.c.h.bf16 %v3397
    %v5079 = vunpack.c.l.bf16 %v3398
    %v5080 = vunpack.c.h.bf16 %v3398
    %v5081 = vunpack.c.l.bf16 %v3399
    %v5082 = vunpack.c.h.bf16 %v3399
    %v5083 = vunpack.c.l.bf16 %v3400
    %v5084 = vunpack.c.h.bf16 %v3400
    %v5085 = vunpack.c.l.bf16 %v3401
    %v5086 = vunpack.c.h.bf16 %v3401
    %v5087 = vunpack.c.l.bf16 %v3402
    %v5088 = vunpack.c.h.bf16 %v3402
    %v5089 = vunpack.c.l.bf16 %v3403
    %v5090 = vunpack.c.h.bf16 %v3403
    %v5091 = vunpack.c.l.bf16 %v3404
    %v5092 = vunpack.c.h.bf16 %v3404
    %v5093 = vunpack.c.l.bf16 %v3405
    %v5094 = vunpack.c.h.bf16 %v3405
    %v5095 = vunpack.c.l.bf16 %v3406
    %v5096 = vunpack.c.h.bf16 %v3406
    %v5097 = vunpack.c.l.bf16 %v3407
    %v5098 = vunpack.c.h.bf16 %v3407
    %v5099 = vunpack.c.l.bf16 %v3408
    %v5100 = vunpack.c.h.bf16 %v3408
    %v5101 = vunpack.c.l.bf16 %v3409
    %v5102 = vunpack.c.h.bf16 %v3409
    %v5103 = vunpack.c.l.bf16 %v3410
    %v5104 = vunpack.c.h.bf16 %v3410
    %v5105 = vunpack.c.l.bf16 %v3411
    %v5106 = vunpack.c.h.bf16 %v3411
    %v5107 = vunpack.c.l.bf16 %v3412
    %v5108 = vunpack.c.h.bf16 %v3412
    %v5109 = vunpack.c.l.bf16 %v3413
    %v5110 = vunpack.c.h.bf16 %v3413
    %v5111 = vunpack.c.l.bf16 %v3414
    %v5112 = vunpack.c.h.bf16 %v3414
    %v5113 = vunpack.c.l.bf16 %v3415
    %v5114 = vunpack.c.h.bf16 %v3415
    %v5115 = vunpack.c.l.bf16 %v3416
    %v5116 = vunpack.c.h.bf16 %v3416
    %v5117 = vunpack.c.l.bf16 %v3417
    %v5118 = vunpack.c.h.bf16 %v3417
    %v5119 = vunpack.c.l.bf16 %v3418
    %v5120 = vunpack.c.h.bf16 %v3418
    %v5121 = vunpack.c.l.bf16 %v3419
    %v5122 = vunpack.c.h.bf16 %v3419
    %v5123 = vunpack.c.l.bf16 %v3420
    %v5124 = vunpack.c.h.bf16 %v3420
    %v5125 = vunpack.c.l.bf16 %v3421
    %v5126 = vunpack.c.h.bf16 %v3421
    %v5127 = vunpack.c.l.bf16 %v3422
    %v5128 = vunpack.c.h.bf16 %v3422
    %v5129 = vunpack.c.l.bf16 %v3423
    %v5130 = vunpack.c.h.bf16 %v3423
    %v5131 = vunpack.c.l.bf16 %v3424
    %v5132 = vunpack.c.h.bf16 %v3424
    %v5133 = vunpack.c.l.bf16 %v3425
    %v5134 = vunpack.c.h.bf16 %v3425
    %v5135 = vunpack.c.l.bf16 %v3426
    %v5136 = vunpack.c.h.bf16 %v3426
    %v5137 = vunpack.c.l.bf16 %v3427
    %v5138 = vunpack.c.h.bf16 %v3427
    %v5139 = vunpack.c.l.bf16 %v3428
    %v5140 = vunpack.c.h.bf16 %v3428
    %v5141 = vunpack.c.l.bf16 %v3429
    %v5142 = vunpack.c.h.bf16 %v3429
    %v5143 = vunpack.c.l.bf16 %v3430
    %v5144 = vunpack.c.h.bf16 %v3430
    %v5145 = vunpack.c.l.bf16 %v3431
    %v5146 = vunpack.c.h.bf16 %v3431
    %v5147 = vunpack.c.l.bf16 %v3432
    %v5148 = vunpack.c.h.bf16 %v3432
    %v5149 = vunpack.c.l.bf16 %v3433
    %v5150 = vunpack.c.h.bf16 %v3433
    %v5151 = vunpack.c.l.bf16 %v3434
    %v5152 = vunpack.c.h.bf16 %v3434
    %v5153 = vunpack.c.l.bf16 %v3435
    %v5154 = vunpack.c.h.bf16 %v3435
    %v5155 = vunpack.c.l.bf16 %v3436
    %v5156 = vunpack.c.h.bf16 %v3436
    %v5157 = vunpack.c.l.bf16 %v3437
    %v5158 = vunpack.c.h.bf16 %v3437
    %v5159 = vunpack.c.l.bf16 %v3438
    %v5160 = vunpack.c.h.bf16 %v3438
    %v5161 = vunpack.c.l.bf16 %v3439
    %v5162 = vunpack.c.h.bf16 %v3439
    %v5163 = vunpack.c.l.bf16 %v3440
    %v5164 = vunpack.c.h.bf16 %v3440
    %v5165 = vunpack.c.l.bf16 %v3441
    %v5166 = vunpack.c.h.bf16 %v3441
    %v5167 = vunpack.c.l.bf16 %v3442
    %v5168 = vunpack.c.h.bf16 %v3442
    %v5169 = vunpack.c.l.bf16 %v3443
    %v5170 = vunpack.c.h.bf16 %v3443
    %v5171 = vunpack.c.l.bf16 %v3444
    %v5172 = vunpack.c.h.bf16 %v3444
    %v5173 = vunpack.c.l.bf16 %v3445
    %v5174 = vunpack.c.h.bf16 %v3445
    %v5175 = vunpack.c.l.bf16 %v3446
    %v5176 = vunpack.c.h.bf16 %v3446
    %v5177 = vunpack.c.l.bf16 %v3447
    %v5178 = vunpack.c.h.bf16 %v3447
    %v5179 = vunpack.c.l.bf16 %v3448
    %v5180 = vunpack.c.h.bf16 %v3448
    %v5181 = vunpack.c.l.bf16 %v3449
    %v5182 = vunpack.c.h.bf16 %v3449
    %v5183 = vunpack.c.l.bf16 %v3450
    %v5184 = vunpack.c.h.bf16 %v3450
    %v5185 = vunpack.c.l.bf16 %v3451
    %v5186 = vunpack.c.h.bf16 %v3451
    %v5187 = vunpack.c.l.bf16 %v3452
    %v5188 = vunpack.c.h.bf16 %v3452
    %v5189 = vunpack.c.l.bf16 %v3453
    %v5190 = vunpack.c.h.bf16 %v3453
    %v5191 = vunpack.c.l.bf16 %v3454
    %v5192 = vunpack.c.h.bf16 %v3454
    %v5193 = vunpack.c.l.bf16 %v3455
    %v5194 = vunpack.c.h.bf16 %v3455
    %v5195 = vunpack.c.l.bf16 %v3456
    %v5196 = vunpack.c.h.bf16 %v3456
    %v5197 = vunpack.c.l.bf16 %v3457
    %v5198 = vunpack.c.h.bf16 %v3457
    %v5199 = vunpack.c.l.bf16 %v3458
    %v5200 = vunpack.c.h.bf16 %v3458
    %v5201 = vunpack.c.l.bf16 %v3459
    %v5202 = vunpack.c.h.bf16 %v3459
    %v5203 = vunpack.c.l.bf16 %v3460
    %v5204 = vunpack.c.h.bf16 %v3460
    %v5205 = vunpack.c.l.bf16 %v3461
    %v5206 = vunpack.c.h.bf16 %v3461
    %v5207 = vunpack.c.l.bf16 %v3462
    %v5208 = vunpack.c.h.bf16 %v3462
    %v5209 = vunpack.c.l.bf16 %v3463
    %v5210 = vunpack.c.h.bf16 %v3463
    %v5211 = vunpack.c.l.bf16 %v3464
    %v5212 = vunpack.c.h.bf16 %v3464
    %v5213 = vunpack.c.l.bf16 %v3465
    %v5214 = vunpack.c.h.bf16 %v3465
    %v5215 = vunpack.c.l.bf16 %v3466
    %v5216 = vunpack.c.h.bf16 %v3466
    %v5217 = vunpack.c.l.bf16 %v3467
    %v5218 = vunpack.c.h.bf16 %v3467
    %v5219 = vunpack.c.l.bf16 %v3468
    %v5220 = vunpack.c.h.bf16 %v3468
    %v5221 = vunpack.c.l.bf16 %v3469
    %v5222 = vunpack.c.h.bf16 %v3469
    %v5223 = vunpack.c.l.bf16 %v3470
    %v5224 = vunpack.c.h.bf16 %v3470
    %v5225 = vunpack.c.l.bf16 %v3471
    %v5226 = vunpack.c.h.bf16 %v3471
    %v5227 = vunpack.c.l.bf16 %v3472
    %v5228 = vunpack.c.h.bf16 %v3472
    %v5229 = vunpack.c.l.bf16 %v3473
    %v5230 = vunpack.c.h.bf16 %v3473
    %v5231 = vunpack.c.l.bf16 %v3474
    %v5232 = vunpack.c.h.bf16 %v3474
    %v5233 = vunpack.c.l.bf16 %v3475
    %v5234 = vunpack.c.h.bf16 %v3475
    %v5235 = vunpack.c.l.bf16 %v3476
    %v5236 = vunpack.c.h.bf16 %v3476
    %v5237 = vunpack.c.l.bf16 %v3477
    %v5238 = vunpack.c.h.bf16 %v3477
    %v5239 = vunpack.c.l.bf16 %v3478
    %v5240 = vunpack.c.h.bf16 %v3478
    %v5241 = vunpack.c.l.bf16 %v3479
    %v5242 = vunpack.c.h.bf16 %v3479
    %v5243 = vunpack.c.l.bf16 %v3480
    %v5244 = vunpack.c.h.bf16 %v3480
    %v5245 = vunpack.c.l.bf16 %v3481
    %v5246 = vunpack.c.h.bf16 %v3481
    %v5247 = vunpack.c.l.bf16 %v3482
    %v5248 = vunpack.c.h.bf16 %v3482
    %v5249 = vunpack.c.l.bf16 %v3483
    %v5250 = vunpack.c.h.bf16 %v3483
    %v5251 = vunpack.c.l.bf16 %v3484
    %v5252 = vunpack.c.h.bf16 %v3484
    %v5253 = vunpack.c.l.bf16 %v3485
    %v5254 = vunpack.c.h.bf16 %v3485
    %v5255 = vunpack.c.l.bf16 %v3486
    %v5256 = vunpack.c.h.bf16 %v3486
    %v5257 = vunpack.c.l.bf16 %v3487
    %v5258 = vunpack.c.h.bf16 %v3487
    %v5259 = vunpack.c.l.bf16 %v3488
    %v5260 = vunpack.c.h.bf16 %v3488
    %v5261 = vunpack.c.l.bf16 %v3489
    %v5262 = vunpack.c.h.bf16 %v3489
    %v5263 = vunpack.c.l.bf16 %v3490
    %v5264 = vunpack.c.h.bf16 %v3490
    %v5265 = vunpack.c.l.bf16 %v3491
    %v5266 = vunpack.c.h.bf16 %v3491
    %v5267 = vunpack.c.l.bf16 %v3492
    %v5268 = vunpack.c.h.bf16 %v3492
    %v5269 = vunpack.c.l.bf16 %v3493
    %v5270 = vunpack.c.h.bf16 %v3493
    %v5271 = vunpack.c.l.bf16 %v3494
    %v5272 = vunpack.c.h.bf16 %v3494
    %v5273 = vunpack.c.l.bf16 %v3495
    %v5274 = vunpack.c.h.bf16 %v3495
    %v5275 = vunpack.c.l.bf16 %v3496
    %v5276 = vunpack.c.h.bf16 %v3496
    %v5277 = vunpack.c.l.bf16 %v3497
    %v5278 = vunpack.c.h.bf16 %v3497
    %v5279 = vunpack.c.l.bf16 %v3498
    %v5280 = vunpack.c.h.bf16 %v3498
    %v5281 = vunpack.c.l.bf16 %v3499
    %v5282 = vunpack.c.h.bf16 %v3499
    %v5283 = vunpack.c.l.bf16 %v3500
    %v5284 = vunpack.c.h.bf16 %v3500
    %v5285 = vunpack.c.l.bf16 %v3501
    %v5286 = vunpack.c.h.bf16 %v3501
    %v5287 = vunpack.c.l.bf16 %v3502
    %v5288 = vunpack.c.h.bf16 %v3502
    %v5289 = vunpack.c.l.bf16 %v3503
    %v5290 = vunpack.c.h.bf16 %v3503
    %v5291 = vunpack.c.l.bf16 %v3504
    %v5292 = vunpack.c.h.bf16 %v3504
    %v5293 = vunpack.c.l.bf16 %v3505
    %v5294 = vunpack.c.h.bf16 %v3505
    %v5295 = vunpack.c.l.bf16 %v3506
    %v5296 = vunpack.c.h.bf16 %v3506
    %v5297 = vunpack.c.l.bf16 %v3507
    %v5298 = vunpack.c.h.bf16 %v3507
    %v5299 = vunpack.c.l.bf16 %v3508
    %v5300 = vunpack.c.h.bf16 %v3508
    %v5301 = vunpack.c.l.bf16 %v3509
    %v5302 = vunpack.c.h.bf16 %v3509
    %v5303 = vunpack.c.l.bf16 %v3510
    %v5304 = vunpack.c.h.bf16 %v3510
    %v5305 = vunpack.c.l.bf16 %v3511
    %v5306 = vunpack.c.h.bf16 %v3511
    %v5307 = vunpack.c.l.bf16 %v3512
    %v5308 = vunpack.c.h.bf16 %v3512
    %v5309 = vunpack.c.l.bf16 %v3513
    %v5310 = vunpack.c.h.bf16 %v3513
    %v5311 = vunpack.c.l.bf16 %v3514
    %v5312 = vunpack.c.h.bf16 %v3514
    %v5313 = vunpack.c.l.bf16 %v3515
    %v5314 = vunpack.c.h.bf16 %v3515
    %v5315 = vunpack.c.l.bf16 %v3516
    %v5316 = vunpack.c.h.bf16 %v3516
    %v5317 = vunpack.c.l.bf16 %v3517
    %v5318 = vunpack.c.h.bf16 %v3517
    %v5319 = vunpack.c.l.bf16 %v3518
    %v5320 = vunpack.c.h.bf16 %v3518
    %v5321 = vunpack.c.l.bf16 %v3519
    %v5322 = vunpack.c.h.bf16 %v3519
    %v5323 = vunpack.c.l.bf16 %v3520
    %v5324 = vunpack.c.h.bf16 %v3520
    %v5325 = vunpack.c.l.bf16 %v3521
    %v5326 = vunpack.c.h.bf16 %v3521
    %v5327 = vunpack.c.l.bf16 %v3522
    %v5328 = vunpack.c.h.bf16 %v3522
    %v5329 = vunpack.c.l.bf16 %v3523
    %v5330 = vunpack.c.h.bf16 %v3523
    %v5331 = vunpack.c.l.bf16 %v3524
    %v5332 = vunpack.c.h.bf16 %v3524
    %v5333 = vunpack.c.l.bf16 %v3525
    %v5334 = vunpack.c.h.bf16 %v3525
    %v5335 = vunpack.c.l.bf16 %v3526
    %v5336 = vunpack.c.h.bf16 %v3526
    %v5337 = vunpack.c.l.bf16 %v3527
    %v5338 = vunpack.c.h.bf16 %v3527
    %v5339 = vunpack.c.l.bf16 %v3528
    %v5340 = vunpack.c.h.bf16 %v3528
    %v5341 = vunpack.c.l.bf16 %v3529
    %v5342 = vunpack.c.h.bf16 %v3529
    %v5343 = vunpack.c.l.bf16 %v3530
    %v5344 = vunpack.c.h.bf16 %v3530
    %v5345 = vunpack.c.l.bf16 %v3531
    %v5346 = vunpack.c.h.bf16 %v3531
    %v5347 = vunpack.c.l.bf16 %v3532
    %v5348 = vunpack.c.h.bf16 %v3532
    %v5349 = vunpack.c.l.bf16 %v3533
    %v5350 = vunpack.c.h.bf16 %v3533
    %v5351 = vunpack.c.l.bf16 %v3534
    %v5352 = vunpack.c.h.bf16 %v3534
    %v5353 = vunpack.c.l.bf16 %v3535
    %v5354 = vunpack.c.h.bf16 %v3535
    %v5355 = vunpack.c.l.bf16 %v3536
    %v5356 = vunpack.c.h.bf16 %v3536
    %v5357 = vunpack.c.l.bf16 %v3537
    %v5358 = vunpack.c.h.bf16 %v3537
    %v5359 = vunpack.c.l.bf16 %v3538
    %v5360 = vunpack.c.h.bf16 %v3538
    %v5361 = vunpack.c.l.bf16 %v3539
    %v5362 = vunpack.c.h.bf16 %v3539
    %v5363 = vunpack.c.l.bf16 %v3540
    %v5364 = vunpack.c.h.bf16 %v3540
    %v5365 = vunpack.c.l.bf16 %v3541
    %v5366 = vunpack.c.h.bf16 %v3541
    %v5367 = vunpack.c.l.bf16 %v3542
    %v5368 = vunpack.c.h.bf16 %v3542
    %v5369 = vunpack.c.l.bf16 %v3543
    %v5370 = vunpack.c.h.bf16 %v3543
    %v5371 = vunpack.c.l.bf16 %v3544
    %v5372 = vunpack.c.h.bf16 %v3544
    %v5373 = vunpack.c.l.bf16 %v3545
    %v5374 = vunpack.c.h.bf16 %v3545
    %v5375 = vunpack.c.l.bf16 %v3546
    %v5376 = vunpack.c.h.bf16 %v3546
    %v5377 = vunpack.c.l.bf16 %v3547
    %v5378 = vunpack.c.h.bf16 %v3547
    %v5379 = vunpack.c.l.bf16 %v3548
    %v5380 = vunpack.c.h.bf16 %v3548
    %v5381 = vunpack.c.l.bf16 %v3549
    %v5382 = vunpack.c.h.bf16 %v3549
    %v5383 = vunpack.c.l.bf16 %v3550
    %v5384 = vunpack.c.h.bf16 %v3550
    %v5385 = vunpack.c.l.bf16 %v3551
    %v5386 = vunpack.c.h.bf16 %v3551
    %v5387 = vunpack.c.l.bf16 %v3552
    %v5388 = vunpack.c.h.bf16 %v3552
    %v5389 = vunpack.c.l.bf16 %v3553
    %v5390 = vunpack.c.h.bf16 %v3553
    %v5391 = vunpack.c.l.bf16 %v3554
    %v5392 = vunpack.c.h.bf16 %v3554
    %v5393 = vunpack.c.l.bf16 %v3555
    %v5394 = vunpack.c.h.bf16 %v3555
    %v5395 = vunpack.c.l.bf16 %v3556
    %v5396 = vunpack.c.h.bf16 %v3556
    %v5397 = vunpack.c.l.bf16 %v3557
    %v5398 = vunpack.c.h.bf16 %v3557
    %v5399 = vunpack.c.l.bf16 %v3558
    %v5400 = vunpack.c.h.bf16 %v3558
    %v5401 = vunpack.c.l.bf16 %v3559
    %v5402 = vunpack.c.h.bf16 %v3559
    %v5403 = vunpack.c.l.bf16 %v3560
    %v5404 = vunpack.c.h.bf16 %v3560
    %v5405 = vunpack.c.l.bf16 %v3561
    %v5406 = vunpack.c.h.bf16 %v3561
    %v5407 = vunpack.c.l.bf16 %v3562
    %v5408 = vunpack.c.h.bf16 %v3562
    %v5409 = vunpack.c.l.bf16 %v3563
    %v5410 = vunpack.c.h.bf16 %v3563
    %v5411 = vunpack.c.l.bf16 %v3564
    %v5412 = vunpack.c.h.bf16 %v3564
    %v5413 = vunpack.c.l.bf16 %v3565
    %v5414 = vunpack.c.h.bf16 %v3565
    %v5415 = vunpack.c.l.bf16 %v3566
    %v5416 = vunpack.c.h.bf16 %v3566
    %v5417 = vunpack.c.l.bf16 %v3567
    %v5418 = vunpack.c.h.bf16 %v3567
    %v5419 = vunpack.c.l.bf16 %v3568
    %v5420 = vunpack.c.h.bf16 %v3568
    %v5421 = vunpack.c.l.bf16 %v3569
    %v5422 = vunpack.c.h.bf16 %v3569
    %v5423 = vunpack.c.l.bf16 %v3570
    %v5424 = vunpack.c.h.bf16 %v3570
    %v5425 = vunpack.c.l.bf16 %v3571
    %v5426 = vunpack.c.h.bf16 %v3571
    %v5427 = vunpack.c.l.bf16 %v3572
    %v5428 = vunpack.c.h.bf16 %v3572
    %v5429 = vunpack.c.l.bf16 %v3573
    %v5430 = vunpack.c.h.bf16 %v3573
    %v5431 = vunpack.c.l.bf16 %v3574
    %v5432 = vunpack.c.h.bf16 %v3574
    %v5433 = vunpack.c.l.bf16 %v3575
    %v5434 = vunpack.c.h.bf16 %v3575
    %v5435 = vunpack.c.l.bf16 %v3576
    %v5436 = vunpack.c.h.bf16 %v3576
    %v5437 = vunpack.c.l.bf16 %v3577
    %v5438 = vunpack.c.h.bf16 %v3577
    %v5439 = vunpack.c.l.bf16 %v3578
    %v5440 = vunpack.c.h.bf16 %v3578
    %v5441 = vunpack.c.l.bf16 %v3579
    %v5442 = vunpack.c.h.bf16 %v3579
    %v5443 = vunpack.c.l.bf16 %v3580
    %v5444 = vunpack.c.h.bf16 %v3580
    %v5445 = vunpack.c.l.bf16 %v3581
    %v5446 = vunpack.c.h.bf16 %v3581
    %v5447 = vunpack.c.l.bf16 %v3582
    %v5448 = vunpack.c.h.bf16 %v3582
    %v5449 = vunpack.c.l.bf16 %v3583
    %v5450 = vunpack.c.h.bf16 %v3583
    %v5451 = vunpack.c.l.bf16 %v3584
    %v5452 = vunpack.c.h.bf16 %v3584
    %v5453 = vunpack.c.l.bf16 %v3585
    %v5454 = vunpack.c.h.bf16 %v3585
    %v5455 = vunpack.c.l.bf16 %v3586
    %v5456 = vunpack.c.h.bf16 %v3586
    %v5457 = vunpack.c.l.bf16 %v3587
    %v5458 = vunpack.c.h.bf16 %v3587
    %v5459 = vunpack.c.l.bf16 %v3588
    %v5460 = vunpack.c.h.bf16 %v3588
    %v5461 = vunpack.c.l.bf16 %v3589
    %v5462 = vunpack.c.h.bf16 %v3589
    %v5463 = vunpack.c.l.bf16 %v3590
    %v5464 = vunpack.c.h.bf16 %v3590
    %v5465 = vunpack.c.l.bf16 %v3591
    %v5466 = vunpack.c.h.bf16 %v3591
    %v5467 = vunpack.c.l.bf16 %v3592
    %v5468 = vunpack.c.h.bf16 %v3592
    %v5469 = vunpack.c.l.bf16 %v3593
    %v5470 = vunpack.c.h.bf16 %v3593
    %v5471 = vunpack.c.l.bf16 %v3594
    %v5472 = vunpack.c.h.bf16 %v3594
    %v5473 = vunpack.c.l.bf16 %v3595
    %v5474 = vunpack.c.h.bf16 %v3595
    %v5475 = vunpack.c.l.bf16 %v3596
    %v5476 = vunpack.c.h.bf16 %v3596
    %v5477 = vunpack.c.l.bf16 %v3597
    %v5478 = vunpack.c.h.bf16 %v3597
    %v5479 = vunpack.c.l.bf16 %v3598
    %v5480 = vunpack.c.h.bf16 %v3598
    %v5481 = vunpack.c.l.bf16 %v3599
    %v5482 = vunpack.c.h.bf16 %v3599
    %v5483 = vunpack.c.l.bf16 %v3600
    %v5484 = vunpack.c.h.bf16 %v3600
    %v5485 = vunpack.c.l.bf16 %v3601
    %v5486 = vunpack.c.h.bf16 %v3601
    %v5487 = vunpack.c.l.bf16 %v3602
    %v5488 = vunpack.c.h.bf16 %v3602
    %v5489 = vunpack.c.l.bf16 %v3603
    %v5490 = vunpack.c.h.bf16 %v3603
    %v5491 = vunpack.c.l.bf16 %v3604
    %v5492 = vunpack.c.h.bf16 %v3604
    %v5493 = vunpack.c.l.bf16 %v3605
    %v5494 = vunpack.c.h.bf16 %v3605
    %v5495 = vunpack.c.l.bf16 %v3606
    %v5496 = vunpack.c.h.bf16 %v3606
    %v5497 = vunpack.c.l.bf16 %v3607
    %v5498 = vunpack.c.h.bf16 %v3607
    %v5499 = vunpack.c.l.bf16 %v3608
    %v5500 = vunpack.c.h.bf16 %v3608
    %v5501 = vunpack.c.l.bf16 %v3609
    %v5502 = vunpack.c.h.bf16 %v3609
    %v5503 = vunpack.c.l.bf16 %v3610
    %v5504 = vunpack.c.h.bf16 %v3610
    %v5505 = vunpack.c.l.bf16 %v3611
    %v5506 = vunpack.c.h.bf16 %v3611
    %v5507 = vunpack.c.l.bf16 %v3612
    %v5508 = vunpack.c.h.bf16 %v3612
    %v5509 = vunpack.c.l.bf16 %v3613
    %v5510 = vunpack.c.h.bf16 %v3613
    %v5511 = vunpack.c.l.bf16 %v3614
    %v5512 = vunpack.c.h.bf16 %v3614
    %v5513 = vunpack.c.l.bf16 %v3615
    %v5514 = vunpack.c.h.bf16 %v3615
    %v5515 = vunpack.c.l.bf16 %v3616
    %v5516 = vunpack.c.h.bf16 %v3616
    %v5517 = vunpack.c.l.bf16 %v3617
    %v5518 = vunpack.c.h.bf16 %v3617
    %v5519 = vunpack.c.l.bf16 %v3618
    %v5520 = vunpack.c.h.bf16 %v3618
    %v5521 = vunpack.c.l.bf16 %v3619
    %v5522 = vunpack.c.h.bf16 %v3619
    %v5523 = vunpack.c.l.bf16 %v3620
    %v5524 = vunpack.c.h.bf16 %v3620
    %v5525 = vunpack.c.l.bf16 %v3621
    %v5526 = vunpack.c.h.bf16 %v3621
    %v5527 = vunpack.c.l.bf16 %v3622
    %v5528 = vunpack.c.h.bf16 %v3622
    %v5529 = vunpack.c.l.bf16 %v3623
    %v5530 = vunpack.c.h.bf16 %v3623
    %v5531 = vunpack.c.l.bf16 %v3624
    %v5532 = vunpack.c.h.bf16 %v3624
    %v5533 = vunpack.c.l.bf16 %v3625
    %v5534 = vunpack.c.h.bf16 %v3625
    %v5535 = vunpack.c.l.bf16 %v3626
    %v5536 = vunpack.c.h.bf16 %v3626
    %v5537 = vunpack.c.l.bf16 %v3627
    %v5538 = vunpack.c.h.bf16 %v3627
    %v5539 = vunpack.c.l.bf16 %v3628
    %v5540 = vunpack.c.h.bf16 %v3628
    %v5541 = vunpack.c.l.bf16 %v3629
    %v5542 = vunpack.c.h.bf16 %v3629
    %v5543 = vunpack.c.l.bf16 %v3630
    %v5544 = vunpack.c.h.bf16 %v3630
    %v5545 = vunpack.c.l.bf16 %v3631
    %v5546 = vunpack.c.h.bf16 %v3631
    %v5547 = vunpack.c.l.bf16 %v3632
    %v5548 = vunpack.c.h.bf16 %v3632
    %v5549 = vunpack.c.l.bf16 %v3633
    %v5550 = vunpack.c.h.bf16 %v3633
    %v5551 = vunpack.c.l.bf16 %v3634
    %v5552 = vunpack.c.h.bf16 %v3634
    %v5553 = vunpack.c.l.bf16 %v3635
    %v5554 = vunpack.c.h.bf16 %v3635
    %v5555 = vunpack.c.l.bf16 %v3636
    %v5556 = vunpack.c.h.bf16 %v3636
    %v5557 = vunpack.c.l.bf16 %v3637
    %v5558 = vunpack.c.h.bf16 %v3637
    %v5559 = vunpack.c.l.bf16 %v3638
    %v5560 = vunpack.c.h.bf16 %v3638
    %v5561 = vunpack.c.l.bf16 %v3639
    %v5562 = vunpack.c.h.bf16 %v3639
    %v5563 = vunpack.c.l.bf16 %v3640
    %v5564 = vunpack.c.h.bf16 %v3640
    %v5565 = vunpack.c.l.bf16 %v3641
    %v5566 = vunpack.c.h.bf16 %v3641
    %v5567 = vunpack.c.l.bf16 %v3642
    %v5568 = vunpack.c.h.bf16 %v3642
    %v5569 = vunpack.c.l.bf16 %v3643
    %v5570 = vunpack.c.h.bf16 %v3643
    %v5571 = vunpack.c.l.bf16 %v3644
    %v5572 = vunpack.c.h.bf16 %v3644
    %v5573 = vunpack.c.l.bf16 %v3645
    %v5574 = vunpack.c.h.bf16 %v3645
    %v5575 = vunpack.c.l.bf16 %v3646
    %v5576 = vunpack.c.h.bf16 %v3646
    %v5577 = vunpack.c.l.bf16 %v3647
    %v5578 = vunpack.c.h.bf16 %v3647
    %v5579 = vunpack.c.l.bf16 %v3648
    %v5580 = vunpack.c.h.bf16 %v3648
    %v5581 = vunpack.c.l.bf16 %v3649
    %v5582 = vunpack.c.h.bf16 %v3649
    %v5583 = vunpack.c.l.bf16 %v3650
    %v5584 = vunpack.c.h.bf16 %v3650
    %v5585 = vunpack.c.l.bf16 %v3651
    %v5586 = vunpack.c.h.bf16 %v3651
    %v5587 = vunpack.c.l.bf16 %v3652
    %v5588 = vunpack.c.h.bf16 %v3652
    %v5589 = vunpack.c.l.bf16 %v3653
    %v5590 = vunpack.c.h.bf16 %v3653
    %v5591 = vunpack.c.l.bf16 %v3654
    %v5592 = vunpack.c.h.bf16 %v3654
    %v5593 = vunpack.c.l.bf16 %v3655
    %v5594 = vunpack.c.h.bf16 %v3655
    %v5595 = vunpack.c.l.bf16 %v3656
    %v5596 = vunpack.c.h.bf16 %v3656
    %v5597 = vunpack.c.l.bf16 %v3657
    %v5598 = vunpack.c.h.bf16 %v3657
    %v5599 = vunpack.c.l.bf16 %v3658
    %v5600 = vunpack.c.h.bf16 %v3658
    %v5601 = vunpack.c.l.bf16 %v3659
    %v5602 = vunpack.c.h.bf16 %v3659
    %v5603 = vunpack.c.l.bf16 %v3660
    %v5604 = vunpack.c.h.bf16 %v3660
    %v5605 = vunpack.c.l.bf16 %v3661
    %v5606 = vunpack.c.h.bf16 %v3661
    %v5607 = vunpack.c.l.bf16 %v3662
    %v5608 = vunpack.c.h.bf16 %v3662
    %v5609 = vunpack.c.l.bf16 %v3663
    %v5610 = vunpack.c.h.bf16 %v3663
    %v5611 = vunpack.c.l.bf16 %v3664
    %v5612 = vunpack.c.h.bf16 %v3664
    %v5613 = vunpack.c.l.bf16 %v3665
    %v5614 = vunpack.c.h.bf16 %v3665
    %v5615 = vunpack.c.l.bf16 %v3666
    %v5616 = vunpack.c.h.bf16 %v3666
    %v5617 = vunpack.c.l.bf16 %v3667
    %v5618 = vunpack.c.h.bf16 %v3667
    %v5619 = vunpack.c.l.bf16 %v3668
    %v5620 = vunpack.c.h.bf16 %v3668
    %v5621 = vunpack.c.l.bf16 %v3669
    %v5622 = vunpack.c.h.bf16 %v3669
    %v5623 = vunpack.c.l.bf16 %v3670
    %v5624 = vunpack.c.h.bf16 %v3670
    %v5625 = vunpack.c.l.bf16 %v3671
    %v5626 = vunpack.c.h.bf16 %v3671
    %v5627 = vunpack.c.l.bf16 %v3672
    %v5628 = vunpack.c.h.bf16 %v3672
    %v5629 = vunpack.c.l.bf16 %v3673
    %v5630 = vunpack.c.h.bf16 %v3673
    %v5631 = vunpack.c.l.bf16 %v3674
    %v5632 = vunpack.c.h.bf16 %v3674
    %v5633 = vunpack.c.l.bf16 %v3675
    %v5634 = vunpack.c.h.bf16 %v3675
    %v5635 = vunpack.c.l.bf16 %v3676
    %v5636 = vunpack.c.h.bf16 %v3676
    %v5637 = vunpack.c.l.bf16 %v3677
    %v5638 = vunpack.c.h.bf16 %v3677
    %v5639 = vunpack.c.l.bf16 %v3678
    %v5640 = vunpack.c.h.bf16 %v3678
    %v5641 = vunpack.c.l.bf16 %v3679
    %v5642 = vunpack.c.h.bf16 %v3679
    %v5643 = vunpack.c.l.bf16 %v3680
    %v5644 = vunpack.c.h.bf16 %v3680
    %v5645 = vunpack.c.l.bf16 %v3681
    %v5646 = vunpack.c.h.bf16 %v3681
    %v5647 = vunpack.c.l.bf16 %v3682
    %v5648 = vunpack.c.h.bf16 %v3682
    %v5649 = vunpack.c.l.bf16 %v3683
    %v5650 = vunpack.c.h.bf16 %v3683
    %v5651 = vunpack.c.l.bf16 %v3684
    %v5652 = vunpack.c.h.bf16 %v3684
    %v5653 = vunpack.c.l.bf16 %v3685
    %v5654 = vunpack.c.h.bf16 %v3685
    %v5655 = vunpack.c.l.bf16 %v3686
    %v5656 = vunpack.c.h.bf16 %v3686
    %v5657 = vunpack.c.l.bf16 %v3687
    %v5658 = vunpack.c.h.bf16 %v3687
    %v5659 = vunpack.c.l.bf16 %v3688
    %v5660 = vunpack.c.h.bf16 %v3688
    %v5661 = vunpack.c.l.bf16 %v3689
    %v5662 = vunpack.c.h.bf16 %v3689
    %v5663 = vunpack.c.l.bf16 %v3690
    %v5664 = vunpack.c.h.bf16 %v3690
    %v5665 = vunpack.c.l.bf16 %v3691
    %v5666 = vunpack.c.h.bf16 %v3691
    %v5667 = vunpack.c.l.bf16 %v3692
    %v5668 = vunpack.c.h.bf16 %v3692
    %v5669 = vunpack.c.l.bf16 %v3693
    %v5670 = vunpack.c.h.bf16 %v3693
    %v5671 = vunpack.c.l.bf16 %v3694
    %v5672 = vunpack.c.h.bf16 %v3694
    %v5673 = vunpack.c.l.bf16 %v3695
    %v5674 = vunpack.c.h.bf16 %v3695
    %v5675 = vunpack.c.l.bf16 %v3696
    %v5676 = vunpack.c.h.bf16 %v3696
    %v5677 = vunpack.c.l.bf16 %v3697
    %v5678 = vunpack.c.h.bf16 %v3697
    %v5679 = vunpack.c.l.bf16 %v3698
    %v5680 = vunpack.c.h.bf16 %v3698
    %v5681 = vunpack.c.l.bf16 %v3699
    %v5682 = vunpack.c.h.bf16 %v3699
    %v5683 = vunpack.c.l.bf16 %v3700
    %v5684 = vunpack.c.h.bf16 %v3700
    %v5685 = vunpack.c.l.bf16 %v3701
    %v5686 = vunpack.c.h.bf16 %v3701
    %v5687 = vunpack.c.l.bf16 %v3702
    %v5688 = vunpack.c.h.bf16 %v3702
    %v5689 = vunpack.c.l.bf16 %v3703
    %v5690 = vunpack.c.h.bf16 %v3703
    %v5691 = vunpack.c.l.bf16 %v3704
    %v5692 = vunpack.c.h.bf16 %v3704
    %v5693 = vunpack.c.l.bf16 %v3705
    %v5694 = vunpack.c.h.bf16 %v3705
    %v5695 = vunpack.c.l.bf16 %v3706
    %v5696 = vunpack.c.h.bf16 %v3706
    %v5697 = vunpack.c.l.bf16 %v3707
    %v5698 = vunpack.c.h.bf16 %v3707
    %v5699 = vunpack.c.l.bf16 %v3708
    %v5700 = vunpack.c.h.bf16 %v3708
    %v5701 = vunpack.c.l.bf16 %v3709
    %v5702 = vunpack.c.h.bf16 %v3709
    %v5703 = vunpack.c.l.bf16 %v3710
    %v5704 = vunpack.c.h.bf16 %v3710
    %v5705 = vunpack.c.l.bf16 %v3711
    %v5706 = vunpack.c.h.bf16 %v3711
    %v5707 = vunpack.c.l.bf16 %v3712
    %v5708 = vunpack.c.h.bf16 %v3712
    %v5709 = vunpack.c.l.bf16 %v3713
    %v5710 = vunpack.c.h.bf16 %v3713
    %v5711 = vunpack.c.l.bf16 %v3714
    %v5712 = vunpack.c.h.bf16 %v3714
    %v5713 = vunpack.c.l.bf16 %v3715
    %v5714 = vunpack.c.h.bf16 %v3715
    %v5715 = vunpack.c.l.bf16 %v3716
    %v5716 = vunpack.c.h.bf16 %v3716
    %v5717 = vunpack.c.l.bf16 %v3717
    %v5718 = vunpack.c.h.bf16 %v3717
    %v5719 = vunpack.c.l.bf16 %v3718
    %v5720 = vunpack.c.h.bf16 %v3718
    %v5721 = vunpack.c.l.bf16 %v3719
    %v5722 = vunpack.c.h.bf16 %v3719
    %v5723 = vunpack.c.l.bf16 %v3720
    %v5724 = vunpack.c.h.bf16 %v3720
    %v5725 = vunpack.c.l.bf16 %v3721
    %v5726 = vunpack.c.h.bf16 %v3721
    %v5727 = vunpack.c.l.bf16 %v3722
    %v5728 = vunpack.c.h.bf16 %v3722
    %v5729 = vunpack.c.l.bf16 %v3723
    %v5730 = vunpack.c.h.bf16 %v3723
    %v5731 = vunpack.c.l.bf16 %v3724
    %v5732 = vunpack.c.h.bf16 %v3724
    %v5733 = vunpack.c.l.bf16 %v3725
    %v5734 = vunpack.c.h.bf16 %v3725
    %v5735 = vunpack.c.l.bf16 %v3726
    %v5736 = vunpack.c.h.bf16 %v3726
    %v5737 = vunpack.c.l.bf16 %v3727
    %v5738 = vunpack.c.h.bf16 %v3727
    %v5739 = vunpack.c.l.bf16 %v3728
    %v5740 = vunpack.c.h.bf16 %v3728
    %v5741 = vunpack.c.l.bf16 %v3729
    %v5742 = vunpack.c.h.bf16 %v3729
    %v5743 = vunpack.c.l.bf16 %v3730
    %v5744 = vunpack.c.h.bf16 %v3730
    %v5745 = vunpack.c.l.bf16 %v3731
    %v5746 = vunpack.c.h.bf16 %v3731
    %v5747 = vunpack.c.l.bf16 %v3732
    %v5748 = vunpack.c.h.bf16 %v3732
    %v5749 = vunpack.c.l.bf16 %v3733
    %v5750 = vunpack.c.h.bf16 %v3733
    %v5751 = vunpack.c.l.bf16 %v3734
    %v5752 = vunpack.c.h.bf16 %v3734
    %v5753 = vunpack.c.l.bf16 %v3735
    %v5754 = vunpack.c.h.bf16 %v3735
    %v5755 = vunpack.c.l.bf16 %v3736
    %v5756 = vunpack.c.h.bf16 %v3736
    %v5757 = vunpack.c.l.bf16 %v3737
    %v5758 = vunpack.c.h.bf16 %v3737
    %v5759 = vunpack.c.l.bf16 %v3738
    %v5760 = vunpack.c.h.bf16 %v3738
    %v5761 = vunpack.c.l.bf16 %v3739
    %v5762 = vunpack.c.h.bf16 %v3739
    %v5763 = vunpack.c.l.bf16 %v3740
    %v5764 = vunpack.c.h.bf16 %v3740
    %v5765 = vunpack.c.l.bf16 %v3741
    %v5766 = vunpack.c.h.bf16 %v3741
    %v5767 = vunpack.c.l.bf16 %v3742
    %v5768 = vunpack.c.h.bf16 %v3742
    %v5769 = vunpack.c.l.bf16 %v3743
    %v5770 = vunpack.c.h.bf16 %v3743
    %v5771 = vunpack.c.l.bf16 %v3744
    %v5772 = vunpack.c.h.bf16 %v3744
    %v5773 = vunpack.c.l.bf16 %v3745
    %v5774 = vunpack.c.h.bf16 %v3745
    %v5775 = vunpack.c.l.bf16 %v3746
    %v5776 = vunpack.c.h.bf16 %v3746
    %v5777 = vunpack.c.l.bf16 %v3747
    %v5778 = vunpack.c.h.bf16 %v3747
    %v5779 = vunpack.c.l.bf16 %v3748
    %v5780 = vunpack.c.h.bf16 %v3748
    %v5781 = vunpack.c.l.bf16 %v3749
    %v5782 = vunpack.c.h.bf16 %v3749
    %v5783 = vunpack.c.l.bf16 %v3750
    %v5784 = vunpack.c.h.bf16 %v3750
    %v5785 = vunpack.c.l.bf16 %v3751
    %v5786 = vunpack.c.h.bf16 %v3751
    %v5787 = vunpack.c.l.bf16 %v3752
    %v5788 = vunpack.c.h.bf16 %v3752
    %v5789 = vunpack.c.l.bf16 %v3753
    %v5790 = vunpack.c.h.bf16 %v3753
    %v5791 = vunpack.c.l.bf16 %v3754
    %v5792 = vunpack.c.h.bf16 %v3754
    %v5793 = vunpack.c.l.bf16 %v3755
    %v5794 = vunpack.c.h.bf16 %v3755
    %v5795 = vunpack.c.l.bf16 %v3756
    %v5796 = vunpack.c.h.bf16 %v3756
    %v5797 = vunpack.c.l.bf16 %v3757
    %v5798 = vunpack.c.h.bf16 %v3757
    %v5799 = vunpack.c.l.bf16 %v3758
    %v5800 = vunpack.c.h.bf16 %v3758
    %v5801 = vunpack.c.l.bf16 %v3759
    %v5802 = vunpack.c.h.bf16 %v3759
    %v5803 = vunpack.c.l.bf16 %v3760
    %v5804 = vunpack.c.h.bf16 %v3760
    %v5805 = vunpack.c.l.bf16 %v3761
    %v5806 = vunpack.c.h.bf16 %v3761
    %v5807 = vunpack.c.l.bf16 %v3762
    %v5808 = vunpack.c.h.bf16 %v3762
    %v5809 = vunpack.c.l.bf16 %v3763
    %v5810 = vunpack.c.h.bf16 %v3763
    %v5811 = vunpack.c.l.bf16 %v3764
    %v5812 = vunpack.c.h.bf16 %v3764
    %v5813 = vunpack.c.l.bf16 %v3765
    %v5814 = vunpack.c.h.bf16 %v3765
    %v5815 = vunpack.c.l.bf16 %v3766
    %v5816 = vunpack.c.h.bf16 %v3766
    %v5817 = vunpack.c.l.bf16 %v3767
    %v5818 = vunpack.c.h.bf16 %v3767
    %v5819 = vunpack.c.l.bf16 %v3768
    %v5820 = vunpack.c.h.bf16 %v3768
    %v5821 = vunpack.c.l.bf16 %v3769
    %v5822 = vunpack.c.h.bf16 %v3769
    %v5823 = vunpack.c.l.bf16 %v3770
    %v5824 = vunpack.c.h.bf16 %v3770
    %v5825 = vunpack.c.l.bf16 %v3771
    %v5826 = vunpack.c.h.bf16 %v3771
    %v5827 = vunpack.c.l.bf16 %v3772
    %v5828 = vunpack.c.h.bf16 %v3772
    %v5837 = vperm.slane %v3773, 0
    %v5838 = vperm.slane %v3773, 4
    %v5839 = vperm.slane %v3774, 0
    %v5840 = vperm.slane %v3774, 4
    %v5841 = vperm.slane %v3775, 0
    %v5842 = vperm.slane %v3775, 4
    %v5843 = vperm.slane %v3776, 0
    %v5844 = vperm.slane %v3776, 4
    %v5845 = vperm.slane %v3777, 0
    %v5846 = vperm.slane %v3777, 4
    %v5847 = vperm.slane %v3778, 0
    %v5848 = vperm.slane %v3778, 4
    %v5849 = vperm.slane %v3779, 0
    %v5850 = vperm.slane %v3779, 4
    %v5851 = vperm.slane %v3780, 0
    %v5852 = vperm.slane %v3780, 4
    %v5869 = vperm.slane %v5837, 0
    %v5870 = vperm.slane %v5838, 0
    %v5871 = vperm.slane %v5839, 0
    %v5872 = vperm.slane %v5840, 0
    %v5873 = vperm.slane %v5841, 0
    %v5874 = vperm.slane %v5842, 0
    %v5875 = vperm.slane %v5843, 0
    %v5876 = vperm.slane %v5844, 0
    %v5877 = vperm.slane %v5845, 0
    %v5878 = vperm.slane %v5846, 0
    %v5879 = vperm.slane %v5847, 0
    %v5880 = vperm.slane %v5848, 0
    %v5881 = vperm.slane %v5849, 0
    %v5882 = vperm.slane %v5850, 0
    %v5883 = vperm.slane %v5851, 0
    %v5884 = vperm.slane %v5852, 0
    %5885 = vmatpush.msra.mxu0 %v4021
    %5886 = vmatpush.msra.mxu0 %v4005
    %5887 = vmatpush.msra.mxu0 %v3989
    %5888 = vmatpush.msra.mxu0 %v3973
    %5889 = vmatpush.msra.mxu0 %v3957
    %5890 = vmatpush.msra.mxu0 %v3941
    %5891 = vmatpush.msra.mxu0 %v3925
    %5892 = vmatpush.msra.mxu0 %v3909
    %5893 = vmatpush.msra.mxu0 %v3893
    %5894 = vmatpush.msra.mxu0 %v3877
    %5895 = vmatpush.msra.mxu0 %v3861
    %5896 = vmatpush.msra.mxu0 %v3845
    %5897 = vmatpush.msra.mxu0 %v3829
    %5898 = vmatpush.msra.mxu0 %v3813
    %5899 = vmatpush.msra.mxu0 %v3797
    %5900 = vmatpush.msra.mxu0 %v3781
    %5901 = vmatmul.f32.gmra.mxu0 %v2737
    %v5902 = vpop.f32.mrf.mxu0
    %v5903 = vadd.f32 %v5869, %v5902
    %5904 = vdwg.mxu0
    %5905 = vmatpush.msra.mxu0 %v4277
    %5906 = vmatpush.msra.mxu0 %v4261
    %5907 = vmatpush.msra.mxu0 %v4245
    %5908 = vmatpush.msra.mxu0 %v4229
    %5909 = vmatpush.msra.mxu0 %v4213
    %5910 = vmatpush.msra.mxu0 %v4197
    %5911 = vmatpush.msra.mxu0 %v4181
    %5912 = vmatpush.msra.mxu0 %v4165
    %5913 = vmatpush.msra.mxu0 %v4149
    %5914 = vmatpush.msra.mxu0 %v4133
    %5915 = vmatpush.msra.mxu0 %v4117
    %5916 = vmatpush.msra.mxu0 %v4101
    %5917 = vmatpush.msra.mxu0 %v4085
    %5918 = vmatpush.msra.mxu0 %v4069
    %5919 = vmatpush.msra.mxu0 %v4053
    %5920 = vmatpush.msra.mxu0 %v4037
    %5921 = vmatmul.f32.gmra.mxu0 %v2738
    %v5922 = vpop.f32.mrf.mxu0
    %v5923 = vadd.f32 %v5903, %v5922
    %5924 = vdwg.mxu0
    %5925 = vmatpush.msra.mxu0 %v4533
    %5926 = vmatpush.msra.mxu0 %v4517
    %5927 = vmatpush.msra.mxu0 %v4501
    %5928 = vmatpush.msra.mxu0 %v4485
    %5929 = vmatpush.msra.mxu0 %v4469
    %5930 = vmatpush.msra.mxu0 %v4453
    %5931 = vmatpush.msra.mxu0 %v4437
    %5932 = vmatpush.msra.mxu0 %v4421
    %5933 = vmatpush.msra.mxu0 %v4405
    %5934 = vmatpush.msra.mxu0 %v4389
    %5935 = vmatpush.msra.mxu0 %v4373
    %5936 = vmatpush.msra.mxu0 %v4357
    %5937 = vmatpush.msra.mxu0 %v4341
    %5938 = vmatpush.msra.mxu0 %v4325
    %5939 = vmatpush.msra.mxu0 %v4309
    %5940 = vmatpush.msra.mxu0 %v4293
    %5941 = vmatmul.f32.gmra.mxu0 %v2739
    %v5942 = vpop.f32.mrf.mxu0
    %v5943 = vadd.f32 %v5923, %v5942
    %5944 = vdwg.mxu0
    %5945 = vmatpush.msra.mxu0 %v4789
    %5946 = vmatpush.msra.mxu0 %v4773
    %5947 = vmatpush.msra.mxu0 %v4757
    %5948 = vmatpush.msra.mxu0 %v4741
    %5949 = vmatpush.msra.mxu0 %v4725
    %5950 = vmatpush.msra.mxu0 %v4709
    %5951 = vmatpush.msra.mxu0 %v4693
    %5952 = vmatpush.msra.mxu0 %v4677
    %5953 = vmatpush.msra.mxu0 %v4661
    %5954 = vmatpush.msra.mxu0 %v4645
    %5955 = vmatpush.msra.mxu0 %v4629
    %5956 = vmatpush.msra.mxu0 %v4613
    %5957 = vmatpush.msra.mxu0 %v4597
    %5958 = vmatpush.msra.mxu0 %v4581
    %5959 = vmatpush.msra.mxu0 %v4565
    %5960 = vmatpush.msra.mxu0 %v4549
    %5961 = vmatmul.f32.gmra.mxu0 %v2740
    %v5962 = vpop.f32.mrf.mxu0
    %v5963 = vadd.f32 %v5943, %v5962
    %5964 = vdwg.mxu0
    %5965 = vmatpush.msra.mxu0 %v5045
    %5966 = vmatpush.msra.mxu0 %v5029
    %5967 = vmatpush.msra.mxu0 %v5013
    %5968 = vmatpush.msra.mxu0 %v4997
    %5969 = vmatpush.msra.mxu0 %v4981
    %5970 = vmatpush.msra.mxu0 %v4965
    %5971 = vmatpush.msra.mxu0 %v4949
    %5972 = vmatpush.msra.mxu0 %v4933
    %5973 = vmatpush.msra.mxu0 %v4917
    %5974 = vmatpush.msra.mxu0 %v4901
    %5975 = vmatpush.msra.mxu0 %v4885
    %5976 = vmatpush.msra.mxu0 %v4869
    %5977 = vmatpush.msra.mxu0 %v4853
    %5978 = vmatpush.msra.mxu0 %v4837
    %5979 = vmatpush.msra.mxu0 %v4821
    %5980 = vmatpush.msra.mxu0 %v4805
    %5981 = vmatmul.f32.gmra.mxu0 %v2741
    %v5982 = vpop.f32.mrf.mxu0
    %v5983 = vadd.f32 %v5963, %v5982
    %5984 = vdwg.mxu0
    %5985 = vmatpush.msra.mxu0 %v5301
    %5986 = vmatpush.msra.mxu0 %v5285
    %5987 = vmatpush.msra.mxu0 %v5269
    %5988 = vmatpush.msra.mxu0 %v5253
    %5989 = vmatpush.msra.mxu0 %v5237
    %5990 = vmatpush.msra.mxu0 %v5221
    %5991 = vmatpush.msra.mxu0 %v5205
    %5992 = vmatpush.msra.mxu0 %v5189
    %5993 = vmatpush.msra.mxu0 %v5173
    %5994 = vmatpush.msra.mxu0 %v5157
    %5995 = vmatpush.msra.mxu0 %v5141
    %5996 = vmatpush.msra.mxu0 %v5125
    %5997 = vmatpush.msra.mxu0 %v5109
    %5998 = vmatpush.msra.mxu0 %v5093
    %5999 = vmatpush.msra.mxu0 %v5077
    %6000 = vmatpush.msra.mxu0 %v5061
    %6001 = vmatmul.f32.gmra.mxu0 %v2742
    %v6002 = vpop.f32.mrf.mxu0
    %v6003 = vadd.f32 %v5983, %v6002
    %6004 = vdwg.mxu0
    %6005 = vmatpush.msra.mxu0 %v5557
    %6006 = vmatpush.msra.mxu0 %v5541
    %6007 = vmatpush.msra.mxu0 %v5525
    %6008 = vmatpush.msra.mxu0 %v5509
    %6009 = vmatpush.msra.mxu0 %v5493
    %6010 = vmatpush.msra.mxu0 %v5477
    %6011 = vmatpush.msra.mxu0 %v5461
    %6012 = vmatpush.msra.mxu0 %v5445
    %6013 = vmatpush.msra.mxu0 %v5429
    %6014 = vmatpush.msra.mxu0 %v5413
    %6015 = vmatpush.msra.mxu0 %v5397
    %6016 = vmatpush.msra.mxu0 %v5381
    %6017 = vmatpush.msra.mxu0 %v5365
    %6018 = vmatpush.msra.mxu0 %v5349
    %6019 = vmatpush.msra.mxu0 %v5333
    %6020 = vmatpush.msra.mxu0 %v5317
    %6021 = vmatmul.f32.gmra.mxu0 %v2743
    %v6022 = vpop.f32.mrf.mxu0
    %v6023 = vadd.f32 %v6003, %v6022
    %6024 = vdwg.mxu0
    %6025 = vmatpush.msra.mxu0 %v5813
    %6026 = vmatpush.msra.mxu0 %v5797
    %6027 = vmatpush.msra.mxu0 %v5781
    %6028 = vmatpush.msra.mxu0 %v5765
    %6029 = vmatpush.msra.mxu0 %v5749
    %6030 = vmatpush.msra.mxu0 %v5733
    %6031 = vmatpush.msra.mxu0 %v5717
    %6032 = vmatpush.msra.mxu0 %v5701
    %6033 = vmatpush.msra.mxu0 %v5685
    %6034 = vmatpush.msra.mxu0 %v5669
    %6035 = vmatpush.msra.mxu0 %v5653
    %6036 = vmatpush.msra.mxu0 %v5637
    %6037 = vmatpush.msra.mxu0 %v5621
    %6038 = vmatpush.msra.mxu0 %v5605
    %6039 = vmatpush.msra.mxu0 %v5589
    %6040 = vmatpush.msra.mxu0 %v5573
    %6041 = vmatmul.f32.gmra.mxu0 %v2744
    %v6042 = vpop.f32.mrf.mxu0
    %v6043 = vadd.f32 %v6023, %v6042
    %6044 = vdwg.mxu0
    %6045 = vmatpush.msra.mxu0 %v4022
    %6046 = vmatpush.msra.mxu0 %v4006
    %6047 = vmatpush.msra.mxu0 %v3990
    %6048 = vmatpush.msra.mxu0 %v3974
    %6049 = vmatpush.msra.mxu0 %v3958
    %6050 = vmatpush.msra.mxu0 %v3942
    %6051 = vmatpush.msra.mxu0 %v3926
    %6052 = vmatpush.msra.mxu0 %v3910
    %6053 = vmatpush.msra.mxu0 %v3894
    %6054 = vmatpush.msra.mxu0 %v3878
    %6055 = vmatpush.msra.mxu0 %v3862
    %6056 = vmatpush.msra.mxu0 %v3846
    %6057 = vmatpush.msra.mxu0 %v3830
    %6058 = vmatpush.msra.mxu0 %v3814
    %6059 = vmatpush.msra.mxu0 %v3798
    %6060 = vmatpush.msra.mxu0 %v3782
    %6061 = vmatmul.f32.gmra.mxu0 %v2737
    %v6062 = vpop.f32.mrf.mxu0
    %v6063 = vadd.f32 %v5870, %v6062
    %6064 = vdwg.mxu0
    %6065 = vmatpush.msra.mxu0 %v4278
    %6066 = vmatpush.msra.mxu0 %v4262
    %6067 = vmatpush.msra.mxu0 %v4246
    %6068 = vmatpush.msra.mxu0 %v4230
    %6069 = vmatpush.msra.mxu0 %v4214
    %6070 = vmatpush.msra.mxu0 %v4198
    %6071 = vmatpush.msra.mxu0 %v4182
    %6072 = vmatpush.msra.mxu0 %v4166
    %6073 = vmatpush.msra.mxu0 %v4150
    %6074 = vmatpush.msra.mxu0 %v4134
    %6075 = vmatpush.msra.mxu0 %v4118
    %6076 = vmatpush.msra.mxu0 %v4102
    %6077 = vmatpush.msra.mxu0 %v4086
    %6078 = vmatpush.msra.mxu0 %v4070
    %6079 = vmatpush.msra.mxu0 %v4054
    %6080 = vmatpush.msra.mxu0 %v4038
    %6081 = vmatmul.f32.gmra.mxu0 %v2738
    %v6082 = vpop.f32.mrf.mxu0
    %v6083 = vadd.f32 %v6063, %v6082
    %6084 = vdwg.mxu0
    %6085 = vmatpush.msra.mxu0 %v4534
    %6086 = vmatpush.msra.mxu0 %v4518
    %6087 = vmatpush.msra.mxu0 %v4502
    %6088 = vmatpush.msra.mxu0 %v4486
    %6089 = vmatpush.msra.mxu0 %v4470
    %6090 = vmatpush.msra.mxu0 %v4454
    %6091 = vmatpush.msra.mxu0 %v4438
    %6092 = vmatpush.msra.mxu0 %v4422
    %6093 = vmatpush.msra.mxu0 %v4406
    %6094 = vmatpush.msra.mxu0 %v4390
    %6095 = vmatpush.msra.mxu0 %v4374
    %6096 = vmatpush.msra.mxu0 %v4358
    %6097 = vmatpush.msra.mxu0 %v4342
    %6098 = vmatpush.msra.mxu0 %v4326
    %6099 = vmatpush.msra.mxu0 %v4310
    %6100 = vmatpush.msra.mxu0 %v4294
    %6101 = vmatmul.f32.gmra.mxu0 %v2739
    %v6102 = vpop.f32.mrf.mxu0
    %v6103 = vadd.f32 %v6083, %v6102
    %6104 = vdwg.mxu0
    %6105 = vmatpush.msra.mxu0 %v4790
    %6106 = vmatpush.msra.mxu0 %v4774
    %6107 = vmatpush.msra.mxu0 %v4758
    %6108 = vmatpush.msra.mxu0 %v4742
    %6109 = vmatpush.msra.mxu0 %v4726
    %6110 = vmatpush.msra.mxu0 %v4710
    %6111 = vmatpush.msra.mxu0 %v4694
    %6112 = vmatpush.msra.mxu0 %v4678
    %6113 = vmatpush.msra.mxu0 %v4662
    %6114 = vmatpush.msra.mxu0 %v4646
    %6115 = vmatpush.msra.mxu0 %v4630
    %6116 = vmatpush.msra.mxu0 %v4614
    %6117 = vmatpush.msra.mxu0 %v4598
    %6118 = vmatpush.msra.mxu0 %v4582
    %6119 = vmatpush.msra.mxu0 %v4566
    %6120 = vmatpush.msra.mxu0 %v4550
    %6121 = vmatmul.f32.gmra.mxu0 %v2740
    %v6122 = vpop.f32.mrf.mxu0
    %v6123 = vadd.f32 %v6103, %v6122
    %6124 = vdwg.mxu0
    %6125 = vmatpush.msra.mxu0 %v5046
    %6126 = vmatpush.msra.mxu0 %v5030
    %6127 = vmatpush.msra.mxu0 %v5014
    %6128 = vmatpush.msra.mxu0 %v4998
    %6129 = vmatpush.msra.mxu0 %v4982
    %6130 = vmatpush.msra.mxu0 %v4966
    %6131 = vmatpush.msra.mxu0 %v4950
    %6132 = vmatpush.msra.mxu0 %v4934
    %6133 = vmatpush.msra.mxu0 %v4918
    %6134 = vmatpush.msra.mxu0 %v4902
    %6135 = vmatpush.msra.mxu0 %v4886
    %6136 = vmatpush.msra.mxu0 %v4870
    %6137 = vmatpush.msra.mxu0 %v4854
    %6138 = vmatpush.msra.mxu0 %v4838
    %6139 = vmatpush.msra.mxu0 %v4822
    %6140 = vmatpush.msra.mxu0 %v4806
    %6141 = vmatmul.f32.gmra.mxu0 %v2741
    %v6142 = vpop.f32.mrf.mxu0
    %v6143 = vadd.f32 %v6123, %v6142
    %6144 = vdwg.mxu0
    %6145 = vmatpush.msra.mxu0 %v5302
    %6146 = vmatpush.msra.mxu0 %v5286
    %6147 = vmatpush.msra.mxu0 %v5270
    %6148 = vmatpush.msra.mxu0 %v5254
    %6149 = vmatpush.msra.mxu0 %v5238
    %6150 = vmatpush.msra.mxu0 %v5222
    %6151 = vmatpush.msra.mxu0 %v5206
    %6152 = vmatpush.msra.mxu0 %v5190
    %6153 = vmatpush.msra.mxu0 %v5174
    %6154 = vmatpush.msra.mxu0 %v5158
    %6155 = vmatpush.msra.mxu0 %v5142
    %6156 = vmatpush.msra.mxu0 %v5126
    %6157 = vmatpush.msra.mxu0 %v5110
    %6158 = vmatpush.msra.mxu0 %v5094
    %6159 = vmatpush.msra.mxu0 %v5078
    %6160 = vmatpush.msra.mxu0 %v5062
    %6161 = vmatmul.f32.gmra.mxu0 %v2742
    %v6162 = vpop.f32.mrf.mxu0
    %v6163 = vadd.f32 %v6143, %v6162
    %6164 = vdwg.mxu0
    %6165 = vmatpush.msra.mxu0 %v5558
    %6166 = vmatpush.msra.mxu0 %v5542
    %6167 = vmatpush.msra.mxu0 %v5526
    %6168 = vmatpush.msra.mxu0 %v5510
    %6169 = vmatpush.msra.mxu0 %v5494
    %6170 = vmatpush.msra.mxu0 %v5478
    %6171 = vmatpush.msra.mxu0 %v5462
    %6172 = vmatpush.msra.mxu0 %v5446
    %6173 = vmatpush.msra.mxu0 %v5430
    %6174 = vmatpush.msra.mxu0 %v5414
    %6175 = vmatpush.msra.mxu0 %v5398
    %6176 = vmatpush.msra.mxu0 %v5382
    %6177 = vmatpush.msra.mxu0 %v5366
    %6178 = vmatpush.msra.mxu0 %v5350
    %6179 = vmatpush.msra.mxu0 %v5334
    %6180 = vmatpush.msra.mxu0 %v5318
    %6181 = vmatmul.f32.gmra.mxu0 %v2743
    %v6182 = vpop.f32.mrf.mxu0
    %v6183 = vadd.f32 %v6163, %v6182
    %6184 = vdwg.mxu0
    %6185 = vmatpush.msra.mxu0 %v5814
    %6186 = vmatpush.msra.mxu0 %v5798
    %6187 = vmatpush.msra.mxu0 %v5782
    %6188 = vmatpush.msra.mxu0 %v5766
    %6189 = vmatpush.msra.mxu0 %v5750
    %6190 = vmatpush.msra.mxu0 %v5734
    %6191 = vmatpush.msra.mxu0 %v5718
    %6192 = vmatpush.msra.mxu0 %v5702
    %6193 = vmatpush.msra.mxu0 %v5686
    %6194 = vmatpush.msra.mxu0 %v5670
    %6195 = vmatpush.msra.mxu0 %v5654
    %6196 = vmatpush.msra.mxu0 %v5638
    %6197 = vmatpush.msra.mxu0 %v5622
    %6198 = vmatpush.msra.mxu0 %v5606
    %6199 = vmatpush.msra.mxu0 %v5590
    %6200 = vmatpush.msra.mxu0 %v5574
    %6201 = vmatmul.f32.gmra.mxu0 %v2744
    %v6202 = vpop.f32.mrf.mxu0
    %v6203 = vadd.f32 %v6183, %v6202
    %6204 = vdwg.mxu0
    %6205 = vmatpush.msra.mxu0 %v4023
    %6206 = vmatpush.msra.mxu0 %v4007
    %6207 = vmatpush.msra.mxu0 %v3991
    %6208 = vmatpush.msra.mxu0 %v3975
    %6209 = vmatpush.msra.mxu0 %v3959
    %6210 = vmatpush.msra.mxu0 %v3943
    %6211 = vmatpush.msra.mxu0 %v3927
    %6212 = vmatpush.msra.mxu0 %v3911
    %6213 = vmatpush.msra.mxu0 %v3895
    %6214 = vmatpush.msra.mxu0 %v3879
    %6215 = vmatpush.msra.mxu0 %v3863
    %6216 = vmatpush.msra.mxu0 %v3847
    %6217 = vmatpush.msra.mxu0 %v3831
    %6218 = vmatpush.msra.mxu0 %v3815
    %6219 = vmatpush.msra.mxu0 %v3799
    %6220 = vmatpush.msra.mxu0 %v3783
    %6221 = vmatmul.f32.gmra.mxu0 %v2737
    %v6222 = vpop.f32.mrf.mxu0
    %v6223 = vadd.f32 %v5871, %v6222
    %6224 = vdwg.mxu0
    %6225 = vmatpush.msra.mxu0 %v4279
    %6226 = vmatpush.msra.mxu0 %v4263
    %6227 = vmatpush.msra.mxu0 %v4247
    %6228 = vmatpush.msra.mxu0 %v4231
    %6229 = vmatpush.msra.mxu0 %v4215
    %6230 = vmatpush.msra.mxu0 %v4199
    %6231 = vmatpush.msra.mxu0 %v4183
    %6232 = vmatpush.msra.mxu0 %v4167
    %6233 = vmatpush.msra.mxu0 %v4151
    %6234 = vmatpush.msra.mxu0 %v4135
    %6235 = vmatpush.msra.mxu0 %v4119
    %6236 = vmatpush.msra.mxu0 %v4103
    %6237 = vmatpush.msra.mxu0 %v4087
    %6238 = vmatpush.msra.mxu0 %v4071
    %6239 = vmatpush.msra.mxu0 %v4055
    %6240 = vmatpush.msra.mxu0 %v4039
    %6241 = vmatmul.f32.gmra.mxu0 %v2738
    %v6242 = vpop.f32.mrf.mxu0
    %v6243 = vadd.f32 %v6223, %v6242
    %6244 = vdwg.mxu0
    %6245 = vmatpush.msra.mxu0 %v4535
    %6246 = vmatpush.msra.mxu0 %v4519
    %6247 = vmatpush.msra.mxu0 %v4503
    %6248 = vmatpush.msra.mxu0 %v4487
    %6249 = vmatpush.msra.mxu0 %v4471
    %6250 = vmatpush.msra.mxu0 %v4455
    %6251 = vmatpush.msra.mxu0 %v4439
    %6252 = vmatpush.msra.mxu0 %v4423
    %6253 = vmatpush.msra.mxu0 %v4407
    %6254 = vmatpush.msra.mxu0 %v4391
    %6255 = vmatpush.msra.mxu0 %v4375
    %6256 = vmatpush.msra.mxu0 %v4359
    %6257 = vmatpush.msra.mxu0 %v4343
    %6258 = vmatpush.msra.mxu0 %v4327
    %6259 = vmatpush.msra.mxu0 %v4311
    %6260 = vmatpush.msra.mxu0 %v4295
    %6261 = vmatmul.f32.gmra.mxu0 %v2739
    %v6262 = vpop.f32.mrf.mxu0
    %v6263 = vadd.f32 %v6243, %v6262
    %6264 = vdwg.mxu0
    %6265 = vmatpush.msra.mxu0 %v4791
    %6266 = vmatpush.msra.mxu0 %v4775
    %6267 = vmatpush.msra.mxu0 %v4759
    %6268 = vmatpush.msra.mxu0 %v4743
    %6269 = vmatpush.msra.mxu0 %v4727
    %6270 = vmatpush.msra.mxu0 %v4711
    %6271 = vmatpush.msra.mxu0 %v4695
    %6272 = vmatpush.msra.mxu0 %v4679
    %6273 = vmatpush.msra.mxu0 %v4663
    %6274 = vmatpush.msra.mxu0 %v4647
    %6275 = vmatpush.msra.mxu0 %v4631
    %6276 = vmatpush.msra.mxu0 %v4615
    %6277 = vmatpush.msra.mxu0 %v4599
    %6278 = vmatpush.msra.mxu0 %v4583
    %6279 = vmatpush.msra.mxu0 %v4567
    %6280 = vmatpush.msra.mxu0 %v4551
    %6281 = vmatmul.f32.gmra.mxu0 %v2740
    %v6282 = vpop.f32.mrf.mxu0
    %v6283 = vadd.f32 %v6263, %v6282
    %6284 = vdwg.mxu0
    %6285 = vmatpush.msra.mxu0 %v5047
    %6286 = vmatpush.msra.mxu0 %v5031
    %6287 = vmatpush.msra.mxu0 %v5015
    %6288 = vmatpush.msra.mxu0 %v4999
    %6289 = vmatpush.msra.mxu0 %v4983
    %6290 = vmatpush.msra.mxu0 %v4967
    %6291 = vmatpush.msra.mxu0 %v4951
    %6292 = vmatpush.msra.mxu0 %v4935
    %6293 = vmatpush.msra.mxu0 %v4919
    %6294 = vmatpush.msra.mxu0 %v4903
    %6295 = vmatpush.msra.mxu0 %v4887
    %6296 = vmatpush.msra.mxu0 %v4871
    %6297 = vmatpush.msra.mxu0 %v4855
    %6298 = vmatpush.msra.mxu0 %v4839
    %6299 = vmatpush.msra.mxu0 %v4823
    %6300 = vmatpush.msra.mxu0 %v4807
    %6301 = vmatmul.f32.gmra.mxu0 %v2741
    %v6302 = vpop.f32.mrf.mxu0
    %v6303 = vadd.f32 %v6283, %v6302
    %6304 = vdwg.mxu0
    %6305 = vmatpush.msra.mxu0 %v5303
    %6306 = vmatpush.msra.mxu0 %v5287
    %6307 = vmatpush.msra.mxu0 %v5271
    %6308 = vmatpush.msra.mxu0 %v5255
    %6309 = vmatpush.msra.mxu0 %v5239
    %6310 = vmatpush.msra.mxu0 %v5223
    %6311 = vmatpush.msra.mxu0 %v5207
    %6312 = vmatpush.msra.mxu0 %v5191
    %6313 = vmatpush.msra.mxu0 %v5175
    %6314 = vmatpush.msra.mxu0 %v5159
    %6315 = vmatpush.msra.mxu0 %v5143
    %6316 = vmatpush.msra.mxu0 %v5127
    %6317 = vmatpush.msra.mxu0 %v5111
    %6318 = vmatpush.msra.mxu0 %v5095
    %6319 = vmatpush.msra.mxu0 %v5079
    %6320 = vmatpush.msra.mxu0 %v5063
    %6321 = vmatmul.f32.gmra.mxu0 %v2742
    %v6322 = vpop.f32.mrf.mxu0
    %v6323 = vadd.f32 %v6303, %v6322
    %6324 = vdwg.mxu0
    %6325 = vmatpush.msra.mxu0 %v5559
    %6326 = vmatpush.msra.mxu0 %v5543
    %6327 = vmatpush.msra.mxu0 %v5527
    %6328 = vmatpush.msra.mxu0 %v5511
    %6329 = vmatpush.msra.mxu0 %v5495
    %6330 = vmatpush.msra.mxu0 %v5479
    %6331 = vmatpush.msra.mxu0 %v5463
    %6332 = vmatpush.msra.mxu0 %v5447
    %6333 = vmatpush.msra.mxu0 %v5431
    %6334 = vmatpush.msra.mxu0 %v5415
    %6335 = vmatpush.msra.mxu0 %v5399
    %6336 = vmatpush.msra.mxu0 %v5383
    %6337 = vmatpush.msra.mxu0 %v5367
    %6338 = vmatpush.msra.mxu0 %v5351
    %6339 = vmatpush.msra.mxu0 %v5335
    %6340 = vmatpush.msra.mxu0 %v5319
    %6341 = vmatmul.f32.gmra.mxu0 %v2743
    %v6342 = vpop.f32.mrf.mxu0
    %v6343 = vadd.f32 %v6323, %v6342
    %6344 = vdwg.mxu0
    %6345 = vmatpush.msra.mxu0 %v5815
    %6346 = vmatpush.msra.mxu0 %v5799
    %6347 = vmatpush.msra.mxu0 %v5783
    %6348 = vmatpush.msra.mxu0 %v5767
    %6349 = vmatpush.msra.mxu0 %v5751
    %6350 = vmatpush.msra.mxu0 %v5735
    %6351 = vmatpush.msra.mxu0 %v5719
    %6352 = vmatpush.msra.mxu0 %v5703
    %6353 = vmatpush.msra.mxu0 %v5687
    %6354 = vmatpush.msra.mxu0 %v5671
    %6355 = vmatpush.msra.mxu0 %v5655
    %6356 = vmatpush.msra.mxu0 %v5639
    %6357 = vmatpush.msra.mxu0 %v5623
    %6358 = vmatpush.msra.mxu0 %v5607
    %6359 = vmatpush.msra.mxu0 %v5591
    %6360 = vmatpush.msra.mxu0 %v5575
    %6361 = vmatmul.f32.gmra.mxu0 %v2744
    %v6362 = vpop.f32.mrf.mxu0
    %v6363 = vadd.f32 %v6343, %v6362
    %6364 = vdwg.mxu0
    %6365 = vmatpush.msra.mxu0 %v4024
    %6366 = vmatpush.msra.mxu0 %v4008
    %6367 = vmatpush.msra.mxu0 %v3992
    %6368 = vmatpush.msra.mxu0 %v3976
    %6369 = vmatpush.msra.mxu0 %v3960
    %6370 = vmatpush.msra.mxu0 %v3944
    %6371 = vmatpush.msra.mxu0 %v3928
    %6372 = vmatpush.msra.mxu0 %v3912
    %6373 = vmatpush.msra.mxu0 %v3896
    %6374 = vmatpush.msra.mxu0 %v3880
    %6375 = vmatpush.msra.mxu0 %v3864
    %6376 = vmatpush.msra.mxu0 %v3848
    %6377 = vmatpush.msra.mxu0 %v3832
    %6378 = vmatpush.msra.mxu0 %v3816
    %6379 = vmatpush.msra.mxu0 %v3800
    %6380 = vmatpush.msra.mxu0 %v3784
    %6381 = vmatmul.f32.gmra.mxu0 %v2737
    %v6382 = vpop.f32.mrf.mxu0
    %v6383 = vadd.f32 %v5872, %v6382
    %6384 = vdwg.mxu0
    %6385 = vmatpush.msra.mxu0 %v4280
    %6386 = vmatpush.msra.mxu0 %v4264
    %6387 = vmatpush.msra.mxu0 %v4248
    %6388 = vmatpush.msra.mxu0 %v4232
    %6389 = vmatpush.msra.mxu0 %v4216
    %6390 = vmatpush.msra.mxu0 %v4200
    %6391 = vmatpush.msra.mxu0 %v4184
    %6392 = vmatpush.msra.mxu0 %v4168
    %6393 = vmatpush.msra.mxu0 %v4152
    %6394 = vmatpush.msra.mxu0 %v4136
    %6395 = vmatpush.msra.mxu0 %v4120
    %6396 = vmatpush.msra.mxu0 %v4104
    %6397 = vmatpush.msra.mxu0 %v4088
    %6398 = vmatpush.msra.mxu0 %v4072
    %6399 = vmatpush.msra.mxu0 %v4056
    %6400 = vmatpush.msra.mxu0 %v4040
    %6401 = vmatmul.f32.gmra.mxu0 %v2738
    %v6402 = vpop.f32.mrf.mxu0
    %v6403 = vadd.f32 %v6383, %v6402
    %6404 = vdwg.mxu0
    %6405 = vmatpush.msra.mxu0 %v4536
    %6406 = vmatpush.msra.mxu0 %v4520
    %6407 = vmatpush.msra.mxu0 %v4504
    %6408 = vmatpush.msra.mxu0 %v4488
    %6409 = vmatpush.msra.mxu0 %v4472
    %6410 = vmatpush.msra.mxu0 %v4456
    %6411 = vmatpush.msra.mxu0 %v4440
    %6412 = vmatpush.msra.mxu0 %v4424
    %6413 = vmatpush.msra.mxu0 %v4408
    %6414 = vmatpush.msra.mxu0 %v4392
    %6415 = vmatpush.msra.mxu0 %v4376
    %6416 = vmatpush.msra.mxu0 %v4360
    %6417 = vmatpush.msra.mxu0 %v4344
    %6418 = vmatpush.msra.mxu0 %v4328
    %6419 = vmatpush.msra.mxu0 %v4312
    %6420 = vmatpush.msra.mxu0 %v4296
    %6421 = vmatmul.f32.gmra.mxu0 %v2739
    %v6422 = vpop.f32.mrf.mxu0
    %v6423 = vadd.f32 %v6403, %v6422
    %6424 = vdwg.mxu0
    %6425 = vmatpush.msra.mxu0 %v4792
    %6426 = vmatpush.msra.mxu0 %v4776
    %6427 = vmatpush.msra.mxu0 %v4760
    %6428 = vmatpush.msra.mxu0 %v4744
    %6429 = vmatpush.msra.mxu0 %v4728
    %6430 = vmatpush.msra.mxu0 %v4712
    %6431 = vmatpush.msra.mxu0 %v4696
    %6432 = vmatpush.msra.mxu0 %v4680
    %6433 = vmatpush.msra.mxu0 %v4664
    %6434 = vmatpush.msra.mxu0 %v4648
    %6435 = vmatpush.msra.mxu0 %v4632
    %6436 = vmatpush.msra.mxu0 %v4616
    %6437 = vmatpush.msra.mxu0 %v4600
    %6438 = vmatpush.msra.mxu0 %v4584
    %6439 = vmatpush.msra.mxu0 %v4568
    %6440 = vmatpush.msra.mxu0 %v4552
    %6441 = vmatmul.f32.gmra.mxu0 %v2740
    %v6442 = vpop.f32.mrf.mxu0
    %v6443 = vadd.f32 %v6423, %v6442
    %6444 = vdwg.mxu0
    %6445 = vmatpush.msra.mxu0 %v5048
    %6446 = vmatpush.msra.mxu0 %v5032
    %6447 = vmatpush.msra.mxu0 %v5016
    %6448 = vmatpush.msra.mxu0 %v5000
    %6449 = vmatpush.msra.mxu0 %v4984
    %6450 = vmatpush.msra.mxu0 %v4968
    %6451 = vmatpush.msra.mxu0 %v4952
    %6452 = vmatpush.msra.mxu0 %v4936
    %6453 = vmatpush.msra.mxu0 %v4920
    %6454 = vmatpush.msra.mxu0 %v4904
    %6455 = vmatpush.msra.mxu0 %v4888
    %6456 = vmatpush.msra.mxu0 %v4872
    %6457 = vmatpush.msra.mxu0 %v4856
    %6458 = vmatpush.msra.mxu0 %v4840
    %6459 = vmatpush.msra.mxu0 %v4824
    %6460 = vmatpush.msra.mxu0 %v4808
    %6461 = vmatmul.f32.gmra.mxu0 %v2741
    %v6462 = vpop.f32.mrf.mxu0
    %v6463 = vadd.f32 %v6443, %v6462
    %6464 = vdwg.mxu0
    %6465 = vmatpush.msra.mxu0 %v5304
    %6466 = vmatpush.msra.mxu0 %v5288
    %6467 = vmatpush.msra.mxu0 %v5272
    %6468 = vmatpush.msra.mxu0 %v5256
    %6469 = vmatpush.msra.mxu0 %v5240
    %6470 = vmatpush.msra.mxu0 %v5224
    %6471 = vmatpush.msra.mxu0 %v5208
    %6472 = vmatpush.msra.mxu0 %v5192
    %6473 = vmatpush.msra.mxu0 %v5176
    %6474 = vmatpush.msra.mxu0 %v5160
    %6475 = vmatpush.msra.mxu0 %v5144
    %6476 = vmatpush.msra.mxu0 %v5128
    %6477 = vmatpush.msra.mxu0 %v5112
    %6478 = vmatpush.msra.mxu0 %v5096
    %6479 = vmatpush.msra.mxu0 %v5080
    %6480 = vmatpush.msra.mxu0 %v5064
    %6481 = vmatmul.f32.gmra.mxu0 %v2742
    %v6482 = vpop.f32.mrf.mxu0
    %v6483 = vadd.f32 %v6463, %v6482
    %6484 = vdwg.mxu0
    %6485 = vmatpush.msra.mxu0 %v5560
    %6486 = vmatpush.msra.mxu0 %v5544
    %6487 = vmatpush.msra.mxu0 %v5528
    %6488 = vmatpush.msra.mxu0 %v5512
    %6489 = vmatpush.msra.mxu0 %v5496
    %6490 = vmatpush.msra.mxu0 %v5480
    %6491 = vmatpush.msra.mxu0 %v5464
    %6492 = vmatpush.msra.mxu0 %v5448
    %6493 = vmatpush.msra.mxu0 %v5432
    %6494 = vmatpush.msra.mxu0 %v5416
    %6495 = vmatpush.msra.mxu0 %v5400
    %6496 = vmatpush.msra.mxu0 %v5384
    %6497 = vmatpush.msra.mxu0 %v5368
    %6498 = vmatpush.msra.mxu0 %v5352
    %6499 = vmatpush.msra.mxu0 %v5336
    %6500 = vmatpush.msra.mxu0 %v5320
    %6501 = vmatmul.f32.gmra.mxu0 %v2743
    %v6502 = vpop.f32.mrf.mxu0
    %v6503 = vadd.f32 %v6483, %v6502
    %6504 = vdwg.mxu0
    %6505 = vmatpush.msra.mxu0 %v5816
    %6506 = vmatpush.msra.mxu0 %v5800
    %6507 = vmatpush.msra.mxu0 %v5784
    %6508 = vmatpush.msra.mxu0 %v5768
    %6509 = vmatpush.msra.mxu0 %v5752
    %6510 = vmatpush.msra.mxu0 %v5736
    %6511 = vmatpush.msra.mxu0 %v5720
    %6512 = vmatpush.msra.mxu0 %v5704
    %6513 = vmatpush.msra.mxu0 %v5688
    %6514 = vmatpush.msra.mxu0 %v5672
    %6515 = vmatpush.msra.mxu0 %v5656
    %6516 = vmatpush.msra.mxu0 %v5640
    %6517 = vmatpush.msra.mxu0 %v5624
    %6518 = vmatpush.msra.mxu0 %v5608
    %6519 = vmatpush.msra.mxu0 %v5592
    %6520 = vmatpush.msra.mxu0 %v5576
    %6521 = vmatmul.f32.gmra.mxu0 %v2744
    %v6522 = vpop.f32.mrf.mxu0
    %v6523 = vadd.f32 %v6503, %v6522
    %6524 = vdwg.mxu0
    %6525 = vmatpush.msra.mxu0 %v4025
    %6526 = vmatpush.msra.mxu0 %v4009
    %6527 = vmatpush.msra.mxu0 %v3993
    %6528 = vmatpush.msra.mxu0 %v3977
    %6529 = vmatpush.msra.mxu0 %v3961
    %6530 = vmatpush.msra.mxu0 %v3945
    %6531 = vmatpush.msra.mxu0 %v3929
    %6532 = vmatpush.msra.mxu0 %v3913
    %6533 = vmatpush.msra.mxu0 %v3897
    %6534 = vmatpush.msra.mxu0 %v3881
    %6535 = vmatpush.msra.mxu0 %v3865
    %6536 = vmatpush.msra.mxu0 %v3849
    %6537 = vmatpush.msra.mxu0 %v3833
    %6538 = vmatpush.msra.mxu0 %v3817
    %6539 = vmatpush.msra.mxu0 %v3801
    %6540 = vmatpush.msra.mxu0 %v3785
    %6541 = vmatmul.f32.gmra.mxu0 %v2737
    %v6542 = vpop.f32.mrf.mxu0
    %v6543 = vadd.f32 %v5873, %v6542
    %6544 = vdwg.mxu0
    %6545 = vmatpush.msra.mxu0 %v4281
    %6546 = vmatpush.msra.mxu0 %v4265
    %6547 = vmatpush.msra.mxu0 %v4249
    %6548 = vmatpush.msra.mxu0 %v4233
    %6549 = vmatpush.msra.mxu0 %v4217
    %6550 = vmatpush.msra.mxu0 %v4201
    %6551 = vmatpush.msra.mxu0 %v4185
    %6552 = vmatpush.msra.mxu0 %v4169
    %6553 = vmatpush.msra.mxu0 %v4153
    %6554 = vmatpush.msra.mxu0 %v4137
    %6555 = vmatpush.msra.mxu0 %v4121
    %6556 = vmatpush.msra.mxu0 %v4105
    %6557 = vmatpush.msra.mxu0 %v4089
    %6558 = vmatpush.msra.mxu0 %v4073
    %6559 = vmatpush.msra.mxu0 %v4057
    %6560 = vmatpush.msra.mxu0 %v4041
    %6561 = vmatmul.f32.gmra.mxu0 %v2738
    %v6562 = vpop.f32.mrf.mxu0
    %v6563 = vadd.f32 %v6543, %v6562
    %6564 = vdwg.mxu0
    %6565 = vmatpush.msra.mxu0 %v4537
    %6566 = vmatpush.msra.mxu0 %v4521
    %6567 = vmatpush.msra.mxu0 %v4505
    %6568 = vmatpush.msra.mxu0 %v4489
    %6569 = vmatpush.msra.mxu0 %v4473
    %6570 = vmatpush.msra.mxu0 %v4457
    %6571 = vmatpush.msra.mxu0 %v4441
    %6572 = vmatpush.msra.mxu0 %v4425
    %6573 = vmatpush.msra.mxu0 %v4409
    %6574 = vmatpush.msra.mxu0 %v4393
    %6575 = vmatpush.msra.mxu0 %v4377
    %6576 = vmatpush.msra.mxu0 %v4361
    %6577 = vmatpush.msra.mxu0 %v4345
    %6578 = vmatpush.msra.mxu0 %v4329
    %6579 = vmatpush.msra.mxu0 %v4313
    %6580 = vmatpush.msra.mxu0 %v4297
    %6581 = vmatmul.f32.gmra.mxu0 %v2739
    %v6582 = vpop.f32.mrf.mxu0
    %v6583 = vadd.f32 %v6563, %v6582
    %6584 = vdwg.mxu0
    %6585 = vmatpush.msra.mxu0 %v4793
    %6586 = vmatpush.msra.mxu0 %v4777
    %6587 = vmatpush.msra.mxu0 %v4761
    %6588 = vmatpush.msra.mxu0 %v4745
    %6589 = vmatpush.msra.mxu0 %v4729
    %6590 = vmatpush.msra.mxu0 %v4713
    %6591 = vmatpush.msra.mxu0 %v4697
    %6592 = vmatpush.msra.mxu0 %v4681
    %6593 = vmatpush.msra.mxu0 %v4665
    %6594 = vmatpush.msra.mxu0 %v4649
    %6595 = vmatpush.msra.mxu0 %v4633
    %6596 = vmatpush.msra.mxu0 %v4617
    %6597 = vmatpush.msra.mxu0 %v4601
    %6598 = vmatpush.msra.mxu0 %v4585
    %6599 = vmatpush.msra.mxu0 %v4569
    %6600 = vmatpush.msra.mxu0 %v4553
    %6601 = vmatmul.f32.gmra.mxu0 %v2740
    %v6602 = vpop.f32.mrf.mxu0
    %v6603 = vadd.f32 %v6583, %v6602
    %6604 = vdwg.mxu0
    %6605 = vmatpush.msra.mxu0 %v5049
    %6606 = vmatpush.msra.mxu0 %v5033
    %6607 = vmatpush.msra.mxu0 %v5017
    %6608 = vmatpush.msra.mxu0 %v5001
    %6609 = vmatpush.msra.mxu0 %v4985
    %6610 = vmatpush.msra.mxu0 %v4969
    %6611 = vmatpush.msra.mxu0 %v4953
    %6612 = vmatpush.msra.mxu0 %v4937
    %6613 = vmatpush.msra.mxu0 %v4921
    %6614 = vmatpush.msra.mxu0 %v4905
    %6615 = vmatpush.msra.mxu0 %v4889
    %6616 = vmatpush.msra.mxu0 %v4873
    %6617 = vmatpush.msra.mxu0 %v4857
    %6618 = vmatpush.msra.mxu0 %v4841
    %6619 = vmatpush.msra.mxu0 %v4825
    %6620 = vmatpush.msra.mxu0 %v4809
    %6621 = vmatmul.f32.gmra.mxu0 %v2741
    %v6622 = vpop.f32.mrf.mxu0
    %v6623 = vadd.f32 %v6603, %v6622
    %6624 = vdwg.mxu0
    %6625 = vmatpush.msra.mxu0 %v5305
    %6626 = vmatpush.msra.mxu0 %v5289
    %6627 = vmatpush.msra.mxu0 %v5273
    %6628 = vmatpush.msra.mxu0 %v5257
    %6629 = vmatpush.msra.mxu0 %v5241
    %6630 = vmatpush.msra.mxu0 %v5225
    %6631 = vmatpush.msra.mxu0 %v5209
    %6632 = vmatpush.msra.mxu0 %v5193
    %6633 = vmatpush.msra.mxu0 %v5177
    %6634 = vmatpush.msra.mxu0 %v5161
    %6635 = vmatpush.msra.mxu0 %v5145
    %6636 = vmatpush.msra.mxu0 %v5129
    %6637 = vmatpush.msra.mxu0 %v5113
    %6638 = vmatpush.msra.mxu0 %v5097
    %6639 = vmatpush.msra.mxu0 %v5081
    %6640 = vmatpush.msra.mxu0 %v5065
    %6641 = vmatmul.f32.gmra.mxu0 %v2742
    %v6642 = vpop.f32.mrf.mxu0
    %v6643 = vadd.f32 %v6623, %v6642
    %6644 = vdwg.mxu0
    %6645 = vmatpush.msra.mxu0 %v5561
    %6646 = vmatpush.msra.mxu0 %v5545
    %6647 = vmatpush.msra.mxu0 %v5529
    %6648 = vmatpush.msra.mxu0 %v5513
    %6649 = vmatpush.msra.mxu0 %v5497
    %6650 = vmatpush.msra.mxu0 %v5481
    %6651 = vmatpush.msra.mxu0 %v5465
    %6652 = vmatpush.msra.mxu0 %v5449
    %6653 = vmatpush.msra.mxu0 %v5433
    %6654 = vmatpush.msra.mxu0 %v5417
    %6655 = vmatpush.msra.mxu0 %v5401
    %6656 = vmatpush.msra.mxu0 %v5385
    %6657 = vmatpush.msra.mxu0 %v5369
    %6658 = vmatpush.msra.mxu0 %v5353
    %6659 = vmatpush.msra.mxu0 %v5337
    %6660 = vmatpush.msra.mxu0 %v5321
    %6661 = vmatmul.f32.gmra.mxu0 %v2743
    %v6662 = vpop.f32.mrf.mxu0
    %v6663 = vadd.f32 %v6643, %v6662
    %6664 = vdwg.mxu0
    %6665 = vmatpush.msra.mxu0 %v5817
    %6666 = vmatpush.msra.mxu0 %v5801
    %6667 = vmatpush.msra.mxu0 %v5785
    %6668 = vmatpush.msra.mxu0 %v5769
    %6669 = vmatpush.msra.mxu0 %v5753
    %6670 = vmatpush.msra.mxu0 %v5737
    %6671 = vmatpush.msra.mxu0 %v5721
    %6672 = vmatpush.msra.mxu0 %v5705
    %6673 = vmatpush.msra.mxu0 %v5689
    %6674 = vmatpush.msra.mxu0 %v5673
    %6675 = vmatpush.msra.mxu0 %v5657
    %6676 = vmatpush.msra.mxu0 %v5641
    %6677 = vmatpush.msra.mxu0 %v5625
    %6678 = vmatpush.msra.mxu0 %v5609
    %6679 = vmatpush.msra.mxu0 %v5593
    %6680 = vmatpush.msra.mxu0 %v5577
    %6681 = vmatmul.f32.gmra.mxu0 %v2744
    %v6682 = vpop.f32.mrf.mxu0
    %v6683 = vadd.f32 %v6663, %v6682
    %6684 = vdwg.mxu0
    %6685 = vmatpush.msra.mxu0 %v4026
    %6686 = vmatpush.msra.mxu0 %v4010
    %6687 = vmatpush.msra.mxu0 %v3994
    %6688 = vmatpush.msra.mxu0 %v3978
    %6689 = vmatpush.msra.mxu0 %v3962
    %6690 = vmatpush.msra.mxu0 %v3946
    %6691 = vmatpush.msra.mxu0 %v3930
    %6692 = vmatpush.msra.mxu0 %v3914
    %6693 = vmatpush.msra.mxu0 %v3898
    %6694 = vmatpush.msra.mxu0 %v3882
    %6695 = vmatpush.msra.mxu0 %v3866
    %6696 = vmatpush.msra.mxu0 %v3850
    %6697 = vmatpush.msra.mxu0 %v3834
    %6698 = vmatpush.msra.mxu0 %v3818
    %6699 = vmatpush.msra.mxu0 %v3802
    %6700 = vmatpush.msra.mxu0 %v3786
    %6701 = vmatmul.f32.gmra.mxu0 %v2737
    %v6702 = vpop.f32.mrf.mxu0
    %v6703 = vadd.f32 %v5874, %v6702
    %6704 = vdwg.mxu0
    %6705 = vmatpush.msra.mxu0 %v4282
    %6706 = vmatpush.msra.mxu0 %v4266
    %6707 = vmatpush.msra.mxu0 %v4250
    %6708 = vmatpush.msra.mxu0 %v4234
    %6709 = vmatpush.msra.mxu0 %v4218
    %6710 = vmatpush.msra.mxu0 %v4202
    %6711 = vmatpush.msra.mxu0 %v4186
    %6712 = vmatpush.msra.mxu0 %v4170
    %6713 = vmatpush.msra.mxu0 %v4154
    %6714 = vmatpush.msra.mxu0 %v4138
    %6715 = vmatpush.msra.mxu0 %v4122
    %6716 = vmatpush.msra.mxu0 %v4106
    %6717 = vmatpush.msra.mxu0 %v4090
    %6718 = vmatpush.msra.mxu0 %v4074
    %6719 = vmatpush.msra.mxu0 %v4058
    %6720 = vmatpush.msra.mxu0 %v4042
    %6721 = vmatmul.f32.gmra.mxu0 %v2738
    %v6722 = vpop.f32.mrf.mxu0
    %v6723 = vadd.f32 %v6703, %v6722
    %6724 = vdwg.mxu0
    %6725 = vmatpush.msra.mxu0 %v4538
    %6726 = vmatpush.msra.mxu0 %v4522
    %6727 = vmatpush.msra.mxu0 %v4506
    %6728 = vmatpush.msra.mxu0 %v4490
    %6729 = vmatpush.msra.mxu0 %v4474
    %6730 = vmatpush.msra.mxu0 %v4458
    %6731 = vmatpush.msra.mxu0 %v4442
    %6732 = vmatpush.msra.mxu0 %v4426
    %6733 = vmatpush.msra.mxu0 %v4410
    %6734 = vmatpush.msra.mxu0 %v4394
    %6735 = vmatpush.msra.mxu0 %v4378
    %6736 = vmatpush.msra.mxu0 %v4362
    %6737 = vmatpush.msra.mxu0 %v4346
    %6738 = vmatpush.msra.mxu0 %v4330
    %6739 = vmatpush.msra.mxu0 %v4314
    %6740 = vmatpush.msra.mxu0 %v4298
    %6741 = vmatmul.f32.gmra.mxu0 %v2739
    %v6742 = vpop.f32.mrf.mxu0
    %v6743 = vadd.f32 %v6723, %v6742
    %6744 = vdwg.mxu0
    %6745 = vmatpush.msra.mxu0 %v4794
    %6746 = vmatpush.msra.mxu0 %v4778
    %6747 = vmatpush.msra.mxu0 %v4762
    %6748 = vmatpush.msra.mxu0 %v4746
    %6749 = vmatpush.msra.mxu0 %v4730
    %6750 = vmatpush.msra.mxu0 %v4714
    %6751 = vmatpush.msra.mxu0 %v4698
    %6752 = vmatpush.msra.mxu0 %v4682
    %6753 = vmatpush.msra.mxu0 %v4666
    %6754 = vmatpush.msra.mxu0 %v4650
    %6755 = vmatpush.msra.mxu0 %v4634
    %6756 = vmatpush.msra.mxu0 %v4618
    %6757 = vmatpush.msra.mxu0 %v4602
    %6758 = vmatpush.msra.mxu0 %v4586
    %6759 = vmatpush.msra.mxu0 %v4570
    %6760 = vmatpush.msra.mxu0 %v4554
    %6761 = vmatmul.f32.gmra.mxu0 %v2740
    %v6762 = vpop.f32.mrf.mxu0
    %v6763 = vadd.f32 %v6743, %v6762
    %6764 = vdwg.mxu0
    %6765 = vmatpush.msra.mxu0 %v5050
    %6766 = vmatpush.msra.mxu0 %v5034
    %6767 = vmatpush.msra.mxu0 %v5018
    %6768 = vmatpush.msra.mxu0 %v5002
    %6769 = vmatpush.msra.mxu0 %v4986
    %6770 = vmatpush.msra.mxu0 %v4970
    %6771 = vmatpush.msra.mxu0 %v4954
    %6772 = vmatpush.msra.mxu0 %v4938
    %6773 = vmatpush.msra.mxu0 %v4922
    %6774 = vmatpush.msra.mxu0 %v4906
    %6775 = vmatpush.msra.mxu0 %v4890
    %6776 = vmatpush.msra.mxu0 %v4874
    %6777 = vmatpush.msra.mxu0 %v4858
    %6778 = vmatpush.msra.mxu0 %v4842
    %6779 = vmatpush.msra.mxu0 %v4826
    %6780 = vmatpush.msra.mxu0 %v4810
    %6781 = vmatmul.f32.gmra.mxu0 %v2741
    %v6782 = vpop.f32.mrf.mxu0
    %v6783 = vadd.f32 %v6763, %v6782
    %6784 = vdwg.mxu0
    %6785 = vmatpush.msra.mxu0 %v5306
    %6786 = vmatpush.msra.mxu0 %v5290
    %6787 = vmatpush.msra.mxu0 %v5274
    %6788 = vmatpush.msra.mxu0 %v5258
    %6789 = vmatpush.msra.mxu0 %v5242
    %6790 = vmatpush.msra.mxu0 %v5226
    %6791 = vmatpush.msra.mxu0 %v5210
    %6792 = vmatpush.msra.mxu0 %v5194
    %6793 = vmatpush.msra.mxu0 %v5178
    %6794 = vmatpush.msra.mxu0 %v5162
    %6795 = vmatpush.msra.mxu0 %v5146
    %6796 = vmatpush.msra.mxu0 %v5130
    %6797 = vmatpush.msra.mxu0 %v5114
    %6798 = vmatpush.msra.mxu0 %v5098
    %6799 = vmatpush.msra.mxu0 %v5082
    %6800 = vmatpush.msra.mxu0 %v5066
    %6801 = vmatmul.f32.gmra.mxu0 %v2742
    %v6802 = vpop.f32.mrf.mxu0
    %v6803 = vadd.f32 %v6783, %v6802
    %6804 = vdwg.mxu0
    %6805 = vmatpush.msra.mxu0 %v5562
    %6806 = vmatpush.msra.mxu0 %v5546
    %6807 = vmatpush.msra.mxu0 %v5530
    %6808 = vmatpush.msra.mxu0 %v5514
    %6809 = vmatpush.msra.mxu0 %v5498
    %6810 = vmatpush.msra.mxu0 %v5482
    %6811 = vmatpush.msra.mxu0 %v5466
    %6812 = vmatpush.msra.mxu0 %v5450
    %6813 = vmatpush.msra.mxu0 %v5434
    %6814 = vmatpush.msra.mxu0 %v5418
    %6815 = vmatpush.msra.mxu0 %v5402
    %6816 = vmatpush.msra.mxu0 %v5386
    %6817 = vmatpush.msra.mxu0 %v5370
    %6818 = vmatpush.msra.mxu0 %v5354
    %6819 = vmatpush.msra.mxu0 %v5338
    %6820 = vmatpush.msra.mxu0 %v5322
    %6821 = vmatmul.f32.gmra.mxu0 %v2743
    %v6822 = vpop.f32.mrf.mxu0
    %v6823 = vadd.f32 %v6803, %v6822
    %6824 = vdwg.mxu0
    %6825 = vmatpush.msra.mxu0 %v5818
    %6826 = vmatpush.msra.mxu0 %v5802
    %6827 = vmatpush.msra.mxu0 %v5786
    %6828 = vmatpush.msra.mxu0 %v5770
    %6829 = vmatpush.msra.mxu0 %v5754
    %6830 = vmatpush.msra.mxu0 %v5738
    %6831 = vmatpush.msra.mxu0 %v5722
    %6832 = vmatpush.msra.mxu0 %v5706
    %6833 = vmatpush.msra.mxu0 %v5690
    %6834 = vmatpush.msra.mxu0 %v5674
    %6835 = vmatpush.msra.mxu0 %v5658
    %6836 = vmatpush.msra.mxu0 %v5642
    %6837 = vmatpush.msra.mxu0 %v5626
    %6838 = vmatpush.msra.mxu0 %v5610
    %6839 = vmatpush.msra.mxu0 %v5594
    %6840 = vmatpush.msra.mxu0 %v5578
    %6841 = vmatmul.f32.gmra.mxu0 %v2744
    %v6842 = vpop.f32.mrf.mxu0
    %v6843 = vadd.f32 %v6823, %v6842
    %6844 = vdwg.mxu0
    %6845 = vmatpush.msra.mxu0 %v4027
    %6846 = vmatpush.msra.mxu0 %v4011
    %6847 = vmatpush.msra.mxu0 %v3995
    %6848 = vmatpush.msra.mxu0 %v3979
    %6849 = vmatpush.msra.mxu0 %v3963
    %6850 = vmatpush.msra.mxu0 %v3947
    %6851 = vmatpush.msra.mxu0 %v3931
    %6852 = vmatpush.msra.mxu0 %v3915
    %6853 = vmatpush.msra.mxu0 %v3899
    %6854 = vmatpush.msra.mxu0 %v3883
    %6855 = vmatpush.msra.mxu0 %v3867
    %6856 = vmatpush.msra.mxu0 %v3851
    %6857 = vmatpush.msra.mxu0 %v3835
    %6858 = vmatpush.msra.mxu0 %v3819
    %6859 = vmatpush.msra.mxu0 %v3803
    %6860 = vmatpush.msra.mxu0 %v3787
    %6861 = vmatmul.f32.gmra.mxu0 %v2737
    %v6862 = vpop.f32.mrf.mxu0
    %v6863 = vadd.f32 %v5875, %v6862
    %6864 = vdwg.mxu0
    %6865 = vmatpush.msra.mxu0 %v4283
    %6866 = vmatpush.msra.mxu0 %v4267
    %6867 = vmatpush.msra.mxu0 %v4251
    %6868 = vmatpush.msra.mxu0 %v4235
    %6869 = vmatpush.msra.mxu0 %v4219
    %6870 = vmatpush.msra.mxu0 %v4203
    %6871 = vmatpush.msra.mxu0 %v4187
    %6872 = vmatpush.msra.mxu0 %v4171
    %6873 = vmatpush.msra.mxu0 %v4155
    %6874 = vmatpush.msra.mxu0 %v4139
    %6875 = vmatpush.msra.mxu0 %v4123
    %6876 = vmatpush.msra.mxu0 %v4107
    %6877 = vmatpush.msra.mxu0 %v4091
    %6878 = vmatpush.msra.mxu0 %v4075
    %6879 = vmatpush.msra.mxu0 %v4059
    %6880 = vmatpush.msra.mxu0 %v4043
    %6881 = vmatmul.f32.gmra.mxu0 %v2738
    %v6882 = vpop.f32.mrf.mxu0
    %v6883 = vadd.f32 %v6863, %v6882
    %6884 = vdwg.mxu0
    %6885 = vmatpush.msra.mxu0 %v4539
    %6886 = vmatpush.msra.mxu0 %v4523
    %6887 = vmatpush.msra.mxu0 %v4507
    %6888 = vmatpush.msra.mxu0 %v4491
    %6889 = vmatpush.msra.mxu0 %v4475
    %6890 = vmatpush.msra.mxu0 %v4459
    %6891 = vmatpush.msra.mxu0 %v4443
    %6892 = vmatpush.msra.mxu0 %v4427
    %6893 = vmatpush.msra.mxu0 %v4411
    %6894 = vmatpush.msra.mxu0 %v4395
    %6895 = vmatpush.msra.mxu0 %v4379
    %6896 = vmatpush.msra.mxu0 %v4363
    %6897 = vmatpush.msra.mxu0 %v4347
    %6898 = vmatpush.msra.mxu0 %v4331
    %6899 = vmatpush.msra.mxu0 %v4315
    %6900 = vmatpush.msra.mxu0 %v4299
    %6901 = vmatmul.f32.gmra.mxu0 %v2739
    %v6902 = vpop.f32.mrf.mxu0
    %v6903 = vadd.f32 %v6883, %v6902
    %6904 = vdwg.mxu0
    %6905 = vmatpush.msra.mxu0 %v4795
    %6906 = vmatpush.msra.mxu0 %v4779
    %6907 = vmatpush.msra.mxu0 %v4763
    %6908 = vmatpush.msra.mxu0 %v4747
    %6909 = vmatpush.msra.mxu0 %v4731
    %6910 = vmatpush.msra.mxu0 %v4715
    %6911 = vmatpush.msra.mxu0 %v4699
    %6912 = vmatpush.msra.mxu0 %v4683
    %6913 = vmatpush.msra.mxu0 %v4667
    %6914 = vmatpush.msra.mxu0 %v4651
    %6915 = vmatpush.msra.mxu0 %v4635
    %6916 = vmatpush.msra.mxu0 %v4619
    %6917 = vmatpush.msra.mxu0 %v4603
    %6918 = vmatpush.msra.mxu0 %v4587
    %6919 = vmatpush.msra.mxu0 %v4571
    %6920 = vmatpush.msra.mxu0 %v4555
    %6921 = vmatmul.f32.gmra.mxu0 %v2740
    %v6922 = vpop.f32.mrf.mxu0
    %v6923 = vadd.f32 %v6903, %v6922
    %6924 = vdwg.mxu0
    %6925 = vmatpush.msra.mxu0 %v5051
    %6926 = vmatpush.msra.mxu0 %v5035
    %6927 = vmatpush.msra.mxu0 %v5019
    %6928 = vmatpush.msra.mxu0 %v5003
    %6929 = vmatpush.msra.mxu0 %v4987
    %6930 = vmatpush.msra.mxu0 %v4971
    %6931 = vmatpush.msra.mxu0 %v4955
    %6932 = vmatpush.msra.mxu0 %v4939
    %6933 = vmatpush.msra.mxu0 %v4923
    %6934 = vmatpush.msra.mxu0 %v4907
    %6935 = vmatpush.msra.mxu0 %v4891
    %6936 = vmatpush.msra.mxu0 %v4875
    %6937 = vmatpush.msra.mxu0 %v4859
    %6938 = vmatpush.msra.mxu0 %v4843
    %6939 = vmatpush.msra.mxu0 %v4827
    %6940 = vmatpush.msra.mxu0 %v4811
    %6941 = vmatmul.f32.gmra.mxu0 %v2741
    %v6942 = vpop.f32.mrf.mxu0
    %v6943 = vadd.f32 %v6923, %v6942
    %6944 = vdwg.mxu0
    %6945 = vmatpush.msra.mxu0 %v5307
    %6946 = vmatpush.msra.mxu0 %v5291
    %6947 = vmatpush.msra.mxu0 %v5275
    %6948 = vmatpush.msra.mxu0 %v5259
    %6949 = vmatpush.msra.mxu0 %v5243
    %6950 = vmatpush.msra.mxu0 %v5227
    %6951 = vmatpush.msra.mxu0 %v5211
    %6952 = vmatpush.msra.mxu0 %v5195
    %6953 = vmatpush.msra.mxu0 %v5179
    %6954 = vmatpush.msra.mxu0 %v5163
    %6955 = vmatpush.msra.mxu0 %v5147
    %6956 = vmatpush.msra.mxu0 %v5131
    %6957 = vmatpush.msra.mxu0 %v5115
    %6958 = vmatpush.msra.mxu0 %v5099
    %6959 = vmatpush.msra.mxu0 %v5083
    %6960 = vmatpush.msra.mxu0 %v5067
    %6961 = vmatmul.f32.gmra.mxu0 %v2742
    %v6962 = vpop.f32.mrf.mxu0
    %v6963 = vadd.f32 %v6943, %v6962
    %6964 = vdwg.mxu0
    %6965 = vmatpush.msra.mxu0 %v5563
    %6966 = vmatpush.msra.mxu0 %v5547
    %6967 = vmatpush.msra.mxu0 %v5531
    %6968 = vmatpush.msra.mxu0 %v5515
    %6969 = vmatpush.msra.mxu0 %v5499
    %6970 = vmatpush.msra.mxu0 %v5483
    %6971 = vmatpush.msra.mxu0 %v5467
    %6972 = vmatpush.msra.mxu0 %v5451
    %6973 = vmatpush.msra.mxu0 %v5435
    %6974 = vmatpush.msra.mxu0 %v5419
    %6975 = vmatpush.msra.mxu0 %v5403
    %6976 = vmatpush.msra.mxu0 %v5387
    %6977 = vmatpush.msra.mxu0 %v5371
    %6978 = vmatpush.msra.mxu0 %v5355
    %6979 = vmatpush.msra.mxu0 %v5339
    %6980 = vmatpush.msra.mxu0 %v5323
    %6981 = vmatmul.f32.gmra.mxu0 %v2743
    %v6982 = vpop.f32.mrf.mxu0
    %v6983 = vadd.f32 %v6963, %v6982
    %6984 = vdwg.mxu0
    %6985 = vmatpush.msra.mxu0 %v5819
    %6986 = vmatpush.msra.mxu0 %v5803
    %6987 = vmatpush.msra.mxu0 %v5787
    %6988 = vmatpush.msra.mxu0 %v5771
    %6989 = vmatpush.msra.mxu0 %v5755
    %6990 = vmatpush.msra.mxu0 %v5739
    %6991 = vmatpush.msra.mxu0 %v5723
    %6992 = vmatpush.msra.mxu0 %v5707
    %6993 = vmatpush.msra.mxu0 %v5691
    %6994 = vmatpush.msra.mxu0 %v5675
    %6995 = vmatpush.msra.mxu0 %v5659
    %6996 = vmatpush.msra.mxu0 %v5643
    %6997 = vmatpush.msra.mxu0 %v5627
    %6998 = vmatpush.msra.mxu0 %v5611
    %6999 = vmatpush.msra.mxu0 %v5595
    %7000 = vmatpush.msra.mxu0 %v5579
    %7001 = vmatmul.f32.gmra.mxu0 %v2744
    %v7002 = vpop.f32.mrf.mxu0
    %v7003 = vadd.f32 %v6983, %v7002
    %7004 = vdwg.mxu0
    %7005 = vmatpush.msra.mxu0 %v4028
    %7006 = vmatpush.msra.mxu0 %v4012
    %7007 = vmatpush.msra.mxu0 %v3996
    %7008 = vmatpush.msra.mxu0 %v3980
    %7009 = vmatpush.msra.mxu0 %v3964
    %7010 = vmatpush.msra.mxu0 %v3948
    %7011 = vmatpush.msra.mxu0 %v3932
    %7012 = vmatpush.msra.mxu0 %v3916
    %7013 = vmatpush.msra.mxu0 %v3900
    %7014 = vmatpush.msra.mxu0 %v3884
    %7015 = vmatpush.msra.mxu0 %v3868
    %7016 = vmatpush.msra.mxu0 %v3852
    %7017 = vmatpush.msra.mxu0 %v3836
    %7018 = vmatpush.msra.mxu0 %v3820
    %7019 = vmatpush.msra.mxu0 %v3804
    %7020 = vmatpush.msra.mxu0 %v3788
    %7021 = vmatmul.f32.gmra.mxu0 %v2737
    %v7022 = vpop.f32.mrf.mxu0
    %v7023 = vadd.f32 %v5876, %v7022
    %7024 = vdwg.mxu0
    %7025 = vmatpush.msra.mxu0 %v4284
    %7026 = vmatpush.msra.mxu0 %v4268
    %7027 = vmatpush.msra.mxu0 %v4252
    %7028 = vmatpush.msra.mxu0 %v4236
    %7029 = vmatpush.msra.mxu0 %v4220
    %7030 = vmatpush.msra.mxu0 %v4204
    %7031 = vmatpush.msra.mxu0 %v4188
    %7032 = vmatpush.msra.mxu0 %v4172
    %7033 = vmatpush.msra.mxu0 %v4156
    %7034 = vmatpush.msra.mxu0 %v4140
    %7035 = vmatpush.msra.mxu0 %v4124
    %7036 = vmatpush.msra.mxu0 %v4108
    %7037 = vmatpush.msra.mxu0 %v4092
    %7038 = vmatpush.msra.mxu0 %v4076
    %7039 = vmatpush.msra.mxu0 %v4060
    %7040 = vmatpush.msra.mxu0 %v4044
    %7041 = vmatmul.f32.gmra.mxu0 %v2738
    %v7042 = vpop.f32.mrf.mxu0
    %v7043 = vadd.f32 %v7023, %v7042
    %7044 = vdwg.mxu0
    %7045 = vmatpush.msra.mxu0 %v4540
    %7046 = vmatpush.msra.mxu0 %v4524
    %7047 = vmatpush.msra.mxu0 %v4508
    %7048 = vmatpush.msra.mxu0 %v4492
    %7049 = vmatpush.msra.mxu0 %v4476
    %7050 = vmatpush.msra.mxu0 %v4460
    %7051 = vmatpush.msra.mxu0 %v4444
    %7052 = vmatpush.msra.mxu0 %v4428
    %7053 = vmatpush.msra.mxu0 %v4412
    %7054 = vmatpush.msra.mxu0 %v4396
    %7055 = vmatpush.msra.mxu0 %v4380
    %7056 = vmatpush.msra.mxu0 %v4364
    %7057 = vmatpush.msra.mxu0 %v4348
    %7058 = vmatpush.msra.mxu0 %v4332
    %7059 = vmatpush.msra.mxu0 %v4316
    %7060 = vmatpush.msra.mxu0 %v4300
    %7061 = vmatmul.f32.gmra.mxu0 %v2739
    %v7062 = vpop.f32.mrf.mxu0
    %v7063 = vadd.f32 %v7043, %v7062
    %7064 = vdwg.mxu0
    %7065 = vmatpush.msra.mxu0 %v4796
    %7066 = vmatpush.msra.mxu0 %v4780
    %7067 = vmatpush.msra.mxu0 %v4764
    %7068 = vmatpush.msra.mxu0 %v4748
    %7069 = vmatpush.msra.mxu0 %v4732
    %7070 = vmatpush.msra.mxu0 %v4716
    %7071 = vmatpush.msra.mxu0 %v4700
    %7072 = vmatpush.msra.mxu0 %v4684
    %7073 = vmatpush.msra.mxu0 %v4668
    %7074 = vmatpush.msra.mxu0 %v4652
    %7075 = vmatpush.msra.mxu0 %v4636
    %7076 = vmatpush.msra.mxu0 %v4620
    %7077 = vmatpush.msra.mxu0 %v4604
    %7078 = vmatpush.msra.mxu0 %v4588
    %7079 = vmatpush.msra.mxu0 %v4572
    %7080 = vmatpush.msra.mxu0 %v4556
    %7081 = vmatmul.f32.gmra.mxu0 %v2740
    %v7082 = vpop.f32.mrf.mxu0
    %v7083 = vadd.f32 %v7063, %v7082
    %7084 = vdwg.mxu0
    %7085 = vmatpush.msra.mxu0 %v5052
    %7086 = vmatpush.msra.mxu0 %v5036
    %7087 = vmatpush.msra.mxu0 %v5020
    %7088 = vmatpush.msra.mxu0 %v5004
    %7089 = vmatpush.msra.mxu0 %v4988
    %7090 = vmatpush.msra.mxu0 %v4972
    %7091 = vmatpush.msra.mxu0 %v4956
    %7092 = vmatpush.msra.mxu0 %v4940
    %7093 = vmatpush.msra.mxu0 %v4924
    %7094 = vmatpush.msra.mxu0 %v4908
    %7095 = vmatpush.msra.mxu0 %v4892
    %7096 = vmatpush.msra.mxu0 %v4876
    %7097 = vmatpush.msra.mxu0 %v4860
    %7098 = vmatpush.msra.mxu0 %v4844
    %7099 = vmatpush.msra.mxu0 %v4828
    %7100 = vmatpush.msra.mxu0 %v4812
    %7101 = vmatmul.f32.gmra.mxu0 %v2741
    %v7102 = vpop.f32.mrf.mxu0
    %v7103 = vadd.f32 %v7083, %v7102
    %7104 = vdwg.mxu0
    %7105 = vmatpush.msra.mxu0 %v5308
    %7106 = vmatpush.msra.mxu0 %v5292
    %7107 = vmatpush.msra.mxu0 %v5276
    %7108 = vmatpush.msra.mxu0 %v5260
    %7109 = vmatpush.msra.mxu0 %v5244
    %7110 = vmatpush.msra.mxu0 %v5228
    %7111 = vmatpush.msra.mxu0 %v5212
    %7112 = vmatpush.msra.mxu0 %v5196
    %7113 = vmatpush.msra.mxu0 %v5180
    %7114 = vmatpush.msra.mxu0 %v5164
    %7115 = vmatpush.msra.mxu0 %v5148
    %7116 = vmatpush.msra.mxu0 %v5132
    %7117 = vmatpush.msra.mxu0 %v5116
    %7118 = vmatpush.msra.mxu0 %v5100
    %7119 = vmatpush.msra.mxu0 %v5084
    %7120 = vmatpush.msra.mxu0 %v5068
    %7121 = vmatmul.f32.gmra.mxu0 %v2742
    %v7122 = vpop.f32.mrf.mxu0
    %v7123 = vadd.f32 %v7103, %v7122
    %7124 = vdwg.mxu0
    %7125 = vmatpush.msra.mxu0 %v5564
    %7126 = vmatpush.msra.mxu0 %v5548
    %7127 = vmatpush.msra.mxu0 %v5532
    %7128 = vmatpush.msra.mxu0 %v5516
    %7129 = vmatpush.msra.mxu0 %v5500
    %7130 = vmatpush.msra.mxu0 %v5484
    %7131 = vmatpush.msra.mxu0 %v5468
    %7132 = vmatpush.msra.mxu0 %v5452
    %7133 = vmatpush.msra.mxu0 %v5436
    %7134 = vmatpush.msra.mxu0 %v5420
    %7135 = vmatpush.msra.mxu0 %v5404
    %7136 = vmatpush.msra.mxu0 %v5388
    %7137 = vmatpush.msra.mxu0 %v5372
    %7138 = vmatpush.msra.mxu0 %v5356
    %7139 = vmatpush.msra.mxu0 %v5340
    %7140 = vmatpush.msra.mxu0 %v5324
    %7141 = vmatmul.f32.gmra.mxu0 %v2743
    %v7142 = vpop.f32.mrf.mxu0
    %v7143 = vadd.f32 %v7123, %v7142
    %7144 = vdwg.mxu0
    %7145 = vmatpush.msra.mxu0 %v5820
    %7146 = vmatpush.msra.mxu0 %v5804
    %7147 = vmatpush.msra.mxu0 %v5788
    %7148 = vmatpush.msra.mxu0 %v5772
    %7149 = vmatpush.msra.mxu0 %v5756
    %7150 = vmatpush.msra.mxu0 %v5740
    %7151 = vmatpush.msra.mxu0 %v5724
    %7152 = vmatpush.msra.mxu0 %v5708
    %7153 = vmatpush.msra.mxu0 %v5692
    %7154 = vmatpush.msra.mxu0 %v5676
    %7155 = vmatpush.msra.mxu0 %v5660
    %7156 = vmatpush.msra.mxu0 %v5644
    %7157 = vmatpush.msra.mxu0 %v5628
    %7158 = vmatpush.msra.mxu0 %v5612
    %7159 = vmatpush.msra.mxu0 %v5596
    %7160 = vmatpush.msra.mxu0 %v5580
    %7161 = vmatmul.f32.gmra.mxu0 %v2744
    %v7162 = vpop.f32.mrf.mxu0
    %v7163 = vadd.f32 %v7143, %v7162
    %7164 = vdwg.mxu0
    %7165 = vmatpush.msra.mxu0 %v4029
    %7166 = vmatpush.msra.mxu0 %v4013
    %7167 = vmatpush.msra.mxu0 %v3997
    %7168 = vmatpush.msra.mxu0 %v3981
    %7169 = vmatpush.msra.mxu0 %v3965
    %7170 = vmatpush.msra.mxu0 %v3949
    %7171 = vmatpush.msra.mxu0 %v3933
    %7172 = vmatpush.msra.mxu0 %v3917
    %7173 = vmatpush.msra.mxu0 %v3901
    %7174 = vmatpush.msra.mxu0 %v3885
    %7175 = vmatpush.msra.mxu0 %v3869
    %7176 = vmatpush.msra.mxu0 %v3853
    %7177 = vmatpush.msra.mxu0 %v3837
    %7178 = vmatpush.msra.mxu0 %v3821
    %7179 = vmatpush.msra.mxu0 %v3805
    %7180 = vmatpush.msra.mxu0 %v3789
    %7181 = vmatmul.f32.gmra.mxu0 %v2737
    %v7182 = vpop.f32.mrf.mxu0
    %v7183 = vadd.f32 %v5877, %v7182
    %7184 = vdwg.mxu0
    %7185 = vmatpush.msra.mxu0 %v4285
    %7186 = vmatpush.msra.mxu0 %v4269
    %7187 = vmatpush.msra.mxu0 %v4253
    %7188 = vmatpush.msra.mxu0 %v4237
    %7189 = vmatpush.msra.mxu0 %v4221
    %7190 = vmatpush.msra.mxu0 %v4205
    %7191 = vmatpush.msra.mxu0 %v4189
    %7192 = vmatpush.msra.mxu0 %v4173
    %7193 = vmatpush.msra.mxu0 %v4157
    %7194 = vmatpush.msra.mxu0 %v4141
    %7195 = vmatpush.msra.mxu0 %v4125
    %7196 = vmatpush.msra.mxu0 %v4109
    %7197 = vmatpush.msra.mxu0 %v4093
    %7198 = vmatpush.msra.mxu0 %v4077
    %7199 = vmatpush.msra.mxu0 %v4061
    %7200 = vmatpush.msra.mxu0 %v4045
    %7201 = vmatmul.f32.gmra.mxu0 %v2738
    %v7202 = vpop.f32.mrf.mxu0
    %v7203 = vadd.f32 %v7183, %v7202
    %7204 = vdwg.mxu0
    %7205 = vmatpush.msra.mxu0 %v4541
    %7206 = vmatpush.msra.mxu0 %v4525
    %7207 = vmatpush.msra.mxu0 %v4509
    %7208 = vmatpush.msra.mxu0 %v4493
    %7209 = vmatpush.msra.mxu0 %v4477
    %7210 = vmatpush.msra.mxu0 %v4461
    %7211 = vmatpush.msra.mxu0 %v4445
    %7212 = vmatpush.msra.mxu0 %v4429
    %7213 = vmatpush.msra.mxu0 %v4413
    %7214 = vmatpush.msra.mxu0 %v4397
    %7215 = vmatpush.msra.mxu0 %v4381
    %7216 = vmatpush.msra.mxu0 %v4365
    %7217 = vmatpush.msra.mxu0 %v4349
    %7218 = vmatpush.msra.mxu0 %v4333
    %7219 = vmatpush.msra.mxu0 %v4317
    %7220 = vmatpush.msra.mxu0 %v4301
    %7221 = vmatmul.f32.gmra.mxu0 %v2739
    %v7222 = vpop.f32.mrf.mxu0
    %v7223 = vadd.f32 %v7203, %v7222
    %7224 = vdwg.mxu0
    %7225 = vmatpush.msra.mxu0 %v4797
    %7226 = vmatpush.msra.mxu0 %v4781
    %7227 = vmatpush.msra.mxu0 %v4765
    %7228 = vmatpush.msra.mxu0 %v4749
    %7229 = vmatpush.msra.mxu0 %v4733
    %7230 = vmatpush.msra.mxu0 %v4717
    %7231 = vmatpush.msra.mxu0 %v4701
    %7232 = vmatpush.msra.mxu0 %v4685
    %7233 = vmatpush.msra.mxu0 %v4669
    %7234 = vmatpush.msra.mxu0 %v4653
    %7235 = vmatpush.msra.mxu0 %v4637
    %7236 = vmatpush.msra.mxu0 %v4621
    %7237 = vmatpush.msra.mxu0 %v4605
    %7238 = vmatpush.msra.mxu0 %v4589
    %7239 = vmatpush.msra.mxu0 %v4573
    %7240 = vmatpush.msra.mxu0 %v4557
    %7241 = vmatmul.f32.gmra.mxu0 %v2740
    %v7242 = vpop.f32.mrf.mxu0
    %v7243 = vadd.f32 %v7223, %v7242
    %7244 = vdwg.mxu0
    %7245 = vmatpush.msra.mxu0 %v5053
    %7246 = vmatpush.msra.mxu0 %v5037
    %7247 = vmatpush.msra.mxu0 %v5021
    %7248 = vmatpush.msra.mxu0 %v5005
    %7249 = vmatpush.msra.mxu0 %v4989
    %7250 = vmatpush.msra.mxu0 %v4973
    %7251 = vmatpush.msra.mxu0 %v4957
    %7252 = vmatpush.msra.mxu0 %v4941
    %7253 = vmatpush.msra.mxu0 %v4925
    %7254 = vmatpush.msra.mxu0 %v4909
    %7255 = vmatpush.msra.mxu0 %v4893
    %7256 = vmatpush.msra.mxu0 %v4877
    %7257 = vmatpush.msra.mxu0 %v4861
    %7258 = vmatpush.msra.mxu0 %v4845
    %7259 = vmatpush.msra.mxu0 %v4829
    %7260 = vmatpush.msra.mxu0 %v4813
    %7261 = vmatmul.f32.gmra.mxu0 %v2741
    %v7262 = vpop.f32.mrf.mxu0
    %v7263 = vadd.f32 %v7243, %v7262
    %7264 = vdwg.mxu0
    %7265 = vmatpush.msra.mxu0 %v5309
    %7266 = vmatpush.msra.mxu0 %v5293
    %7267 = vmatpush.msra.mxu0 %v5277
    %7268 = vmatpush.msra.mxu0 %v5261
    %7269 = vmatpush.msra.mxu0 %v5245
    %7270 = vmatpush.msra.mxu0 %v5229
    %7271 = vmatpush.msra.mxu0 %v5213
    %7272 = vmatpush.msra.mxu0 %v5197
    %7273 = vmatpush.msra.mxu0 %v5181
    %7274 = vmatpush.msra.mxu0 %v5165
    %7275 = vmatpush.msra.mxu0 %v5149
    %7276 = vmatpush.msra.mxu0 %v5133
    %7277 = vmatpush.msra.mxu0 %v5117
    %7278 = vmatpush.msra.mxu0 %v5101
    %7279 = vmatpush.msra.mxu0 %v5085
    %7280 = vmatpush.msra.mxu0 %v5069
    %7281 = vmatmul.f32.gmra.mxu0 %v2742
    %v7282 = vpop.f32.mrf.mxu0
    %v7283 = vadd.f32 %v7263, %v7282
    %7284 = vdwg.mxu0
    %7285 = vmatpush.msra.mxu0 %v5565
    %7286 = vmatpush.msra.mxu0 %v5549
    %7287 = vmatpush.msra.mxu0 %v5533
    %7288 = vmatpush.msra.mxu0 %v5517
    %7289 = vmatpush.msra.mxu0 %v5501
    %7290 = vmatpush.msra.mxu0 %v5485
    %7291 = vmatpush.msra.mxu0 %v5469
    %7292 = vmatpush.msra.mxu0 %v5453
    %7293 = vmatpush.msra.mxu0 %v5437
    %7294 = vmatpush.msra.mxu0 %v5421
    %7295 = vmatpush.msra.mxu0 %v5405
    %7296 = vmatpush.msra.mxu0 %v5389
    %7297 = vmatpush.msra.mxu0 %v5373
    %7298 = vmatpush.msra.mxu0 %v5357
    %7299 = vmatpush.msra.mxu0 %v5341
    %7300 = vmatpush.msra.mxu0 %v5325
    %7301 = vmatmul.f32.gmra.mxu0 %v2743
    %v7302 = vpop.f32.mrf.mxu0
    %v7303 = vadd.f32 %v7283, %v7302
    %7304 = vdwg.mxu0
    %7305 = vmatpush.msra.mxu0 %v5821
    %7306 = vmatpush.msra.mxu0 %v5805
    %7307 = vmatpush.msra.mxu0 %v5789
    %7308 = vmatpush.msra.mxu0 %v5773
    %7309 = vmatpush.msra.mxu0 %v5757
    %7310 = vmatpush.msra.mxu0 %v5741
    %7311 = vmatpush.msra.mxu0 %v5725
    %7312 = vmatpush.msra.mxu0 %v5709
    %7313 = vmatpush.msra.mxu0 %v5693
    %7314 = vmatpush.msra.mxu0 %v5677
    %7315 = vmatpush.msra.mxu0 %v5661
    %7316 = vmatpush.msra.mxu0 %v5645
    %7317 = vmatpush.msra.mxu0 %v5629
    %7318 = vmatpush.msra.mxu0 %v5613
    %7319 = vmatpush.msra.mxu0 %v5597
    %7320 = vmatpush.msra.mxu0 %v5581
    %7321 = vmatmul.f32.gmra.mxu0 %v2744
    %v7322 = vpop.f32.mrf.mxu0
    %v7323 = vadd.f32 %v7303, %v7322
    %7324 = vdwg.mxu0
    %7325 = vmatpush.msra.mxu0 %v4030
    %7326 = vmatpush.msra.mxu0 %v4014
    %7327 = vmatpush.msra.mxu0 %v3998
    %7328 = vmatpush.msra.mxu0 %v3982
    %7329 = vmatpush.msra.mxu0 %v3966
    %7330 = vmatpush.msra.mxu0 %v3950
    %7331 = vmatpush.msra.mxu0 %v3934
    %7332 = vmatpush.msra.mxu0 %v3918
    %7333 = vmatpush.msra.mxu0 %v3902
    %7334 = vmatpush.msra.mxu0 %v3886
    %7335 = vmatpush.msra.mxu0 %v3870
    %7336 = vmatpush.msra.mxu0 %v3854
    %7337 = vmatpush.msra.mxu0 %v3838
    %7338 = vmatpush.msra.mxu0 %v3822
    %7339 = vmatpush.msra.mxu0 %v3806
    %7340 = vmatpush.msra.mxu0 %v3790
    %7341 = vmatmul.f32.gmra.mxu0 %v2737
    %v7342 = vpop.f32.mrf.mxu0
    %v7343 = vadd.f32 %v5878, %v7342
    %7344 = vdwg.mxu0
    %7345 = vmatpush.msra.mxu0 %v4286
    %7346 = vmatpush.msra.mxu0 %v4270
    %7347 = vmatpush.msra.mxu0 %v4254
    %7348 = vmatpush.msra.mxu0 %v4238
    %7349 = vmatpush.msra.mxu0 %v4222
    %7350 = vmatpush.msra.mxu0 %v4206
    %7351 = vmatpush.msra.mxu0 %v4190
    %7352 = vmatpush.msra.mxu0 %v4174
    %7353 = vmatpush.msra.mxu0 %v4158
    %7354 = vmatpush.msra.mxu0 %v4142
    %7355 = vmatpush.msra.mxu0 %v4126
    %7356 = vmatpush.msra.mxu0 %v4110
    %7357 = vmatpush.msra.mxu0 %v4094
    %7358 = vmatpush.msra.mxu0 %v4078
    %7359 = vmatpush.msra.mxu0 %v4062
    %7360 = vmatpush.msra.mxu0 %v4046
    %7361 = vmatmul.f32.gmra.mxu0 %v2738
    %v7362 = vpop.f32.mrf.mxu0
    %v7363 = vadd.f32 %v7343, %v7362
    %7364 = vdwg.mxu0
    %7365 = vmatpush.msra.mxu0 %v4542
    %7366 = vmatpush.msra.mxu0 %v4526
    %7367 = vmatpush.msra.mxu0 %v4510
    %7368 = vmatpush.msra.mxu0 %v4494
    %7369 = vmatpush.msra.mxu0 %v4478
    %7370 = vmatpush.msra.mxu0 %v4462
    %7371 = vmatpush.msra.mxu0 %v4446
    %7372 = vmatpush.msra.mxu0 %v4430
    %7373 = vmatpush.msra.mxu0 %v4414
    %7374 = vmatpush.msra.mxu0 %v4398
    %7375 = vmatpush.msra.mxu0 %v4382
    %7376 = vmatpush.msra.mxu0 %v4366
    %7377 = vmatpush.msra.mxu0 %v4350
    %7378 = vmatpush.msra.mxu0 %v4334
    %7379 = vmatpush.msra.mxu0 %v4318
    %7380 = vmatpush.msra.mxu0 %v4302
    %7381 = vmatmul.f32.gmra.mxu0 %v2739
    %v7382 = vpop.f32.mrf.mxu0
    %v7383 = vadd.f32 %v7363, %v7382
    %7384 = vdwg.mxu0
    %7385 = vmatpush.msra.mxu0 %v4798
    %7386 = vmatpush.msra.mxu0 %v4782
    %7387 = vmatpush.msra.mxu0 %v4766
    %7388 = vmatpush.msra.mxu0 %v4750
    %7389 = vmatpush.msra.mxu0 %v4734
    %7390 = vmatpush.msra.mxu0 %v4718
    %7391 = vmatpush.msra.mxu0 %v4702
    %7392 = vmatpush.msra.mxu0 %v4686
    %7393 = vmatpush.msra.mxu0 %v4670
    %7394 = vmatpush.msra.mxu0 %v4654
    %7395 = vmatpush.msra.mxu0 %v4638
    %7396 = vmatpush.msra.mxu0 %v4622
    %7397 = vmatpush.msra.mxu0 %v4606
    %7398 = vmatpush.msra.mxu0 %v4590
    %7399 = vmatpush.msra.mxu0 %v4574
    %7400 = vmatpush.msra.mxu0 %v4558
    %7401 = vmatmul.f32.gmra.mxu0 %v2740
    %v7402 = vpop.f32.mrf.mxu0
    %v7403 = vadd.f32 %v7383, %v7402
    %7404 = vdwg.mxu0
    %7405 = vmatpush.msra.mxu0 %v5054
    %7406 = vmatpush.msra.mxu0 %v5038
    %7407 = vmatpush.msra.mxu0 %v5022
    %7408 = vmatpush.msra.mxu0 %v5006
    %7409 = vmatpush.msra.mxu0 %v4990
    %7410 = vmatpush.msra.mxu0 %v4974
    %7411 = vmatpush.msra.mxu0 %v4958
    %7412 = vmatpush.msra.mxu0 %v4942
    %7413 = vmatpush.msra.mxu0 %v4926
    %7414 = vmatpush.msra.mxu0 %v4910
    %7415 = vmatpush.msra.mxu0 %v4894
    %7416 = vmatpush.msra.mxu0 %v4878
    %7417 = vmatpush.msra.mxu0 %v4862
    %7418 = vmatpush.msra.mxu0 %v4846
    %7419 = vmatpush.msra.mxu0 %v4830
    %7420 = vmatpush.msra.mxu0 %v4814
    %7421 = vmatmul.f32.gmra.mxu0 %v2741
    %v7422 = vpop.f32.mrf.mxu0
    %v7423 = vadd.f32 %v7403, %v7422
    %7424 = vdwg.mxu0
    %7425 = vmatpush.msra.mxu0 %v5310
    %7426 = vmatpush.msra.mxu0 %v5294
    %7427 = vmatpush.msra.mxu0 %v5278
    %7428 = vmatpush.msra.mxu0 %v5262
    %7429 = vmatpush.msra.mxu0 %v5246
    %7430 = vmatpush.msra.mxu0 %v5230
    %7431 = vmatpush.msra.mxu0 %v5214
    %7432 = vmatpush.msra.mxu0 %v5198
    %7433 = vmatpush.msra.mxu0 %v5182
    %7434 = vmatpush.msra.mxu0 %v5166
    %7435 = vmatpush.msra.mxu0 %v5150
    %7436 = vmatpush.msra.mxu0 %v5134
    %7437 = vmatpush.msra.mxu0 %v5118
    %7438 = vmatpush.msra.mxu0 %v5102
    %7439 = vmatpush.msra.mxu0 %v5086
    %7440 = vmatpush.msra.mxu0 %v5070
    %7441 = vmatmul.f32.gmra.mxu0 %v2742
    %v7442 = vpop.f32.mrf.mxu0
    %v7443 = vadd.f32 %v7423, %v7442
    %7444 = vdwg.mxu0
    %7445 = vmatpush.msra.mxu0 %v5566
    %7446 = vmatpush.msra.mxu0 %v5550
    %7447 = vmatpush.msra.mxu0 %v5534
    %7448 = vmatpush.msra.mxu0 %v5518
    %7449 = vmatpush.msra.mxu0 %v5502
    %7450 = vmatpush.msra.mxu0 %v5486
    %7451 = vmatpush.msra.mxu0 %v5470
    %7452 = vmatpush.msra.mxu0 %v5454
    %7453 = vmatpush.msra.mxu0 %v5438
    %7454 = vmatpush.msra.mxu0 %v5422
    %7455 = vmatpush.msra.mxu0 %v5406
    %7456 = vmatpush.msra.mxu0 %v5390
    %7457 = vmatpush.msra.mxu0 %v5374
    %7458 = vmatpush.msra.mxu0 %v5358
    %7459 = vmatpush.msra.mxu0 %v5342
    %7460 = vmatpush.msra.mxu0 %v5326
    %7461 = vmatmul.f32.gmra.mxu0 %v2743
    %v7462 = vpop.f32.mrf.mxu0
    %v7463 = vadd.f32 %v7443, %v7462
    %7464 = vdwg.mxu0
    %7465 = vmatpush.msra.mxu0 %v5822
    %7466 = vmatpush.msra.mxu0 %v5806
    %7467 = vmatpush.msra.mxu0 %v5790
    %7468 = vmatpush.msra.mxu0 %v5774
    %7469 = vmatpush.msra.mxu0 %v5758
    %7470 = vmatpush.msra.mxu0 %v5742
    %7471 = vmatpush.msra.mxu0 %v5726
    %7472 = vmatpush.msra.mxu0 %v5710
    %7473 = vmatpush.msra.mxu0 %v5694
    %7474 = vmatpush.msra.mxu0 %v5678
    %7475 = vmatpush.msra.mxu0 %v5662
    %7476 = vmatpush.msra.mxu0 %v5646
    %7477 = vmatpush.msra.mxu0 %v5630
    %7478 = vmatpush.msra.mxu0 %v5614
    %7479 = vmatpush.msra.mxu0 %v5598
    %7480 = vmatpush.msra.mxu0 %v5582
    %7481 = vmatmul.f32.gmra.mxu0 %v2744
    %v7482 = vpop.f32.mrf.mxu0
    %v7483 = vadd.f32 %v7463, %v7482
    %7484 = vdwg.mxu0
    %7485 = vmatpush.msra.mxu0 %v4031
    %7486 = vmatpush.msra.mxu0 %v4015
    %7487 = vmatpush.msra.mxu0 %v3999
    %7488 = vmatpush.msra.mxu0 %v3983
    %7489 = vmatpush.msra.mxu0 %v3967
    %7490 = vmatpush.msra.mxu0 %v3951
    %7491 = vmatpush.msra.mxu0 %v3935
    %7492 = vmatpush.msra.mxu0 %v3919
    %7493 = vmatpush.msra.mxu0 %v3903
    %7494 = vmatpush.msra.mxu0 %v3887
    %7495 = vmatpush.msra.mxu0 %v3871
    %7496 = vmatpush.msra.mxu0 %v3855
    %7497 = vmatpush.msra.mxu0 %v3839
    %7498 = vmatpush.msra.mxu0 %v3823
    %7499 = vmatpush.msra.mxu0 %v3807
    %7500 = vmatpush.msra.mxu0 %v3791
    %7501 = vmatmul.f32.gmra.mxu0 %v2737
    %v7502 = vpop.f32.mrf.mxu0
    %v7503 = vadd.f32 %v5879, %v7502
    %7504 = vdwg.mxu0
    %7505 = vmatpush.msra.mxu0 %v4287
    %7506 = vmatpush.msra.mxu0 %v4271
    %7507 = vmatpush.msra.mxu0 %v4255
    %7508 = vmatpush.msra.mxu0 %v4239
    %7509 = vmatpush.msra.mxu0 %v4223
    %7510 = vmatpush.msra.mxu0 %v4207
    %7511 = vmatpush.msra.mxu0 %v4191
    %7512 = vmatpush.msra.mxu0 %v4175
    %7513 = vmatpush.msra.mxu0 %v4159
    %7514 = vmatpush.msra.mxu0 %v4143
    %7515 = vmatpush.msra.mxu0 %v4127
    %7516 = vmatpush.msra.mxu0 %v4111
    %7517 = vmatpush.msra.mxu0 %v4095
    %7518 = vmatpush.msra.mxu0 %v4079
    %7519 = vmatpush.msra.mxu0 %v4063
    %7520 = vmatpush.msra.mxu0 %v4047
    %7521 = vmatmul.f32.gmra.mxu0 %v2738
    %v7522 = vpop.f32.mrf.mxu0
    %v7523 = vadd.f32 %v7503, %v7522
    %7524 = vdwg.mxu0
    %7525 = vmatpush.msra.mxu0 %v4543
    %7526 = vmatpush.msra.mxu0 %v4527
    %7527 = vmatpush.msra.mxu0 %v4511
    %7528 = vmatpush.msra.mxu0 %v4495
    %7529 = vmatpush.msra.mxu0 %v4479
    %7530 = vmatpush.msra.mxu0 %v4463
    %7531 = vmatpush.msra.mxu0 %v4447
    %7532 = vmatpush.msra.mxu0 %v4431
    %7533 = vmatpush.msra.mxu0 %v4415
    %7534 = vmatpush.msra.mxu0 %v4399
    %7535 = vmatpush.msra.mxu0 %v4383
    %7536 = vmatpush.msra.mxu0 %v4367
    %7537 = vmatpush.msra.mxu0 %v4351
    %7538 = vmatpush.msra.mxu0 %v4335
    %7539 = vmatpush.msra.mxu0 %v4319
    %7540 = vmatpush.msra.mxu0 %v4303
    %7541 = vmatmul.f32.gmra.mxu0 %v2739
    %v7542 = vpop.f32.mrf.mxu0
    %v7543 = vadd.f32 %v7523, %v7542
    %7544 = vdwg.mxu0
    %7545 = vmatpush.msra.mxu0 %v4799
    %7546 = vmatpush.msra.mxu0 %v4783
    %7547 = vmatpush.msra.mxu0 %v4767
    %7548 = vmatpush.msra.mxu0 %v4751
    %7549 = vmatpush.msra.mxu0 %v4735
    %7550 = vmatpush.msra.mxu0 %v4719
    %7551 = vmatpush.msra.mxu0 %v4703
    %7552 = vmatpush.msra.mxu0 %v4687
    %7553 = vmatpush.msra.mxu0 %v4671
    %7554 = vmatpush.msra.mxu0 %v4655
    %7555 = vmatpush.msra.mxu0 %v4639
    %7556 = vmatpush.msra.mxu0 %v4623
    %7557 = vmatpush.msra.mxu0 %v4607
    %7558 = vmatpush.msra.mxu0 %v4591
    %7559 = vmatpush.msra.mxu0 %v4575
    %7560 = vmatpush.msra.mxu0 %v4559
    %7561 = vmatmul.f32.gmra.mxu0 %v2740
    %v7562 = vpop.f32.mrf.mxu0
    %v7563 = vadd.f32 %v7543, %v7562
    %7564 = vdwg.mxu0
    %7565 = vmatpush.msra.mxu0 %v5055
    %7566 = vmatpush.msra.mxu0 %v5039
    %7567 = vmatpush.msra.mxu0 %v5023
    %7568 = vmatpush.msra.mxu0 %v5007
    %7569 = vmatpush.msra.mxu0 %v4991
    %7570 = vmatpush.msra.mxu0 %v4975
    %7571 = vmatpush.msra.mxu0 %v4959
    %7572 = vmatpush.msra.mxu0 %v4943
    %7573 = vmatpush.msra.mxu0 %v4927
    %7574 = vmatpush.msra.mxu0 %v4911
    %7575 = vmatpush.msra.mxu0 %v4895
    %7576 = vmatpush.msra.mxu0 %v4879
    %7577 = vmatpush.msra.mxu0 %v4863
    %7578 = vmatpush.msra.mxu0 %v4847
    %7579 = vmatpush.msra.mxu0 %v4831
    %7580 = vmatpush.msra.mxu0 %v4815
    %7581 = vmatmul.f32.gmra.mxu0 %v2741
    %v7582 = vpop.f32.mrf.mxu0
    %v7583 = vadd.f32 %v7563, %v7582
    %7584 = vdwg.mxu0
    %7585 = vmatpush.msra.mxu0 %v5311
    %7586 = vmatpush.msra.mxu0 %v5295
    %7587 = vmatpush.msra.mxu0 %v5279
    %7588 = vmatpush.msra.mxu0 %v5263
    %7589 = vmatpush.msra.mxu0 %v5247
    %7590 = vmatpush.msra.mxu0 %v5231
    %7591 = vmatpush.msra.mxu0 %v5215
    %7592 = vmatpush.msra.mxu0 %v5199
    %7593 = vmatpush.msra.mxu0 %v5183
    %7594 = vmatpush.msra.mxu0 %v5167
    %7595 = vmatpush.msra.mxu0 %v5151
    %7596 = vmatpush.msra.mxu0 %v5135
    %7597 = vmatpush.msra.mxu0 %v5119
    %7598 = vmatpush.msra.mxu0 %v5103
    %7599 = vmatpush.msra.mxu0 %v5087
    %7600 = vmatpush.msra.mxu0 %v5071
    %7601 = vmatmul.f32.gmra.mxu0 %v2742
    %v7602 = vpop.f32.mrf.mxu0
    %v7603 = vadd.f32 %v7583, %v7602
    %7604 = vdwg.mxu0
    %7605 = vmatpush.msra.mxu0 %v5567
    %7606 = vmatpush.msra.mxu0 %v5551
    %7607 = vmatpush.msra.mxu0 %v5535
    %7608 = vmatpush.msra.mxu0 %v5519
    %7609 = vmatpush.msra.mxu0 %v5503
    %7610 = vmatpush.msra.mxu0 %v5487
    %7611 = vmatpush.msra.mxu0 %v5471
    %7612 = vmatpush.msra.mxu0 %v5455
    %7613 = vmatpush.msra.mxu0 %v5439
    %7614 = vmatpush.msra.mxu0 %v5423
    %7615 = vmatpush.msra.mxu0 %v5407
    %7616 = vmatpush.msra.mxu0 %v5391
    %7617 = vmatpush.msra.mxu0 %v5375
    %7618 = vmatpush.msra.mxu0 %v5359
    %7619 = vmatpush.msra.mxu0 %v5343
    %7620 = vmatpush.msra.mxu0 %v5327
    %7621 = vmatmul.f32.gmra.mxu0 %v2743
    %v7622 = vpop.f32.mrf.mxu0
    %v7623 = vadd.f32 %v7603, %v7622
    %7624 = vdwg.mxu0
    %7625 = vmatpush.msra.mxu0 %v5823
    %7626 = vmatpush.msra.mxu0 %v5807
    %7627 = vmatpush.msra.mxu0 %v5791
    %7628 = vmatpush.msra.mxu0 %v5775
    %7629 = vmatpush.msra.mxu0 %v5759
    %7630 = vmatpush.msra.mxu0 %v5743
    %7631 = vmatpush.msra.mxu0 %v5727
    %7632 = vmatpush.msra.mxu0 %v5711
    %7633 = vmatpush.msra.mxu0 %v5695
    %7634 = vmatpush.msra.mxu0 %v5679
    %7635 = vmatpush.msra.mxu0 %v5663
    %7636 = vmatpush.msra.mxu0 %v5647
    %7637 = vmatpush.msra.mxu0 %v5631
    %7638 = vmatpush.msra.mxu0 %v5615
    %7639 = vmatpush.msra.mxu0 %v5599
    %7640 = vmatpush.msra.mxu0 %v5583
    %7641 = vmatmul.f32.gmra.mxu0 %v2744
    %v7642 = vpop.f32.mrf.mxu0
    %v7643 = vadd.f32 %v7623, %v7642
    %7644 = vdwg.mxu0
    %7645 = vmatpush.msra.mxu0 %v4032
    %7646 = vmatpush.msra.mxu0 %v4016
    %7647 = vmatpush.msra.mxu0 %v4000
    %7648 = vmatpush.msra.mxu0 %v3984
    %7649 = vmatpush.msra.mxu0 %v3968
    %7650 = vmatpush.msra.mxu0 %v3952
    %7651 = vmatpush.msra.mxu0 %v3936
    %7652 = vmatpush.msra.mxu0 %v3920
    %7653 = vmatpush.msra.mxu0 %v3904
    %7654 = vmatpush.msra.mxu0 %v3888
    %7655 = vmatpush.msra.mxu0 %v3872
    %7656 = vmatpush.msra.mxu0 %v3856
    %7657 = vmatpush.msra.mxu0 %v3840
    %7658 = vmatpush.msra.mxu0 %v3824
    %7659 = vmatpush.msra.mxu0 %v3808
    %7660 = vmatpush.msra.mxu0 %v3792
    %7661 = vmatmul.f32.gmra.mxu0 %v2737
    %v7662 = vpop.f32.mrf.mxu0
    %v7663 = vadd.f32 %v5880, %v7662
    %7664 = vdwg.mxu0
    %7665 = vmatpush.msra.mxu0 %v4288
    %7666 = vmatpush.msra.mxu0 %v4272
    %7667 = vmatpush.msra.mxu0 %v4256
    %7668 = vmatpush.msra.mxu0 %v4240
    %7669 = vmatpush.msra.mxu0 %v4224
    %7670 = vmatpush.msra.mxu0 %v4208
    %7671 = vmatpush.msra.mxu0 %v4192
    %7672 = vmatpush.msra.mxu0 %v4176
    %7673 = vmatpush.msra.mxu0 %v4160
    %7674 = vmatpush.msra.mxu0 %v4144
    %7675 = vmatpush.msra.mxu0 %v4128
    %7676 = vmatpush.msra.mxu0 %v4112
    %7677 = vmatpush.msra.mxu0 %v4096
    %7678 = vmatpush.msra.mxu0 %v4080
    %7679 = vmatpush.msra.mxu0 %v4064
    %7680 = vmatpush.msra.mxu0 %v4048
    %7681 = vmatmul.f32.gmra.mxu0 %v2738
    %v7682 = vpop.f32.mrf.mxu0
    %v7683 = vadd.f32 %v7663, %v7682
    %7684 = vdwg.mxu0
    %7685 = vmatpush.msra.mxu0 %v4544
    %7686 = vmatpush.msra.mxu0 %v4528
    %7687 = vmatpush.msra.mxu0 %v4512
    %7688 = vmatpush.msra.mxu0 %v4496
    %7689 = vmatpush.msra.mxu0 %v4480
    %7690 = vmatpush.msra.mxu0 %v4464
    %7691 = vmatpush.msra.mxu0 %v4448
    %7692 = vmatpush.msra.mxu0 %v4432
    %7693 = vmatpush.msra.mxu0 %v4416
    %7694 = vmatpush.msra.mxu0 %v4400
    %7695 = vmatpush.msra.mxu0 %v4384
    %7696 = vmatpush.msra.mxu0 %v4368
    %7697 = vmatpush.msra.mxu0 %v4352
    %7698 = vmatpush.msra.mxu0 %v4336
    %7699 = vmatpush.msra.mxu0 %v4320
    %7700 = vmatpush.msra.mxu0 %v4304
    %7701 = vmatmul.f32.gmra.mxu0 %v2739
    %v7702 = vpop.f32.mrf.mxu0
    %v7703 = vadd.f32 %v7683, %v7702
    %7704 = vdwg.mxu0
    %7705 = vmatpush.msra.mxu0 %v4800
    %7706 = vmatpush.msra.mxu0 %v4784
    %7707 = vmatpush.msra.mxu0 %v4768
    %7708 = vmatpush.msra.mxu0 %v4752
    %7709 = vmatpush.msra.mxu0 %v4736
    %7710 = vmatpush.msra.mxu0 %v4720
    %7711 = vmatpush.msra.mxu0 %v4704
    %7712 = vmatpush.msra.mxu0 %v4688
    %7713 = vmatpush.msra.mxu0 %v4672
    %7714 = vmatpush.msra.mxu0 %v4656
    %7715 = vmatpush.msra.mxu0 %v4640
    %7716 = vmatpush.msra.mxu0 %v4624
    %7717 = vmatpush.msra.mxu0 %v4608
    %7718 = vmatpush.msra.mxu0 %v4592
    %7719 = vmatpush.msra.mxu0 %v4576
    %7720 = vmatpush.msra.mxu0 %v4560
    %7721 = vmatmul.f32.gmra.mxu0 %v2740
    %v7722 = vpop.f32.mrf.mxu0
    %v7723 = vadd.f32 %v7703, %v7722
    %7724 = vdwg.mxu0
    %7725 = vmatpush.msra.mxu0 %v5056
    %7726 = vmatpush.msra.mxu0 %v5040
    %7727 = vmatpush.msra.mxu0 %v5024
    %7728 = vmatpush.msra.mxu0 %v5008
    %7729 = vmatpush.msra.mxu0 %v4992
    %7730 = vmatpush.msra.mxu0 %v4976
    %7731 = vmatpush.msra.mxu0 %v4960
    %7732 = vmatpush.msra.mxu0 %v4944
    %7733 = vmatpush.msra.mxu0 %v4928
    %7734 = vmatpush.msra.mxu0 %v4912
    %7735 = vmatpush.msra.mxu0 %v4896
    %7736 = vmatpush.msra.mxu0 %v4880
    %7737 = vmatpush.msra.mxu0 %v4864
    %7738 = vmatpush.msra.mxu0 %v4848
    %7739 = vmatpush.msra.mxu0 %v4832
    %7740 = vmatpush.msra.mxu0 %v4816
    %7741 = vmatmul.f32.gmra.mxu0 %v2741
    %v7742 = vpop.f32.mrf.mxu0
    %v7743 = vadd.f32 %v7723, %v7742
    %7744 = vdwg.mxu0
    %7745 = vmatpush.msra.mxu0 %v5312
    %7746 = vmatpush.msra.mxu0 %v5296
    %7747 = vmatpush.msra.mxu0 %v5280
    %7748 = vmatpush.msra.mxu0 %v5264
    %7749 = vmatpush.msra.mxu0 %v5248
    %7750 = vmatpush.msra.mxu0 %v5232
    %7751 = vmatpush.msra.mxu0 %v5216
    %7752 = vmatpush.msra.mxu0 %v5200
    %7753 = vmatpush.msra.mxu0 %v5184
    %7754 = vmatpush.msra.mxu0 %v5168
    %7755 = vmatpush.msra.mxu0 %v5152
    %7756 = vmatpush.msra.mxu0 %v5136
    %7757 = vmatpush.msra.mxu0 %v5120
    %7758 = vmatpush.msra.mxu0 %v5104
    %7759 = vmatpush.msra.mxu0 %v5088
    %7760 = vmatpush.msra.mxu0 %v5072
    %7761 = vmatmul.f32.gmra.mxu0 %v2742
    %v7762 = vpop.f32.mrf.mxu0
    %v7763 = vadd.f32 %v7743, %v7762
    %7764 = vdwg.mxu0
    %7765 = vmatpush.msra.mxu0 %v5568
    %7766 = vmatpush.msra.mxu0 %v5552
    %7767 = vmatpush.msra.mxu0 %v5536
    %7768 = vmatpush.msra.mxu0 %v5520
    %7769 = vmatpush.msra.mxu0 %v5504
    %7770 = vmatpush.msra.mxu0 %v5488
    %7771 = vmatpush.msra.mxu0 %v5472
    %7772 = vmatpush.msra.mxu0 %v5456
    %7773 = vmatpush.msra.mxu0 %v5440
    %7774 = vmatpush.msra.mxu0 %v5424
    %7775 = vmatpush.msra.mxu0 %v5408
    %7776 = vmatpush.msra.mxu0 %v5392
    %7777 = vmatpush.msra.mxu0 %v5376
    %7778 = vmatpush.msra.mxu0 %v5360
    %7779 = vmatpush.msra.mxu0 %v5344
    %7780 = vmatpush.msra.mxu0 %v5328
    %7781 = vmatmul.f32.gmra.mxu0 %v2743
    %v7782 = vpop.f32.mrf.mxu0
    %v7783 = vadd.f32 %v7763, %v7782
    %7784 = vdwg.mxu0
    %7785 = vmatpush.msra.mxu0 %v5824
    %7786 = vmatpush.msra.mxu0 %v5808
    %7787 = vmatpush.msra.mxu0 %v5792
    %7788 = vmatpush.msra.mxu0 %v5776
    %7789 = vmatpush.msra.mxu0 %v5760
    %7790 = vmatpush.msra.mxu0 %v5744
    %7791 = vmatpush.msra.mxu0 %v5728
    %7792 = vmatpush.msra.mxu0 %v5712
    %7793 = vmatpush.msra.mxu0 %v5696
    %7794 = vmatpush.msra.mxu0 %v5680
    %7795 = vmatpush.msra.mxu0 %v5664
    %7796 = vmatpush.msra.mxu0 %v5648
    %7797 = vmatpush.msra.mxu0 %v5632
    %7798 = vmatpush.msra.mxu0 %v5616
    %7799 = vmatpush.msra.mxu0 %v5600
    %7800 = vmatpush.msra.mxu0 %v5584
    %7801 = vmatmul.f32.gmra.mxu0 %v2744
    %v7802 = vpop.f32.mrf.mxu0
    %v7803 = vadd.f32 %v7783, %v7802
    %7804 = vdwg.mxu0
    %7805 = vmatpush.msra.mxu0 %v4033
    %7806 = vmatpush.msra.mxu0 %v4017
    %7807 = vmatpush.msra.mxu0 %v4001
    %7808 = vmatpush.msra.mxu0 %v3985
    %7809 = vmatpush.msra.mxu0 %v3969
    %7810 = vmatpush.msra.mxu0 %v3953
    %7811 = vmatpush.msra.mxu0 %v3937
    %7812 = vmatpush.msra.mxu0 %v3921
    %7813 = vmatpush.msra.mxu0 %v3905
    %7814 = vmatpush.msra.mxu0 %v3889
    %7815 = vmatpush.msra.mxu0 %v3873
    %7816 = vmatpush.msra.mxu0 %v3857
    %7817 = vmatpush.msra.mxu0 %v3841
    %7818 = vmatpush.msra.mxu0 %v3825
    %7819 = vmatpush.msra.mxu0 %v3809
    %7820 = vmatpush.msra.mxu0 %v3793
    %7821 = vmatmul.f32.gmra.mxu0 %v2737
    %v7822 = vpop.f32.mrf.mxu0
    %v7823 = vadd.f32 %v5881, %v7822
    %7824 = vdwg.mxu0
    %7825 = vmatpush.msra.mxu0 %v4289
    %7826 = vmatpush.msra.mxu0 %v4273
    %7827 = vmatpush.msra.mxu0 %v4257
    %7828 = vmatpush.msra.mxu0 %v4241
    %7829 = vmatpush.msra.mxu0 %v4225
    %7830 = vmatpush.msra.mxu0 %v4209
    %7831 = vmatpush.msra.mxu0 %v4193
    %7832 = vmatpush.msra.mxu0 %v4177
    %7833 = vmatpush.msra.mxu0 %v4161
    %7834 = vmatpush.msra.mxu0 %v4145
    %7835 = vmatpush.msra.mxu0 %v4129
    %7836 = vmatpush.msra.mxu0 %v4113
    %7837 = vmatpush.msra.mxu0 %v4097
    %7838 = vmatpush.msra.mxu0 %v4081
    %7839 = vmatpush.msra.mxu0 %v4065
    %7840 = vmatpush.msra.mxu0 %v4049
    %7841 = vmatmul.f32.gmra.mxu0 %v2738
    %v7842 = vpop.f32.mrf.mxu0
    %v7843 = vadd.f32 %v7823, %v7842
    %7844 = vdwg.mxu0
    %7845 = vmatpush.msra.mxu0 %v4545
    %7846 = vmatpush.msra.mxu0 %v4529
    %7847 = vmatpush.msra.mxu0 %v4513
    %7848 = vmatpush.msra.mxu0 %v4497
    %7849 = vmatpush.msra.mxu0 %v4481
    %7850 = vmatpush.msra.mxu0 %v4465
    %7851 = vmatpush.msra.mxu0 %v4449
    %7852 = vmatpush.msra.mxu0 %v4433
    %7853 = vmatpush.msra.mxu0 %v4417
    %7854 = vmatpush.msra.mxu0 %v4401
    %7855 = vmatpush.msra.mxu0 %v4385
    %7856 = vmatpush.msra.mxu0 %v4369
    %7857 = vmatpush.msra.mxu0 %v4353
    %7858 = vmatpush.msra.mxu0 %v4337
    %7859 = vmatpush.msra.mxu0 %v4321
    %7860 = vmatpush.msra.mxu0 %v4305
    %7861 = vmatmul.f32.gmra.mxu0 %v2739
    %v7862 = vpop.f32.mrf.mxu0
    %v7863 = vadd.f32 %v7843, %v7862
    %7864 = vdwg.mxu0
    %7865 = vmatpush.msra.mxu0 %v4801
    %7866 = vmatpush.msra.mxu0 %v4785
    %7867 = vmatpush.msra.mxu0 %v4769
    %7868 = vmatpush.msra.mxu0 %v4753
    %7869 = vmatpush.msra.mxu0 %v4737
    %7870 = vmatpush.msra.mxu0 %v4721
    %7871 = vmatpush.msra.mxu0 %v4705
    %7872 = vmatpush.msra.mxu0 %v4689
    %7873 = vmatpush.msra.mxu0 %v4673
    %7874 = vmatpush.msra.mxu0 %v4657
    %7875 = vmatpush.msra.mxu0 %v4641
    %7876 = vmatpush.msra.mxu0 %v4625
    %7877 = vmatpush.msra.mxu0 %v4609
    %7878 = vmatpush.msra.mxu0 %v4593
    %7879 = vmatpush.msra.mxu0 %v4577
    %7880 = vmatpush.msra.mxu0 %v4561
    %7881 = vmatmul.f32.gmra.mxu0 %v2740
    %v7882 = vpop.f32.mrf.mxu0
    %v7883 = vadd.f32 %v7863, %v7882
    %7884 = vdwg.mxu0
    %7885 = vmatpush.msra.mxu0 %v5057
    %7886 = vmatpush.msra.mxu0 %v5041
    %7887 = vmatpush.msra.mxu0 %v5025
    %7888 = vmatpush.msra.mxu0 %v5009
    %7889 = vmatpush.msra.mxu0 %v4993
    %7890 = vmatpush.msra.mxu0 %v4977
    %7891 = vmatpush.msra.mxu0 %v4961
    %7892 = vmatpush.msra.mxu0 %v4945
    %7893 = vmatpush.msra.mxu0 %v4929
    %7894 = vmatpush.msra.mxu0 %v4913
    %7895 = vmatpush.msra.mxu0 %v4897
    %7896 = vmatpush.msra.mxu0 %v4881
    %7897 = vmatpush.msra.mxu0 %v4865
    %7898 = vmatpush.msra.mxu0 %v4849
    %7899 = vmatpush.msra.mxu0 %v4833
    %7900 = vmatpush.msra.mxu0 %v4817
    %7901 = vmatmul.f32.gmra.mxu0 %v2741
    %v7902 = vpop.f32.mrf.mxu0
    %v7903 = vadd.f32 %v7883, %v7902
    %7904 = vdwg.mxu0
    %7905 = vmatpush.msra.mxu0 %v5313
    %7906 = vmatpush.msra.mxu0 %v5297
    %7907 = vmatpush.msra.mxu0 %v5281
    %7908 = vmatpush.msra.mxu0 %v5265
    %7909 = vmatpush.msra.mxu0 %v5249
    %7910 = vmatpush.msra.mxu0 %v5233
    %7911 = vmatpush.msra.mxu0 %v5217
    %7912 = vmatpush.msra.mxu0 %v5201
    %7913 = vmatpush.msra.mxu0 %v5185
    %7914 = vmatpush.msra.mxu0 %v5169
    %7915 = vmatpush.msra.mxu0 %v5153
    %7916 = vmatpush.msra.mxu0 %v5137
    %7917 = vmatpush.msra.mxu0 %v5121
    %7918 = vmatpush.msra.mxu0 %v5105
    %7919 = vmatpush.msra.mxu0 %v5089
    %7920 = vmatpush.msra.mxu0 %v5073
    %7921 = vmatmul.f32.gmra.mxu0 %v2742
    %v7922 = vpop.f32.mrf.mxu0
    %v7923 = vadd.f32 %v7903, %v7922
    %7924 = vdwg.mxu0
    %7925 = vmatpush.msra.mxu0 %v5569
    %7926 = vmatpush.msra.mxu0 %v5553
    %7927 = vmatpush.msra.mxu0 %v5537
    %7928 = vmatpush.msra.mxu0 %v5521
    %7929 = vmatpush.msra.mxu0 %v5505
    %7930 = vmatpush.msra.mxu0 %v5489
    %7931 = vmatpush.msra.mxu0 %v5473
    %7932 = vmatpush.msra.mxu0 %v5457
    %7933 = vmatpush.msra.mxu0 %v5441
    %7934 = vmatpush.msra.mxu0 %v5425
    %7935 = vmatpush.msra.mxu0 %v5409
    %7936 = vmatpush.msra.mxu0 %v5393
    %7937 = vmatpush.msra.mxu0 %v5377
    %7938 = vmatpush.msra.mxu0 %v5361
    %7939 = vmatpush.msra.mxu0 %v5345
    %7940 = vmatpush.msra.mxu0 %v5329
    %7941 = vmatmul.f32.gmra.mxu0 %v2743
    %v7942 = vpop.f32.mrf.mxu0
    %v7943 = vadd.f32 %v7923, %v7942
    %7944 = vdwg.mxu0
    %7945 = vmatpush.msra.mxu0 %v5825
    %7946 = vmatpush.msra.mxu0 %v5809
    %7947 = vmatpush.msra.mxu0 %v5793
    %7948 = vmatpush.msra.mxu0 %v5777
    %7949 = vmatpush.msra.mxu0 %v5761
    %7950 = vmatpush.msra.mxu0 %v5745
    %7951 = vmatpush.msra.mxu0 %v5729
    %7952 = vmatpush.msra.mxu0 %v5713
    %7953 = vmatpush.msra.mxu0 %v5697
    %7954 = vmatpush.msra.mxu0 %v5681
    %7955 = vmatpush.msra.mxu0 %v5665
    %7956 = vmatpush.msra.mxu0 %v5649
    %7957 = vmatpush.msra.mxu0 %v5633
    %7958 = vmatpush.msra.mxu0 %v5617
    %7959 = vmatpush.msra.mxu0 %v5601
    %7960 = vmatpush.msra.mxu0 %v5585
    %7961 = vmatmul.f32.gmra.mxu0 %v2744
    %v7962 = vpop.f32.mrf.mxu0
    %v7963 = vadd.f32 %v7943, %v7962
    %7964 = vdwg.mxu0
    %7965 = vmatpush.msra.mxu0 %v4034
    %7966 = vmatpush.msra.mxu0 %v4018
    %7967 = vmatpush.msra.mxu0 %v4002
    %7968 = vmatpush.msra.mxu0 %v3986
    %7969 = vmatpush.msra.mxu0 %v3970
    %7970 = vmatpush.msra.mxu0 %v3954
    %7971 = vmatpush.msra.mxu0 %v3938
    %7972 = vmatpush.msra.mxu0 %v3922
    %7973 = vmatpush.msra.mxu0 %v3906
    %7974 = vmatpush.msra.mxu0 %v3890
    %7975 = vmatpush.msra.mxu0 %v3874
    %7976 = vmatpush.msra.mxu0 %v3858
    %7977 = vmatpush.msra.mxu0 %v3842
    %7978 = vmatpush.msra.mxu0 %v3826
    %7979 = vmatpush.msra.mxu0 %v3810
    %7980 = vmatpush.msra.mxu0 %v3794
    %7981 = vmatmul.f32.gmra.mxu0 %v2737
    %v7982 = vpop.f32.mrf.mxu0
    %v7983 = vadd.f32 %v5882, %v7982
    %7984 = vdwg.mxu0
    %7985 = vmatpush.msra.mxu0 %v4290
    %7986 = vmatpush.msra.mxu0 %v4274
    %7987 = vmatpush.msra.mxu0 %v4258
    %7988 = vmatpush.msra.mxu0 %v4242
    %7989 = vmatpush.msra.mxu0 %v4226
    %7990 = vmatpush.msra.mxu0 %v4210
    %7991 = vmatpush.msra.mxu0 %v4194
    %7992 = vmatpush.msra.mxu0 %v4178
    %7993 = vmatpush.msra.mxu0 %v4162
    %7994 = vmatpush.msra.mxu0 %v4146
    %7995 = vmatpush.msra.mxu0 %v4130
    %7996 = vmatpush.msra.mxu0 %v4114
    %7997 = vmatpush.msra.mxu0 %v4098
    %7998 = vmatpush.msra.mxu0 %v4082
    %7999 = vmatpush.msra.mxu0 %v4066
    %8000 = vmatpush.msra.mxu0 %v4050
    %8001 = vmatmul.f32.gmra.mxu0 %v2738
    %v8002 = vpop.f32.mrf.mxu0
    %v8003 = vadd.f32 %v7983, %v8002
    %8004 = vdwg.mxu0
    %8005 = vmatpush.msra.mxu0 %v4546
    %8006 = vmatpush.msra.mxu0 %v4530
    %8007 = vmatpush.msra.mxu0 %v4514
    %8008 = vmatpush.msra.mxu0 %v4498
    %8009 = vmatpush.msra.mxu0 %v4482
    %8010 = vmatpush.msra.mxu0 %v4466
    %8011 = vmatpush.msra.mxu0 %v4450
    %8012 = vmatpush.msra.mxu0 %v4434
    %8013 = vmatpush.msra.mxu0 %v4418
    %8014 = vmatpush.msra.mxu0 %v4402
    %8015 = vmatpush.msra.mxu0 %v4386
    %8016 = vmatpush.msra.mxu0 %v4370
    %8017 = vmatpush.msra.mxu0 %v4354
    %8018 = vmatpush.msra.mxu0 %v4338
    %8019 = vmatpush.msra.mxu0 %v4322
    %8020 = vmatpush.msra.mxu0 %v4306
    %8021 = vmatmul.f32.gmra.mxu0 %v2739
    %v8022 = vpop.f32.mrf.mxu0
    %v8023 = vadd.f32 %v8003, %v8022
    %8024 = vdwg.mxu0
    %8025 = vmatpush.msra.mxu0 %v4802
    %8026 = vmatpush.msra.mxu0 %v4786
    %8027 = vmatpush.msra.mxu0 %v4770
    %8028 = vmatpush.msra.mxu0 %v4754
    %8029 = vmatpush.msra.mxu0 %v4738
    %8030 = vmatpush.msra.mxu0 %v4722
    %8031 = vmatpush.msra.mxu0 %v4706
    %8032 = vmatpush.msra.mxu0 %v4690
    %8033 = vmatpush.msra.mxu0 %v4674
    %8034 = vmatpush.msra.mxu0 %v4658
    %8035 = vmatpush.msra.mxu0 %v4642
    %8036 = vmatpush.msra.mxu0 %v4626
    %8037 = vmatpush.msra.mxu0 %v4610
    %8038 = vmatpush.msra.mxu0 %v4594
    %8039 = vmatpush.msra.mxu0 %v4578
    %8040 = vmatpush.msra.mxu0 %v4562
    %8041 = vmatmul.f32.gmra.mxu0 %v2740
    %v8042 = vpop.f32.mrf.mxu0
    %v8043 = vadd.f32 %v8023, %v8042
    %8044 = vdwg.mxu0
    %8045 = vmatpush.msra.mxu0 %v5058
    %8046 = vmatpush.msra.mxu0 %v5042
    %8047 = vmatpush.msra.mxu0 %v5026
    %8048 = vmatpush.msra.mxu0 %v5010
    %8049 = vmatpush.msra.mxu0 %v4994
    %8050 = vmatpush.msra.mxu0 %v4978
    %8051 = vmatpush.msra.mxu0 %v4962
    %8052 = vmatpush.msra.mxu0 %v4946
    %8053 = vmatpush.msra.mxu0 %v4930
    %8054 = vmatpush.msra.mxu0 %v4914
    %8055 = vmatpush.msra.mxu0 %v4898
    %8056 = vmatpush.msra.mxu0 %v4882
    %8057 = vmatpush.msra.mxu0 %v4866
    %8058 = vmatpush.msra.mxu0 %v4850
    %8059 = vmatpush.msra.mxu0 %v4834
    %8060 = vmatpush.msra.mxu0 %v4818
    %8061 = vmatmul.f32.gmra.mxu0 %v2741
    %v8062 = vpop.f32.mrf.mxu0
    %v8063 = vadd.f32 %v8043, %v8062
    %8064 = vdwg.mxu0
    %8065 = vmatpush.msra.mxu0 %v5314
    %8066 = vmatpush.msra.mxu0 %v5298
    %8067 = vmatpush.msra.mxu0 %v5282
    %8068 = vmatpush.msra.mxu0 %v5266
    %8069 = vmatpush.msra.mxu0 %v5250
    %8070 = vmatpush.msra.mxu0 %v5234
    %8071 = vmatpush.msra.mxu0 %v5218
    %8072 = vmatpush.msra.mxu0 %v5202
    %8073 = vmatpush.msra.mxu0 %v5186
    %8074 = vmatpush.msra.mxu0 %v5170
    %8075 = vmatpush.msra.mxu0 %v5154
    %8076 = vmatpush.msra.mxu0 %v5138
    %8077 = vmatpush.msra.mxu0 %v5122
    %8078 = vmatpush.msra.mxu0 %v5106
    %8079 = vmatpush.msra.mxu0 %v5090
    %8080 = vmatpush.msra.mxu0 %v5074
    %8081 = vmatmul.f32.gmra.mxu0 %v2742
    %v8082 = vpop.f32.mrf.mxu0
    %v8083 = vadd.f32 %v8063, %v8082
    %8084 = vdwg.mxu0
    %8085 = vmatpush.msra.mxu0 %v5570
    %8086 = vmatpush.msra.mxu0 %v5554
    %8087 = vmatpush.msra.mxu0 %v5538
    %8088 = vmatpush.msra.mxu0 %v5522
    %8089 = vmatpush.msra.mxu0 %v5506
    %8090 = vmatpush.msra.mxu0 %v5490
    %8091 = vmatpush.msra.mxu0 %v5474
    %8092 = vmatpush.msra.mxu0 %v5458
    %8093 = vmatpush.msra.mxu0 %v5442
    %8094 = vmatpush.msra.mxu0 %v5426
    %8095 = vmatpush.msra.mxu0 %v5410
    %8096 = vmatpush.msra.mxu0 %v5394
    %8097 = vmatpush.msra.mxu0 %v5378
    %8098 = vmatpush.msra.mxu0 %v5362
    %8099 = vmatpush.msra.mxu0 %v5346
    %8100 = vmatpush.msra.mxu0 %v5330
    %8101 = vmatmul.f32.gmra.mxu0 %v2743
    %v8102 = vpop.f32.mrf.mxu0
    %v8103 = vadd.f32 %v8083, %v8102
    %8104 = vdwg.mxu0
    %8105 = vmatpush.msra.mxu0 %v5826
    %8106 = vmatpush.msra.mxu0 %v5810
    %8107 = vmatpush.msra.mxu0 %v5794
    %8108 = vmatpush.msra.mxu0 %v5778
    %8109 = vmatpush.msra.mxu0 %v5762
    %8110 = vmatpush.msra.mxu0 %v5746
    %8111 = vmatpush.msra.mxu0 %v5730
    %8112 = vmatpush.msra.mxu0 %v5714
    %8113 = vmatpush.msra.mxu0 %v5698
    %8114 = vmatpush.msra.mxu0 %v5682
    %8115 = vmatpush.msra.mxu0 %v5666
    %8116 = vmatpush.msra.mxu0 %v5650
    %8117 = vmatpush.msra.mxu0 %v5634
    %8118 = vmatpush.msra.mxu0 %v5618
    %8119 = vmatpush.msra.mxu0 %v5602
    %8120 = vmatpush.msra.mxu0 %v5586
    %8121 = vmatmul.f32.gmra.mxu0 %v2744
    %v8122 = vpop.f32.mrf.mxu0
    %v8123 = vadd.f32 %v8103, %v8122
    %8124 = vdwg.mxu0
    %8125 = vmatpush.msra.mxu0 %v4035
    %8126 = vmatpush.msra.mxu0 %v4019
    %8127 = vmatpush.msra.mxu0 %v4003
    %8128 = vmatpush.msra.mxu0 %v3987
    %8129 = vmatpush.msra.mxu0 %v3971
    %8130 = vmatpush.msra.mxu0 %v3955
    %8131 = vmatpush.msra.mxu0 %v3939
    %8132 = vmatpush.msra.mxu0 %v3923
    %8133 = vmatpush.msra.mxu0 %v3907
    %8134 = vmatpush.msra.mxu0 %v3891
    %8135 = vmatpush.msra.mxu0 %v3875
    %8136 = vmatpush.msra.mxu0 %v3859
    %8137 = vmatpush.msra.mxu0 %v3843
    %8138 = vmatpush.msra.mxu0 %v3827
    %8139 = vmatpush.msra.mxu0 %v3811
    %8140 = vmatpush.msra.mxu0 %v3795
    %8141 = vmatmul.f32.gmra.mxu0 %v2737
    %v8142 = vpop.f32.mrf.mxu0
    %v8143 = vadd.f32 %v5883, %v8142
    %8144 = vdwg.mxu0
    %8145 = vmatpush.msra.mxu0 %v4291
    %8146 = vmatpush.msra.mxu0 %v4275
    %8147 = vmatpush.msra.mxu0 %v4259
    %8148 = vmatpush.msra.mxu0 %v4243
    %8149 = vmatpush.msra.mxu0 %v4227
    %8150 = vmatpush.msra.mxu0 %v4211
    %8151 = vmatpush.msra.mxu0 %v4195
    %8152 = vmatpush.msra.mxu0 %v4179
    %8153 = vmatpush.msra.mxu0 %v4163
    %8154 = vmatpush.msra.mxu0 %v4147
    %8155 = vmatpush.msra.mxu0 %v4131
    %8156 = vmatpush.msra.mxu0 %v4115
    %8157 = vmatpush.msra.mxu0 %v4099
    %8158 = vmatpush.msra.mxu0 %v4083
    %8159 = vmatpush.msra.mxu0 %v4067
    %8160 = vmatpush.msra.mxu0 %v4051
    %8161 = vmatmul.f32.gmra.mxu0 %v2738
    %v8162 = vpop.f32.mrf.mxu0
    %v8163 = vadd.f32 %v8143, %v8162
    %8164 = vdwg.mxu0
    %8165 = vmatpush.msra.mxu0 %v4547
    %8166 = vmatpush.msra.mxu0 %v4531
    %8167 = vmatpush.msra.mxu0 %v4515
    %8168 = vmatpush.msra.mxu0 %v4499
    %8169 = vmatpush.msra.mxu0 %v4483
    %8170 = vmatpush.msra.mxu0 %v4467
    %8171 = vmatpush.msra.mxu0 %v4451
    %8172 = vmatpush.msra.mxu0 %v4435
    %8173 = vmatpush.msra.mxu0 %v4419
    %8174 = vmatpush.msra.mxu0 %v4403
    %8175 = vmatpush.msra.mxu0 %v4387
    %8176 = vmatpush.msra.mxu0 %v4371
    %8177 = vmatpush.msra.mxu0 %v4355
    %8178 = vmatpush.msra.mxu0 %v4339
    %8179 = vmatpush.msra.mxu0 %v4323
    %8180 = vmatpush.msra.mxu0 %v4307
    %8181 = vmatmul.f32.gmra.mxu0 %v2739
    %v8182 = vpop.f32.mrf.mxu0
    %v8183 = vadd.f32 %v8163, %v8182
    %8184 = vdwg.mxu0
    %8185 = vmatpush.msra.mxu0 %v4803
    %8186 = vmatpush.msra.mxu0 %v4787
    %8187 = vmatpush.msra.mxu0 %v4771
    %8188 = vmatpush.msra.mxu0 %v4755
    %8189 = vmatpush.msra.mxu0 %v4739
    %8190 = vmatpush.msra.mxu0 %v4723
    %8191 = vmatpush.msra.mxu0 %v4707
    %8192 = vmatpush.msra.mxu0 %v4691
    %8193 = vmatpush.msra.mxu0 %v4675
    %8194 = vmatpush.msra.mxu0 %v4659
    %8195 = vmatpush.msra.mxu0 %v4643
    %8196 = vmatpush.msra.mxu0 %v4627
    %8197 = vmatpush.msra.mxu0 %v4611
    %8198 = vmatpush.msra.mxu0 %v4595
    %8199 = vmatpush.msra.mxu0 %v4579
    %8200 = vmatpush.msra.mxu0 %v4563
    %8201 = vmatmul.f32.gmra.mxu0 %v2740
    %v8202 = vpop.f32.mrf.mxu0
    %v8203 = vadd.f32 %v8183, %v8202
    %8204 = vdwg.mxu0
    %8205 = vmatpush.msra.mxu0 %v5059
    %8206 = vmatpush.msra.mxu0 %v5043
    %8207 = vmatpush.msra.mxu0 %v5027
    %8208 = vmatpush.msra.mxu0 %v5011
    %8209 = vmatpush.msra.mxu0 %v4995
    %8210 = vmatpush.msra.mxu0 %v4979
    %8211 = vmatpush.msra.mxu0 %v4963
    %8212 = vmatpush.msra.mxu0 %v4947
    %8213 = vmatpush.msra.mxu0 %v4931
    %8214 = vmatpush.msra.mxu0 %v4915
    %8215 = vmatpush.msra.mxu0 %v4899
    %8216 = vmatpush.msra.mxu0 %v4883
    %8217 = vmatpush.msra.mxu0 %v4867
    %8218 = vmatpush.msra.mxu0 %v4851
    %8219 = vmatpush.msra.mxu0 %v4835
    %8220 = vmatpush.msra.mxu0 %v4819
    %8221 = vmatmul.f32.gmra.mxu0 %v2741
    %v8222 = vpop.f32.mrf.mxu0
    %v8223 = vadd.f32 %v8203, %v8222
    %8224 = vdwg.mxu0
    %8225 = vmatpush.msra.mxu0 %v5315
    %8226 = vmatpush.msra.mxu0 %v5299
    %8227 = vmatpush.msra.mxu0 %v5283
    %8228 = vmatpush.msra.mxu0 %v5267
    %8229 = vmatpush.msra.mxu0 %v5251
    %8230 = vmatpush.msra.mxu0 %v5235
    %8231 = vmatpush.msra.mxu0 %v5219
    %8232 = vmatpush.msra.mxu0 %v5203
    %8233 = vmatpush.msra.mxu0 %v5187
    %8234 = vmatpush.msra.mxu0 %v5171
    %8235 = vmatpush.msra.mxu0 %v5155
    %8236 = vmatpush.msra.mxu0 %v5139
    %8237 = vmatpush.msra.mxu0 %v5123
    %8238 = vmatpush.msra.mxu0 %v5107
    %8239 = vmatpush.msra.mxu0 %v5091
    %8240 = vmatpush.msra.mxu0 %v5075
    %8241 = vmatmul.f32.gmra.mxu0 %v2742
    %v8242 = vpop.f32.mrf.mxu0
    %v8243 = vadd.f32 %v8223, %v8242
    %8244 = vdwg.mxu0
    %8245 = vmatpush.msra.mxu0 %v5571
    %8246 = vmatpush.msra.mxu0 %v5555
    %8247 = vmatpush.msra.mxu0 %v5539
    %8248 = vmatpush.msra.mxu0 %v5523
    %8249 = vmatpush.msra.mxu0 %v5507
    %8250 = vmatpush.msra.mxu0 %v5491
    %8251 = vmatpush.msra.mxu0 %v5475
    %8252 = vmatpush.msra.mxu0 %v5459
    %8253 = vmatpush.msra.mxu0 %v5443
    %8254 = vmatpush.msra.mxu0 %v5427
    %8255 = vmatpush.msra.mxu0 %v5411
    %8256 = vmatpush.msra.mxu0 %v5395
    %8257 = vmatpush.msra.mxu0 %v5379
    %8258 = vmatpush.msra.mxu0 %v5363
    %8259 = vmatpush.msra.mxu0 %v5347
    %8260 = vmatpush.msra.mxu0 %v5331
    %8261 = vmatmul.f32.gmra.mxu0 %v2743
    %v8262 = vpop.f32.mrf.mxu0
    %v8263 = vadd.f32 %v8243, %v8262
    %8264 = vdwg.mxu0
    %8265 = vmatpush.msra.mxu0 %v5827
    %8266 = vmatpush.msra.mxu0 %v5811
    %8267 = vmatpush.msra.mxu0 %v5795
    %8268 = vmatpush.msra.mxu0 %v5779
    %8269 = vmatpush.msra.mxu0 %v5763
    %8270 = vmatpush.msra.mxu0 %v5747
    %8271 = vmatpush.msra.mxu0 %v5731
    %8272 = vmatpush.msra.mxu0 %v5715
    %8273 = vmatpush.msra.mxu0 %v5699
    %8274 = vmatpush.msra.mxu0 %v5683
    %8275 = vmatpush.msra.mxu0 %v5667
    %8276 = vmatpush.msra.mxu0 %v5651
    %8277 = vmatpush.msra.mxu0 %v5635
    %8278 = vmatpush.msra.mxu0 %v5619
    %8279 = vmatpush.msra.mxu0 %v5603
    %8280 = vmatpush.msra.mxu0 %v5587
    %8281 = vmatmul.f32.gmra.mxu0 %v2744
    %v8282 = vpop.f32.mrf.mxu0
    %v8283 = vadd.f32 %v8263, %v8282
    %8284 = vdwg.mxu0
    %8285 = vmatpush.msra.mxu0 %v4036
    %8286 = vmatpush.msra.mxu0 %v4020
    %8287 = vmatpush.msra.mxu0 %v4004
    %8288 = vmatpush.msra.mxu0 %v3988
    %8289 = vmatpush.msra.mxu0 %v3972
    %8290 = vmatpush.msra.mxu0 %v3956
    %8291 = vmatpush.msra.mxu0 %v3940
    %8292 = vmatpush.msra.mxu0 %v3924
    %8293 = vmatpush.msra.mxu0 %v3908
    %8294 = vmatpush.msra.mxu0 %v3892
    %8295 = vmatpush.msra.mxu0 %v3876
    %8296 = vmatpush.msra.mxu0 %v3860
    %8297 = vmatpush.msra.mxu0 %v3844
    %8298 = vmatpush.msra.mxu0 %v3828
    %8299 = vmatpush.msra.mxu0 %v3812
    %8300 = vmatpush.msra.mxu0 %v3796
    %8301 = vmatmul.f32.gmra.mxu0 %v2737
    %v8302 = vpop.f32.mrf.mxu0
    %v8303 = vadd.f32 %v5884, %v8302
    %8304 = vdwg.mxu0
    %8305 = vmatpush.msra.mxu0 %v4292
    %8306 = vmatpush.msra.mxu0 %v4276
    %8307 = vmatpush.msra.mxu0 %v4260
    %8308 = vmatpush.msra.mxu0 %v4244
    %8309 = vmatpush.msra.mxu0 %v4228
    %8310 = vmatpush.msra.mxu0 %v4212
    %8311 = vmatpush.msra.mxu0 %v4196
    %8312 = vmatpush.msra.mxu0 %v4180
    %8313 = vmatpush.msra.mxu0 %v4164
    %8314 = vmatpush.msra.mxu0 %v4148
    %8315 = vmatpush.msra.mxu0 %v4132
    %8316 = vmatpush.msra.mxu0 %v4116
    %8317 = vmatpush.msra.mxu0 %v4100
    %8318 = vmatpush.msra.mxu0 %v4084
    %8319 = vmatpush.msra.mxu0 %v4068
    %8320 = vmatpush.msra.mxu0 %v4052
    %8321 = vmatmul.f32.gmra.mxu0 %v2738
    %v8322 = vpop.f32.mrf.mxu0
    %v8323 = vadd.f32 %v8303, %v8322
    %8324 = vdwg.mxu0
    %8325 = vmatpush.msra.mxu0 %v4548
    %8326 = vmatpush.msra.mxu0 %v4532
    %8327 = vmatpush.msra.mxu0 %v4516
    %8328 = vmatpush.msra.mxu0 %v4500
    %8329 = vmatpush.msra.mxu0 %v4484
    %8330 = vmatpush.msra.mxu0 %v4468
    %8331 = vmatpush.msra.mxu0 %v4452
    %8332 = vmatpush.msra.mxu0 %v4436
    %8333 = vmatpush.msra.mxu0 %v4420
    %8334 = vmatpush.msra.mxu0 %v4404
    %8335 = vmatpush.msra.mxu0 %v4388
    %8336 = vmatpush.msra.mxu0 %v4372
    %8337 = vmatpush.msra.mxu0 %v4356
    %8338 = vmatpush.msra.mxu0 %v4340
    %8339 = vmatpush.msra.mxu0 %v4324
    %8340 = vmatpush.msra.mxu0 %v4308
    %8341 = vmatmul.f32.gmra.mxu0 %v2739
    %v8342 = vpop.f32.mrf.mxu0
    %v8343 = vadd.f32 %v8323, %v8342
    %8344 = vdwg.mxu0
    %8345 = vmatpush.msra.mxu0 %v4804
    %8346 = vmatpush.msra.mxu0 %v4788
    %8347 = vmatpush.msra.mxu0 %v4772
    %8348 = vmatpush.msra.mxu0 %v4756
    %8349 = vmatpush.msra.mxu0 %v4740
    %8350 = vmatpush.msra.mxu0 %v4724
    %8351 = vmatpush.msra.mxu0 %v4708
    %8352 = vmatpush.msra.mxu0 %v4692
    %8353 = vmatpush.msra.mxu0 %v4676
    %8354 = vmatpush.msra.mxu0 %v4660
    %8355 = vmatpush.msra.mxu0 %v4644
    %8356 = vmatpush.msra.mxu0 %v4628
    %8357 = vmatpush.msra.mxu0 %v4612
    %8358 = vmatpush.msra.mxu0 %v4596
    %8359 = vmatpush.msra.mxu0 %v4580
    %8360 = vmatpush.msra.mxu0 %v4564
    %8361 = vmatmul.f32.gmra.mxu0 %v2740
    %v8362 = vpop.f32.mrf.mxu0
    %v8363 = vadd.f32 %v8343, %v8362
    %8364 = vdwg.mxu0
    %8365 = vmatpush.msra.mxu0 %v5060
    %8366 = vmatpush.msra.mxu0 %v5044
    %8367 = vmatpush.msra.mxu0 %v5028
    %8368 = vmatpush.msra.mxu0 %v5012
    %8369 = vmatpush.msra.mxu0 %v4996
    %8370 = vmatpush.msra.mxu0 %v4980
    %8371 = vmatpush.msra.mxu0 %v4964
    %8372 = vmatpush.msra.mxu0 %v4948
    %8373 = vmatpush.msra.mxu0 %v4932
    %8374 = vmatpush.msra.mxu0 %v4916
    %8375 = vmatpush.msra.mxu0 %v4900
    %8376 = vmatpush.msra.mxu0 %v4884
    %8377 = vmatpush.msra.mxu0 %v4868
    %8378 = vmatpush.msra.mxu0 %v4852
    %8379 = vmatpush.msra.mxu0 %v4836
    %8380 = vmatpush.msra.mxu0 %v4820
    %8381 = vmatmul.f32.gmra.mxu0 %v2741
    %v8382 = vpop.f32.mrf.mxu0
    %v8383 = vadd.f32 %v8363, %v8382
    %8384 = vdwg.mxu0
    %8385 = vmatpush.msra.mxu0 %v5316
    %8386 = vmatpush.msra.mxu0 %v5300
    %8387 = vmatpush.msra.mxu0 %v5284
    %8388 = vmatpush.msra.mxu0 %v5268
    %8389 = vmatpush.msra.mxu0 %v5252
    %8390 = vmatpush.msra.mxu0 %v5236
    %8391 = vmatpush.msra.mxu0 %v5220
    %8392 = vmatpush.msra.mxu0 %v5204
    %8393 = vmatpush.msra.mxu0 %v5188
    %8394 = vmatpush.msra.mxu0 %v5172
    %8395 = vmatpush.msra.mxu0 %v5156
    %8396 = vmatpush.msra.mxu0 %v5140
    %8397 = vmatpush.msra.mxu0 %v5124
    %8398 = vmatpush.msra.mxu0 %v5108
    %8399 = vmatpush.msra.mxu0 %v5092
    %8400 = vmatpush.msra.mxu0 %v5076
    %8401 = vmatmul.f32.gmra.mxu0 %v2742
    %v8402 = vpop.f32.mrf.mxu0
    %v8403 = vadd.f32 %v8383, %v8402
    %8404 = vdwg.mxu0
    %8405 = vmatpush.msra.mxu0 %v5572
    %8406 = vmatpush.msra.mxu0 %v5556
    %8407 = vmatpush.msra.mxu0 %v5540
    %8408 = vmatpush.msra.mxu0 %v5524
    %8409 = vmatpush.msra.mxu0 %v5508
    %8410 = vmatpush.msra.mxu0 %v5492
    %8411 = vmatpush.msra.mxu0 %v5476
    %8412 = vmatpush.msra.mxu0 %v5460
    %8413 = vmatpush.msra.mxu0 %v5444
    %8414 = vmatpush.msra.mxu0 %v5428
    %8415 = vmatpush.msra.mxu0 %v5412
    %8416 = vmatpush.msra.mxu0 %v5396
    %8417 = vmatpush.msra.mxu0 %v5380
    %8418 = vmatpush.msra.mxu0 %v5364
    %8419 = vmatpush.msra.mxu0 %v5348
    %8420 = vmatpush.msra.mxu0 %v5332
    %8421 = vmatmul.f32.gmra.mxu0 %v2743
    %v8422 = vpop.f32.mrf.mxu0
    %v8423 = vadd.f32 %v8403, %v8422
    %8424 = vdwg.mxu0
    %8425 = vmatpush.msra.mxu0 %v5828
    %8426 = vmatpush.msra.mxu0 %v5812
    %8427 = vmatpush.msra.mxu0 %v5796
    %8428 = vmatpush.msra.mxu0 %v5780
    %8429 = vmatpush.msra.mxu0 %v5764
    %8430 = vmatpush.msra.mxu0 %v5748
    %8431 = vmatpush.msra.mxu0 %v5732
    %8432 = vmatpush.msra.mxu0 %v5716
    %8433 = vmatpush.msra.mxu0 %v5700
    %8434 = vmatpush.msra.mxu0 %v5684
    %8435 = vmatpush.msra.mxu0 %v5668
    %8436 = vmatpush.msra.mxu0 %v5652
    %8437 = vmatpush.msra.mxu0 %v5636
    %8438 = vmatpush.msra.mxu0 %v5620
    %8439 = vmatpush.msra.mxu0 %v5604
    %8440 = vmatpush.msra.mxu0 %v5588
    %8441 = vmatmul.f32.gmra.mxu0 %v2744
    %v8442 = vpop.f32.mrf.mxu0
    %v8443 = vadd.f32 %v8423, %v8442
    %8444 = vdwg.mxu0
    %vm8445 = vcmp.gt.f32.partialorder %v6043, 0.0
    %vm8446 = vcmp.gt.f32.partialorder %v6203, 0.0
    %vm8447 = vcmp.gt.f32.partialorder %v6363, 0.0
    %vm8448 = vcmp.gt.f32.partialorder %v6523, 0.0
    %vm8449 = vcmp.gt.f32.partialorder %v6683, 0.0
    %vm8450 = vcmp.gt.f32.partialorder %v6843, 0.0
    %vm8451 = vcmp.gt.f32.partialorder %v7003, 0.0
    %vm8452 = vcmp.gt.f32.partialorder %v7163, 0.0
    %vm8453 = vcmp.gt.f32.partialorder %v7323, 0.0
    %vm8454 = vcmp.gt.f32.partialorder %v7483, 0.0
    %vm8455 = vcmp.gt.f32.partialorder %v7643, 0.0
    %vm8456 = vcmp.gt.f32.partialorder %v7803, 0.0
    %vm8457 = vcmp.gt.f32.partialorder %v7963, 0.0
    %vm8458 = vcmp.gt.f32.partialorder %v8123, 0.0
    %vm8459 = vcmp.gt.f32.partialorder %v8283, 0.0
    %vm8460 = vcmp.gt.f32.partialorder %v8443, 0.0
    %v8461 = vmul.f32 %v6043, 0.2
    %v8462 = vmul.f32 %v6203, 0.2
    %v8463 = vmul.f32 %v6363, 0.2
    %v8464 = vmul.f32 %v6523, 0.2
    %v8465 = vmul.f32 %v6683, 0.2
    %v8466 = vmul.f32 %v6843, 0.2
    %v8467 = vmul.f32 %v7003, 0.2
    %v8468 = vmul.f32 %v7163, 0.2
    %v8469 = vmul.f32 %v7323, 0.2
    %v8470 = vmul.f32 %v7483, 0.2
    %v8471 = vmul.f32 %v7643, 0.2
    %v8472 = vmul.f32 %v7803, 0.2
    %v8473 = vmul.f32 %v7963, 0.2
    %v8474 = vmul.f32 %v8123, 0.2
    %v8475 = vmul.f32 %v8283, 0.2
    %v8476 = vmul.f32 %v8443, 0.2
    %v8477 = vsel %vm8445, %v6043, %v8461
    %v8478 = vsel %vm8446, %v6203, %v8462
    %v8479 = vsel %vm8447, %v6363, %v8463
    %v8480 = vsel %vm8448, %v6523, %v8464
    %v8481 = vsel %vm8449, %v6683, %v8465
    %v8482 = vsel %vm8450, %v6843, %v8466
    %v8483 = vsel %vm8451, %v7003, %v8467
    %v8484 = vsel %vm8452, %v7163, %v8468
    %v8485 = vsel %vm8453, %v7323, %v8469
    %v8486 = vsel %vm8454, %v7483, %v8470
    %v8487 = vsel %vm8455, %v7643, %v8471
    %v8488 = vsel %vm8456, %v7803, %v8472
    %v8489 = vsel %vm8457, %v7963, %v8473
    %v8490 = vsel %vm8458, %v8123, %v8474
    %v8491 = vsel %vm8459, %v8283, %v8475
    %v8492 = vsel %vm8460, %v8443, %v8476
    %v8493 = vrot.slane %v8477, 4
    %v8494 = vadd.f32 %v8477, %v8493
    %v8495 = vrot.slane %v8494, 2
    %v8496 = vadd.f32 %v8494, %v8495
    %v8497 = vrot.slane %v8496, 1
    %v8498 = vadd.f32 %v8496, %v8497
    %v8499 = vrot.slane %v8478, 4
    %v8500 = vadd.f32 %v8478, %v8499
    %v8501 = vrot.slane %v8500, 2
    %v8502 = vadd.f32 %v8500, %v8501
    %v8503 = vrot.slane %v8502, 1
    %v8504 = vadd.f32 %v8502, %v8503
    %v8505 = vrot.slane %v8479, 4
    %v8506 = vadd.f32 %v8479, %v8505
    %v8507 = vrot.slane %v8506, 2
    %v8508 = vadd.f32 %v8506, %v8507
    %v8509 = vrot.slane %v8508, 1
    %v8510 = vadd.f32 %v8508, %v8509
    %v8511 = vrot.slane %v8480, 4
    %v8512 = vadd.f32 %v8480, %v8511
    %v8513 = vrot.slane %v8512, 2
    %v8514 = vadd.f32 %v8512, %v8513
    %v8515 = vrot.slane %v8514, 1
    %v8516 = vadd.f32 %v8514, %v8515
    %v8517 = vrot.slane %v8481, 4
    %v8518 = vadd.f32 %v8481, %v8517
    %v8519 = vrot.slane %v8518, 2
    %v8520 = vadd.f32 %v8518, %v8519
    %v8521 = vrot.slane %v8520, 1
    %v8522 = vadd.f32 %v8520, %v8521
    %v8523 = vrot.slane %v8482, 4
    %v8524 = vadd.f32 %v8482, %v8523
    %v8525 = vrot.slane %v8524, 2
    %v8526 = vadd.f32 %v8524, %v8525
    %v8527 = vrot.slane %v8526, 1
    %v8528 = vadd.f32 %v8526, %v8527
    %v8529 = vrot.slane %v8483, 4
    %v8530 = vadd.f32 %v8483, %v8529
    %v8531 = vrot.slane %v8530, 2
    %v8532 = vadd.f32 %v8530, %v8531
    %v8533 = vrot.slane %v8532, 1
    %v8534 = vadd.f32 %v8532, %v8533
    %v8535 = vrot.slane %v8484, 4
    %v8536 = vadd.f32 %v8484, %v8535
    %v8537 = vrot.slane %v8536, 2
    %v8538 = vadd.f32 %v8536, %v8537
    %v8539 = vrot.slane %v8538, 1
    %v8540 = vadd.f32 %v8538, %v8539
    %v8541 = vrot.slane %v8485, 4
    %v8542 = vadd.f32 %v8485, %v8541
    %v8543 = vrot.slane %v8542, 2
    %v8544 = vadd.f32 %v8542, %v8543
    %v8545 = vrot.slane %v8544, 1
    %v8546 = vadd.f32 %v8544, %v8545
    %v8547 = vrot.slane %v8486, 4
    %v8548 = vadd.f32 %v8486, %v8547
    %v8549 = vrot.slane %v8548, 2
    %v8550 = vadd.f32 %v8548, %v8549
    %v8551 = vrot.slane %v8550, 1
    %v8552 = vadd.f32 %v8550, %v8551
    %v8553 = vrot.slane %v8487, 4
    %v8554 = vadd.f32 %v8487, %v8553
    %v8555 = vrot.slane %v8554, 2
    %v8556 = vadd.f32 %v8554, %v8555
    %v8557 = vrot.slane %v8556, 1
    %v8558 = vadd.f32 %v8556, %v8557
    %v8559 = vrot.slane %v8488, 4
    %v8560 = vadd.f32 %v8488, %v8559
    %v8561 = vrot.slane %v8560, 2
    %v8562 = vadd.f32 %v8560, %v8561
    %v8563 = vrot.slane %v8562, 1
    %v8564 = vadd.f32 %v8562, %v8563
    %v8565 = vrot.slane %v8489, 4
    %v8566 = vadd.f32 %v8489, %v8565
    %v8567 = vrot.slane %v8566, 2
    %v8568 = vadd.f32 %v8566, %v8567
    %v8569 = vrot.slane %v8568, 1
    %v8570 = vadd.f32 %v8568, %v8569
    %v8571 = vrot.slane %v8490, 4
    %v8572 = vadd.f32 %v8490, %v8571
    %v8573 = vrot.slane %v8572, 2
    %v8574 = vadd.f32 %v8572, %v8573
    %v8575 = vrot.slane %v8574, 1
    %v8576 = vadd.f32 %v8574, %v8575
    %v8577 = vrot.slane %v8491, 4
    %v8578 = vadd.f32 %v8491, %v8577
    %v8579 = vrot.slane %v8578, 2
    %v8580 = vadd.f32 %v8578, %v8579
    %v8581 = vrot.slane %v8580, 1
    %v8582 = vadd.f32 %v8580, %v8581
    %v8583 = vrot.slane %v8492, 4
    %v8584 = vadd.f32 %v8492, %v8583
    %v8585 = vrot.slane %v8584, 2
    %v8586 = vadd.f32 %v8584, %v8585
    %v8587 = vrot.slane %v8586, 1
    %v8588 = vadd.f32 %v8586, %v8587
    %v8589 = vmul.f32 %v8477, %v8477
    %v8590 = vmul.f32 %v8478, %v8478
    %v8591 = vmul.f32 %v8479, %v8479
    %v8592 = vmul.f32 %v8480, %v8480
    %v8593 = vmul.f32 %v8481, %v8481
    %v8594 = vmul.f32 %v8482, %v8482
    %v8595 = vmul.f32 %v8483, %v8483
    %v8596 = vmul.f32 %v8484, %v8484
    %v8597 = vmul.f32 %v8485, %v8485
    %v8598 = vmul.f32 %v8486, %v8486
    %v8599 = vmul.f32 %v8487, %v8487
    %v8600 = vmul.f32 %v8488, %v8488
    %v8601 = vmul.f32 %v8489, %v8489
    %v8602 = vmul.f32 %v8490, %v8490
    %v8603 = vmul.f32 %v8491, %v8491
    %v8604 = vmul.f32 %v8492, %v8492
    %v8605 = vrot.slane %v8589, 4
    %v8606 = vadd.f32 %v8589, %v8605
    %v8607 = vrot.slane %v8606, 2
    %v8608 = vadd.f32 %v8606, %v8607
    %v8609 = vrot.slane %v8608, 1
    %v8610 = vadd.f32 %v8608, %v8609
    %v8611 = vrot.slane %v8590, 4
    %v8612 = vadd.f32 %v8590, %v8611
    %v8613 = vrot.slane %v8612, 2
    %v8614 = vadd.f32 %v8612, %v8613
    %v8615 = vrot.slane %v8614, 1
    %v8616 = vadd.f32 %v8614, %v8615
    %v8617 = vrot.slane %v8591, 4
    %v8618 = vadd.f32 %v8591, %v8617
    %v8619 = vrot.slane %v8618, 2
    %v8620 = vadd.f32 %v8618, %v8619
    %v8621 = vrot.slane %v8620, 1
    %v8622 = vadd.f32 %v8620, %v8621
    %v8623 = vrot.slane %v8592, 4
    %v8624 = vadd.f32 %v8592, %v8623
    %v8625 = vrot.slane %v8624, 2
    %v8626 = vadd.f32 %v8624, %v8625
    %v8627 = vrot.slane %v8626, 1
    %v8628 = vadd.f32 %v8626, %v8627
    %v8629 = vrot.slane %v8593, 4
    %v8630 = vadd.f32 %v8593, %v8629
    %v8631 = vrot.slane %v8630, 2
    %v8632 = vadd.f32 %v8630, %v8631
    %v8633 = vrot.slane %v8632, 1
    %v8634 = vadd.f32 %v8632, %v8633
    %v8635 = vrot.slane %v8594, 4
    %v8636 = vadd.f32 %v8594, %v8635
    %v8637 = vrot.slane %v8636, 2
    %v8638 = vadd.f32 %v8636, %v8637
    %v8639 = vrot.slane %v8638, 1
    %v8640 = vadd.f32 %v8638, %v8639
    %v8641 = vrot.slane %v8595, 4
    %v8642 = vadd.f32 %v8595, %v8641
    %v8643 = vrot.slane %v8642, 2
    %v8644 = vadd.f32 %v8642, %v8643
    %v8645 = vrot.slane %v8644, 1
    %v8646 = vadd.f32 %v8644, %v8645
    %v8647 = vrot.slane %v8596, 4
    %v8648 = vadd.f32 %v8596, %v8647
    %v8649 = vrot.slane %v8648, 2
    %v8650 = vadd.f32 %v8648, %v8649
    %v8651 = vrot.slane %v8650, 1
    %v8652 = vadd.f32 %v8650, %v8651
    %v8653 = vrot.slane %v8597, 4
    %v8654 = vadd.f32 %v8597, %v8653
    %v8655 = vrot.slane %v8654, 2
    %v8656 = vadd.f32 %v8654, %v8655
    %v8657 = vrot.slane %v8656, 1
    %v8658 = vadd.f32 %v8656, %v8657
    %v8659 = vrot.slane %v8598, 4
    %v8660 = vadd.f32 %v8598, %v8659
    %v8661 = vrot.slane %v8660, 2
    %v8662 = vadd.f32 %v8660, %v8661
    %v8663 = vrot.slane %v8662, 1
    %v8664 = vadd.f32 %v8662, %v8663
    %v8665 = vrot.slane %v8599, 4
    %v8666 = vadd.f32 %v8599, %v8665
    %v8667 = vrot.slane %v8666, 2
    %v8668 = vadd.f32 %v8666, %v8667
    %v8669 = vrot.slane %v8668, 1
    %v8670 = vadd.f32 %v8668, %v8669
    %v8671 = vrot.slane %v8600, 4
    %v8672 = vadd.f32 %v8600, %v8671
    %v8673 = vrot.slane %v8672, 2
    %v8674 = vadd.f32 %v8672, %v8673
    %v8675 = vrot.slane %v8674, 1
    %v8676 = vadd.f32 %v8674, %v8675
    %v8677 = vrot.slane %v8601, 4
    %v8678 = vadd.f32 %v8601, %v8677
    %v8679 = vrot.slane %v8678, 2
    %v8680 = vadd.f32 %v8678, %v8679
    %v8681 = vrot.slane %v8680, 1
    %v8682 = vadd.f32 %v8680, %v8681
    %v8683 = vrot.slane %v8602, 4
    %v8684 = vadd.f32 %v8602, %v8683
    %v8685 = vrot.slane %v8684, 2
    %v8686 = vadd.f32 %v8684, %v8685
    %v8687 = vrot.slane %v8686, 1
    %v8688 = vadd.f32 %v8686, %v8687
    %v8689 = vrot.slane %v8603, 4
    %v8690 = vadd.f32 %v8603, %v8689
    %v8691 = vrot.slane %v8690, 2
    %v8692 = vadd.f32 %v8690, %v8691
    %v8693 = vrot.slane %v8692, 1
    %v8694 = vadd.f32 %v8692, %v8693
    %v8695 = vrot.slane %v8604, 4
    %v8696 = vadd.f32 %v8604, %v8695
    %v8697 = vrot.slane %v8696, 2
    %v8698 = vadd.f32 %v8696, %v8697
    %v8699 = vrot.slane %v8698, 1
    %v8700 = vadd.f32 %v8698, %v8699
    %v8701 = vmul.f32 %v8498, 0.125
    %v8702 = vmul.f32 %v8504, 0.125
    %v8703 = vmul.f32 %v8510, 0.125
    %v8704 = vmul.f32 %v8516, 0.125
    %v8705 = vmul.f32 %v8522, 0.125
    %v8706 = vmul.f32 %v8528, 0.125
    %v8707 = vmul.f32 %v8534, 0.125
    %v8708 = vmul.f32 %v8540, 0.125
    %v8709 = vmul.f32 %v8546, 0.125
    %v8710 = vmul.f32 %v8552, 0.125
    %v8711 = vmul.f32 %v8558, 0.125
    %v8712 = vmul.f32 %v8564, 0.125
    %v8713 = vmul.f32 %v8570, 0.125
    %v8714 = vmul.f32 %v8576, 0.125
    %v8715 = vmul.f32 %v8582, 0.125
    %v8716 = vmul.f32 %v8588, 0.125
    %v8717 = vmul.f32 %v8610, 0.125
    %v8718 = vmul.f32 %v8616, 0.125
    %v8719 = vmul.f32 %v8622, 0.125
    %v8720 = vmul.f32 %v8628, 0.125
    %v8721 = vmul.f32 %v8634, 0.125
    %v8722 = vmul.f32 %v8640, 0.125
    %v8723 = vmul.f32 %v8646, 0.125
    %v8724 = vmul.f32 %v8652, 0.125
    %v8725 = vmul.f32 %v8658, 0.125
    %v8726 = vmul.f32 %v8664, 0.125
    %v8727 = vmul.f32 %v8670, 0.125
    %v8728 = vmul.f32 %v8676, 0.125
    %v8729 = vmul.f32 %v8682, 0.125
    %v8730 = vmul.f32 %v8688, 0.125
    %v8731 = vmul.f32 %v8694, 0.125
    %v8732 = vmul.f32 %v8700, 0.125
    %v8733 = vmul.f32 %v8701, %v8701
    %v8734 = vmul.f32 %v8702, %v8702
    %v8735 = vmul.f32 %v8703, %v8703
    %v8736 = vmul.f32 %v8704, %v8704
    %v8737 = vmul.f32 %v8705, %v8705
    %v8738 = vmul.f32 %v8706, %v8706
    %v8739 = vmul.f32 %v8707, %v8707
    %v8740 = vmul.f32 %v8708, %v8708
    %v8741 = vmul.f32 %v8709, %v8709
    %v8742 = vmul.f32 %v8710, %v8710
    %v8743 = vmul.f32 %v8711, %v8711
    %v8744 = vmul.f32 %v8712, %v8712
    %v8745 = vmul.f32 %v8713, %v8713
    %v8746 = vmul.f32 %v8714, %v8714
    %v8747 = vmul.f32 %v8715, %v8715
    %v8748 = vmul.f32 %v8716, %v8716
    %v8749 = vsub.f32 %v8717, %v8733
    %v8750 = vsub.f32 %v8718, %v8734
    %v8751 = vsub.f32 %v8719, %v8735
    %v8752 = vsub.f32 %v8720, %v8736
    %v8753 = vsub.f32 %v8721, %v8737
    %v8754 = vsub.f32 %v8722, %v8738
    %v8755 = vsub.f32 %v8723, %v8739
    %v8756 = vsub.f32 %v8724, %v8740
    %v8757 = vsub.f32 %v8725, %v8741
    %v8758 = vsub.f32 %v8726, %v8742
    %v8759 = vsub.f32 %v8727, %v8743
    %v8760 = vsub.f32 %v8728, %v8744
    %v8761 = vsub.f32 %v8729, %v8745
    %v8762 = vsub.f32 %v8730, %v8746
    %v8763 = vsub.f32 %v8731, %v8747
    %v8764 = vsub.f32 %v8732, %v8748
    %v8765 = vmax.f32 %v8749, 0.0
    %v8766 = vmax.f32 %v8750, 0.0
    %v8767 = vmax.f32 %v8751, 0.0
    %v8768 = vmax.f32 %v8752, 0.0
    %v8769 = vmax.f32 %v8753, 0.0
    %v8770 = vmax.f32 %v8754, 0.0
    %v8771 = vmax.f32 %v8755, 0.0
    %v8772 = vmax.f32 %v8756, 0.0
    %v8773 = vmax.f32 %v8757, 0.0
    %v8774 = vmax.f32 %v8758, 0.0
    %v8775 = vmax.f32 %v8759, 0.0
    %v8776 = vmax.f32 %v8760, 0.0
    %v8777 = vmax.f32 %v8761, 0.0
    %v8778 = vmax.f32 %v8762, 0.0
    %v8779 = vmax.f32 %v8763, 0.0
    %v8780 = vmax.f32 %v8764, 0.0
    %v8781 = vadd.f32 %v8765, 1e-05
    %v8782 = vadd.f32 %v8766, 1e-05
    %v8783 = vadd.f32 %v8767, 1e-05
    %v8784 = vadd.f32 %v8768, 1e-05
    %v8785 = vadd.f32 %v8769, 1e-05
    %v8786 = vadd.f32 %v8770, 1e-05
    %v8787 = vadd.f32 %v8771, 1e-05
    %v8788 = vadd.f32 %v8772, 1e-05
    %v8789 = vadd.f32 %v8773, 1e-05
    %v8790 = vadd.f32 %v8774, 1e-05
    %v8791 = vadd.f32 %v8775, 1e-05
    %v8792 = vadd.f32 %v8776, 1e-05
    %v8793 = vadd.f32 %v8777, 1e-05
    %v8794 = vadd.f32 %v8778, 1e-05
    %v8795 = vadd.f32 %v8779, 1e-05
    %v8796 = vadd.f32 %v8780, 1e-05
    %v8797 = vrsqrt.pop %v8781
    %v8798 = vmul.f32 %v8797, %v8781
    %v8799 = vmul.f32 %v8798, %v8797
    %v8800 = vmul.f32 0.5, %v8799
    %v8801 = vsub.f32 1.5, %v8800
    %v8802 = vmul.f32 %v8797, %v8801
    %vm8803 = vweird.f32 %v8781
    %vm8804 = vweird.f32 %v8797
    %vm8805 = vmor %vm8803, %vm8804
    %v8806 = vsel %vm8805, %v8797, %v8802
    %v8807 = vrsqrt.pop %v8782
    %v8808 = vmul.f32 %v8807, %v8782
    %v8809 = vmul.f32 %v8808, %v8807
    %v8810 = vmul.f32 0.5, %v8809
    %v8811 = vsub.f32 1.5, %v8810
    %v8812 = vmul.f32 %v8807, %v8811
    %vm8813 = vweird.f32 %v8782
    %vm8814 = vweird.f32 %v8807
    %vm8815 = vmor %vm8813, %vm8814
    %v8816 = vsel %vm8815, %v8807, %v8812
    %v8817 = vrsqrt.pop %v8783
    %v8818 = vmul.f32 %v8817, %v8783
    %v8819 = vmul.f32 %v8818, %v8817
    %v8820 = vmul.f32 0.5, %v8819
    %v8821 = vsub.f32 1.5, %v8820
    %v8822 = vmul.f32 %v8817, %v8821
    %vm8823 = vweird.f32 %v8783
    %vm8824 = vweird.f32 %v8817
    %vm8825 = vmor %vm8823, %vm8824
    %v8826 = vsel %vm8825, %v8817, %v8822
    %v8827 = vrsqrt.pop %v8784
    %v8828 = vmul.f32 %v8827, %v8784
    %v8829 = vmul.f32 %v8828, %v8827
    %v8830 = vmul.f32 0.5, %v8829
    %v8831 = vsub.f32 1.5, %v8830
    %v8832 = vmul.f32 %v8827, %v8831
    %vm8833 = vweird.f32 %v8784
    %vm8834 = vweird.f32 %v8827
    %vm8835 = vmor %vm8833, %vm8834
    %v8836 = vsel %vm8835, %v8827, %v8832
    %v8837 = vrsqrt.pop %v8785
    %v8838 = vmul.f32 %v8837, %v8785
    %v8839 = vmul.f32 %v8838, %v8837
    %v8840 = vmul.f32 0.5, %v8839
    %v8841 = vsub.f32 1.5, %v8840
    %v8842 = vmul.f32 %v8837, %v8841
    %vm8843 = vweird.f32 %v8785
    %vm8844 = vweird.f32 %v8837
    %vm8845 = vmor %vm8843, %vm8844
    %v8846 = vsel %vm8845, %v8837, %v8842
    %v8847 = vrsqrt.pop %v8786
    %v8848 = vmul.f32 %v8847, %v8786
    %v8849 = vmul.f32 %v8848, %v8847
    %v8850 = vmul.f32 0.5, %v8849
    %v8851 = vsub.f32 1.5, %v8850
    %v8852 = vmul.f32 %v8847, %v8851
    %vm8853 = vweird.f32 %v8786
    %vm8854 = vweird.f32 %v8847
    %vm8855 = vmor %vm8853, %vm8854
    %v8856 = vsel %vm8855, %v8847, %v8852
    %v8857 = vrsqrt.pop %v8787
    %v8858 = vmul.f32 %v8857, %v8787
    %v8859 = vmul.f32 %v8858, %v8857
    %v8860 = vmul.f32 0.5, %v8859
    %v8861 = vsub.f32 1.5, %v8860
    %v8862 = vmul.f32 %v8857, %v8861
    %vm8863 = vweird.f32 %v8787
    %vm8864 = vweird.f32 %v8857
    %vm8865 = vmor %vm8863, %vm8864
    %v8866 = vsel %vm8865, %v8857, %v8862
    %v8867 = vrsqrt.pop %v8788
    %v8868 = vmul.f32 %v8867, %v8788
    %v8869 = vmul.f32 %v8868, %v8867
    %v8870 = vmul.f32 0.5, %v8869
    %v8871 = vsub.f32 1.5, %v8870
    %v8872 = vmul.f32 %v8867, %v8871
    %vm8873 = vweird.f32 %v8788
    %vm8874 = vweird.f32 %v8867
    %vm8875 = vmor %vm8873, %vm8874
    %v8876 = vsel %vm8875, %v8867, %v8872
    %v8877 = vrsqrt.pop %v8789
    %v8878 = vmul.f32 %v8877, %v8789
    %v8879 = vmul.f32 %v8878, %v8877
    %v8880 = vmul.f32 0.5, %v8879
    %v8881 = vsub.f32 1.5, %v8880
    %v8882 = vmul.f32 %v8877, %v8881
    %vm8883 = vweird.f32 %v8789
    %vm8884 = vweird.f32 %v8877
    %vm8885 = vmor %vm8883, %vm8884
    %v8886 = vsel %vm8885, %v8877, %v8882
    %v8887 = vrsqrt.pop %v8790
    %v8888 = vmul.f32 %v8887, %v8790
    %v8889 = vmul.f32 %v8888, %v8887
    %v8890 = vmul.f32 0.5, %v8889
    %v8891 = vsub.f32 1.5, %v8890
    %v8892 = vmul.f32 %v8887, %v8891
    %vm8893 = vweird.f32 %v8790
    %vm8894 = vweird.f32 %v8887
    %vm8895 = vmor %vm8893, %vm8894
    %v8896 = vsel %vm8895, %v8887, %v8892
    %v8897 = vrsqrt.pop %v8791
    %v8898 = vmul.f32 %v8897, %v8791
    %v8899 = vmul.f32 %v8898, %v8897
    %v8900 = vmul.f32 0.5, %v8899
    %v8901 = vsub.f32 1.5, %v8900
    %v8902 = vmul.f32 %v8897, %v8901
    %vm8903 = vweird.f32 %v8791
    %vm8904 = vweird.f32 %v8897
    %vm8905 = vmor %vm8903, %vm8904
    %v8906 = vsel %vm8905, %v8897, %v8902
    %v8907 = vrsqrt.pop %v8792
    %v8908 = vmul.f32 %v8907, %v8792
    %v8909 = vmul.f32 %v8908, %v8907
    %v8910 = vmul.f32 0.5, %v8909
    %v8911 = vsub.f32 1.5, %v8910
    %v8912 = vmul.f32 %v8907, %v8911
    %vm8913 = vweird.f32 %v8792
    %vm8914 = vweird.f32 %v8907
    %vm8915 = vmor %vm8913, %vm8914
    %v8916 = vsel %vm8915, %v8907, %v8912
    %v8917 = vrsqrt.pop %v8793
    %v8918 = vmul.f32 %v8917, %v8793
    %v8919 = vmul.f32 %v8918, %v8917
    %v8920 = vmul.f32 0.5, %v8919
    %v8921 = vsub.f32 1.5, %v8920
    %v8922 = vmul.f32 %v8917, %v8921
    %vm8923 = vweird.f32 %v8793
    %vm8924 = vweird.f32 %v8917
    %vm8925 = vmor %vm8923, %vm8924
    %v8926 = vsel %vm8925, %v8917, %v8922
    %v8927 = vrsqrt.pop %v8794
    %v8928 = vmul.f32 %v8927, %v8794
    %v8929 = vmul.f32 %v8928, %v8927
    %v8930 = vmul.f32 0.5, %v8929
    %v8931 = vsub.f32 1.5, %v8930
    %v8932 = vmul.f32 %v8927, %v8931
    %vm8933 = vweird.f32 %v8794
    %vm8934 = vweird.f32 %v8927
    %vm8935 = vmor %vm8933, %vm8934
    %v8936 = vsel %vm8935, %v8927, %v8932
    %v8937 = vrsqrt.pop %v8795
    %v8938 = vmul.f32 %v8937, %v8795
    %v8939 = vmul.f32 %v8938, %v8937
    %v8940 = vmul.f32 0.5, %v8939
    %v8941 = vsub.f32 1.5, %v8940
    %v8942 = vmul.f32 %v8937, %v8941
    %vm8943 = vweird.f32 %v8795
    %vm8944 = vweird.f32 %v8937
    %vm8945 = vmor %vm8943, %vm8944
    %v8946 = vsel %vm8945, %v8937, %v8942
    %v8947 = vrsqrt.pop %v8796
    %v8948 = vmul.f32 %v8947, %v8796
    %v8949 = vmul.f32 %v8948, %v8947
    %v8950 = vmul.f32 0.5, %v8949
    %v8951 = vsub.f32 1.5, %v8950
    %v8952 = vmul.f32 %v8947, %v8951
    %vm8953 = vweird.f32 %v8796
    %vm8954 = vweird.f32 %v8947
    %vm8955 = vmor %vm8953, %vm8954
    %v8956 = vsel %vm8955, %v8947, %v8952
    %v8973 = vrot.slane %v8816, 4
    %v8974 = vrot.slane %v8836, 4
    %v8975 = vrot.slane %v8856, 4
    %v8976 = vrot.slane %v8876, 4
    %v8977 = vrot.slane %v8896, 4
    %v8978 = vrot.slane %v8916, 4
    %v8979 = vrot.slane %v8936, 4
    %v8980 = vrot.slane %v8956, 4
    %v8981 = vsel %vm313, %v8806, %v8973
    %v8982 = vsel %vm313, %v8826, %v8974
    %v8983 = vsel %vm313, %v8846, %v8975
    %v8984 = vsel %vm313, %v8866, %v8976
    %v8985 = vsel %vm313, %v8886, %v8977
    %v8986 = vsel %vm313, %v8906, %v8978
    %v8987 = vsel %vm313, %v8926, %v8979
    %v8988 = vsel %vm313, %v8946, %v8980
    %v8989 = vrot.slane %v8981, 7
    %v8990 = vrot.slane %v8982, 7
    %v8991 = vrot.slane %v8983, 7
    %v8992 = vrot.slane %v8984, 7
    %v8993 = vrot.slane %v8985, 7
    %v8994 = vrot.slane %v8986, 7
    %v8995 = vrot.slane %v8987, 7
    %v8996 = vrot.slane %v8988, 7
    %v9005 = vmul.f32 %v3773, %v8989
    %v9006 = vmul.f32 %v3774, %v8990
    %v9007 = vmul.f32 %v3775, %v8991
    %v9008 = vmul.f32 %v3776, %v8992
    %v9009 = vmul.f32 %v3777, %v8993
    %v9010 = vmul.f32 %v3778, %v8994
    %v9011 = vmul.f32 %v3779, %v8995
    %v9012 = vmul.f32 %v3780, %v8996
    %v9021 = vperm.slane %v9005, 1
    %v9022 = vperm.slane %v9005, 5
    %v9023 = vperm.slane %v9006, 1
    %v9024 = vperm.slane %v9006, 5
    %v9025 = vperm.slane %v9007, 1
    %v9026 = vperm.slane %v9007, 5
    %v9027 = vperm.slane %v9008, 1
    %v9028 = vperm.slane %v9008, 5
    %v9029 = vperm.slane %v9009, 1
    %v9030 = vperm.slane %v9009, 5
    %v9031 = vperm.slane %v9010, 1
    %v9032 = vperm.slane %v9010, 5
    %v9033 = vperm.slane %v9011, 1
    %v9034 = vperm.slane %v9011, 5
    %v9035 = vperm.slane %v9012, 1
    %v9036 = vperm.slane %v9012, 5
    %v9053 = vmul.f32 %v8701, %v9021
    %v9054 = vmul.f32 %v8702, %v9022
    %v9055 = vmul.f32 %v8703, %v9023
    %v9056 = vmul.f32 %v8704, %v9024
    %v9057 = vmul.f32 %v8705, %v9025
    %v9058 = vmul.f32 %v8706, %v9026
    %v9059 = vmul.f32 %v8707, %v9027
    %v9060 = vmul.f32 %v8708, %v9028
    %v9061 = vmul.f32 %v8709, %v9029
    %v9062 = vmul.f32 %v8710, %v9030
    %v9063 = vmul.f32 %v8711, %v9031
    %v9064 = vmul.f32 %v8712, %v9032
    %v9065 = vmul.f32 %v8713, %v9033
    %v9066 = vmul.f32 %v8714, %v9034
    %v9067 = vmul.f32 %v8715, %v9035
    %v9068 = vmul.f32 %v8716, %v9036
    %v9085 = vrot.slane %v9054, 4
    %v9086 = vrot.slane %v9056, 4
    %v9087 = vrot.slane %v9058, 4
    %v9088 = vrot.slane %v9060, 4
    %v9089 = vrot.slane %v9062, 4
    %v9090 = vrot.slane %v9064, 4
    %v9091 = vrot.slane %v9066, 4
    %v9092 = vrot.slane %v9068, 4
    %v9093 = vsel %vm313, %v9053, %v9085
    %v9094 = vsel %vm313, %v9055, %v9086
    %v9095 = vsel %vm313, %v9057, %v9087
    %v9096 = vsel %vm313, %v9059, %v9088
    %v9097 = vsel %vm313, %v9061, %v9089
    %v9098 = vsel %vm313, %v9063, %v9090
    %v9099 = vsel %vm313, %v9065, %v9091
    %v9100 = vsel %vm313, %v9067, %v9092
    %v9101 = vrot.slane %v9093, 6
    %v9102 = vrot.slane %v9094, 6
    %v9103 = vrot.slane %v9095, 6
    %v9104 = vrot.slane %v9096, 6
    %v9105 = vrot.slane %v9097, 6
    %v9106 = vrot.slane %v9098, 6
    %v9107 = vrot.slane %v9099, 6
    %v9108 = vrot.slane %v9100, 6
    %v9117 = vsub.f32 %v3773, %v9101
    %v9118 = vsub.f32 %v3774, %v9102
    %v9119 = vsub.f32 %v3775, %v9103
    %v9120 = vsub.f32 %v3776, %v9104
    %v9121 = vsub.f32 %v3777, %v9105
    %v9122 = vsub.f32 %v3778, %v9106
    %v9123 = vsub.f32 %v3779, %v9107
    %v9124 = vsub.f32 %v3780, %v9108
    %v9125 = vperm.slane %v9021, 1
    %v9126 = vperm.slane %v9022, 1
    %v9127 = vperm.slane %v9023, 1
    %v9128 = vperm.slane %v9024, 1
    %v9129 = vperm.slane %v9025, 1
    %v9130 = vperm.slane %v9026, 1
    %v9131 = vperm.slane %v9027, 1
    %v9132 = vperm.slane %v9028, 1
    %v9133 = vperm.slane %v9029, 1
    %v9134 = vperm.slane %v9030, 1
    %v9135 = vperm.slane %v9031, 1
    %v9136 = vperm.slane %v9032, 1
    %v9137 = vperm.slane %v9033, 1
    %v9138 = vperm.slane %v9034, 1
    %v9139 = vperm.slane %v9035, 1
    %v9140 = vperm.slane %v9036, 1
    %v9141 = vmul.f32 %v8477, %v9125
    %v9142 = vmul.f32 %v8478, %v9126
    %v9143 = vmul.f32 %v8479, %v9127
    %v9144 = vmul.f32 %v8480, %v9128
    %v9145 = vmul.f32 %v8481, %v9129
    %v9146 = vmul.f32 %v8482, %v9130
    %v9147 = vmul.f32 %v8483, %v9131
    %v9148 = vmul.f32 %v8484, %v9132
    %v9149 = vmul.f32 %v8485, %v9133
    %v9150 = vmul.f32 %v8486, %v9134
    %v9151 = vmul.f32 %v8487, %v9135
    %v9152 = vmul.f32 %v8488, %v9136
    %v9153 = vmul.f32 %v8489, %v9137
    %v9154 = vmul.f32 %v8490, %v9138
    %v9155 = vmul.f32 %v8491, %v9139
    %v9156 = vmul.f32 %v8492, %v9140
    %v9165 = vperm.slane %v9117, 2
    %v9166 = vperm.slane %v9117, 6
    %v9167 = vperm.slane %v9118, 2
    %v9168 = vperm.slane %v9118, 6
    %v9169 = vperm.slane %v9119, 2
    %v9170 = vperm.slane %v9119, 6
    %v9171 = vperm.slane %v9120, 2
    %v9172 = vperm.slane %v9120, 6
    %v9173 = vperm.slane %v9121, 2
    %v9174 = vperm.slane %v9121, 6
    %v9175 = vperm.slane %v9122, 2
    %v9176 = vperm.slane %v9122, 6
    %v9177 = vperm.slane %v9123, 2
    %v9178 = vperm.slane %v9123, 6
    %v9179 = vperm.slane %v9124, 2
    %v9180 = vperm.slane %v9124, 6
    %v9197 = vperm.slane %v9165, 2
    %v9198 = vperm.slane %v9166, 2
    %v9199 = vperm.slane %v9167, 2
    %v9200 = vperm.slane %v9168, 2
    %v9201 = vperm.slane %v9169, 2
    %v9202 = vperm.slane %v9170, 2
    %v9203 = vperm.slane %v9171, 2
    %v9204 = vperm.slane %v9172, 2
    %v9205 = vperm.slane %v9173, 2
    %v9206 = vperm.slane %v9174, 2
    %v9207 = vperm.slane %v9175, 2
    %v9208 = vperm.slane %v9176, 2
    %v9209 = vperm.slane %v9177, 2
    %v9210 = vperm.slane %v9178, 2
    %v9211 = vperm.slane %v9179, 2
    %v9212 = vperm.slane %v9180, 2
    %v9213 = vadd.f32 %v9141, %v9197
    %v9214 = vadd.f32 %v9142, %v9198
    %v9215 = vadd.f32 %v9143, %v9199
    %v9216 = vadd.f32 %v9144, %v9200
    %v9217 = vadd.f32 %v9145, %v9201
    %v9218 = vadd.f32 %v9146, %v9202
    %v9219 = vadd.f32 %v9147, %v9203
    %v9220 = vadd.f32 %v9148, %v9204
    %v9221 = vadd.f32 %v9149, %v9205
    %v9222 = vadd.f32 %v9150, %v9206
    %v9223 = vadd.f32 %v9151, %v9207
    %v9224 = vadd.f32 %v9152, %v9208
    %v9225 = vadd.f32 %v9153, %v9209
    %v9226 = vadd.f32 %v9154, %v9210
    %v9227 = vadd.f32 %v9155, %v9211
    %v9228 = vadd.f32 %v9156, %v9212
    %v9229 = vld [vmem:[%s9] sm:$0xf]
    %v9230 = vld [vmem:[%s9 + $0x4] sm:$0xf]
    %v9231 = vld [vmem:[%s9 + $0x8] sm:$0xf]
    %v9232 = vld [vmem:[%s9 + $0xc] sm:$0xf]
    %v9233 = vld [vmem:[%s9 + $0x10] sm:$0xf]
    %v9234 = vld [vmem:[%s9 + $0x14] sm:$0xf]
    %v9235 = vld [vmem:[%s9 + $0x18] sm:$0xf]
    %v9236 = vld [vmem:[%s9 + $0x1c] sm:$0xf]
    %v9237 = vld [vmem:[%s9 + $0x20] sm:$0xf]
    %v9238 = vld [vmem:[%s9 + $0x24] sm:$0xf]
    %v9239 = vld [vmem:[%s9 + $0x28] sm:$0xf]
    %v9240 = vld [vmem:[%s9 + $0x2c] sm:$0xf]
    %v9241 = vld [vmem:[%s9 + $0x30] sm:$0xf]
    %v9242 = vld [vmem:[%s9 + $0x34] sm:$0xf]
    %v9243 = vld [vmem:[%s9 + $0x38] sm:$0xf]
    %v9244 = vld [vmem:[%s9 + $0x3c] sm:$0xf]
    %v9245 = vld [vmem:[%s9 + $0x40] sm:$0xf]
    %v9246 = vld [vmem:[%s9 + $0x44] sm:$0xf]
    %v9247 = vld [vmem:[%s9 + $0x48] sm:$0xf]
    %v9248 = vld [vmem:[%s9 + $0x4c] sm:$0xf]
    %v9249 = vld [vmem:[%s9 + $0x50] sm:$0xf]
    %v9250 = vld [vmem:[%s9 + $0x54] sm:$0xf]
    %v9251 = vld [vmem:[%s9 + $0x58] sm:$0xf]
    %v9252 = vld [vmem:[%s9 + $0x5c] sm:$0xf]
    %v9253 = vld [vmem:[%s9 + $0x60] sm:$0xf]
    %v9254 = vld [vmem:[%s9 + $0x64] sm:$0xf]
    %v9255 = vld [vmem:[%s9 + $0x68] sm:$0xf]
    %v9256 = vld [vmem:[%s9 + $0x6c] sm:$0xf]
    %v9257 = vld [vmem:[%s9 + $0x70] sm:$0xf]
    %v9258 = vld [vmem:[%s9 + $0x74] sm:$0xf]
    %v9259 = vld [vmem:[%s9 + $0x78] sm:$0xf]
    %v9260 = vld [vmem:[%s9 + $0x7c] sm:$0xf]
    %v9261 = vld [vmem:[%s9 + $0x80] sm:$0xf]
    %v9262 = vld [vmem:[%s9 + $0x84] sm:$0xf]
    %v9263 = vld [vmem:[%s9 + $0x88] sm:$0xf]
    %v9264 = vld [vmem:[%s9 + $0x8c] sm:$0xf]
    %v9265 = vld [vmem:[%s9 + $0x90] sm:$0xf]
    %v9266 = vld [vmem:[%s9 + $0x94] sm:$0xf]
    %v9267 = vld [vmem:[%s9 + $0x98] sm:$0xf]
    %v9268 = vld [vmem:[%s9 + $0x9c] sm:$0xf]
    %v9269 = vld [vmem:[%s9 + $0xa0] sm:$0xf]
    %v9270 = vld [vmem:[%s9 + $0xa4] sm:$0xf]
    %v9271 = vld [vmem:[%s9 + $0xa8] sm:$0xf]
    %v9272 = vld [vmem:[%s9 + $0xac] sm:$0xf]
    %v9273 = vld [vmem:[%s9 + $0xb0] sm:$0xf]
    %v9274 = vld [vmem:[%s9 + $0xb4] sm:$0xf]
    %v9275 = vld [vmem:[%s9 + $0xb8] sm:$0xf]
    %v9276 = vld [vmem:[%s9 + $0xbc] sm:$0xf]
    %v9277 = vld [vmem:[%s9 + $0xc0] sm:$0xf]
    %v9278 = vld [vmem:[%s9 + $0xc4] sm:$0xf]
    %v9279 = vld [vmem:[%s9 + $0xc8] sm:$0xf]
    %v9280 = vld [vmem:[%s9 + $0xcc] sm:$0xf]
    %v9281 = vld [vmem:[%s9 + $0xd0] sm:$0xf]
    %v9282 = vld [vmem:[%s9 + $0xd4] sm:$0xf]
    %v9283 = vld [vmem:[%s9 + $0xd8] sm:$0xf]
    %v9284 = vld [vmem:[%s9 + $0xdc] sm:$0xf]
    %v9285 = vld [vmem:[%s9 + $0xe0] sm:$0xf]
    %v9286 = vld [vmem:[%s9 + $0xe4] sm:$0xf]
    %v9287 = vld [vmem:[%s9 + $0xe8] sm:$0xf]
    %v9288 = vld [vmem:[%s9 + $0xec] sm:$0xf]
    %v9289 = vld [vmem:[%s9 + $0xf0] sm:$0xf]
    %v9290 = vld [vmem:[%s9 + $0xf4] sm:$0xf]
    %v9291 = vld [vmem:[%s9 + $0xf8] sm:$0xf]
    %v9292 = vld [vmem:[%s9 + $0xfc] sm:$0xf]
    %v9293 = vld [vmem:[%s9 + $0x100] sm:$0xf]
    %v9294 = vld [vmem:[%s9 + $0x104] sm:$0xf]
    %v9295 = vld [vmem:[%s9 + $0x108] sm:$0xf]
    %v9296 = vld [vmem:[%s9 + $0x10c] sm:$0xf]
    %v9297 = vld [vmem:[%s9 + $0x110] sm:$0xf]
    %v9298 = vld [vmem:[%s9 + $0x114] sm:$0xf]
    %v9299 = vld [vmem:[%s9 + $0x118] sm:$0xf]
    %v9300 = vld [vmem:[%s9 + $0x11c] sm:$0xf]
    %v9301 = vld [vmem:[%s9 + $0x120] sm:$0xf]
    %v9302 = vld [vmem:[%s9 + $0x124] sm:$0xf]
    %v9303 = vld [vmem:[%s9 + $0x128] sm:$0xf]
    %v9304 = vld [vmem:[%s9 + $0x12c] sm:$0xf]
    %v9305 = vld [vmem:[%s9 + $0x130] sm:$0xf]
    %v9306 = vld [vmem:[%s9 + $0x134] sm:$0xf]
    %v9307 = vld [vmem:[%s9 + $0x138] sm:$0xf]
    %v9308 = vld [vmem:[%s9 + $0x13c] sm:$0xf]
    %v9309 = vld [vmem:[%s9 + $0x140] sm:$0xf]
    %v9310 = vld [vmem:[%s9 + $0x144] sm:$0xf]
    %v9311 = vld [vmem:[%s9 + $0x148] sm:$0xf]
    %v9312 = vld [vmem:[%s9 + $0x14c] sm:$0xf]
    %v9313 = vld [vmem:[%s9 + $0x150] sm:$0xf]
    %v9314 = vld [vmem:[%s9 + $0x154] sm:$0xf]
    %v9315 = vld [vmem:[%s9 + $0x158] sm:$0xf]
    %v9316 = vld [vmem:[%s9 + $0x15c] sm:$0xf]
    %v9317 = vld [vmem:[%s9 + $0x160] sm:$0xf]
    %v9318 = vld [vmem:[%s9 + $0x164] sm:$0xf]
    %v9319 = vld [vmem:[%s9 + $0x168] sm:$0xf]
    %v9320 = vld [vmem:[%s9 + $0x16c] sm:$0xf]
    %v9321 = vld [vmem:[%s9 + $0x170] sm:$0xf]
    %v9322 = vld [vmem:[%s9 + $0x174] sm:$0xf]
    %v9323 = vld [vmem:[%s9 + $0x178] sm:$0xf]
    %v9324 = vld [vmem:[%s9 + $0x17c] sm:$0xf]
    %v9325 = vld [vmem:[%s9 + $0x180] sm:$0xf]
    %v9326 = vld [vmem:[%s9 + $0x184] sm:$0xf]
    %v9327 = vld [vmem:[%s9 + $0x188] sm:$0xf]
    %v9328 = vld [vmem:[%s9 + $0x18c] sm:$0xf]
    %v9329 = vld [vmem:[%s9 + $0x190] sm:$0xf]
    %v9330 = vld [vmem:[%s9 + $0x194] sm:$0xf]
    %v9331 = vld [vmem:[%s9 + $0x198] sm:$0xf]
    %v9332 = vld [vmem:[%s9 + $0x19c] sm:$0xf]
    %v9333 = vld [vmem:[%s9 + $0x1a0] sm:$0xf]
    %v9334 = vld [vmem:[%s9 + $0x1a4] sm:$0xf]
    %v9335 = vld [vmem:[%s9 + $0x1a8] sm:$0xf]
    %v9336 = vld [vmem:[%s9 + $0x1ac] sm:$0xf]
    %v9337 = vld [vmem:[%s9 + $0x1b0] sm:$0xf]
    %v9338 = vld [vmem:[%s9 + $0x1b4] sm:$0xf]
    %v9339 = vld [vmem:[%s9 + $0x1b8] sm:$0xf]
    %v9340 = vld [vmem:[%s9 + $0x1bc] sm:$0xf]
    %v9341 = vld [vmem:[%s9 + $0x1c0] sm:$0xf]
    %v9342 = vld [vmem:[%s9 + $0x1c4] sm:$0xf]
    %v9343 = vld [vmem:[%s9 + $0x1c8] sm:$0xf]
    %v9344 = vld [vmem:[%s9 + $0x1cc] sm:$0xf]
    %v9345 = vld [vmem:[%s9 + $0x1d0] sm:$0xf]
    %v9346 = vld [vmem:[%s9 + $0x1d4] sm:$0xf]
    %v9347 = vld [vmem:[%s9 + $0x1d8] sm:$0xf]
    %v9348 = vld [vmem:[%s9 + $0x1dc] sm:$0xf]
    %v9349 = vld [vmem:[%s9 + $0x1e0] sm:$0xf]
    %v9350 = vld [vmem:[%s9 + $0x1e4] sm:$0xf]
    %v9351 = vld [vmem:[%s9 + $0x1e8] sm:$0xf]
    %v9352 = vld [vmem:[%s9 + $0x1ec] sm:$0xf]
    %v9353 = vld [vmem:[%s9 + $0x1f0] sm:$0xf]
    %v9354 = vld [vmem:[%s9 + $0x1f4] sm:$0xf]
    %v9355 = vld [vmem:[%s9 + $0x1f8] sm:$0xf]
    %v9356 = vld [vmem:[%s9 + $0x1fc] sm:$0xf]
    %v9357 = vld [vmem:[%s9 + $0x200] sm:$0xf]
    %v9358 = vld [vmem:[%s9 + $0x204] sm:$0xf]
    %v9359 = vld [vmem:[%s9 + $0x208] sm:$0xf]
    %v9360 = vld [vmem:[%s9 + $0x20c] sm:$0xf]
    %v9361 = vld [vmem:[%s9 + $0x210] sm:$0xf]
    %v9362 = vld [vmem:[%s9 + $0x214] sm:$0xf]
    %v9363 = vld [vmem:[%s9 + $0x218] sm:$0xf]
    %v9364 = vld [vmem:[%s9 + $0x21c] sm:$0xf]
    %v9365 = vld [vmem:[%s9 + $0x220] sm:$0xf]
    %v9366 = vld [vmem:[%s9 + $0x224] sm:$0xf]
    %v9367 = vld [vmem:[%s9 + $0x228] sm:$0xf]
    %v9368 = vld [vmem:[%s9 + $0x22c] sm:$0xf]
    %v9369 = vld [vmem:[%s9 + $0x230] sm:$0xf]
    %v9370 = vld [vmem:[%s9 + $0x234] sm:$0xf]
    %v9371 = vld [vmem:[%s9 + $0x238] sm:$0xf]
    %v9372 = vld [vmem:[%s9 + $0x23c] sm:$0xf]
    %v9373 = vld [vmem:[%s9 + $0x240] sm:$0xf]
    %v9374 = vld [vmem:[%s9 + $0x244] sm:$0xf]
    %v9375 = vld [vmem:[%s9 + $0x248] sm:$0xf]
    %v9376 = vld [vmem:[%s9 + $0x24c] sm:$0xf]
    %v9377 = vld [vmem:[%s9 + $0x250] sm:$0xf]
    %v9378 = vld [vmem:[%s9 + $0x254] sm:$0xf]
    %v9379 = vld [vmem:[%s9 + $0x258] sm:$0xf]
    %v9380 = vld [vmem:[%s9 + $0x25c] sm:$0xf]
    %v9381 = vld [vmem:[%s9 + $0x260] sm:$0xf]
    %v9382 = vld [vmem:[%s9 + $0x264] sm:$0xf]
    %v9383 = vld [vmem:[%s9 + $0x268] sm:$0xf]
    %v9384 = vld [vmem:[%s9 + $0x26c] sm:$0xf]
    %v9385 = vld [vmem:[%s9 + $0x270] sm:$0xf]
    %v9386 = vld [vmem:[%s9 + $0x274] sm:$0xf]
    %v9387 = vld [vmem:[%s9 + $0x278] sm:$0xf]
    %v9388 = vld [vmem:[%s9 + $0x27c] sm:$0xf]
    %v9389 = vld [vmem:[%s9 + $0x280] sm:$0xf]
    %v9390 = vld [vmem:[%s9 + $0x284] sm:$0xf]
    %v9391 = vld [vmem:[%s9 + $0x288] sm:$0xf]
    %v9392 = vld [vmem:[%s9 + $0x28c] sm:$0xf]
    %v9393 = vld [vmem:[%s9 + $0x290] sm:$0xf]
    %v9394 = vld [vmem:[%s9 + $0x294] sm:$0xf]
    %v9395 = vld [vmem:[%s9 + $0x298] sm:$0xf]
    %v9396 = vld [vmem:[%s9 + $0x29c] sm:$0xf]
    %v9397 = vld [vmem:[%s9 + $0x2a0] sm:$0xf]
    %v9398 = vld [vmem:[%s9 + $0x2a4] sm:$0xf]
    %v9399 = vld [vmem:[%s9 + $0x2a8] sm:$0xf]
    %v9400 = vld [vmem:[%s9 + $0x2ac] sm:$0xf]
    %v9401 = vld [vmem:[%s9 + $0x2b0] sm:$0xf]
    %v9402 = vld [vmem:[%s9 + $0x2b4] sm:$0xf]
    %v9403 = vld [vmem:[%s9 + $0x2b8] sm:$0xf]
    %v9404 = vld [vmem:[%s9 + $0x2bc] sm:$0xf]
    %v9405 = vld [vmem:[%s9 + $0x2c0] sm:$0xf]
    %v9406 = vld [vmem:[%s9 + $0x2c4] sm:$0xf]
    %v9407 = vld [vmem:[%s9 + $0x2c8] sm:$0xf]
    %v9408 = vld [vmem:[%s9 + $0x2cc] sm:$0xf]
    %v9409 = vld [vmem:[%s9 + $0x2d0] sm:$0xf]
    %v9410 = vld [vmem:[%s9 + $0x2d4] sm:$0xf]
    %v9411 = vld [vmem:[%s9 + $0x2d8] sm:$0xf]
    %v9412 = vld [vmem:[%s9 + $0x2dc] sm:$0xf]
    %v9413 = vld [vmem:[%s9 + $0x2e0] sm:$0xf]
    %v9414 = vld [vmem:[%s9 + $0x2e4] sm:$0xf]
    %v9415 = vld [vmem:[%s9 + $0x2e8] sm:$0xf]
    %v9416 = vld [vmem:[%s9 + $0x2ec] sm:$0xf]
    %v9417 = vld [vmem:[%s9 + $0x2f0] sm:$0xf]
    %v9418 = vld [vmem:[%s9 + $0x2f4] sm:$0xf]
    %v9419 = vld [vmem:[%s9 + $0x2f8] sm:$0xf]
    %v9420 = vld [vmem:[%s9 + $0x2fc] sm:$0xf]
    %v9421 = vld [vmem:[%s9 + $0x300] sm:$0xf]
    %v9422 = vld [vmem:[%s9 + $0x304] sm:$0xf]
    %v9423 = vld [vmem:[%s9 + $0x308] sm:$0xf]
    %v9424 = vld [vmem:[%s9 + $0x30c] sm:$0xf]
    %v9425 = vld [vmem:[%s9 + $0x310] sm:$0xf]
    %v9426 = vld [vmem:[%s9 + $0x314] sm:$0xf]
    %v9427 = vld [vmem:[%s9 + $0x318] sm:$0xf]
    %v9428 = vld [vmem:[%s9 + $0x31c] sm:$0xf]
    %v9429 = vld [vmem:[%s9 + $0x320] sm:$0xf]
    %v9430 = vld [vmem:[%s9 + $0x324] sm:$0xf]
    %v9431 = vld [vmem:[%s9 + $0x328] sm:$0xf]
    %v9432 = vld [vmem:[%s9 + $0x32c] sm:$0xf]
    %v9433 = vld [vmem:[%s9 + $0x330] sm:$0xf]
    %v9434 = vld [vmem:[%s9 + $0x334] sm:$0xf]
    %v9435 = vld [vmem:[%s9 + $0x338] sm:$0xf]
    %v9436 = vld [vmem:[%s9 + $0x33c] sm:$0xf]
    %v9437 = vld [vmem:[%s9 + $0x340] sm:$0xf]
    %v9438 = vld [vmem:[%s9 + $0x344] sm:$0xf]
    %v9439 = vld [vmem:[%s9 + $0x348] sm:$0xf]
    %v9440 = vld [vmem:[%s9 + $0x34c] sm:$0xf]
    %v9441 = vld [vmem:[%s9 + $0x350] sm:$0xf]
    %v9442 = vld [vmem:[%s9 + $0x354] sm:$0xf]
    %v9443 = vld [vmem:[%s9 + $0x358] sm:$0xf]
    %v9444 = vld [vmem:[%s9 + $0x35c] sm:$0xf]
    %v9445 = vld [vmem:[%s9 + $0x360] sm:$0xf]
    %v9446 = vld [vmem:[%s9 + $0x364] sm:$0xf]
    %v9447 = vld [vmem:[%s9 + $0x368] sm:$0xf]
    %v9448 = vld [vmem:[%s9 + $0x36c] sm:$0xf]
    %v9449 = vld [vmem:[%s9 + $0x370] sm:$0xf]
    %v9450 = vld [vmem:[%s9 + $0x374] sm:$0xf]
    %v9451 = vld [vmem:[%s9 + $0x378] sm:$0xf]
    %v9452 = vld [vmem:[%s9 + $0x37c] sm:$0xf]
    %v9453 = vld [vmem:[%s9 + $0x380] sm:$0xf]
    %v9454 = vld [vmem:[%s9 + $0x384] sm:$0xf]
    %v9455 = vld [vmem:[%s9 + $0x388] sm:$0xf]
    %v9456 = vld [vmem:[%s9 + $0x38c] sm:$0xf]
    %v9457 = vld [vmem:[%s9 + $0x390] sm:$0xf]
    %v9458 = vld [vmem:[%s9 + $0x394] sm:$0xf]
    %v9459 = vld [vmem:[%s9 + $0x398] sm:$0xf]
    %v9460 = vld [vmem:[%s9 + $0x39c] sm:$0xf]
    %v9461 = vld [vmem:[%s9 + $0x3a0] sm:$0xf]
    %v9462 = vld [vmem:[%s9 + $0x3a4] sm:$0xf]
    %v9463 = vld [vmem:[%s9 + $0x3a8] sm:$0xf]
    %v9464 = vld [vmem:[%s9 + $0x3ac] sm:$0xf]
    %v9465 = vld [vmem:[%s9 + $0x3b0] sm:$0xf]
    %v9466 = vld [vmem:[%s9 + $0x3b4] sm:$0xf]
    %v9467 = vld [vmem:[%s9 + $0x3b8] sm:$0xf]
    %v9468 = vld [vmem:[%s9 + $0x3bc] sm:$0xf]
    %v9469 = vld [vmem:[%s9 + $0x3c0] sm:$0xf]
    %v9470 = vld [vmem:[%s9 + $0x3c4] sm:$0xf]
    %v9471 = vld [vmem:[%s9 + $0x3c8] sm:$0xf]
    %v9472 = vld [vmem:[%s9 + $0x3cc] sm:$0xf]
    %v9473 = vld [vmem:[%s9 + $0x3d0] sm:$0xf]
    %v9474 = vld [vmem:[%s9 + $0x3d4] sm:$0xf]
    %v9475 = vld [vmem:[%s9 + $0x3d8] sm:$0xf]
    %v9476 = vld [vmem:[%s9 + $0x3dc] sm:$0xf]
    %v9477 = vld [vmem:[%s9 + $0x3e0] sm:$0xf]
    %v9478 = vld [vmem:[%s9 + $0x3e4] sm:$0xf]
    %v9479 = vld [vmem:[%s9 + $0x3e8] sm:$0xf]
    %v9480 = vld [vmem:[%s9 + $0x3ec] sm:$0xf]
    %v9481 = vld [vmem:[%s9 + $0x3f0] sm:$0xf]
    %v9482 = vld [vmem:[%s9 + $0x3f4] sm:$0xf]
    %v9483 = vld [vmem:[%s9 + $0x3f8] sm:$0xf]
    %v9484 = vld [vmem:[%s9 + $0x3fc] sm:$0xf]
    %v9485 = vunpack.c.l.bf16 %v9229
    %v9486 = vunpack.c.l.bf16 %v9230
    %v9487 = vunpack.c.l.bf16 %v9231
    %v9488 = vunpack.c.l.bf16 %v9232
    %v9489 = vunpack.c.l.bf16 %v9233
    %v9490 = vunpack.c.l.bf16 %v9234
    %v9491 = vunpack.c.l.bf16 %v9235
    %v9492 = vunpack.c.l.bf16 %v9236
    %v9493 = vunpack.c.l.bf16 %v9237
    %v9494 = vunpack.c.l.bf16 %v9238
    %v9495 = vunpack.c.l.bf16 %v9239
    %v9496 = vunpack.c.l.bf16 %v9240
    %v9497 = vunpack.c.l.bf16 %v9241
    %v9498 = vunpack.c.l.bf16 %v9242
    %v9499 = vunpack.c.l.bf16 %v9243
    %v9500 = vunpack.c.l.bf16 %v9244
    %v9501 = vunpack.c.l.bf16 %v9245
    %v9502 = vunpack.c.l.bf16 %v9246
    %v9503 = vunpack.c.l.bf16 %v9247
    %v9504 = vunpack.c.l.bf16 %v9248
    %v9505 = vunpack.c.l.bf16 %v9249
    %v9506 = vunpack.c.l.bf16 %v9250
    %v9507 = vunpack.c.l.bf16 %v9251
    %v9508 = vunpack.c.l.bf16 %v9252
    %v9509 = vunpack.c.l.bf16 %v9253
    %v9510 = vunpack.c.l.bf16 %v9254
    %v9511 = vunpack.c.l.bf16 %v9255
    %v9512 = vunpack.c.l.bf16 %v9256
    %v9513 = vunpack.c.l.bf16 %v9257
    %v9514 = vunpack.c.l.bf16 %v9258
    %v9515 = vunpack.c.l.bf16 %v9259
    %v9516 = vunpack.c.l.bf16 %v9260
    %v9517 = vunpack.c.l.bf16 %v9261
    %v9518 = vunpack.c.l.bf16 %v9262
    %v9519 = vunpack.c.l.bf16 %v9263
    %v9520 = vunpack.c.l.bf16 %v9264
    %v9521 = vunpack.c.l.bf16 %v9265
    %v9522 = vunpack.c.l.bf16 %v9266
    %v9523 = vunpack.c.l.bf16 %v9267
    %v9524 = vunpack.c.l.bf16 %v9268
    %v9525 = vunpack.c.l.bf16 %v9269
    %v9526 = vunpack.c.l.bf16 %v9270
    %v9527 = vunpack.c.l.bf16 %v9271
    %v9528 = vunpack.c.l.bf16 %v9272
    %v9529 = vunpack.c.l.bf16 %v9273
    %v9530 = vunpack.c.l.bf16 %v9274
    %v9531 = vunpack.c.l.bf16 %v9275
    %v9532 = vunpack.c.l.bf16 %v9276
    %v9533 = vunpack.c.l.bf16 %v9277
    %v9534 = vunpack.c.l.bf16 %v9278
    %v9535 = vunpack.c.l.bf16 %v9279
    %v9536 = vunpack.c.l.bf16 %v9280
    %v9537 = vunpack.c.l.bf16 %v9281
    %v9538 = vunpack.c.l.bf16 %v9282
    %v9539 = vunpack.c.l.bf16 %v9283
    %v9540 = vunpack.c.l.bf16 %v9284
    %v9541 = vunpack.c.l.bf16 %v9285
    %v9542 = vunpack.c.l.bf16 %v9286
    %v9543 = vunpack.c.l.bf16 %v9287
    %v9544 = vunpack.c.l.bf16 %v9288
    %v9545 = vunpack.c.l.bf16 %v9289
    %v9546 = vunpack.c.l.bf16 %v9290
    %v9547 = vunpack.c.l.bf16 %v9291
    %v9548 = vunpack.c.l.bf16 %v9292
    %v9549 = vunpack.c.l.bf16 %v9293
    %v9550 = vunpack.c.l.bf16 %v9294
    %v9551 = vunpack.c.l.bf16 %v9295
    %v9552 = vunpack.c.l.bf16 %v9296
    %v9553 = vunpack.c.l.bf16 %v9297
    %v9554 = vunpack.c.l.bf16 %v9298
    %v9555 = vunpack.c.l.bf16 %v9299
    %v9556 = vunpack.c.l.bf16 %v9300
    %v9557 = vunpack.c.l.bf16 %v9301
    %v9558 = vunpack.c.l.bf16 %v9302
    %v9559 = vunpack.c.l.bf16 %v9303
    %v9560 = vunpack.c.l.bf16 %v9304
    %v9561 = vunpack.c.l.bf16 %v9305
    %v9562 = vunpack.c.l.bf16 %v9306
    %v9563 = vunpack.c.l.bf16 %v9307
    %v9564 = vunpack.c.l.bf16 %v9308
    %v9565 = vunpack.c.l.bf16 %v9309
    %v9566 = vunpack.c.l.bf16 %v9310
    %v9567 = vunpack.c.l.bf16 %v9311
    %v9568 = vunpack.c.l.bf16 %v9312
    %v9569 = vunpack.c.l.bf16 %v9313
    %v9570 = vunpack.c.l.bf16 %v9314
    %v9571 = vunpack.c.l.bf16 %v9315
    %v9572 = vunpack.c.l.bf16 %v9316
    %v9573 = vunpack.c.l.bf16 %v9317
    %v9574 = vunpack.c.l.bf16 %v9318
    %v9575 = vunpack.c.l.bf16 %v9319
    %v9576 = vunpack.c.l.bf16 %v9320
    %v9577 = vunpack.c.l.bf16 %v9321
    %v9578 = vunpack.c.l.bf16 %v9322
    %v9579 = vunpack.c.l.bf16 %v9323
    %v9580 = vunpack.c.l.bf16 %v9324
    %v9581 = vunpack.c.l.bf16 %v9325
    %v9582 = vunpack.c.l.bf16 %v9326
    %v9583 = vunpack.c.l.bf16 %v9327
    %v9584 = vunpack.c.l.bf16 %v9328
    %v9585 = vunpack.c.l.bf16 %v9329
    %v9586 = vunpack.c.l.bf16 %v9330
    %v9587 = vunpack.c.l.bf16 %v9331
    %v9588 = vunpack.c.l.bf16 %v9332
    %v9589 = vunpack.c.l.bf16 %v9333
    %v9590 = vunpack.c.l.bf16 %v9334
    %v9591 = vunpack.c.l.bf16 %v9335
    %v9592 = vunpack.c.l.bf16 %v9336
    %v9593 = vunpack.c.l.bf16 %v9337
    %v9594 = vunpack.c.l.bf16 %v9338
    %v9595 = vunpack.c.l.bf16 %v9339
    %v9596 = vunpack.c.l.bf16 %v9340
    %v9597 = vunpack.c.l.bf16 %v9341
    %v9598 = vunpack.c.l.bf16 %v9342
    %v9599 = vunpack.c.l.bf16 %v9343
    %v9600 = vunpack.c.l.bf16 %v9344
    %v9601 = vunpack.c.l.bf16 %v9345
    %v9602 = vunpack.c.l.bf16 %v9346
    %v9603 = vunpack.c.l.bf16 %v9347
    %v9604 = vunpack.c.l.bf16 %v9348
    %v9605 = vunpack.c.l.bf16 %v9349
    %v9606 = vunpack.c.l.bf16 %v9350
    %v9607 = vunpack.c.l.bf16 %v9351
    %v9608 = vunpack.c.l.bf16 %v9352
    %v9609 = vunpack.c.l.bf16 %v9353
    %v9610 = vunpack.c.l.bf16 %v9354
    %v9611 = vunpack.c.l.bf16 %v9355
    %v9612 = vunpack.c.l.bf16 %v9356
    %v9613 = vunpack.c.l.bf16 %v9357
    %v9614 = vunpack.c.l.bf16 %v9358
    %v9615 = vunpack.c.l.bf16 %v9359
    %v9616 = vunpack.c.l.bf16 %v9360
    %v9617 = vunpack.c.l.bf16 %v9361
    %v9618 = vunpack.c.l.bf16 %v9362
    %v9619 = vunpack.c.l.bf16 %v9363
    %v9620 = vunpack.c.l.bf16 %v9364
    %v9621 = vunpack.c.l.bf16 %v9365
    %v9622 = vunpack.c.l.bf16 %v9366
    %v9623 = vunpack.c.l.bf16 %v9367
    %v9624 = vunpack.c.l.bf16 %v9368
    %v9625 = vunpack.c.l.bf16 %v9369
    %v9626 = vunpack.c.l.bf16 %v9370
    %v9627 = vunpack.c.l.bf16 %v9371
    %v9628 = vunpack.c.l.bf16 %v9372
    %v9629 = vunpack.c.l.bf16 %v9373
    %v9630 = vunpack.c.l.bf16 %v9374
    %v9631 = vunpack.c.l.bf16 %v9375
    %v9632 = vunpack.c.l.bf16 %v9376
    %v9633 = vunpack.c.l.bf16 %v9377
    %v9634 = vunpack.c.l.bf16 %v9378
    %v9635 = vunpack.c.l.bf16 %v9379
    %v9636 = vunpack.c.l.bf16 %v9380
    %v9637 = vunpack.c.l.bf16 %v9381
    %v9638 = vunpack.c.l.bf16 %v9382
    %v9639 = vunpack.c.l.bf16 %v9383
    %v9640 = vunpack.c.l.bf16 %v9384
    %v9641 = vunpack.c.l.bf16 %v9385
    %v9642 = vunpack.c.l.bf16 %v9386
    %v9643 = vunpack.c.l.bf16 %v9387
    %v9644 = vunpack.c.l.bf16 %v9388
    %v9645 = vunpack.c.l.bf16 %v9389
    %v9646 = vunpack.c.l.bf16 %v9390
    %v9647 = vunpack.c.l.bf16 %v9391
    %v9648 = vunpack.c.l.bf16 %v9392
    %v9649 = vunpack.c.l.bf16 %v9393
    %v9650 = vunpack.c.l.bf16 %v9394
    %v9651 = vunpack.c.l.bf16 %v9395
    %v9652 = vunpack.c.l.bf16 %v9396
    %v9653 = vunpack.c.l.bf16 %v9397
    %v9654 = vunpack.c.l.bf16 %v9398
    %v9655 = vunpack.c.l.bf16 %v9399
    %v9656 = vunpack.c.l.bf16 %v9400
    %v9657 = vunpack.c.l.bf16 %v9401
    %v9658 = vunpack.c.l.bf16 %v9402
    %v9659 = vunpack.c.l.bf16 %v9403
    %v9660 = vunpack.c.l.bf16 %v9404
    %v9661 = vunpack.c.l.bf16 %v9405
    %v9662 = vunpack.c.l.bf16 %v9406
    %v9663 = vunpack.c.l.bf16 %v9407
    %v9664 = vunpack.c.l.bf16 %v9408
    %v9665 = vunpack.c.l.bf16 %v9409
    %v9666 = vunpack.c.l.bf16 %v9410
    %v9667 = vunpack.c.l.bf16 %v9411
    %v9668 = vunpack.c.l.bf16 %v9412
    %v9669 = vunpack.c.l.bf16 %v9413
    %v9670 = vunpack.c.l.bf16 %v9414
    %v9671 = vunpack.c.l.bf16 %v9415
    %v9672 = vunpack.c.l.bf16 %v9416
    %v9673 = vunpack.c.l.bf16 %v9417
    %v9674 = vunpack.c.l.bf16 %v9418
    %v9675 = vunpack.c.l.bf16 %v9419
    %v9676 = vunpack.c.l.bf16 %v9420
    %v9677 = vunpack.c.l.bf16 %v9421
    %v9678 = vunpack.c.l.bf16 %v9422
    %v9679 = vunpack.c.l.bf16 %v9423
    %v9680 = vunpack.c.l.bf16 %v9424
    %v9681 = vunpack.c.l.bf16 %v9425
    %v9682 = vunpack.c.l.bf16 %v9426
    %v9683 = vunpack.c.l.bf16 %v9427
    %v9684 = vunpack.c.l.bf16 %v9428
    %v9685 = vunpack.c.l.bf16 %v9429
    %v9686 = vunpack.c.l.bf16 %v9430
    %v9687 = vunpack.c.l.bf16 %v9431
    %v9688 = vunpack.c.l.bf16 %v9432
    %v9689 = vunpack.c.l.bf16 %v9433
    %v9690 = vunpack.c.l.bf16 %v9434
    %v9691 = vunpack.c.l.bf16 %v9435
    %v9692 = vunpack.c.l.bf16 %v9436
    %v9693 = vunpack.c.l.bf16 %v9437
    %v9694 = vunpack.c.l.bf16 %v9438
    %v9695 = vunpack.c.l.bf16 %v9439
    %v9696 = vunpack.c.l.bf16 %v9440
    %v9697 = vunpack.c.l.bf16 %v9441
    %v9698 = vunpack.c.l.bf16 %v9442
    %v9699 = vunpack.c.l.bf16 %v9443
    %v9700 = vunpack.c.l.bf16 %v9444
    %v9701 = vunpack.c.l.bf16 %v9445
    %v9702 = vunpack.c.l.bf16 %v9446
    %v9703 = vunpack.c.l.bf16 %v9447
    %v9704 = vunpack.c.l.bf16 %v9448
    %v9705 = vunpack.c.l.bf16 %v9449
    %v9706 = vunpack.c.l.bf16 %v9450
    %v9707 = vunpack.c.l.bf16 %v9451
    %v9708 = vunpack.c.l.bf16 %v9452
    %v9709 = vunpack.c.l.bf16 %v9453
    %v9710 = vunpack.c.l.bf16 %v9454
    %v9711 = vunpack.c.l.bf16 %v9455
    %v9712 = vunpack.c.l.bf16 %v9456
    %v9713 = vunpack.c.l.bf16 %v9457
    %v9714 = vunpack.c.l.bf16 %v9458
    %v9715 = vunpack.c.l.bf16 %v9459
    %v9716 = vunpack.c.l.bf16 %v9460
    %v9717 = vunpack.c.l.bf16 %v9461
    %v9718 = vunpack.c.l.bf16 %v9462
    %v9719 = vunpack.c.l.bf16 %v9463
    %v9720 = vunpack.c.l.bf16 %v9464
    %v9721 = vunpack.c.l.bf16 %v9465
    %v9722 = vunpack.c.l.bf16 %v9466
    %v9723 = vunpack.c.l.bf16 %v9467
    %v9724 = vunpack.c.l.bf16 %v9468
    %v9725 = vunpack.c.l.bf16 %v9469
    %v9726 = vunpack.c.l.bf16 %v9470
    %v9727 = vunpack.c.l.bf16 %v9471
    %v9728 = vunpack.c.l.bf16 %v9472
    %v9729 = vunpack.c.l.bf16 %v9473
    %v9730 = vunpack.c.l.bf16 %v9474
    %v9731 = vunpack.c.l.bf16 %v9475
    %v9732 = vunpack.c.l.bf16 %v9476
    %v9733 = vunpack.c.l.bf16 %v9477
    %v9734 = vunpack.c.l.bf16 %v9478
    %v9735 = vunpack.c.l.bf16 %v9479
    %v9736 = vunpack.c.l.bf16 %v9480
    %v9737 = vunpack.c.l.bf16 %v9481
    %v9738 = vunpack.c.l.bf16 %v9482
    %v9739 = vunpack.c.l.bf16 %v9483
    %v9740 = vunpack.c.l.bf16 %v9484
    %v9741 = vld [vmem:[#allocation5] sm:$0x1]
    %v9743 = vperm.slane %v9741, 0
    %9745 = vmatpush.msra.mxu0 %v9500
    %9746 = vmatpush.msra.mxu0 %v9499
    %9747 = vmatpush.msra.mxu0 %v9498
    %9748 = vmatpush.msra.mxu0 %v9497
    %9749 = vmatpush.msra.mxu0 %v9496
    %9750 = vmatpush.msra.mxu0 %v9495
    %9751 = vmatpush.msra.mxu0 %v9494
    %9752 = vmatpush.msra.mxu0 %v9493
    %9753 = vmatpush.msra.mxu0 %v9492
    %9754 = vmatpush.msra.mxu0 %v9491
    %9755 = vmatpush.msra.mxu0 %v9490
    %9756 = vmatpush.msra.mxu0 %v9489
    %9757 = vmatpush.msra.mxu0 %v9488
    %9758 = vmatpush.msra.mxu0 %v9487
    %9759 = vmatpush.msra.mxu0 %v9486
    %9760 = vmatpush.msra.mxu0 %v9485
    %9761 = vmatmul.f32.gmra.mxu0 %v9213
    %v9762 = vpop.f32.mrf.mxu0
    %v9763 = vadd.f32 %v9743, %v9762
    %9764 = vdwg.mxu0
    %9765 = vmatpush.msra.mxu0 %v9516
    %9766 = vmatpush.msra.mxu0 %v9515
    %9767 = vmatpush.msra.mxu0 %v9514
    %9768 = vmatpush.msra.mxu0 %v9513
    %9769 = vmatpush.msra.mxu0 %v9512
    %9770 = vmatpush.msra.mxu0 %v9511
    %9771 = vmatpush.msra.mxu0 %v9510
    %9772 = vmatpush.msra.mxu0 %v9509
    %9773 = vmatpush.msra.mxu0 %v9508
    %9774 = vmatpush.msra.mxu0 %v9507
    %9775 = vmatpush.msra.mxu0 %v9506
    %9776 = vmatpush.msra.mxu0 %v9505
    %9777 = vmatpush.msra.mxu0 %v9504
    %9778 = vmatpush.msra.mxu0 %v9503
    %9779 = vmatpush.msra.mxu0 %v9502
    %9780 = vmatpush.msra.mxu0 %v9501
    %9781 = vmatmul.f32.gmra.mxu0 %v9214
    %v9782 = vpop.f32.mrf.mxu0
    %v9783 = vadd.f32 %v9763, %v9782
    %9784 = vdwg.mxu0
    %9785 = vmatpush.msra.mxu0 %v9532
    %9786 = vmatpush.msra.mxu0 %v9531
    %9787 = vmatpush.msra.mxu0 %v9530
    %9788 = vmatpush.msra.mxu0 %v9529
    %9789 = vmatpush.msra.mxu0 %v9528
    %9790 = vmatpush.msra.mxu0 %v9527
    %9791 = vmatpush.msra.mxu0 %v9526
    %9792 = vmatpush.msra.mxu0 %v9525
    %9793 = vmatpush.msra.mxu0 %v9524
    %9794 = vmatpush.msra.mxu0 %v9523
    %9795 = vmatpush.msra.mxu0 %v9522
    %9796 = vmatpush.msra.mxu0 %v9521
    %9797 = vmatpush.msra.mxu0 %v9520
    %9798 = vmatpush.msra.mxu0 %v9519
    %9799 = vmatpush.msra.mxu0 %v9518
    %9800 = vmatpush.msra.mxu0 %v9517
    %9801 = vmatmul.f32.gmra.mxu0 %v9215
    %v9802 = vpop.f32.mrf.mxu0
    %v9803 = vadd.f32 %v9783, %v9802
    %9804 = vdwg.mxu0
    %9805 = vmatpush.msra.mxu0 %v9548
    %9806 = vmatpush.msra.mxu0 %v9547
    %9807 = vmatpush.msra.mxu0 %v9546
    %9808 = vmatpush.msra.mxu0 %v9545
    %9809 = vmatpush.msra.mxu0 %v9544
    %9810 = vmatpush.msra.mxu0 %v9543
    %9811 = vmatpush.msra.mxu0 %v9542
    %9812 = vmatpush.msra.mxu0 %v9541
    %9813 = vmatpush.msra.mxu0 %v9540
    %9814 = vmatpush.msra.mxu0 %v9539
    %9815 = vmatpush.msra.mxu0 %v9538
    %9816 = vmatpush.msra.mxu0 %v9537
    %9817 = vmatpush.msra.mxu0 %v9536
    %9818 = vmatpush.msra.mxu0 %v9535
    %9819 = vmatpush.msra.mxu0 %v9534
    %9820 = vmatpush.msra.mxu0 %v9533
    %9821 = vmatmul.f32.gmra.mxu0 %v9216
    %v9822 = vpop.f32.mrf.mxu0
    %v9823 = vadd.f32 %v9803, %v9822
    %9824 = vdwg.mxu0
    %9825 = vmatpush.msra.mxu0 %v9564
    %9826 = vmatpush.msra.mxu0 %v9563
    %9827 = vmatpush.msra.mxu0 %v9562
    %9828 = vmatpush.msra.mxu0 %v9561
    %9829 = vmatpush.msra.mxu0 %v9560
    %9830 = vmatpush.msra.mxu0 %v9559
    %9831 = vmatpush.msra.mxu0 %v9558
    %9832 = vmatpush.msra.mxu0 %v9557
    %9833 = vmatpush.msra.mxu0 %v9556
    %9834 = vmatpush.msra.mxu0 %v9555
    %9835 = vmatpush.msra.mxu0 %v9554
    %9836 = vmatpush.msra.mxu0 %v9553
    %9837 = vmatpush.msra.mxu0 %v9552
    %9838 = vmatpush.msra.mxu0 %v9551
    %9839 = vmatpush.msra.mxu0 %v9550
    %9840 = vmatpush.msra.mxu0 %v9549
    %9841 = vmatmul.f32.gmra.mxu0 %v9217
    %v9842 = vpop.f32.mrf.mxu0
    %v9843 = vadd.f32 %v9823, %v9842
    %9844 = vdwg.mxu0
    %9845 = vmatpush.msra.mxu0 %v9580
    %9846 = vmatpush.msra.mxu0 %v9579
    %9847 = vmatpush.msra.mxu0 %v9578
    %9848 = vmatpush.msra.mxu0 %v9577
    %9849 = vmatpush.msra.mxu0 %v9576
    %9850 = vmatpush.msra.mxu0 %v9575
    %9851 = vmatpush.msra.mxu0 %v9574
    %9852 = vmatpush.msra.mxu0 %v9573
    %9853 = vmatpush.msra.mxu0 %v9572
    %9854 = vmatpush.msra.mxu0 %v9571
    %9855 = vmatpush.msra.mxu0 %v9570
    %9856 = vmatpush.msra.mxu0 %v9569
    %9857 = vmatpush.msra.mxu0 %v9568
    %9858 = vmatpush.msra.mxu0 %v9567
    %9859 = vmatpush.msra.mxu0 %v9566
    %9860 = vmatpush.msra.mxu0 %v9565
    %9861 = vmatmul.f32.gmra.mxu0 %v9218
    %v9862 = vpop.f32.mrf.mxu0
    %v9863 = vadd.f32 %v9843, %v9862
    %9864 = vdwg.mxu0
    %9865 = vmatpush.msra.mxu0 %v9596
    %9866 = vmatpush.msra.mxu0 %v9595
    %9867 = vmatpush.msra.mxu0 %v9594
    %9868 = vmatpush.msra.mxu0 %v9593
    %9869 = vmatpush.msra.mxu0 %v9592
    %9870 = vmatpush.msra.mxu0 %v9591
    %9871 = vmatpush.msra.mxu0 %v9590
    %9872 = vmatpush.msra.mxu0 %v9589
    %9873 = vmatpush.msra.mxu0 %v9588
    %9874 = vmatpush.msra.mxu0 %v9587
    %9875 = vmatpush.msra.mxu0 %v9586
    %9876 = vmatpush.msra.mxu0 %v9585
    %9877 = vmatpush.msra.mxu0 %v9584
    %9878 = vmatpush.msra.mxu0 %v9583
    %9879 = vmatpush.msra.mxu0 %v9582
    %9880 = vmatpush.msra.mxu0 %v9581
    %9881 = vmatmul.f32.gmra.mxu0 %v9219
    %v9882 = vpop.f32.mrf.mxu0
    %v9883 = vadd.f32 %v9863, %v9882
    %9884 = vdwg.mxu0
    %9885 = vmatpush.msra.mxu0 %v9612
    %9886 = vmatpush.msra.mxu0 %v9611
    %9887 = vmatpush.msra.mxu0 %v9610
    %9888 = vmatpush.msra.mxu0 %v9609
    %9889 = vmatpush.msra.mxu0 %v9608
    %9890 = vmatpush.msra.mxu0 %v9607
    %9891 = vmatpush.msra.mxu0 %v9606
    %9892 = vmatpush.msra.mxu0 %v9605
    %9893 = vmatpush.msra.mxu0 %v9604
    %9894 = vmatpush.msra.mxu0 %v9603
    %9895 = vmatpush.msra.mxu0 %v9602
    %9896 = vmatpush.msra.mxu0 %v9601
    %9897 = vmatpush.msra.mxu0 %v9600
    %9898 = vmatpush.msra.mxu0 %v9599
    %9899 = vmatpush.msra.mxu0 %v9598
    %9900 = vmatpush.msra.mxu0 %v9597
    %9901 = vmatmul.f32.gmra.mxu0 %v9220
    %v9902 = vpop.f32.mrf.mxu0
    %v9903 = vadd.f32 %v9883, %v9902
    %9904 = vdwg.mxu0
    %9905 = vmatpush.msra.mxu0 %v9628
    %9906 = vmatpush.msra.mxu0 %v9627
    %9907 = vmatpush.msra.mxu0 %v9626
    %9908 = vmatpush.msra.mxu0 %v9625
    %9909 = vmatpush.msra.mxu0 %v9624
    %9910 = vmatpush.msra.mxu0 %v9623
    %9911 = vmatpush.msra.mxu0 %v9622
    %9912 = vmatpush.msra.mxu0 %v9621
    %9913 = vmatpush.msra.mxu0 %v9620
    %9914 = vmatpush.msra.mxu0 %v9619
    %9915 = vmatpush.msra.mxu0 %v9618
    %9916 = vmatpush.msra.mxu0 %v9617
    %9917 = vmatpush.msra.mxu0 %v9616
    %9918 = vmatpush.msra.mxu0 %v9615
    %9919 = vmatpush.msra.mxu0 %v9614
    %9920 = vmatpush.msra.mxu0 %v9613
    %9921 = vmatmul.f32.gmra.mxu0 %v9221
    %v9922 = vpop.f32.mrf.mxu0
    %v9923 = vadd.f32 %v9903, %v9922
    %9924 = vdwg.mxu0
    %9925 = vmatpush.msra.mxu0 %v9644
    %9926 = vmatpush.msra.mxu0 %v9643
    %9927 = vmatpush.msra.mxu0 %v9642
    %9928 = vmatpush.msra.mxu0 %v9641
    %9929 = vmatpush.msra.mxu0 %v9640
    %9930 = vmatpush.msra.mxu0 %v9639
    %9931 = vmatpush.msra.mxu0 %v9638
    %9932 = vmatpush.msra.mxu0 %v9637
    %9933 = vmatpush.msra.mxu0 %v9636
    %9934 = vmatpush.msra.mxu0 %v9635
    %9935 = vmatpush.msra.mxu0 %v9634
    %9936 = vmatpush.msra.mxu0 %v9633
    %9937 = vmatpush.msra.mxu0 %v9632
    %9938 = vmatpush.msra.mxu0 %v9631
    %9939 = vmatpush.msra.mxu0 %v9630
    %9940 = vmatpush.msra.mxu0 %v9629
    %9941 = vmatmul.f32.gmra.mxu0 %v9222
    %v9942 = vpop.f32.mrf.mxu0
    %v9943 = vadd.f32 %v9923, %v9942
    %9944 = vdwg.mxu0
    %9945 = vmatpush.msra.mxu0 %v9660
    %9946 = vmatpush.msra.mxu0 %v9659
    %9947 = vmatpush.msra.mxu0 %v9658
    %9948 = vmatpush.msra.mxu0 %v9657
    %9949 = vmatpush.msra.mxu0 %v9656
    %9950 = vmatpush.msra.mxu0 %v9655
    %9951 = vmatpush.msra.mxu0 %v9654
    %9952 = vmatpush.msra.mxu0 %v9653
    %9953 = vmatpush.msra.mxu0 %v9652
    %9954 = vmatpush.msra.mxu0 %v9651
    %9955 = vmatpush.msra.mxu0 %v9650
    %9956 = vmatpush.msra.mxu0 %v9649
    %9957 = vmatpush.msra.mxu0 %v9648
    %9958 = vmatpush.msra.mxu0 %v9647
    %9959 = vmatpush.msra.mxu0 %v9646
    %9960 = vmatpush.msra.mxu0 %v9645
    %9961 = vmatmul.f32.gmra.mxu0 %v9223
    %v9962 = vpop.f32.mrf.mxu0
    %v9963 = vadd.f32 %v9943, %v9962
    %9964 = vdwg.mxu0
    %9965 = vmatpush.msra.mxu0 %v9676
    %9966 = vmatpush.msra.mxu0 %v9675
    %9967 = vmatpush.msra.mxu0 %v9674
    %9968 = vmatpush.msra.mxu0 %v9673
    %9969 = vmatpush.msra.mxu0 %v9672
    %9970 = vmatpush.msra.mxu0 %v9671
    %9971 = vmatpush.msra.mxu0 %v9670
    %9972 = vmatpush.msra.mxu0 %v9669
    %9973 = vmatpush.msra.mxu0 %v9668
    %9974 = vmatpush.msra.mxu0 %v9667
    %9975 = vmatpush.msra.mxu0 %v9666
    %9976 = vmatpush.msra.mxu0 %v9665
    %9977 = vmatpush.msra.mxu0 %v9664
    %9978 = vmatpush.msra.mxu0 %v9663
    %9979 = vmatpush.msra.mxu0 %v9662
    %9980 = vmatpush.msra.mxu0 %v9661
    %9981 = vmatmul.f32.gmra.mxu0 %v9224
    %v9982 = vpop.f32.mrf.mxu0
    %v9983 = vadd.f32 %v9963, %v9982
    %9984 = vdwg.mxu0
    %9985 = vmatpush.msra.mxu0 %v9692
    %9986 = vmatpush.msra.mxu0 %v9691
    %9987 = vmatpush.msra.mxu0 %v9690
    %9988 = vmatpush.msra.mxu0 %v9689
    %9989 = vmatpush.msra.mxu0 %v9688
    %9990 = vmatpush.msra.mxu0 %v9687
    %9991 = vmatpush.msra.mxu0 %v9686
    %9992 = vmatpush.msra.mxu0 %v9685
    %9993 = vmatpush.msra.mxu0 %v9684
    %9994 = vmatpush.msra.mxu0 %v9683
    %9995 = vmatpush.msra.mxu0 %v9682
    %9996 = vmatpush.msra.mxu0 %v9681
    %9997 = vmatpush.msra.mxu0 %v9680
    %9998 = vmatpush.msra.mxu0 %v9679
    %9999 = vmatpush.msra.mxu0 %v9678
    %10000 = vmatpush.msra.mxu0 %v9677
    %10001 = vmatmul.f32.gmra.mxu0 %v9225
    %v10002 = vpop.f32.mrf.mxu0
    %v10003 = vadd.f32 %v9983, %v10002
    %10004 = vdwg.mxu0
    %10005 = vmatpush.msra.mxu0 %v9708
    %10006 = vmatpush.msra.mxu0 %v9707
    %10007 = vmatpush.msra.mxu0 %v9706
    %10008 = vmatpush.msra.mxu0 %v9705
    %10009 = vmatpush.msra.mxu0 %v9704
    %10010 = vmatpush.msra.mxu0 %v9703
    %10011 = vmatpush.msra.mxu0 %v9702
    %10012 = vmatpush.msra.mxu0 %v9701
    %10013 = vmatpush.msra.mxu0 %v9700
    %10014 = vmatpush.msra.mxu0 %v9699
    %10015 = vmatpush.msra.mxu0 %v9698
    %10016 = vmatpush.msra.mxu0 %v9697
    %10017 = vmatpush.msra.mxu0 %v9696
    %10018 = vmatpush.msra.mxu0 %v9695
    %10019 = vmatpush.msra.mxu0 %v9694
    %10020 = vmatpush.msra.mxu0 %v9693
    %10021 = vmatmul.f32.gmra.mxu0 %v9226
    %v10022 = vpop.f32.mrf.mxu0
    %v10023 = vadd.f32 %v10003, %v10022
    %10024 = vdwg.mxu0
    %10025 = vmatpush.msra.mxu0 %v9724
    %10026 = vmatpush.msra.mxu0 %v9723
    %10027 = vmatpush.msra.mxu0 %v9722
    %10028 = vmatpush.msra.mxu0 %v9721
    %10029 = vmatpush.msra.mxu0 %v9720
    %10030 = vmatpush.msra.mxu0 %v9719
    %10031 = vmatpush.msra.mxu0 %v9718
    %10032 = vmatpush.msra.mxu0 %v9717
    %10033 = vmatpush.msra.mxu0 %v9716
    %10034 = vmatpush.msra.mxu0 %v9715
    %10035 = vmatpush.msra.mxu0 %v9714
    %10036 = vmatpush.msra.mxu0 %v9713
    %10037 = vmatpush.msra.mxu0 %v9712
    %10038 = vmatpush.msra.mxu0 %v9711
    %10039 = vmatpush.msra.mxu0 %v9710
    %10040 = vmatpush.msra.mxu0 %v9709
    %10041 = vmatmul.f32.gmra.mxu0 %v9227
    %v10042 = vpop.f32.mrf.mxu0
    %v10043 = vadd.f32 %v10023, %v10042
    %10044 = vdwg.mxu0
    %10045 = vmatpush.msra.mxu0 %v9740
    %10046 = vmatpush.msra.mxu0 %v9739
    %10047 = vmatpush.msra.mxu0 %v9738
    %10048 = vmatpush.msra.mxu0 %v9737
    %10049 = vmatpush.msra.mxu0 %v9736
    %10050 = vmatpush.msra.mxu0 %v9735
    %10051 = vmatpush.msra.mxu0 %v9734
    %10052 = vmatpush.msra.mxu0 %v9733
    %10053 = vmatpush.msra.mxu0 %v9732
    %10054 = vmatpush.msra.mxu0 %v9731
    %10055 = vmatpush.msra.mxu0 %v9730
    %10056 = vmatpush.msra.mxu0 %v9729
    %10057 = vmatpush.msra.mxu0 %v9728
    %10058 = vmatpush.msra.mxu0 %v9727
    %10059 = vmatpush.msra.mxu0 %v9726
    %10060 = vmatpush.msra.mxu0 %v9725
    %10061 = vmatmul.f32.gmra.mxu0 %v9228
    %v10062 = vpop.f32.mrf.mxu0
    %v10063 = vadd.f32 %v10043, %v10062
    %10064 = vdwg.mxu0
    %v10065 = vxor.u32 %v10063, 2147483648
    %v10066 = vmul.f32 %v10065, 1.442695
    %v10067 = vpow.pop %v10066
    %v10068 = vadd.f32 %v10067, 1.0
    %v10069 = vrcp.pop %v10068
    %v10070 = vmul.f32 %v10068, %v10069
    %v10071 = vsub.f32 1.0, %v10070
    %v10072 = vmul.f32 %v10069, %v10071
    %v10073 = vadd.f32 %v10069, %v10072
    %vm10074 = vweird.f32 %v10068
    %vm10075 = vweird.f32 %v10069
    %vm10076 = vmor %vm10074, %vm10075
    %v10077 = vsel %vm10076, %v10069, %v10073
    %v10078 = vand.u32 2147483647, %v10068
    %vm10079 = vcmp.eq.f32.partialorder %v10078, 8.507059e+37
    %v10080 = vand.u32 %v10068, 2147483648
    %v10081 = vor.u32 1.1754944e-38, %v10080
    %v10082 = vsel %vm10079, %v10081, %v10077
    %v10083 = vmul.f32 1.0, %v10082
    %vm10084 = vcmask 7168
    %10085 = vst.msk [vmem:[%s11] sm:$0xff] %vm10084, %v10083
    // Predicated region
    $region70: #{backward_discriminator.1} parent=1 // pred_check
      _
    $region71: #{backward_discriminator.1} parent=1 // pred_check_branch
      %10087 = sbr.rel (0) target = $region73
    $region72: #{backward_discriminator.1} parent=1 // pred_region
      _
    $region73: #{backward_discriminator.1} parent=1 // pred_fallthru
      _
    // Predicated region
    $region74: #{backward_discriminator.1} parent=1 // pred_check
      _
    $region75: #{backward_discriminator.1} parent=1 // pred_check_branch
      %10089 = sbr.rel (0) target = $region77
    $region76: #{backward_discriminator.1} parent=1 // pred_region
      _
    $region77: #{backward_discriminator.1} parent=1 // pred_fallthru
      _
    %10090 = vsyncpa [#allocation7], 1
    %10091 = vsyncpa [#allocation9], 1
    %10092 = vsyncpa [#allocation12], 1
    %10093 = vsyncpa [#allocation15], 1
  %10094 = vsyncmov [#allocation4]
  %s10095 = vpop.sfrf %10094
  %p10096 = scmp.eq.s32.totalorder %s10095, 0
  %p10097 = pneg %p10096
  %10099 = shalt.err (%p10097)
  %s10100 = scalar_lea.sflag [#allocation4], 1
  %10101 = vsyncmov %s10100
  %s10102 = vpop.sfrf %10101
  %p10103 = scmp.eq.s32.totalorder %s10102, 0
  %p10104 = pneg %p10103
  %10106 = shalt.err (%p10104)

</llo_original>
